<compile_context>
chip_gen: v7x
topology: tpu7x:2x2x1
jax: 0.10.0
libtpu: 0.0.40
codegen_flags: <defaults>
</compile_context>

<pallas_src>
import functools
import math

import jax
import jax.numpy as jnp
from jax.experimental import pallas as pl
from jax.experimental.pallas import tpu as pltpu


def _round_up(x, m):
    return ((x + m - 1) // m) * m


# ----------------------------------------------------------------------------
# Pallas kernel: whole-cycle fused forward (weights resident in VMEM)
# ----------------------------------------------------------------------------
# Per-layer activations of the assumed MMD_VAE:
#   conv1 LeakyReLU, conv2 LeakyReLU, fc_enc (z, no act), fc_dec ReLU,
#   deconv1 ReLU, deconv2 (no act).
_LAYER_ACTS = ("leaky_relu", "leaky_relu", None, "relu", "relu", None)


def _vae_mlp(x, w_refs, b_refs):
    """One unrolled MMD-VAE forward.

    x: [8, F] f32 (rows beyond the real branches are free sublane filler).
    w_refs/b_refs: 6 VMEM refs each, bf16 [K, N] weights and f32 [1, N] biases.
    Returns (z [8, ZP] f32, recon [8, F] f32).
    """
    h = x
    z = None
    for idx in range(6):
        y = jnp.dot(h.astype(jnp.bfloat16), w_refs[idx][...],
                    preferred_element_type=jnp.float32)
        y = y + b_refs[idx][...]                       # f32 epilogue (v5e-safe)
        act = _LAYER_ACTS[idx]
        if act == "leaky_relu":                        # nn.LeakyReLU() slope 0.01
            y = jnp.where(y > 0, y, 0.01 * y)
        elif act == "relu":
            y = jnp.maximum(y, 0.0)
        if idx == 2:
            z = y
        h = y
    return z, h


def _cycle_kernel(*refs):
    # inputs: xab, xba, 6x W_ab, 6x b_ab, 6x W_ba, 6x b_ba   |  outputs: z, rec
    xab_ref, xba_ref = refs[0], refs[1]
    wab, bab = refs[2:8], refs[8:14]
    wba, bba = refs[14:20], refs[20:26]
    z_ref, rec_ref = refs[26], refs[27]

    # Stage 1 (independent branches): ab on {A, B}, ba on {B, A}.
    z1, r1 = _vae_mlp(xab_ref[...], wab, bab)      # rows 0,1 -> AtoB, BtoB
    z2, r2 = _vae_mlp(xba_ref[...], wba, bba)      # rows 0,1 -> BtoA, AtoA
    # Stage 2 (chained branches): feed stage-1 reconstructions straight back
    # through the opposite VAE; only row 0 of each result is used, the rest is
    # free sublane filler (no row shuffling needed).
    z3, r3 = _vae_mlp(r1, wba, bba)                # row 0 -> AtoBtoA
    z4, r4 = _vae_mlp(r2, wab, bab)                # row 0 -> BtoAtoB

    z_ref[0:2, :] = z1[0:2, :]
    z_ref[2:4, :] = z2[0:2, :]
    z_ref[4:6, :] = z3[0:2, :]
    z_ref[6:8, :] = z4[0:2, :]
    rec_ref[0:2, :] = r1[0:2, :]
    rec_ref[2:4, :] = r2[0:2, :]
    rec_ref[4:6, :] = r3[0:2, :]
    rec_ref[6:8, :] = r4[0:2, :]


# ----------------------------------------------------------------------------
# Reference conv / conv-transpose (PyTorch semantics, f32, high precision)
# ----------------------------------------------------------------------------
_HP = jax.lax.Precision.HIGHEST


def _ref_conv(x, w, b, s, p):
    y = jax.lax.conv_general_dilated(
        x, w, (s, s), ((p, p), (p, p)),
        dimension_numbers=("NCHW", "OIHW", "NCHW"), precision=_HP)
    return y + b[None, :, None, None]


def _ref_convT(x, w, b, s, p):
    k = w.shape[2]
    w_eq = jnp.flip(w, (2, 3)).transpose(1, 0, 2, 3)
    y = jax.lax.conv_general_dilated(
        x, w_eq, (1, 1), ((k - 1 - p, k - 1 - p),) * 2,
        lhs_dilation=(s, s), dimension_numbers=("NCHW", "OIHW", "NCHW"),
        precision=_HP)
    return y + b[None, :, None, None]


# ----------------------------------------------------------------------------
# One-time weight preparation: unroll every layer into a dense GEMM operator
# ----------------------------------------------------------------------------
def _conv_operator(w, b, cin, h, wd, stride, pad):
    """Conv2d as a dense [Cin*H*W, Cout*Ho*Wo] operator (NCHW flattening)."""
    f_in = cin * h * wd
    eye = jnp.eye(f_in, dtype=jnp.float32).reshape(f_in, cin, h, wd)
    y = _ref_conv(eye, w, jnp.zeros((w.shape[0],), jnp.float32), stride, pad)
    cout, ho, wo = y.shape[1], y.shape[2], y.shape[3]
    return y.reshape(f_in, cout * ho * wo), jnp.repeat(b, ho * wo)


def _convT_operator(w, b, cin, h, wd, stride, pad):
    """ConvTranspose2d as a dense operator, built from the reference convT."""
    f_in = cin * h * wd
    eye = jnp.eye(f_in, dtype=jnp.float32).reshape(f_in, cin, h, wd)
    y = _ref_convT(eye, w, jnp.zeros((w.shape[1],), jnp.float32), stride, pad)
    cout, ho, wo = y.shape[1], y.shape[2], y.shape[3]
    return y.reshape(f_in, cout * ho * wo), jnp.repeat(b, ho * wo)


def unroll_mmd_vae(p, NC, NEF, NDF, zdims, H, W):
    """All six layers as exact f32 [K, N] dense operators + f32 [N] biases,
    over NCHW-flattened activations (so the fc weights need no permutation)."""
    H2, W2, H4, W4 = H // 2, W // 2, H // 4, W // 4
    w1, b1 = _conv_operator(p["conv1_w"], p["conv1_b"], NC, H, W, 2, 1)
    w2, b2 = _conv_operator(p["conv2_w"], p["conv2_b"], NEF, H2, W2, 2, 1)
    w3, b3 = p["fc_enc_w"].T, p["fc_enc_b"]
    w4, b4 = p["fc_dec_w"].T, p["fc_dec_b"]
    w5, b5 = _convT_operator(p["deconv1_w"], p["deconv1_b"], NDF * 2, H4, W4, 2, 1)
    w6, b6 = _convT_operator(p["deconv2_w"], p["deconv2_b"], NDF, H2, W2, 2, 1)
    return [w1, w2, w3, w4, w5, w6], [b1, b2, b3, b4, b5, b6]


def prepare_mmd_vae(p, NC, NEF, NDF, zdims, H, W):
    """One-time transform: unroll to dense operators, zero-pad the latent dim
    to a lane-dense 128 multiple (exact), cast weights to bf16, biases to
    f32 [1, N] rows.  No per-forward padding remains."""
    ws, bs = unroll_mmd_vae(p, NC, NEF, NDF, zdims, H, W)
    zp = _round_up(max(zdims, 128), 128)
    w3 = jnp.zeros((ws[2].shape[0], zp), jnp.float32).at[:, :zdims].set(ws[2])
    b3 = jnp.zeros((zp,), jnp.float32).at[:zdims].set(bs[2])
    w4 = jnp.zeros((zp, ws[3].shape[1]), jnp.float32).at[:zdims, :].set(ws[3])
    ws = [ws[0], ws[1], w3, w4, ws[4], ws[5]]
    bs = [bs[0], bs[1], b3, bs[3], bs[4], bs[5]]
    return {"w": [w.astype(jnp.bfloat16) for w in ws],
            "b": [b.reshape(1, -1).astype(jnp.float32) for b in bs]}


# ----------------------------------------------------------------------------
# MMD_VAE parameter init (PyTorch-layout / PyTorch-default bounds)
# ----------------------------------------------------------------------------
def _uniform(key, shape, bound):
    return jax.random.uniform(key, shape, jnp.float32, -bound, bound)


def _init_conv(key, cout, cin, k):
    k1, k2 = jax.random.split(key)
    bound = 1.0 / math.sqrt(cin * k * k)
    return _uniform(k1, (cout, cin, k, k), bound), _uniform(k2, (cout,), bound)


def _init_convT(key, cin, cout, k):
    k1, k2 = jax.random.split(key)
    bound = 1.0 / math.sqrt(cout * k * k)
    return _uniform(k1, (cin, cout, k, k), bound), _uniform(k2, (cout,), bound)


def _init_linear(key, fan_in, fan_out):
    k1, k2 = jax.random.split(key)
    bound = 1.0 / math.sqrt(fan_in)
    return _uniform(k1, (fan_out, fan_in), bound), _uniform(k2, (fan_out,), bound)


def init_mmd_vae(key, zdims, NC, NEF, NDF, H, W):
    keys = jax.random.split(key, 6)
    H4, W4 = H // 4, W // 4
    p = {}
    p["conv1_w"], p["conv1_b"] = _init_conv(keys[0], NEF, NC, 4)
    p["conv2_w"], p["conv2_b"] = _init_conv(keys[1], NEF * 2, NEF, 4)
    p["fc_enc_w"], p["fc_enc_b"] = _init_linear(keys[2], NEF * 2 * H4 * W4, zdims)
    p["fc_dec_w"], p["fc_dec_b"] = _init_linear(keys[3], zdims, NDF * 2 * H4 * W4)
    p["deconv1_w"], p["deconv1_b"] = _init_convT(keys[4], NDF * 2, NDF, 4)
    p["deconv2_w"], p["deconv2_b"] = _init_convT(keys[5], NDF, NC, 4)
    return p


# ----------------------------------------------------------------------------
# CycleProtTransVAE.forward  (one pallas_call for the whole cycle)
# ----------------------------------------------------------------------------
def cycle_prot_trans_vae_forward(prep_ab, prep_ba, pro_A_raw, pro_B_raw, *, zdims):
    # TODO(synk): t5_encoder(input_ids, attention_mask) omitted (frozen
    #             pretrained ProtT5 checkpoint); pro_*_raw stand in for its
    #             [batch, seq, d_model] output.
    NC, H, W = pro_A_raw.shape
    F = NC * H * W
    ZP = prep_ab["w"][2].shape[1]

    pro_A = pro_A_raw[None]                       # torch.unsqueeze(dim=0)
    pro_B = pro_B_raw[None]

    a = pro_A_raw.reshape(1, F).astype(jnp.float32)
    b = pro_B_raw.reshape(1, F).astype(jnp.float32)
    xab = jnp.zeros((8, F), jnp.float32).at[0:2, :].set(jnp.concatenate([a, b], 0))
    xba = jnp.zeros((8, F), jnp.float32).at[0:2, :].set(jnp.concatenate([b, a], 0))

    inputs = ([xab, xba]
              + list(prep_ab["w"]) + list(prep_ab["b"])
              + list(prep_ba["w"]) + list(prep_ba["b"]))

    vspec = pl.BlockSpec(memory_space=pltpu.MemorySpace.VMEM)
    z_all, rec_all = pl.pallas_call(
        _cycle_kernel,
        out_shape=(jax.ShapeDtypeStruct((8, ZP), jnp.float32),
                   jax.ShapeDtypeStruct((8, F), jnp.float32)),
        in_specs=[vspec] * len(inputs),
        out_specs=(vspec, vspec),
    )(*inputs)

    z = z_all[:, :zdims]

    def rec(i):
        return rec_all[i].reshape(1, NC, H, W)

    # Row map: 0 AtoB, 1 BtoB, 2 BtoA, 3 AtoA, 4 AtoBtoA, 6 BtoAtoB.
    return {
        "pro_A": pro_A, "pro_B": pro_B,
        "z_AtoB": z[0:1], "pro_AtoB": rec(0),
        "z_BtoB": z[1:2], "pro_BtoB": rec(1),
        "z_BtoA": z[2:3], "pro_BtoA": rec(2),
        "z_AtoA": z[3:4], "pro_AtoA": rec(3),
        "z_AtoBtoA": z[4:5], "pro_AtoBtoA": rec(4),
        "z_BtoAtoB": z[6:7], "pro_BtoAtoB": rec(6),
    }


# ----------------------------------------------------------------------------
# Pure-JAX f32 references for correctness checking
# ----------------------------------------------------------------------------
def _mmd_vae_ref(p, x, NDF, H, W):
    lrelu = lambda t: jnp.where(t > 0, t, 0.01 * t)
    h = lrelu(_ref_conv(x, p["conv1_w"], p["conv1_b"], 2, 1))
    h = lrelu(_ref_conv(h, p["conv2_w"], p["conv2_b"], 2, 1))
    h = h.reshape(x.shape[0], -1)
    z = jnp.dot(h, p["fc_enc_w"].T, precision=_HP) + p["fc_enc_b"]
    d = jnp.maximum(jnp.dot(z, p["fc_dec_w"].T, precision=_HP) + p["fc_dec_b"], 0.0)
    d = d.reshape(x.shape[0], 2 * NDF, H // 4, W // 4)
    d = jnp.maximum(_ref_convT(d, p["deconv1_w"], p["deconv1_b"], 2, 1), 0.0)
    xr = _ref_convT(d, p["deconv2_w"], p["deconv2_b"], 2, 1)
    return z, xr


def _cycle_ref(p_ab, p_ba, pro_A_raw, pro_B_raw, NDF, H, W):
    pro_A, pro_B = pro_A_raw[None], pro_B_raw[None]
    z_AtoB, pro_AtoB = _mmd_vae_ref(p_ab, pro_A, NDF, H, W)
    z_BtoA, pro_BtoA = _mmd_vae_ref(p_ba, pro_B, NDF, H, W)
    z_AtoBtoA, pro_AtoBtoA = _mmd_vae_ref(p_ba, pro_AtoB, NDF, H, W)
    z_BtoAtoB, pro_BtoAtoB = _mmd_vae_ref(p_ab, pro_BtoA, NDF, H, W)
    z_BtoB, pro_BtoB = _mmd_vae_ref(p_ab, pro_B, NDF, H, W)
    z_AtoA, pro_AtoA = _mmd_vae_ref(p_ba, pro_A, NDF, H, W)
    return {
        "pro_A": pro_A, "pro_B": pro_B,
        "z_AtoB": z_AtoB, "pro_AtoB": pro_AtoB,
        "z_BtoA": z_BtoA, "pro_BtoA": pro_BtoA,
        "z_AtoBtoA": z_AtoBtoA, "pro_AtoBtoA": pro_AtoBtoA,
        "z_BtoAtoB": z_BtoAtoB, "pro_BtoAtoB": pro_BtoAtoB,
        "z_BtoB": z_BtoB, "pro_BtoB": pro_BtoB,
        "z_AtoA": z_AtoA, "pro_AtoA": pro_AtoA,
    }


def _dense_vae_f32(ws, bs, x_flat):
    """f32 chain through the unrolled operators (no Pallas) — used to verify
    the operator construction exactly against the conv reference."""
    h = x_flat
    z = None
    for i, (w, b) in enumerate(zip(ws, bs)):
        y = jnp.dot(h, w, precision=_HP) + b
        if _LAYER_ACTS[i] == "leaky_relu":
            y = jnp.where(y > 0, y, 0.01 * y)
        elif _LAYER_ACTS[i] == "relu":
            y = jnp.maximum(y, 0.0)
        if i == 2:
            z = y
        h = y
    return z, h


if __name__ == "__main__":
    # Small shapes consistent with the module:
    #   batch_size=4 -> NC=4, NEF=NDF=8; latent_dim=32; seq=8, d_model=32
    batch_size = 4
    seq = 8
    d_model = 32
    latent_dim = 32
    NC, NEF, NDF = batch_size, batch_size * 2, batch_size * 2

    key = jax.random.PRNGKey(0)
    k_ab, k_ba, k_a, k_b = jax.random.split(key, 4)

    params_ab = init_mmd_vae(k_ab, latent_dim, NC, NEF, NDF, seq, d_model)
    params_ba = init_mmd_vae(k_ba, latent_dim, NC, NEF, NDF, seq, d_model)
    # One-time weight preparation (dense unrolled GEMM operators), outside jit.
    prep_ab = prepare_mmd_vae(params_ab, NC, NEF, NDF, latent_dim, seq, d_model)
    prep_ba = prepare_mmd_vae(params_ba, NC, NEF, NDF, latent_dim, seq, d_model)

    # Stand-ins for the (frozen) T5 encoder outputs of input_A / input_B.
    pro_A_raw = jax.random.normal(k_a, (batch_size, seq, d_model), jnp.float32)
    pro_B_raw = jax.random.normal(k_b, (batch_size, seq, d_model), jnp.float32)

    fwd = jax.jit(functools.partial(cycle_prot_trans_vae_forward,
                                    zdims=latent_dim))
    out = fwd(prep_ab, prep_ba, pro_A_raw, pro_B_raw)
    jax.block_until_ready(out)

    # Shape checks.
    assert out["pro_AtoB"].shape == (1, batch_size, seq, d_model)
    assert out["z_AtoB"].shape == (1, latent_dim)
    assert out["pro_AtoBtoA"].shape == out["pro_A"].shape

    # Check 1: the dense unrolled operators exactly reproduce the per-layer
    # conv / conv-transpose reference (f32, tight tolerance).
    ws_f32, bs_f32 = unroll_mmd_vae(params_ab, NC, NEF, NDF, latent_dim,
                                    seq, d_model)
    x_chk = pro_A_raw[None]
    z_d, r_d = _dense_vae_f32(ws_f32, bs_f32, x_chk.reshape(1, -1))
    z_r, r_r = _mmd_vae_ref(params_ab, x_chk, NDF, seq, d_model)
    assert float(jnp.max(jnp.abs(z_d - z_r))) < 1e-3, "fc/conv operator mismatch"
    assert float(jnp.max(jnp.abs(r_d.reshape(r_r.shape) - r_r))) < 1e-3, \
        "conv-transpose operator mismatch"

    # Check 2: Pallas end-to-end vs. pure-JAX f32 reference (loose tolerance:
    # the Pallas path uses bf16 MXU operands with f32 accumulation).
    ref = _cycle_ref(params_ab, params_ba, pro_A_raw, pro_B_raw,
                     NDF, seq, d_model)
    for name in out:
        got, want = out[name], ref[name]
        assert got.shape == want.shape, (name, got.shape, want.shape)
        rel = float(jnp.max(jnp.abs(got - want)) /
                    (jnp.max(jnp.abs(want)) + 1e-6))
        assert rel < 0.1, f"{name}: rel-to-max error {rel}"

    print("KERNEL_OK")
</pallas_src>

<mosaic_0001>
module attributes {stable_mosaic.version = 11 : i64} {
  func.func @_cycle_kernel(%arg0: memref<8x1024xf32, #tpu.memory_space<vmem>>, %arg1: memref<8x1024xf32, #tpu.memory_space<vmem>>, %arg2: memref<1024x512xbf16, #tpu.memory_space<vmem>>, %arg3: memref<512x256xbf16, #tpu.memory_space<vmem>>, %arg4: memref<256x128xbf16, #tpu.memory_space<vmem>>, %arg5: memref<128x256xbf16, #tpu.memory_space<vmem>>, %arg6: memref<256x512xbf16, #tpu.memory_space<vmem>>, %arg7: memref<512x1024xbf16, #tpu.memory_space<vmem>>, %arg8: memref<1x512xf32, #tpu.memory_space<vmem>>, %arg9: memref<1x256xf32, #tpu.memory_space<vmem>>, %arg10: memref<1x128xf32, #tpu.memory_space<vmem>>, %arg11: memref<1x256xf32, #tpu.memory_space<vmem>>, %arg12: memref<1x512xf32, #tpu.memory_space<vmem>>, %arg13: memref<1x1024xf32, #tpu.memory_space<vmem>>, %arg14: memref<1024x512xbf16, #tpu.memory_space<vmem>>, %arg15: memref<512x256xbf16, #tpu.memory_space<vmem>>, %arg16: memref<256x128xbf16, #tpu.memory_space<vmem>>, %arg17: memref<128x256xbf16, #tpu.memory_space<vmem>>, %arg18: memref<256x512xbf16, #tpu.memory_space<vmem>>, %arg19: memref<512x1024xbf16, #tpu.memory_space<vmem>>, %arg20: memref<1x512xf32, #tpu.memory_space<vmem>>, %arg21: memref<1x256xf32, #tpu.memory_space<vmem>>, %arg22: memref<1x128xf32, #tpu.memory_space<vmem>>, %arg23: memref<1x256xf32, #tpu.memory_space<vmem>>, %arg24: memref<1x512xf32, #tpu.memory_space<vmem>>, %arg25: memref<1x1024xf32, #tpu.memory_space<vmem>>, %arg26: memref<8x128xf32, #tpu.memory_space<vmem>>, %arg27: memref<8x1024xf32, #tpu.memory_space<vmem>>) attributes {dimension_semantics = [], scalar_prefetch = 0 : i64, scratch_operands = 0 : i64, tpu.core_type = #tpu.core_type<tc>} {
    %c0 = arith.constant 0 : index
    %c0_0 = arith.constant 0 : index
    %0 = vector.load %arg0[%c0, %c0_0] : memref<8x1024xf32, #tpu.memory_space<vmem>>, vector<8x1024xf32>
    %1 = arith.truncf %0 : vector<8x1024xf32> to vector<8x1024xbf16>
    %c0_1 = arith.constant 0 : index
    %c0_2 = arith.constant 0 : index
    %2 = vector.load %arg2[%c0_1, %c0_2] : memref<1024x512xbf16, #tpu.memory_space<vmem>>, vector<1024x512xbf16>
    %cst = arith.constant dense<0.000000e+00> : vector<8x512xf32>
    %3 = tpu.matmul %1, %2, %cst {dimension_numbers = #tpu.dot_dimension_numbers<[1], [0], [0], [1], [0, 0, 1, 1], [], []>} : vector<8x1024xbf16>, vector<1024x512xbf16>, vector<8x512xf32> -> vector<8x512xf32>
    %c0_3 = arith.constant 0 : index
    %c0_4 = arith.constant 0 : index
    %4 = vector.load %arg8[%c0_3, %c0_4] : memref<1x512xf32, #tpu.memory_space<vmem>>, vector<1x512xf32>
    %5 = vector.broadcast %4 : vector<1x512xf32> to vector<8x512xf32>
    %6 = arith.addf %3, %5 : vector<8x512xf32>
    %cst_5 = arith.constant 0.000000e+00 : f32
    %7 = vector.broadcast %cst_5 : f32 to vector<8x512xf32>
    %8 = arith.cmpf ogt, %6, %7 : vector<8x512xf32>
    %cst_6 = arith.constant 0.00999999977 : f32
    %9 = vector.broadcast %cst_6 : f32 to vector<8x512xf32>
    %10 = arith.mulf %9, %6 : vector<8x512xf32>
    %11 = arith.select %8, %6, %10 : vector<8x512xi1>, vector<8x512xf32>
    %12 = arith.truncf %11 : vector<8x512xf32> to vector<8x512xbf16>
    %c0_7 = arith.constant 0 : index
    %c0_8 = arith.constant 0 : index
    %13 = vector.load %arg3[%c0_7, %c0_8] : memref<512x256xbf16, #tpu.memory_space<vmem>>, vector<512x256xbf16>
    %cst_9 = arith.constant dense<0.000000e+00> : vector<8x256xf32>
    %14 = tpu.matmul %12, %13, %cst_9 {dimension_numbers = #tpu.dot_dimension_numbers<[1], [0], [0], [1], [0, 0, 1, 1], [], []>} : vector<8x512xbf16>, vector<512x256xbf16>, vector<8x256xf32> -> vector<8x256xf32>
    %c0_10 = arith.constant 0 : index
    %c0_11 = arith.constant 0 : index
    %15 = vector.load %arg9[%c0_10, %c0_11] : memref<1x256xf32, #tpu.memory_space<vmem>>, vector<1x256xf32>
    %16 = vector.broadcast %15 : vector<1x256xf32> to vector<8x256xf32>
    %17 = arith.addf %14, %16 : vector<8x256xf32>
    %cst_12 = arith.constant 0.000000e+00 : f32
    %18 = vector.broadcast %cst_12 : f32 to vector<8x256xf32>
    %19 = arith.cmpf ogt, %17, %18 : vector<8x256xf32>
    %cst_13 = arith.constant 0.00999999977 : f32
    %20 = vector.broadcast %cst_13 : f32 to vector<8x256xf32>
    %21 = arith.mulf %20, %17 : vector<8x256xf32>
    %22 = arith.select %19, %17, %21 : vector<8x256xi1>, vector<8x256xf32>
    %23 = arith.truncf %22 : vector<8x256xf32> to vector<8x256xbf16>
    %c0_14 = arith.constant 0 : index
    %c0_15 = arith.constant 0 : index
    %24 = vector.load %arg4[%c0_14, %c0_15] : memref<256x128xbf16, #tpu.memory_space<vmem>>, vector<256x128xbf16>
    %cst_16 = arith.constant dense<0.000000e+00> : vector<8x128xf32>
    %25 = tpu.matmul %23, %24, %cst_16 {dimension_numbers = #tpu.dot_dimension_numbers<[1], [0], [0], [1], [0, 0, 1, 1], [], []>} : vector<8x256xbf16>, vector<256x128xbf16>, vector<8x128xf32> -> vector<8x128xf32>
    %c0_17 = arith.constant 0 : index
    %c0_18 = arith.constant 0 : index
    %26 = vector.load %arg10[%c0_17, %c0_18] : memref<1x128xf32, #tpu.memory_space<vmem>>, vector<1x128xf32>
    %27 = vector.broadcast %26 : vector<1x128xf32> to vector<8x128xf32>
    %28 = arith.addf %25, %27 : vector<8x128xf32>
    %29 = arith.truncf %28 : vector<8x128xf32> to vector<8x128xbf16>
    %c0_19 = arith.constant 0 : index
    %c0_20 = arith.constant 0 : index
    %30 = vector.load %arg5[%c0_19, %c0_20] : memref<128x256xbf16, #tpu.memory_space<vmem>>, vector<128x256xbf16>
    %cst_21 = arith.constant dense<0.000000e+00> : vector<8x256xf32>
    %31 = tpu.matmul %29, %30, %cst_21 {dimension_numbers = #tpu.dot_dimension_numbers<[1], [0], [0], [1], [0, 0, 1, 1], [], []>} : vector<8x128xbf16>, vector<128x256xbf16>, vector<8x256xf32> -> vector<8x256xf32>
    %c0_22 = arith.constant 0 : index
    %c0_23 = arith.constant 0 : index
    %32 = vector.load %arg11[%c0_22, %c0_23] : memref<1x256xf32, #tpu.memory_space<vmem>>, vector<1x256xf32>
    %33 = vector.broadcast %32 : vector<1x256xf32> to vector<8x256xf32>
    %34 = arith.addf %31, %33 : vector<8x256xf32>
    %cst_24 = arith.constant 0.000000e+00 : f32
    %35 = vector.broadcast %cst_24 : f32 to vector<8x256xf32>
    %36 = arith.maximumf %34, %35 : vector<8x256xf32>
    %37 = arith.truncf %36 : vector<8x256xf32> to vector<8x256xbf16>
    %c0_25 = arith.constant 0 : index
    %c0_26 = arith.constant 0 : index
    %38 = vector.load %arg6[%c0_25, %c0_26] : memref<256x512xbf16, #tpu.memory_space<vmem>>, vector<256x512xbf16>
    %cst_27 = arith.constant dense<0.000000e+00> : vector<8x512xf32>
    %39 = tpu.matmul %37, %38, %cst_27 {dimension_numbers = #tpu.dot_dimension_numbers<[1], [0], [0], [1], [0, 0, 1, 1], [], []>} : vector<8x256xbf16>, vector<256x512xbf16>, vector<8x512xf32> -> vector<8x512xf32>
    %c0_28 = arith.constant 0 : index
    %c0_29 = arith.constant 0 : index
    %40 = vector.load %arg12[%c0_28, %c0_29] : memref<1x512xf32, #tpu.memory_space<vmem>>, vector<1x512xf32>
    %41 = vector.broadcast %40 : vector<1x512xf32> to vector<8x512xf32>
    %42 = arith.addf %39, %41 : vector<8x512xf32>
    %cst_30 = arith.constant 0.000000e+00 : f32
    %43 = vector.broadcast %cst_30 : f32 to vector<8x512xf32>
    %44 = arith.maximumf %42, %43 : vector<8x512xf32>
    %45 = arith.truncf %44 : vector<8x512xf32> to vector<8x512xbf16>
    %c0_31 = arith.constant 0 : index
    %c0_32 = arith.constant 0 : index
    %46 = vector.load %arg7[%c0_31, %c0_32] : memref<512x1024xbf16, #tpu.memory_space<vmem>>, vector<512x1024xbf16>
    %cst_33 = arith.constant dense<0.000000e+00> : vector<8x1024xf32>
    %47 = tpu.matmul %45, %46, %cst_33 {dimension_numbers = #tpu.dot_dimension_numbers<[1], [0], [0], [1], [0, 0, 1, 1], [], []>} : vector<8x512xbf16>, vector<512x1024xbf16>, vector<8x1024xf32> -> vector<8x1024xf32>
    %c0_34 = arith.constant 0 : index
    %c0_35 = arith.constant 0 : index
    %48 = vector.load %arg13[%c0_34, %c0_35] : memref<1x1024xf32, #tpu.memory_space<vmem>>, vector<1x1024xf32>
    %49 = vector.broadcast %48 : vector<1x1024xf32> to vector<8x1024xf32>
    %50 = arith.addf %47, %49 : vector<8x1024xf32>
    %c0_36 = arith.constant 0 : index
    %c0_37 = arith.constant 0 : index
    %51 = vector.load %arg1[%c0_36, %c0_37] : memref<8x1024xf32, #tpu.memory_space<vmem>>, vector<8x1024xf32>
    %52 = arith.truncf %51 : vector<8x1024xf32> to vector<8x1024xbf16>
    %c0_38 = arith.constant 0 : index
    %c0_39 = arith.constant 0 : index
    %53 = vector.load %arg14[%c0_38, %c0_39] : memref<1024x512xbf16, #tpu.memory_space<vmem>>, vector<1024x512xbf16>
    %cst_40 = arith.constant dense<0.000000e+00> : vector<8x512xf32>
    %54 = tpu.matmul %52, %53, %cst_40 {dimension_numbers = #tpu.dot_dimension_numbers<[1], [0], [0], [1], [0, 0, 1, 1], [], []>} : vector<8x1024xbf16>, vector<1024x512xbf16>, vector<8x512xf32> -> vector<8x512xf32>
    %c0_41 = arith.constant 0 : index
    %c0_42 = arith.constant 0 : index
    %55 = vector.load %arg20[%c0_41, %c0_42] : memref<1x512xf32, #tpu.memory_space<vmem>>, vector<1x512xf32>
    %56 = vector.broadcast %55 : vector<1x512xf32> to vector<8x512xf32>
    %57 = arith.addf %54, %56 : vector<8x512xf32>
    %cst_43 = arith.constant 0.000000e+00 : f32
    %58 = vector.broadcast %cst_43 : f32 to vector<8x512xf32>
    %59 = arith.cmpf ogt, %57, %58 : vector<8x512xf32>
    %cst_44 = arith.constant 0.00999999977 : f32
    %60 = vector.broadcast %cst_44 : f32 to vector<8x512xf32>
    %61 = arith.mulf %60, %57 : vector<8x512xf32>
    %62 = arith.select %59, %57, %61 : vector<8x512xi1>, vector<8x512xf32>
    %63 = arith.truncf %62 : vector<8x512xf32> to vector<8x512xbf16>
    %c0_45 = arith.constant 0 : index
    %c0_46 = arith.constant 0 : index
    %64 = vector.load %arg15[%c0_45, %c0_46] : memref<512x256xbf16, #tpu.memory_space<vmem>>, vector<512x256xbf16>
    %cst_47 = arith.constant dense<0.000000e+00> : vector<8x256xf32>
    %65 = tpu.matmul %63, %64, %cst_47 {dimension_numbers = #tpu.dot_dimension_numbers<[1], [0], [0], [1], [0, 0, 1, 1], [], []>} : vector<8x512xbf16>, vector<512x256xbf16>, vector<8x256xf32> -> vector<8x256xf32>
    %c0_48 = arith.constant 0 : index
    %c0_49 = arith.constant 0 : index
    %66 = vector.load %arg21[%c0_48, %c0_49] : memref<1x256xf32, #tpu.memory_space<vmem>>, vector<1x256xf32>
    %67 = vector.broadcast %66 : vector<1x256xf32> to vector<8x256xf32>
    %68 = arith.addf %65, %67 : vector<8x256xf32>
    %cst_50 = arith.constant 0.000000e+00 : f32
    %69 = vector.broadcast %cst_50 : f32 to vector<8x256xf32>
    %70 = arith.cmpf ogt, %68, %69 : vector<8x256xf32>
    %cst_51 = arith.constant 0.00999999977 : f32
    %71 = vector.broadcast %cst_51 : f32 to vector<8x256xf32>
    %72 = arith.mulf %71, %68 : vector<8x256xf32>
    %73 = arith.select %70, %68, %72 : vector<8x256xi1>, vector<8x256xf32>
    %74 = arith.truncf %73 : vector<8x256xf32> to vector<8x256xbf16>
    %c0_52 = arith.constant 0 : index
    %c0_53 = arith.constant 0 : index
    %75 = vector.load %arg16[%c0_52, %c0_53] : memref<256x128xbf16, #tpu.memory_space<vmem>>, vector<256x128xbf16>
    %cst_54 = arith.constant dense<0.000000e+00> : vector<8x128xf32>
    %76 = tpu.matmul %74, %75, %cst_54 {dimension_numbers = #tpu.dot_dimension_numbers<[1], [0], [0], [1], [0, 0, 1, 1], [], []>} : vector<8x256xbf16>, vector<256x128xbf16>, vector<8x128xf32> -> vector<8x128xf32>
    %c0_55 = arith.constant 0 : index
    %c0_56 = arith.constant 0 : index
    %77 = vector.load %arg22[%c0_55, %c0_56] : memref<1x128xf32, #tpu.memory_space<vmem>>, vector<1x128xf32>
    %78 = vector.broadcast %77 : vector<1x128xf32> to vector<8x128xf32>
    %79 = arith.addf %76, %78 : vector<8x128xf32>
    %80 = arith.truncf %79 : vector<8x128xf32> to vector<8x128xbf16>
    %c0_57 = arith.constant 0 : index
    %c0_58 = arith.constant 0 : index
    %81 = vector.load %arg17[%c0_57, %c0_58] : memref<128x256xbf16, #tpu.memory_space<vmem>>, vector<128x256xbf16>
    %cst_59 = arith.constant dense<0.000000e+00> : vector<8x256xf32>
    %82 = tpu.matmul %80, %81, %cst_59 {dimension_numbers = #tpu.dot_dimension_numbers<[1], [0], [0], [1], [0, 0, 1, 1], [], []>} : vector<8x128xbf16>, vector<128x256xbf16>, vector<8x256xf32> -> vector<8x256xf32>
    %c0_60 = arith.constant 0 : index
    %c0_61 = arith.constant 0 : index
    %83 = vector.load %arg23[%c0_60, %c0_61] : memref<1x256xf32, #tpu.memory_space<vmem>>, vector<1x256xf32>
    %84 = vector.broadcast %83 : vector<1x256xf32> to vector<8x256xf32>
    %85 = arith.addf %82, %84 : vector<8x256xf32>
    %cst_62 = arith.constant 0.000000e+00 : f32
    %86 = vector.broadcast %cst_62 : f32 to vector<8x256xf32>
    %87 = arith.maximumf %85, %86 : vector<8x256xf32>
    %88 = arith.truncf %87 : vector<8x256xf32> to vector<8x256xbf16>
    %c0_63 = arith.constant 0 : index
    %c0_64 = arith.constant 0 : index
    %89 = vector.load %arg18[%c0_63, %c0_64] : memref<256x512xbf16, #tpu.memory_space<vmem>>, vector<256x512xbf16>
    %cst_65 = arith.constant dense<0.000000e+00> : vector<8x512xf32>
    %90 = tpu.matmul %88, %89, %cst_65 {dimension_numbers = #tpu.dot_dimension_numbers<[1], [0], [0], [1], [0, 0, 1, 1], [], []>} : vector<8x256xbf16>, vector<256x512xbf16>, vector<8x512xf32> -> vector<8x512xf32>
    %c0_66 = arith.constant 0 : index
    %c0_67 = arith.constant 0 : index
    %91 = vector.load %arg24[%c0_66, %c0_67] : memref<1x512xf32, #tpu.memory_space<vmem>>, vector<1x512xf32>
    %92 = vector.broadcast %91 : vector<1x512xf32> to vector<8x512xf32>
    %93 = arith.addf %90, %92 : vector<8x512xf32>
    %cst_68 = arith.constant 0.000000e+00 : f32
    %94 = vector.broadcast %cst_68 : f32 to vector<8x512xf32>
    %95 = arith.maximumf %93, %94 : vector<8x512xf32>
    %96 = arith.truncf %95 : vector<8x512xf32> to vector<8x512xbf16>
    %c0_69 = arith.constant 0 : index
    %c0_70 = arith.constant 0 : index
    %97 = vector.load %arg19[%c0_69, %c0_70] : memref<512x1024xbf16, #tpu.memory_space<vmem>>, vector<512x1024xbf16>
    %cst_71 = arith.constant dense<0.000000e+00> : vector<8x1024xf32>
    %98 = tpu.matmul %96, %97, %cst_71 {dimension_numbers = #tpu.dot_dimension_numbers<[1], [0], [0], [1], [0, 0, 1, 1], [], []>} : vector<8x512xbf16>, vector<512x1024xbf16>, vector<8x1024xf32> -> vector<8x1024xf32>
    %c0_72 = arith.constant 0 : index
    %c0_73 = arith.constant 0 : index
    %99 = vector.load %arg25[%c0_72, %c0_73] : memref<1x1024xf32, #tpu.memory_space<vmem>>, vector<1x1024xf32>
    %100 = vector.broadcast %99 : vector<1x1024xf32> to vector<8x1024xf32>
    %101 = arith.addf %98, %100 : vector<8x1024xf32>
    %102 = arith.truncf %50 : vector<8x1024xf32> to vector<8x1024xbf16>
    %c0_74 = arith.constant 0 : index
    %c0_75 = arith.constant 0 : index
    %103 = vector.load %arg14[%c0_74, %c0_75] : memref<1024x512xbf16, #tpu.memory_space<vmem>>, vector<1024x512xbf16>
    %cst_76 = arith.constant dense<0.000000e+00> : vector<8x512xf32>
    %104 = tpu.matmul %102, %103, %cst_76 {dimension_numbers = #tpu.dot_dimension_numbers<[1], [0], [0], [1], [0, 0, 1, 1], [], []>} : vector<8x1024xbf16>, vector<1024x512xbf16>, vector<8x512xf32> -> vector<8x512xf32>
    %c0_77 = arith.constant 0 : index
    %c0_78 = arith.constant 0 : index
    %105 = vector.load %arg20[%c0_77, %c0_78] : memref<1x512xf32, #tpu.memory_space<vmem>>, vector<1x512xf32>
    %106 = vector.broadcast %105 : vector<1x512xf32> to vector<8x512xf32>
    %107 = arith.addf %104, %106 : vector<8x512xf32>
    %cst_79 = arith.constant 0.000000e+00 : f32
    %108 = vector.broadcast %cst_79 : f32 to vector<8x512xf32>
    %109 = arith.cmpf ogt, %107, %108 : vector<8x512xf32>
    %cst_80 = arith.constant 0.00999999977 : f32
    %110 = vector.broadcast %cst_80 : f32 to vector<8x512xf32>
    %111 = arith.mulf %110, %107 : vector<8x512xf32>
    %112 = arith.select %109, %107, %111 : vector<8x512xi1>, vector<8x512xf32>
    %113 = arith.truncf %112 : vector<8x512xf32> to vector<8x512xbf16>
    %c0_81 = arith.constant 0 : index
    %c0_82 = arith.constant 0 : index
    %114 = vector.load %arg15[%c0_81, %c0_82] : memref<512x256xbf16, #tpu.memory_space<vmem>>, vector<512x256xbf16>
    %cst_83 = arith.constant dense<0.000000e+00> : vector<8x256xf32>
    %115 = tpu.matmul %113, %114, %cst_83 {dimension_numbers = #tpu.dot_dimension_numbers<[1], [0], [0], [1], [0, 0, 1, 1], [], []>} : vector<8x512xbf16>, vector<512x256xbf16>, vector<8x256xf32> -> vector<8x256xf32>
    %c0_84 = arith.constant 0 : index
    %c0_85 = arith.constant 0 : index
    %116 = vector.load %arg21[%c0_84, %c0_85] : memref<1x256xf32, #tpu.memory_space<vmem>>, vector<1x256xf32>
    %117 = vector.broadcast %116 : vector<1x256xf32> to vector<8x256xf32>
    %118 = arith.addf %115, %117 : vector<8x256xf32>
    %cst_86 = arith.constant 0.000000e+00 : f32
    %119 = vector.broadcast %cst_86 : f32 to vector<8x256xf32>
    %120 = arith.cmpf ogt, %118, %119 : vector<8x256xf32>
    %cst_87 = arith.constant 0.00999999977 : f32
    %121 = vector.broadcast %cst_87 : f32 to vector<8x256xf32>
    %122 = arith.mulf %121, %118 : vector<8x256xf32>
    %123 = arith.select %120, %118, %122 : vector<8x256xi1>, vector<8x256xf32>
    %124 = arith.truncf %123 : vector<8x256xf32> to vector<8x256xbf16>
    %c0_88 = arith.constant 0 : index
    %c0_89 = arith.constant 0 : index
    %125 = vector.load %arg16[%c0_88, %c0_89] : memref<256x128xbf16, #tpu.memory_space<vmem>>, vector<256x128xbf16>
    %cst_90 = arith.constant dense<0.000000e+00> : vector<8x128xf32>
    %126 = tpu.matmul %124, %125, %cst_90 {dimension_numbers = #tpu.dot_dimension_numbers<[1], [0], [0], [1], [0, 0, 1, 1], [], []>} : vector<8x256xbf16>, vector<256x128xbf16>, vector<8x128xf32> -> vector<8x128xf32>
    %c0_91 = arith.constant 0 : index
    %c0_92 = arith.constant 0 : index
    %127 = vector.load %arg22[%c0_91, %c0_92] : memref<1x128xf32, #tpu.memory_space<vmem>>, vector<1x128xf32>
    %128 = vector.broadcast %127 : vector<1x128xf32> to vector<8x128xf32>
    %129 = arith.addf %126, %128 : vector<8x128xf32>
    %130 = arith.truncf %129 : vector<8x128xf32> to vector<8x128xbf16>
    %c0_93 = arith.constant 0 : index
    %c0_94 = arith.constant 0 : index
    %131 = vector.load %arg17[%c0_93, %c0_94] : memref<128x256xbf16, #tpu.memory_space<vmem>>, vector<128x256xbf16>
    %cst_95 = arith.constant dense<0.000000e+00> : vector<8x256xf32>
    %132 = tpu.matmul %130, %131, %cst_95 {dimension_numbers = #tpu.dot_dimension_numbers<[1], [0], [0], [1], [0, 0, 1, 1], [], []>} : vector<8x128xbf16>, vector<128x256xbf16>, vector<8x256xf32> -> vector<8x256xf32>
    %c0_96 = arith.constant 0 : index
    %c0_97 = arith.constant 0 : index
    %133 = vector.load %arg23[%c0_96, %c0_97] : memref<1x256xf32, #tpu.memory_space<vmem>>, vector<1x256xf32>
    %134 = vector.broadcast %133 : vector<1x256xf32> to vector<8x256xf32>
    %135 = arith.addf %132, %134 : vector<8x256xf32>
    %cst_98 = arith.constant 0.000000e+00 : f32
    %136 = vector.broadcast %cst_98 : f32 to vector<8x256xf32>
    %137 = arith.maximumf %135, %136 : vector<8x256xf32>
    %138 = arith.truncf %137 : vector<8x256xf32> to vector<8x256xbf16>
    %c0_99 = arith.constant 0 : index
    %c0_100 = arith.constant 0 : index
    %139 = vector.load %arg18[%c0_99, %c0_100] : memref<256x512xbf16, #tpu.memory_space<vmem>>, vector<256x512xbf16>
    %cst_101 = arith.constant dense<0.000000e+00> : vector<8x512xf32>
    %140 = tpu.matmul %138, %139, %cst_101 {dimension_numbers = #tpu.dot_dimension_numbers<[1], [0], [0], [1], [0, 0, 1, 1], [], []>} : vector<8x256xbf16>, vector<256x512xbf16>, vector<8x512xf32> -> vector<8x512xf32>
    %c0_102 = arith.constant 0 : index
    %c0_103 = arith.constant 0 : index
    %141 = vector.load %arg24[%c0_102, %c0_103] : memref<1x512xf32, #tpu.memory_space<vmem>>, vector<1x512xf32>
    %142 = vector.broadcast %141 : vector<1x512xf32> to vector<8x512xf32>
    %143 = arith.addf %140, %142 : vector<8x512xf32>
    %cst_104 = arith.constant 0.000000e+00 : f32
    %144 = vector.broadcast %cst_104 : f32 to vector<8x512xf32>
    %145 = arith.maximumf %143, %144 : vector<8x512xf32>
    %146 = arith.truncf %145 : vector<8x512xf32> to vector<8x512xbf16>
    %c0_105 = arith.constant 0 : index
    %c0_106 = arith.constant 0 : index
    %147 = vector.load %arg19[%c0_105, %c0_106] : memref<512x1024xbf16, #tpu.memory_space<vmem>>, vector<512x1024xbf16>
    %cst_107 = arith.constant dense<0.000000e+00> : vector<8x1024xf32>
    %148 = tpu.matmul %146, %147, %cst_107 {dimension_numbers = #tpu.dot_dimension_numbers<[1], [0], [0], [1], [0, 0, 1, 1], [], []>} : vector<8x512xbf16>, vector<512x1024xbf16>, vector<8x1024xf32> -> vector<8x1024xf32>
    %c0_108 = arith.constant 0 : index
    %c0_109 = arith.constant 0 : index
    %149 = vector.load %arg25[%c0_108, %c0_109] : memref<1x1024xf32, #tpu.memory_space<vmem>>, vector<1x1024xf32>
    %150 = vector.broadcast %149 : vector<1x1024xf32> to vector<8x1024xf32>
    %151 = arith.addf %148, %150 : vector<8x1024xf32>
    %152 = arith.truncf %101 : vector<8x1024xf32> to vector<8x1024xbf16>
    %c0_110 = arith.constant 0 : index
    %c0_111 = arith.constant 0 : index
    %153 = vector.load %arg2[%c0_110, %c0_111] : memref<1024x512xbf16, #tpu.memory_space<vmem>>, vector<1024x512xbf16>
    %cst_112 = arith.constant dense<0.000000e+00> : vector<8x512xf32>
    %154 = tpu.matmul %152, %153, %cst_112 {dimension_numbers = #tpu.dot_dimension_numbers<[1], [0], [0], [1], [0, 0, 1, 1], [], []>} : vector<8x1024xbf16>, vector<1024x512xbf16>, vector<8x512xf32> -> vector<8x512xf32>
    %c0_113 = arith.constant 0 : index
    %c0_114 = arith.constant 0 : index
    %155 = vector.load %arg8[%c0_113, %c0_114] : memref<1x512xf32, #tpu.memory_space<vmem>>, vector<1x512xf32>
    %156 = vector.broadcast %155 : vector<1x512xf32> to vector<8x512xf32>
    %157 = arith.addf %154, %156 : vector<8x512xf32>
    %cst_115 = arith.constant 0.000000e+00 : f32
    %158 = vector.broadcast %cst_115 : f32 to vector<8x512xf32>
    %159 = arith.cmpf ogt, %157, %158 : vector<8x512xf32>
    %cst_116 = arith.constant 0.00999999977 : f32
    %160 = vector.broadcast %cst_116 : f32 to vector<8x512xf32>
    %161 = arith.mulf %160, %157 : vector<8x512xf32>
    %162 = arith.select %159, %157, %161 : vector<8x512xi1>, vector<8x512xf32>
    %163 = arith.truncf %162 : vector<8x512xf32> to vector<8x512xbf16>
    %c0_117 = arith.constant 0 : index
    %c0_118 = arith.constant 0 : index
    %164 = vector.load %arg3[%c0_117, %c0_118] : memref<512x256xbf16, #tpu.memory_space<vmem>>, vector<512x256xbf16>
    %cst_119 = arith.constant dense<0.000000e+00> : vector<8x256xf32>
    %165 = tpu.matmul %163, %164, %cst_119 {dimension_numbers = #tpu.dot_dimension_numbers<[1], [0], [0], [1], [0, 0, 1, 1], [], []>} : vector<8x512xbf16>, vector<512x256xbf16>, vector<8x256xf32> -> vector<8x256xf32>
    %c0_120 = arith.constant 0 : index
    %c0_121 = arith.constant 0 : index
    %166 = vector.load %arg9[%c0_120, %c0_121] : memref<1x256xf32, #tpu.memory_space<vmem>>, vector<1x256xf32>
    %167 = vector.broadcast %166 : vector<1x256xf32> to vector<8x256xf32>
    %168 = arith.addf %165, %167 : vector<8x256xf32>
    %cst_122 = arith.constant 0.000000e+00 : f32
    %169 = vector.broadcast %cst_122 : f32 to vector<8x256xf32>
    %170 = arith.cmpf ogt, %168, %169 : vector<8x256xf32>
    %cst_123 = arith.constant 0.00999999977 : f32
    %171 = vector.broadcast %cst_123 : f32 to vector<8x256xf32>
    %172 = arith.mulf %171, %168 : vector<8x256xf32>
    %173 = arith.select %170, %168, %172 : vector<8x256xi1>, vector<8x256xf32>
    %174 = arith.truncf %173 : vector<8x256xf32> to vector<8x256xbf16>
    %c0_124 = arith.constant 0 : index
    %c0_125 = arith.constant 0 : index
    %175 = vector.load %arg4[%c0_124, %c0_125] : memref<256x128xbf16, #tpu.memory_space<vmem>>, vector<256x128xbf16>
    %cst_126 = arith.constant dense<0.000000e+00> : vector<8x128xf32>
    %176 = tpu.matmul %174, %175, %cst_126 {dimension_numbers = #tpu.dot_dimension_numbers<[1], [0], [0], [1], [0, 0, 1, 1], [], []>} : vector<8x256xbf16>, vector<256x128xbf16>, vector<8x128xf32> -> vector<8x128xf32>
    %c0_127 = arith.constant 0 : index
    %c0_128 = arith.constant 0 : index
    %177 = vector.load %arg10[%c0_127, %c0_128] : memref<1x128xf32, #tpu.memory_space<vmem>>, vector<1x128xf32>
    %178 = vector.broadcast %177 : vector<1x128xf32> to vector<8x128xf32>
    %179 = arith.addf %176, %178 : vector<8x128xf32>
    %180 = arith.truncf %179 : vector<8x128xf32> to vector<8x128xbf16>
    %c0_129 = arith.constant 0 : index
    %c0_130 = arith.constant 0 : index
    %181 = vector.load %arg5[%c0_129, %c0_130] : memref<128x256xbf16, #tpu.memory_space<vmem>>, vector<128x256xbf16>
    %cst_131 = arith.constant dense<0.000000e+00> : vector<8x256xf32>
    %182 = tpu.matmul %180, %181, %cst_131 {dimension_numbers = #tpu.dot_dimension_numbers<[1], [0], [0], [1], [0, 0, 1, 1], [], []>} : vector<8x128xbf16>, vector<128x256xbf16>, vector<8x256xf32> -> vector<8x256xf32>
    %c0_132 = arith.constant 0 : index
    %c0_133 = arith.constant 0 : index
    %183 = vector.load %arg11[%c0_132, %c0_133] : memref<1x256xf32, #tpu.memory_space<vmem>>, vector<1x256xf32>
    %184 = vector.broadcast %183 : vector<1x256xf32> to vector<8x256xf32>
    %185 = arith.addf %182, %184 : vector<8x256xf32>
    %cst_134 = arith.constant 0.000000e+00 : f32
    %186 = vector.broadcast %cst_134 : f32 to vector<8x256xf32>
    %187 = arith.maximumf %185, %186 : vector<8x256xf32>
    %188 = arith.truncf %187 : vector<8x256xf32> to vector<8x256xbf16>
    %c0_135 = arith.constant 0 : index
    %c0_136 = arith.constant 0 : index
    %189 = vector.load %arg6[%c0_135, %c0_136] : memref<256x512xbf16, #tpu.memory_space<vmem>>, vector<256x512xbf16>
    %cst_137 = arith.constant dense<0.000000e+00> : vector<8x512xf32>
    %190 = tpu.matmul %188, %189, %cst_137 {dimension_numbers = #tpu.dot_dimension_numbers<[1], [0], [0], [1], [0, 0, 1, 1], [], []>} : vector<8x256xbf16>, vector<256x512xbf16>, vector<8x512xf32> -> vector<8x512xf32>
    %c0_138 = arith.constant 0 : index
    %c0_139 = arith.constant 0 : index
    %191 = vector.load %arg12[%c0_138, %c0_139] : memref<1x512xf32, #tpu.memory_space<vmem>>, vector<1x512xf32>
    %192 = vector.broadcast %191 : vector<1x512xf32> to vector<8x512xf32>
    %193 = arith.addf %190, %192 : vector<8x512xf32>
    %cst_140 = arith.constant 0.000000e+00 : f32
    %194 = vector.broadcast %cst_140 : f32 to vector<8x512xf32>
    %195 = arith.maximumf %193, %194 : vector<8x512xf32>
    %196 = arith.truncf %195 : vector<8x512xf32> to vector<8x512xbf16>
    %c0_141 = arith.constant 0 : index
    %c0_142 = arith.constant 0 : index
    %197 = vector.load %arg7[%c0_141, %c0_142] : memref<512x1024xbf16, #tpu.memory_space<vmem>>, vector<512x1024xbf16>
    %cst_143 = arith.constant dense<0.000000e+00> : vector<8x1024xf32>
    %198 = tpu.matmul %196, %197, %cst_143 {dimension_numbers = #tpu.dot_dimension_numbers<[1], [0], [0], [1], [0, 0, 1, 1], [], []>} : vector<8x512xbf16>, vector<512x1024xbf16>, vector<8x1024xf32> -> vector<8x1024xf32>
    %c0_144 = arith.constant 0 : index
    %c0_145 = arith.constant 0 : index
    %199 = vector.load %arg13[%c0_144, %c0_145] : memref<1x1024xf32, #tpu.memory_space<vmem>>, vector<1x1024xf32>
    %200 = vector.broadcast %199 : vector<1x1024xf32> to vector<8x1024xf32>
    %201 = arith.addf %198, %200 : vector<8x1024xf32>
    %202 = vector.extract_strided_slice %28 {offsets = [0, 0], sizes = [2, 128], strides = [1, 1]} : vector<8x128xf32> to vector<2x128xf32>
    %c0_146 = arith.constant 0 : index
    %c0_147 = arith.constant 0 : index
    %203 = vector.load %arg26[%c0_146, %c0_147] : memref<8x128xf32, #tpu.memory_space<vmem>>, vector<2x128xf32>
    tpu.vector_store %arg26[%c0_146, %c0_147], %202 {strides = array<i32>} : memref<8x128xf32, #tpu.memory_space<vmem>>, vector<2x128xf32>,
    %204 = vector.extract_strided_slice %79 {offsets = [0, 0], sizes = [2, 128], strides = [1, 1]} : vector<8x128xf32> to vector<2x128xf32>
    %c2 = arith.constant 2 : index
    %c0_148 = arith.constant 0 : index
    %205 = vector.load %arg26[%c2, %c0_148] : memref<8x128xf32, #tpu.memory_space<vmem>>, vector<2x128xf32>
    tpu.vector_store %arg26[%c2, %c0_148], %204 {strides = array<i32>} : memref<8x128xf32, #tpu.memory_space<vmem>>, vector<2x128xf32>,
    %206 = vector.extract_strided_slice %129 {offsets = [0, 0], sizes = [2, 128], strides = [1, 1]} : vector<8x128xf32> to vector<2x128xf32>
    %c4 = arith.constant 4 : index
    %c0_149 = arith.constant 0 : index
    %207 = vector.load %arg26[%c4, %c0_149] : memref<8x128xf32, #tpu.memory_space<vmem>>, vector<2x128xf32>
    tpu.vector_store %arg26[%c4, %c0_149], %206 {strides = array<i32>} : memref<8x128xf32, #tpu.memory_space<vmem>>, vector<2x128xf32>,
    %208 = vector.extract_strided_slice %179 {offsets = [0, 0], sizes = [2, 128], strides = [1, 1]} : vector<8x128xf32> to vector<2x128xf32>
    %c6 = arith.constant 6 : index
    %c0_150 = arith.constant 0 : index
    %209 = vector.load %arg26[%c6, %c0_150] : memref<8x128xf32, #tpu.memory_space<vmem>>, vector<2x128xf32>
    tpu.vector_store %arg26[%c6, %c0_150], %208 {strides = array<i32>} : memref<8x128xf32, #tpu.memory_space<vmem>>, vector<2x128xf32>,
    %210 = vector.extract_strided_slice %50 {offsets = [0, 0], sizes = [2, 1024], strides = [1, 1]} : vector<8x1024xf32> to vector<2x1024xf32>
    %c0_151 = arith.constant 0 : index
    %c0_152 = arith.constant 0 : index
    %211 = vector.load %arg27[%c0_151, %c0_152] : memref<8x1024xf32, #tpu.memory_space<vmem>>, vector<2x1024xf32>
    tpu.vector_store %arg27[%c0_151, %c0_152], %210 {strides = array<i32>} : memref<8x1024xf32, #tpu.memory_space<vmem>>, vector<2x1024xf32>,
    %212 = vector.extract_strided_slice %101 {offsets = [0, 0], sizes = [2, 1024], strides = [1, 1]} : vector<8x1024xf32> to vector<2x1024xf32>
    %c2_153 = arith.constant 2 : index
    %c0_154 = arith.constant 0 : index
    %213 = vector.load %arg27[%c2_153, %c0_154] : memref<8x1024xf32, #tpu.memory_space<vmem>>, vector<2x1024xf32>
    tpu.vector_store %arg27[%c2_153, %c0_154], %212 {strides = array<i32>} : memref<8x1024xf32, #tpu.memory_space<vmem>>, vector<2x1024xf32>,
    %214 = vector.extract_strided_slice %151 {offsets = [0, 0], sizes = [2, 1024], strides = [1, 1]} : vector<8x1024xf32> to vector<2x1024xf32>
    %c4_155 = arith.constant 4 : index
    %c0_156 = arith.constant 0 : index
    %215 = vector.load %arg27[%c4_155, %c0_156] : memref<8x1024xf32, #tpu.memory_space<vmem>>, vector<2x1024xf32>
    tpu.vector_store %arg27[%c4_155, %c0_156], %214 {strides = array<i32>} : memref<8x1024xf32, #tpu.memory_space<vmem>>, vector<2x1024xf32>,
    %216 = vector.extract_strided_slice %201 {offsets = [0, 0], sizes = [2, 1024], strides = [1, 1]} : vector<8x1024xf32> to vector<2x1024xf32>
    %c6_157 = arith.constant 6 : index
    %c0_158 = arith.constant 0 : index
    %217 = vector.load %arg27[%c6_157, %c0_158] : memref<8x1024xf32, #tpu.memory_space<vmem>>, vector<2x1024xf32>
    tpu.vector_store %arg27[%c6_157, %c0_158], %216 {strides = array<i32>} : memref<8x1024xf32, #tpu.memory_space<vmem>>, vector<2x1024xf32>,
    return
  }
}

</mosaic_0001>

<llo_original>
// kernel: squeeze.10
$region0: #{squeeze.10}
  %s0 = inlined_call_operand.vmem [shape: f32[1024], index: 0, kind: input, shape index: {}]
  %s1 = inlined_call_operand.hbm [shape: f32[1,4,8,32], index: 1, kind: output, shape index: {}]
  $region1: #{squeeze.10} parent=0
    #allocation0 [shape = 'u8[16384]{0}', space=vmem, size = 0x4000, scoped, tag = 'operand span for operand 1']
    #allocation1 [shape = 's32[1]{0}', space=sflag, size = 0x4, scoped, tag = 'scoped memory for squeeze.10']
    %2 = vsyncpa [#allocation1], 0
    %v3 = vld [vmem:[%s0] sm:$0xff]
    %vm4 = vcmask 261120
    %5 = vst.msk [vmem:[#allocation0] ss:$4 sm:$0xff] %vm4, %v3
    %v6 = vld [vmem:[%s0] sm:$0xff]
    %7 = vrot.lane.b32.xlu0 %v6, 96
    %v8 = vpop.permute.xlu0 %7
    %vm9 = vcmask 261120
    %s10 = scalar_lea.vmem [#allocation0], 1
    %11 = vst.msk [vmem:[%s10] ss:$4 sm:$0xff] %vm9, %v8
    %v12 = vld [vmem:[%s0] sm:$0xff]
    %13 = vrot.lane.b32.xlu0 %v12, 64
    %v14 = vpop.permute.xlu0 %13
    %vm15 = vcmask 261120
    %s16 = scalar_lea.vmem [#allocation0], 2
    %17 = vst.msk [vmem:[%s16] ss:$4 sm:$0xff] %vm15, %v14
    %v18 = vld [vmem:[%s0] sm:$0xff]
    %19 = vrot.lane.b32.xlu0 %v18, 32
    %v20 = vpop.permute.xlu0 %19
    %vm21 = vcmask 261120
    %s22 = scalar_lea.vmem [#allocation0], 3
    %23 = vst.msk [vmem:[%s22] ss:$4 sm:$0xff] %vm21, %v20
    %s25 = ssub.s32 512, 512
    %26 = vsyncadd [#allocation1], %s25
    %s28 = sshll.u32 [#allocation0], 4
    %s29 = int_to_ptr.vmem [resolvable:$true] %s28
    %31 = dma.vmem_to_hbm [thread:$0]  %s29, 512, %s1, [#allocation1]
    %32 = dma.done [#allocation1], 512
    %33 = vsyncpa [#allocation1], 1

// kernel: cycle_prot_trans_vae_forward.1
$region0: #{cycle_prot_trans_vae_forward.1}
  #allocation0 [shape = 'u32[]', space=smem, size = 0x4, offset = 0x4, fixed_abs, tag = 'smem constant byte address 0x4 - core index']
  #allocation1 [shape = 'u32[144,128]{1,0:T(1,128)}', space=vmem, size = 0x12000, scoped, tag = 'internal scratch']
  %s0 = inlined_call_operand.vmem [shape: f32[8,1024], index: 0, kind: input, shape index: {}]
  %s1 = inlined_call_operand.vmem [shape: f32[8,1024], index: 1, kind: input, shape index: {}]
  %s2 = inlined_call_operand.hbm [shape: bf16[1024,512], index: 2, kind: input, shape index: {}]
  %s3 = inlined_call_operand.hbm [shape: bf16[512,256], index: 3, kind: input, shape index: {}]
  %s4 = inlined_call_operand.vmem [shape: bf16[256,128], index: 4, kind: input, shape index: {}]
  %s5 = inlined_call_operand.vmem [shape: bf16[128,256], index: 5, kind: input, shape index: {}]
  %s6 = inlined_call_operand.hbm [shape: bf16[256,512], index: 6, kind: input, shape index: {}]
  %s7 = inlined_call_operand.hbm [shape: bf16[512,1024], index: 7, kind: input, shape index: {}]
  %s8 = inlined_call_operand.hbm [shape: f32[1,512], index: 8, kind: input, shape index: {}]
  %s9 = inlined_call_operand.vmem [shape: f32[1,256], index: 9, kind: input, shape index: {}]
  %s10 = inlined_call_operand.hbm [shape: f32[1,128], index: 10, kind: input, shape index: {}]
  %s11 = inlined_call_operand.hbm [shape: f32[1,256], index: 11, kind: input, shape index: {}]
  %s12 = inlined_call_operand.hbm [shape: f32[1,512], index: 12, kind: input, shape index: {}]
  %s13 = inlined_call_operand.hbm [shape: f32[1,1024], index: 13, kind: input, shape index: {}]
  %s14 = inlined_call_operand.hbm [shape: bf16[1024,512], index: 14, kind: input, shape index: {}]
  %s15 = inlined_call_operand.hbm [shape: bf16[512,256], index: 15, kind: input, shape index: {}]
  %s16 = inlined_call_operand.hbm [shape: bf16[256,128], index: 16, kind: input, shape index: {}]
  %s17 = inlined_call_operand.hbm [shape: bf16[128,256], index: 17, kind: input, shape index: {}]
  %s18 = inlined_call_operand.hbm [shape: bf16[256,512], index: 18, kind: input, shape index: {}]
  %s19 = inlined_call_operand.hbm [shape: bf16[512,1024], index: 19, kind: input, shape index: {}]
  %s20 = inlined_call_operand.hbm [shape: f32[1,512], index: 20, kind: input, shape index: {}]
  %s21 = inlined_call_operand.hbm [shape: f32[1,256], index: 21, kind: input, shape index: {}]
  %s22 = inlined_call_operand.hbm [shape: f32[1,128], index: 22, kind: input, shape index: {}]
  %s23 = inlined_call_operand.hbm [shape: f32[1,256], index: 23, kind: input, shape index: {}]
  %s24 = inlined_call_operand.hbm [shape: f32[1,512], index: 24, kind: input, shape index: {}]
  %s25 = inlined_call_operand.hbm [shape: f32[1,1024], index: 25, kind: input, shape index: {}]
  %s26 = inlined_call_operand.vmem [shape: f32[8,128], index: 26, kind: output, shape index: {0}]
  %s27 = inlined_call_operand.vmem [shape: f32[8,1024], index: 27, kind: output, shape index: {1}]
  %28 = xla_tuple %s26, %s27
  %s29 = sld [smem:[#allocation0]]
  $region206: #{cycle_prot_trans_vae_forward.1} parent=0
    _
  %s31 = ssub.s32 1, %s29
  %s32 = scalar_select 0, %s31, %s29
  $region1: #{cycle_prot_trans_vae_forward.1} parent=0
    #allocation2 [shape = 'u8[1048576]{0}', space=vmem, size = 0x100000, scoped, tag = 'input window, operand 2, single buffered']
    #allocation3 [shape = 's32[1]{0}', space=sflag, size = 0x4, scoped, tag = 'scoped memory for cycle_prot_trans_vae_forward.1']
    #allocation4 [shape = 'u8[262144]{0}', space=vmem, size = 0x40000, scoped, tag = 'input window, operand 3, single buffered']
    #allocation5 [shape = 's32[1]{0}', space=sflag, size = 0x4, scoped, tag = 'scoped memory for cycle_prot_trans_vae_forward.1']
    #allocation6 [shape = 'u8[262144]{0}', space=vmem, size = 0x40000, scoped, tag = 'input window, operand 6, single buffered']
    #allocation7 [shape = 'u8[1048576]{0}', space=vmem, size = 0x100000, scoped, tag = 'input window, operand 7, single buffered']
    #allocation8 [shape = 's32[1]{0}', space=sflag, size = 0x4, scoped, tag = 'scoped memory for cycle_prot_trans_vae_forward.1']
    #allocation9 [shape = 'u8[2048]{0}', space=vmem, size = 0x800, scoped, tag = 'input window, operand 8, single buffered']
    #allocation10 [shape = 'u8[512]{0}', space=vmem, size = 0x400, scoped, tag = 'input window, operand 10, single buffered']
    #allocation11 [shape = 's32[1]{0}', space=sflag, size = 0x4, scoped, tag = 'scoped memory for cycle_prot_trans_vae_forward.1']
    #allocation12 [shape = 'u8[1024]{0}', space=vmem, size = 0x400, scoped, tag = 'input window, operand 11, single buffered']
    #allocation13 [shape = 'u8[2048]{0}', space=vmem, size = 0x800, scoped, tag = 'input window, operand 12, single buffered']
    #allocation14 [shape = 's32[1]{0}', space=sflag, size = 0x4, scoped, tag = 'scoped memory for cycle_prot_trans_vae_forward.1']
    #allocation15 [shape = 'u8[4096]{0}', space=vmem, size = 0x1000, scoped, tag = 'input window, operand 13, single buffered']
    #allocation16 [shape = 'u8[1048576]{0}', space=vmem, size = 0x100000, scoped, tag = 'input window, operand 14, single buffered']
    #allocation17 [shape = 's32[1]{0}', space=sflag, size = 0x4, scoped, tag = 'scoped memory for cycle_prot_trans_vae_forward.1']
    #allocation18 [shape = 'u8[262144]{0}', space=vmem, size = 0x40000, scoped, tag = 'input window, operand 15, single buffered']
    #allocation19 [shape = 'u8[65536]{0}', space=vmem, size = 0x10000, scoped, tag = 'input window, operand 16, single buffered']
    #allocation20 [shape = 's32[1]{0}', space=sflag, size = 0x4, scoped, tag = 'scoped memory for cycle_prot_trans_vae_forward.1']
    #allocation21 [shape = 'u8[65536]{0}', space=vmem, size = 0x10000, scoped, tag = 'input window, operand 17, single buffered']
    #allocation22 [shape = 'u8[262144]{0}', space=vmem, size = 0x40000, scoped, tag = 'input window, operand 18, single buffered']
    #allocation23 [shape = 's32[1]{0}', space=sflag, size = 0x4, scoped, tag = 'scoped memory for cycle_prot_trans_vae_forward.1']
    #allocation24 [shape = 'u8[1048576]{0}', space=vmem, size = 0x100000, scoped, tag = 'input window, operand 19, single buffered']
    #allocation25 [shape = 'u8[2048]{0}', space=vmem, size = 0x800, scoped, tag = 'input window, operand 20, single buffered']
    #allocation26 [shape = 's32[1]{0}', space=sflag, size = 0x4, scoped, tag = 'scoped memory for cycle_prot_trans_vae_forward.1']
    #allocation27 [shape = 'u8[1024]{0}', space=vmem, size = 0x400, scoped, tag = 'input window, operand 21, single buffered']
    #allocation28 [shape = 'u8[512]{0}', space=vmem, size = 0x400, scoped, tag = 'input window, operand 22, single buffered']
    #allocation29 [shape = 's32[1]{0}', space=sflag, size = 0x4, scoped, tag = 'scoped memory for cycle_prot_trans_vae_forward.1']
    #allocation30 [shape = 'u8[1024]{0}', space=vmem, size = 0x400, scoped, tag = 'input window, operand 23, single buffered']
    #allocation31 [shape = 'u8[2048]{0}', space=vmem, size = 0x800, scoped, tag = 'input window, operand 24, single buffered']
    #allocation32 [shape = 's32[1]{0}', space=sflag, size = 0x4, scoped, tag = 'scoped memory for cycle_prot_trans_vae_forward.1']
    #allocation33 [shape = 'u8[4096]{0}', space=vmem, size = 0x1000, scoped, tag = 'input window, operand 25, single buffered']
    %33 = vsyncpa [#allocation3], 0
    %34 = vsyncpa [#allocation5], 0
    %35 = vsyncpa [#allocation8], 0
    %36 = vsyncpa [#allocation11], 0
    %37 = vsyncpa [#allocation14], 0
    %38 = vsyncpa [#allocation17], 0
    %39 = vsyncpa [#allocation20], 0
    %40 = vsyncpa [#allocation23], 0
    %41 = vsyncpa [#allocation26], 0
    %42 = vsyncpa [#allocation29], 0
    %43 = vsyncpa [#allocation32], 0
    // Predicated region
    $region2: #{cycle_prot_trans_vae_forward.1} parent=1 // pred_check
      _
    $region3: #{cycle_prot_trans_vae_forward.1} parent=1 // pred_check_branch
      %45 = sbr.rel (0) target = $region5
    $region4: #{cycle_prot_trans_vae_forward.1} parent=1 // pred_region
      _
    $region5: #{cycle_prot_trans_vae_forward.1} parent=1 // pred_fallthru
      _
    // Predicated region
    $region6: #{cycle_prot_trans_vae_forward.1} parent=1 // pred_check
      _
    $region7: #{cycle_prot_trans_vae_forward.1} parent=1 // pred_check_branch
      %47 = sbr.rel (0) target = $region9
    $region8: #{cycle_prot_trans_vae_forward.1} parent=1 // pred_region
      _
    $region9: #{cycle_prot_trans_vae_forward.1} parent=1 // pred_fallthru
      _
    // Predicated region
    $region10: #{cycle_prot_trans_vae_forward.1} parent=1 // pred_check
      _
    $region11: #{cycle_prot_trans_vae_forward.1} parent=1 // pred_check_branch
      %49 = sbr.rel (0) target = $region13
    $region12: #{cycle_prot_trans_vae_forward.1} parent=1 // pred_region
      %s51 = ssub.s32 32768, 32768
      %52 = vsyncadd [#allocation3], %s51
      %s53 = sshll.u32 [#allocation2], 4
      %s54 = int_to_ptr.vmem [resolvable:$true] %s53
      %59 = dma.hbm_to_vmem [thread:$0]  %s2, 32768, %s54, [#allocation3], 256, 256, 16
    $region13: #{cycle_prot_trans_vae_forward.1} parent=1 // pred_fallthru
      _
    // Predicated region
    $region14: #{cycle_prot_trans_vae_forward.1} parent=1 // pred_check
      _
    $region15: #{cycle_prot_trans_vae_forward.1} parent=1 // pred_check_branch
      %61 = sbr.rel (0) target = $region17
    $region16: #{cycle_prot_trans_vae_forward.1} parent=1 // pred_region
      %s63 = ssub.s32 8192, 8192
      %64 = vsyncadd [#allocation5], %s63
      %s65 = sshll.u32 [#allocation4], 4
      %s66 = int_to_ptr.vmem [resolvable:$true] %s65
      %71 = dma.hbm_to_vmem [thread:$0]  %s3, 8192, %s66, [#allocation5], 128, 128, 8
    $region17: #{cycle_prot_trans_vae_forward.1} parent=1 // pred_fallthru
      _
    // Predicated region
    $region18: #{cycle_prot_trans_vae_forward.1} parent=1 // pred_check
      _
    $region19: #{cycle_prot_trans_vae_forward.1} parent=1 // pred_check_branch
      %73 = sbr.rel (0) target = $region21
    $region20: #{cycle_prot_trans_vae_forward.1} parent=1 // pred_region
      _
    $region21: #{cycle_prot_trans_vae_forward.1} parent=1 // pred_fallthru
      _
    // Predicated region
    $region22: #{cycle_prot_trans_vae_forward.1} parent=1 // pred_check
      _
    $region23: #{cycle_prot_trans_vae_forward.1} parent=1 // pred_check_branch
      %75 = sbr.rel (0) target = $region25
    $region24: #{cycle_prot_trans_vae_forward.1} parent=1 // pred_region
      _
    $region25: #{cycle_prot_trans_vae_forward.1} parent=1 // pred_fallthru
      _
    // Predicated region
    $region26: #{cycle_prot_trans_vae_forward.1} parent=1 // pred_check
      _
    $region27: #{cycle_prot_trans_vae_forward.1} parent=1 // pred_check_branch
      %77 = sbr.rel (0) target = $region29
    $region28: #{cycle_prot_trans_vae_forward.1} parent=1 // pred_region
      %s79 = ssub.s32 8192, 8192
      %80 = vsyncadd [#allocation5], %s79
      %s81 = sshll.u32 [#allocation6], 4
      %s82 = int_to_ptr.vmem [resolvable:$true] %s81
      %87 = dma.hbm_to_vmem [thread:$0]  %s6, 8192, %s82, [#allocation5], 256, 256, 16
    $region29: #{cycle_prot_trans_vae_forward.1} parent=1 // pred_fallthru
      _
    // Predicated region
    $region30: #{cycle_prot_trans_vae_forward.1} parent=1 // pred_check
      _
    $region31: #{cycle_prot_trans_vae_forward.1} parent=1 // pred_check_branch
      %89 = sbr.rel (0) target = $region33
    $region32: #{cycle_prot_trans_vae_forward.1} parent=1 // pred_region
      %s91 = ssub.s32 32768, 32768
      %92 = vsyncadd [#allocation8], %s91
      %s93 = sshll.u32 [#allocation7], 4
      %s94 = int_to_ptr.vmem [resolvable:$true] %s93
      %99 = dma.hbm_to_vmem [thread:$0]  %s7, 32768, %s94, [#allocation8], 512, 512, 32
    $region33: #{cycle_prot_trans_vae_forward.1} parent=1 // pred_fallthru
      _
    // Predicated region
    $region34: #{cycle_prot_trans_vae_forward.1} parent=1 // pred_check
      _
    $region35: #{cycle_prot_trans_vae_forward.1} parent=1 // pred_check_branch
      %101 = sbr.rel (0) target = $region37
    $region36: #{cycle_prot_trans_vae_forward.1} parent=1 // pred_region
      %s103 = ssub.s32 64, 64
      %104 = vsyncadd [#allocation8], %s103
      %s106 = sshll.u32 [#allocation9], 4
      %s107 = int_to_ptr.vmem [resolvable:$true] %s106
      %109 = dma.hbm_to_vmem [thread:$0]  %s8, 64, %s107, [#allocation8]
    $region37: #{cycle_prot_trans_vae_forward.1} parent=1 // pred_fallthru
      _
    // Predicated region
    $region38: #{cycle_prot_trans_vae_forward.1} parent=1 // pred_check
      _
    $region39: #{cycle_prot_trans_vae_forward.1} parent=1 // pred_check_branch
      %111 = sbr.rel (0) target = $region41
    $region40: #{cycle_prot_trans_vae_forward.1} parent=1 // pred_region
      _
    $region41: #{cycle_prot_trans_vae_forward.1} parent=1 // pred_fallthru
      _
    // Predicated region
    $region42: #{cycle_prot_trans_vae_forward.1} parent=1 // pred_check
      _
    $region43: #{cycle_prot_trans_vae_forward.1} parent=1 // pred_check_branch
      %113 = sbr.rel (0) target = $region45
    $region44: #{cycle_prot_trans_vae_forward.1} parent=1 // pred_region
      %s115 = ssub.s32 16, 16
      %116 = vsyncadd [#allocation11], %s115
      %s118 = sshll.u32 [#allocation10], 4
      %s119 = int_to_ptr.vmem [resolvable:$true] %s118
      %121 = dma.hbm_to_vmem [thread:$0]  %s10, 16, %s119, [#allocation11]
    $region45: #{cycle_prot_trans_vae_forward.1} parent=1 // pred_fallthru
      _
    // Predicated region
    $region46: #{cycle_prot_trans_vae_forward.1} parent=1 // pred_check
      _
    $region47: #{cycle_prot_trans_vae_forward.1} parent=1 // pred_check_branch
      %123 = sbr.rel (0) target = $region49
    $region48: #{cycle_prot_trans_vae_forward.1} parent=1 // pred_region
      %s125 = ssub.s32 32, 32
      %126 = vsyncadd [#allocation11], %s125
      %s128 = sshll.u32 [#allocation12], 4
      %s129 = int_to_ptr.vmem [resolvable:$true] %s128
      %131 = dma.hbm_to_vmem [thread:$0]  %s11, 32, %s129, [#allocation11]
    $region49: #{cycle_prot_trans_vae_forward.1} parent=1 // pred_fallthru
      _
    // Predicated region
    $region50: #{cycle_prot_trans_vae_forward.1} parent=1 // pred_check
      _
    $region51: #{cycle_prot_trans_vae_forward.1} parent=1 // pred_check_branch
      %133 = sbr.rel (0) target = $region53
    $region52: #{cycle_prot_trans_vae_forward.1} parent=1 // pred_region
      %s135 = ssub.s32 64, 64
      %136 = vsyncadd [#allocation14], %s135
      %s138 = sshll.u32 [#allocation13], 4
      %s139 = int_to_ptr.vmem [resolvable:$true] %s138
      %141 = dma.hbm_to_vmem [thread:$0]  %s12, 64, %s139, [#allocation14]
    $region53: #{cycle_prot_trans_vae_forward.1} parent=1 // pred_fallthru
      _
    // Predicated region
    $region54: #{cycle_prot_trans_vae_forward.1} parent=1 // pred_check
      _
    $region55: #{cycle_prot_trans_vae_forward.1} parent=1 // pred_check_branch
      %143 = sbr.rel (0) target = $region57
    $region56: #{cycle_prot_trans_vae_forward.1} parent=1 // pred_region
      %s145 = ssub.s32 128, 128
      %146 = vsyncadd [#allocation14], %s145
      %s148 = sshll.u32 [#allocation15], 4
      %s149 = int_to_ptr.vmem [resolvable:$true] %s148
      %151 = dma.hbm_to_vmem [thread:$0]  %s13, 128, %s149, [#allocation14]
    $region57: #{cycle_prot_trans_vae_forward.1} parent=1 // pred_fallthru
      _
    // Predicated region
    $region58: #{cycle_prot_trans_vae_forward.1} parent=1 // pred_check
      _
    $region59: #{cycle_prot_trans_vae_forward.1} parent=1 // pred_check_branch
      %153 = sbr.rel (0) target = $region61
    $region60: #{cycle_prot_trans_vae_forward.1} parent=1 // pred_region
      %s155 = ssub.s32 32768, 32768
      %156 = vsyncadd [#allocation17], %s155
      %s157 = sshll.u32 [#allocation16], 4
      %s158 = int_to_ptr.vmem [resolvable:$true] %s157
      %163 = dma.hbm_to_vmem [thread:$0]  %s14, 32768, %s158, [#allocation17], 256, 256, 16
    $region61: #{cycle_prot_trans_vae_forward.1} parent=1 // pred_fallthru
      _
    // Predicated region
    $region62: #{cycle_prot_trans_vae_forward.1} parent=1 // pred_check
      _
    $region63: #{cycle_prot_trans_vae_forward.1} parent=1 // pred_check_branch
      %165 = sbr.rel (0) target = $region65
    $region64: #{cycle_prot_trans_vae_forward.1} parent=1 // pred_region
      %s167 = ssub.s32 8192, 8192
      %168 = vsyncadd [#allocation17], %s167
      %s169 = sshll.u32 [#allocation18], 4
      %s170 = int_to_ptr.vmem [resolvable:$true] %s169
      %175 = dma.hbm_to_vmem [thread:$0]  %s15, 8192, %s170, [#allocation17], 128, 128, 8
    $region65: #{cycle_prot_trans_vae_forward.1} parent=1 // pred_fallthru
      _
    // Predicated region
    $region66: #{cycle_prot_trans_vae_forward.1} parent=1 // pred_check
      _
    $region67: #{cycle_prot_trans_vae_forward.1} parent=1 // pred_check_branch
      %177 = sbr.rel (0) target = $region69
    $region68: #{cycle_prot_trans_vae_forward.1} parent=1 // pred_region
      %s179 = ssub.s32 2048, 2048
      %180 = vsyncadd [#allocation20], %s179
      %s181 = sshll.u32 [#allocation19], 4
      %s182 = int_to_ptr.vmem [resolvable:$true] %s181
      %187 = dma.hbm_to_vmem [thread:$0]  %s16, 2048, %s182, [#allocation20], 64, 64, 4
    $region69: #{cycle_prot_trans_vae_forward.1} parent=1 // pred_fallthru
      _
    // Predicated region
    $region70: #{cycle_prot_trans_vae_forward.1} parent=1 // pred_check
      _
    $region71: #{cycle_prot_trans_vae_forward.1} parent=1 // pred_check_branch
      %189 = sbr.rel (0) target = $region73
    $region72: #{cycle_prot_trans_vae_forward.1} parent=1 // pred_region
      %s191 = ssub.s32 2048, 2048
      %192 = vsyncadd [#allocation20], %s191
      %s193 = sshll.u32 [#allocation21], 4
      %s194 = int_to_ptr.vmem [resolvable:$true] %s193
      %199 = dma.hbm_to_vmem [thread:$0]  %s17, 2048, %s194, [#allocation20], 128, 128, 8
    $region73: #{cycle_prot_trans_vae_forward.1} parent=1 // pred_fallthru
      _
    // Predicated region
    $region74: #{cycle_prot_trans_vae_forward.1} parent=1 // pred_check
      _
    $region75: #{cycle_prot_trans_vae_forward.1} parent=1 // pred_check_branch
      %201 = sbr.rel (0) target = $region77
    $region76: #{cycle_prot_trans_vae_forward.1} parent=1 // pred_region
      %s203 = ssub.s32 8192, 8192
      %204 = vsyncadd [#allocation23], %s203
      %s205 = sshll.u32 [#allocation22], 4
      %s206 = int_to_ptr.vmem [resolvable:$true] %s205
      %211 = dma.hbm_to_vmem [thread:$0]  %s18, 8192, %s206, [#allocation23], 256, 256, 16
    $region77: #{cycle_prot_trans_vae_forward.1} parent=1 // pred_fallthru
      _
    // Predicated region
    $region78: #{cycle_prot_trans_vae_forward.1} parent=1 // pred_check
      _
    $region79: #{cycle_prot_trans_vae_forward.1} parent=1 // pred_check_branch
      %213 = sbr.rel (0) target = $region81
    $region80: #{cycle_prot_trans_vae_forward.1} parent=1 // pred_region
      %s215 = ssub.s32 32768, 32768
      %216 = vsyncadd [#allocation23], %s215
      %s217 = sshll.u32 [#allocation24], 4
      %s218 = int_to_ptr.vmem [resolvable:$true] %s217
      %223 = dma.hbm_to_vmem [thread:$0]  %s19, 32768, %s218, [#allocation23], 512, 512, 32
    $region81: #{cycle_prot_trans_vae_forward.1} parent=1 // pred_fallthru
      _
    // Predicated region
    $region82: #{cycle_prot_trans_vae_forward.1} parent=1 // pred_check
      _
    $region83: #{cycle_prot_trans_vae_forward.1} parent=1 // pred_check_branch
      %225 = sbr.rel (0) target = $region85
    $region84: #{cycle_prot_trans_vae_forward.1} parent=1 // pred_region
      %s227 = ssub.s32 64, 64
      %228 = vsyncadd [#allocation26], %s227
      %s230 = sshll.u32 [#allocation25], 4
      %s231 = int_to_ptr.vmem [resolvable:$true] %s230
      %233 = dma.hbm_to_vmem [thread:$0]  %s20, 64, %s231, [#allocation26]
    $region85: #{cycle_prot_trans_vae_forward.1} parent=1 // pred_fallthru
      _
    // Predicated region
    $region86: #{cycle_prot_trans_vae_forward.1} parent=1 // pred_check
      _
    $region87: #{cycle_prot_trans_vae_forward.1} parent=1 // pred_check_branch
      %235 = sbr.rel (0) target = $region89
    $region88: #{cycle_prot_trans_vae_forward.1} parent=1 // pred_region
      %s237 = ssub.s32 32, 32
      %238 = vsyncadd [#allocation26], %s237
      %s240 = sshll.u32 [#allocation27], 4
      %s241 = int_to_ptr.vmem [resolvable:$true] %s240
      %243 = dma.hbm_to_vmem [thread:$0]  %s21, 32, %s241, [#allocation26]
    $region89: #{cycle_prot_trans_vae_forward.1} parent=1 // pred_fallthru
      _
    // Predicated region
    $region90: #{cycle_prot_trans_vae_forward.1} parent=1 // pred_check
      _
    $region91: #{cycle_prot_trans_vae_forward.1} parent=1 // pred_check_branch
      %245 = sbr.rel (0) target = $region93
    $region92: #{cycle_prot_trans_vae_forward.1} parent=1 // pred_region
      %s247 = ssub.s32 16, 16
      %248 = vsyncadd [#allocation29], %s247
      %s250 = sshll.u32 [#allocation28], 4
      %s251 = int_to_ptr.vmem [resolvable:$true] %s250
      %253 = dma.hbm_to_vmem [thread:$0]  %s22, 16, %s251, [#allocation29]
    $region93: #{cycle_prot_trans_vae_forward.1} parent=1 // pred_fallthru
      _
    // Predicated region
    $region94: #{cycle_prot_trans_vae_forward.1} parent=1 // pred_check
      _
    $region95: #{cycle_prot_trans_vae_forward.1} parent=1 // pred_check_branch
      %255 = sbr.rel (0) target = $region97
    $region96: #{cycle_prot_trans_vae_forward.1} parent=1 // pred_region
      %s257 = ssub.s32 32, 32
      %258 = vsyncadd [#allocation29], %s257
      %s260 = sshll.u32 [#allocation30], 4
      %s261 = int_to_ptr.vmem [resolvable:$true] %s260
      %263 = dma.hbm_to_vmem [thread:$0]  %s23, 32, %s261, [#allocation29]
    $region97: #{cycle_prot_trans_vae_forward.1} parent=1 // pred_fallthru
      _
    // Predicated region
    $region98: #{cycle_prot_trans_vae_forward.1} parent=1 // pred_check
      _
    $region99: #{cycle_prot_trans_vae_forward.1} parent=1 // pred_check_branch
      %265 = sbr.rel (0) target = $region101
    $region100: #{cycle_prot_trans_vae_forward.1} parent=1 // pred_region
      %s267 = ssub.s32 64, 64
      %268 = vsyncadd [#allocation32], %s267
      %s270 = sshll.u32 [#allocation31], 4
      %s271 = int_to_ptr.vmem [resolvable:$true] %s270
      %273 = dma.hbm_to_vmem [thread:$0]  %s24, 64, %s271, [#allocation32]
    $region101: #{cycle_prot_trans_vae_forward.1} parent=1 // pred_fallthru
      _
    // Predicated region
    $region102: #{cycle_prot_trans_vae_forward.1} parent=1 // pred_check
      _
    $region103: #{cycle_prot_trans_vae_forward.1} parent=1 // pred_check_branch
      %275 = sbr.rel (0) target = $region105
    $region104: #{cycle_prot_trans_vae_forward.1} parent=1 // pred_region
      %s277 = ssub.s32 128, 128
      %278 = vsyncadd [#allocation32], %s277
      %s280 = sshll.u32 [#allocation33], 4
      %s281 = int_to_ptr.vmem [resolvable:$true] %s280
      %283 = dma.hbm_to_vmem [thread:$0]  %s25, 128, %s281, [#allocation32]
    $region105: #{cycle_prot_trans_vae_forward.1} parent=1 // pred_fallthru
      _
    // Predicated region
    $region106: #{cycle_prot_trans_vae_forward.1} parent=1 // pred_check
      _
    $region107: #{cycle_prot_trans_vae_forward.1} parent=1 // pred_check_branch
      %285 = sbr.rel (0) target = $region109
    $region108: #{cycle_prot_trans_vae_forward.1} parent=1 // pred_region
      %286 = dma.done [#allocation3], 32768
    $region109: #{cycle_prot_trans_vae_forward.1} parent=1 // pred_fallthru
      _
    // Predicated region
    $region110: #{cycle_prot_trans_vae_forward.1} parent=1 // pred_check
      _
    $region111: #{cycle_prot_trans_vae_forward.1} parent=1 // pred_check_branch
      %288 = sbr.rel (0) target = $region113
    $region112: #{cycle_prot_trans_vae_forward.1} parent=1 // pred_region
      %289 = dma.done [#allocation5], 8192
    $region113: #{cycle_prot_trans_vae_forward.1} parent=1 // pred_fallthru
      _
    // Predicated region
    $region114: #{cycle_prot_trans_vae_forward.1} parent=1 // pred_check
      _
    $region115: #{cycle_prot_trans_vae_forward.1} parent=1 // pred_check_branch
      %291 = sbr.rel (0) target = $region117
    $region116: #{cycle_prot_trans_vae_forward.1} parent=1 // pred_region
      %292 = dma.done [#allocation5], 8192
    $region117: #{cycle_prot_trans_vae_forward.1} parent=1 // pred_fallthru
      _
    // Predicated region
    $region118: #{cycle_prot_trans_vae_forward.1} parent=1 // pred_check
      _
    $region119: #{cycle_prot_trans_vae_forward.1} parent=1 // pred_check_branch
      %294 = sbr.rel (0) target = $region121
    $region120: #{cycle_prot_trans_vae_forward.1} parent=1 // pred_region
      %295 = dma.done [#allocation8], 32768
    $region121: #{cycle_prot_trans_vae_forward.1} parent=1 // pred_fallthru
      _
    // Predicated region
    $region122: #{cycle_prot_trans_vae_forward.1} parent=1 // pred_check
      _
    $region123: #{cycle_prot_trans_vae_forward.1} parent=1 // pred_check_branch
      %297 = sbr.rel (0) target = $region125
    $region124: #{cycle_prot_trans_vae_forward.1} parent=1 // pred_region
      %298 = dma.done [#allocation8], 64
    $region125: #{cycle_prot_trans_vae_forward.1} parent=1 // pred_fallthru
      _
    // Predicated region
    $region126: #{cycle_prot_trans_vae_forward.1} parent=1 // pred_check
      _
    $region127: #{cycle_prot_trans_vae_forward.1} parent=1 // pred_check_branch
      %300 = sbr.rel (0) target = $region129
    $region128: #{cycle_prot_trans_vae_forward.1} parent=1 // pred_region
      %301 = dma.done [#allocation11], 16
    $region129: #{cycle_prot_trans_vae_forward.1} parent=1 // pred_fallthru
      _
    // Predicated region
    $region130: #{cycle_prot_trans_vae_forward.1} parent=1 // pred_check
      _
    $region131: #{cycle_prot_trans_vae_forward.1} parent=1 // pred_check_branch
      %303 = sbr.rel (0) target = $region133
    $region132: #{cycle_prot_trans_vae_forward.1} parent=1 // pred_region
      %304 = dma.done [#allocation11], 32
    $region133: #{cycle_prot_trans_vae_forward.1} parent=1 // pred_fallthru
      _
    // Predicated region
    $region134: #{cycle_prot_trans_vae_forward.1} parent=1 // pred_check
      _
    $region135: #{cycle_prot_trans_vae_forward.1} parent=1 // pred_check_branch
      %306 = sbr.rel (0) target = $region137
    $region136: #{cycle_prot_trans_vae_forward.1} parent=1 // pred_region
      %307 = dma.done [#allocation14], 64
    $region137: #{cycle_prot_trans_vae_forward.1} parent=1 // pred_fallthru
      _
    // Predicated region
    $region138: #{cycle_prot_trans_vae_forward.1} parent=1 // pred_check
      _
    $region139: #{cycle_prot_trans_vae_forward.1} parent=1 // pred_check_branch
      %309 = sbr.rel (0) target = $region141
    $region140: #{cycle_prot_trans_vae_forward.1} parent=1 // pred_region
      %310 = dma.done [#allocation14], 128
    $region141: #{cycle_prot_trans_vae_forward.1} parent=1 // pred_fallthru
      _
    // Predicated region
    $region142: #{cycle_prot_trans_vae_forward.1} parent=1 // pred_check
      _
    $region143: #{cycle_prot_trans_vae_forward.1} parent=1 // pred_check_branch
      %312 = sbr.rel (0) target = $region145
    $region144: #{cycle_prot_trans_vae_forward.1} parent=1 // pred_region
      %313 = dma.done [#allocation17], 32768
    $region145: #{cycle_prot_trans_vae_forward.1} parent=1 // pred_fallthru
      _
    // Predicated region
    $region146: #{cycle_prot_trans_vae_forward.1} parent=1 // pred_check
      _
    $region147: #{cycle_prot_trans_vae_forward.1} parent=1 // pred_check_branch
      %315 = sbr.rel (0) target = $region149
    $region148: #{cycle_prot_trans_vae_forward.1} parent=1 // pred_region
      %316 = dma.done [#allocation17], 8192
    $region149: #{cycle_prot_trans_vae_forward.1} parent=1 // pred_fallthru
      _
    // Predicated region
    $region150: #{cycle_prot_trans_vae_forward.1} parent=1 // pred_check
      _
    $region151: #{cycle_prot_trans_vae_forward.1} parent=1 // pred_check_branch
      %318 = sbr.rel (0) target = $region153
    $region152: #{cycle_prot_trans_vae_forward.1} parent=1 // pred_region
      %319 = dma.done [#allocation20], 2048
    $region153: #{cycle_prot_trans_vae_forward.1} parent=1 // pred_fallthru
      _
    // Predicated region
    $region154: #{cycle_prot_trans_vae_forward.1} parent=1 // pred_check
      _
    $region155: #{cycle_prot_trans_vae_forward.1} parent=1 // pred_check_branch
      %321 = sbr.rel (0) target = $region157
    $region156: #{cycle_prot_trans_vae_forward.1} parent=1 // pred_region
      %322 = dma.done [#allocation20], 2048
    $region157: #{cycle_prot_trans_vae_forward.1} parent=1 // pred_fallthru
      _
    // Predicated region
    $region158: #{cycle_prot_trans_vae_forward.1} parent=1 // pred_check
      _
    $region159: #{cycle_prot_trans_vae_forward.1} parent=1 // pred_check_branch
      %324 = sbr.rel (0) target = $region161
    $region160: #{cycle_prot_trans_vae_forward.1} parent=1 // pred_region
      %325 = dma.done [#allocation23], 8192
    $region161: #{cycle_prot_trans_vae_forward.1} parent=1 // pred_fallthru
      _
    // Predicated region
    $region162: #{cycle_prot_trans_vae_forward.1} parent=1 // pred_check
      _
    $region163: #{cycle_prot_trans_vae_forward.1} parent=1 // pred_check_branch
      %327 = sbr.rel (0) target = $region165
    $region164: #{cycle_prot_trans_vae_forward.1} parent=1 // pred_region
      %328 = dma.done [#allocation23], 32768
    $region165: #{cycle_prot_trans_vae_forward.1} parent=1 // pred_fallthru
      _
    // Predicated region
    $region166: #{cycle_prot_trans_vae_forward.1} parent=1 // pred_check
      _
    $region167: #{cycle_prot_trans_vae_forward.1} parent=1 // pred_check_branch
      %330 = sbr.rel (0) target = $region169
    $region168: #{cycle_prot_trans_vae_forward.1} parent=1 // pred_region
      %331 = dma.done [#allocation26], 64
    $region169: #{cycle_prot_trans_vae_forward.1} parent=1 // pred_fallthru
      _
    // Predicated region
    $region170: #{cycle_prot_trans_vae_forward.1} parent=1 // pred_check
      _
    $region171: #{cycle_prot_trans_vae_forward.1} parent=1 // pred_check_branch
      %333 = sbr.rel (0) target = $region173
    $region172: #{cycle_prot_trans_vae_forward.1} parent=1 // pred_region
      %334 = dma.done [#allocation26], 32
    $region173: #{cycle_prot_trans_vae_forward.1} parent=1 // pred_fallthru
      _
    // Predicated region
    $region174: #{cycle_prot_trans_vae_forward.1} parent=1 // pred_check
      _
    $region175: #{cycle_prot_trans_vae_forward.1} parent=1 // pred_check_branch
      %336 = sbr.rel (0) target = $region177
    $region176: #{cycle_prot_trans_vae_forward.1} parent=1 // pred_region
      %337 = dma.done [#allocation29], 16
    $region177: #{cycle_prot_trans_vae_forward.1} parent=1 // pred_fallthru
      _
    // Predicated region
    $region178: #{cycle_prot_trans_vae_forward.1} parent=1 // pred_check
      _
    $region179: #{cycle_prot_trans_vae_forward.1} parent=1 // pred_check_branch
      %339 = sbr.rel (0) target = $region181
    $region180: #{cycle_prot_trans_vae_forward.1} parent=1 // pred_region
      %340 = dma.done [#allocation29], 32
    $region181: #{cycle_prot_trans_vae_forward.1} parent=1 // pred_fallthru
      _
    // Predicated region
    $region182: #{cycle_prot_trans_vae_forward.1} parent=1 // pred_check
      _
    $region183: #{cycle_prot_trans_vae_forward.1} parent=1 // pred_check_branch
      %342 = sbr.rel (0) target = $region185
    $region184: #{cycle_prot_trans_vae_forward.1} parent=1 // pred_region
      %343 = dma.done [#allocation32], 64
    $region185: #{cycle_prot_trans_vae_forward.1} parent=1 // pred_fallthru
      _
    // Predicated region
    $region186: #{cycle_prot_trans_vae_forward.1} parent=1 // pred_check
      _
    $region187: #{cycle_prot_trans_vae_forward.1} parent=1 // pred_check_branch
      %345 = sbr.rel (0) target = $region189
    $region188: #{cycle_prot_trans_vae_forward.1} parent=1 // pred_region
      %346 = dma.done [#allocation32], 128
    $region189: #{cycle_prot_trans_vae_forward.1} parent=1 // pred_fallthru
      _
    %v348 = vld [vmem:[%s0] sm:$0xff]
    %v349 = vld [vmem:[%s0 + $0x8] sm:$0xff]
    %v350 = vld [vmem:[%s0 + $0x10] sm:$0xff]
    %v351 = vld [vmem:[%s0 + $0x18] sm:$0xff]
    %v352 = vld [vmem:[%s0 + $0x20] sm:$0xff]
    %v353 = vld [vmem:[%s0 + $0x28] sm:$0xff]
    %v354 = vld [vmem:[%s0 + $0x30] sm:$0xff]
    %v355 = vld [vmem:[%s0 + $0x38] sm:$0xff]
    %v356 = vpack.c.bf16 %v348, %v348
    %v357 = vpack.c.bf16 %v349, %v349
    %v358 = vpack.c.bf16 %v350, %v350
    %v359 = vpack.c.bf16 %v351, %v351
    %v360 = vpack.c.bf16 %v352, %v352
    %v361 = vpack.c.bf16 %v353, %v353
    %v362 = vpack.c.bf16 %v354, %v354
    %v363 = vpack.c.bf16 %v355, %v355
    %v364 = vld [vmem:[#allocation2] sm:$0xff]
    %v365 = vld [vmem:[#allocation2 + $0x8] sm:$0xff]
    %v366 = vld [vmem:[#allocation2 + $0x10] sm:$0xff]
    %v367 = vld [vmem:[#allocation2 + $0x18] sm:$0xff]
    %v368 = vld [vmem:[#allocation2 + $0x20] sm:$0xff]
    %v369 = vld [vmem:[#allocation2 + $0x28] sm:$0xff]
    %v370 = vld [vmem:[#allocation2 + $0x30] sm:$0xff]
    %v371 = vld [vmem:[#allocation2 + $0x38] sm:$0xff]
    %v372 = vld [vmem:[#allocation2 + $0x40] sm:$0xff]
    %v373 = vld [vmem:[#allocation2 + $0x48] sm:$0xff]
    %v374 = vld [vmem:[#allocation2 + $0x50] sm:$0xff]
    %v375 = vld [vmem:[#allocation2 + $0x58] sm:$0xff]
    %v376 = vld [vmem:[#allocation2 + $0x60] sm:$0xff]
    %v377 = vld [vmem:[#allocation2 + $0x68] sm:$0xff]
    %v378 = vld [vmem:[#allocation2 + $0x70] sm:$0xff]
    %v379 = vld [vmem:[#allocation2 + $0x78] sm:$0xff]
    %v380 = vld [vmem:[#allocation2 + $0x80] sm:$0xff]
    %v381 = vld [vmem:[#allocation2 + $0x88] sm:$0xff]
    %v382 = vld [vmem:[#allocation2 + $0x90] sm:$0xff]
    %v383 = vld [vmem:[#allocation2 + $0x98] sm:$0xff]
    %v384 = vld [vmem:[#allocation2 + $0xa0] sm:$0xff]
    %v385 = vld [vmem:[#allocation2 + $0xa8] sm:$0xff]
    %v386 = vld [vmem:[#allocation2 + $0xb0] sm:$0xff]
    %v387 = vld [vmem:[#allocation2 + $0xb8] sm:$0xff]
    %v388 = vld [vmem:[#allocation2 + $0xc0] sm:$0xff]
    %v389 = vld [vmem:[#allocation2 + $0xc8] sm:$0xff]
    %v390 = vld [vmem:[#allocation2 + $0xd0] sm:$0xff]
    %v391 = vld [vmem:[#allocation2 + $0xd8] sm:$0xff]
    %v392 = vld [vmem:[#allocation2 + $0xe0] sm:$0xff]
    %v393 = vld [vmem:[#allocation2 + $0xe8] sm:$0xff]
    %v394 = vld [vmem:[#allocation2 + $0xf0] sm:$0xff]
    %v395 = vld [vmem:[#allocation2 + $0xf8] sm:$0xff]
    %v396 = vld [vmem:[#allocation2 + $0x100] sm:$0xff]
    %v397 = vld [vmem:[#allocation2 + $0x108] sm:$0xff]
    %v398 = vld [vmem:[#allocation2 + $0x110] sm:$0xff]
    %v399 = vld [vmem:[#allocation2 + $0x118] sm:$0xff]
    %v400 = vld [vmem:[#allocation2 + $0x120] sm:$0xff]
    %v401 = vld [vmem:[#allocation2 + $0x128] sm:$0xff]
    %v402 = vld [vmem:[#allocation2 + $0x130] sm:$0xff]
    %v403 = vld [vmem:[#allocation2 + $0x138] sm:$0xff]
    %v404 = vld [vmem:[#allocation2 + $0x140] sm:$0xff]
    %v405 = vld [vmem:[#allocation2 + $0x148] sm:$0xff]
    %v406 = vld [vmem:[#allocation2 + $0x150] sm:$0xff]
    %v407 = vld [vmem:[#allocation2 + $0x158] sm:$0xff]
    %v408 = vld [vmem:[#allocation2 + $0x160] sm:$0xff]
    %v409 = vld [vmem:[#allocation2 + $0x168] sm:$0xff]
    %v410 = vld [vmem:[#allocation2 + $0x170] sm:$0xff]
    %v411 = vld [vmem:[#allocation2 + $0x178] sm:$0xff]
    %v412 = vld [vmem:[#allocation2 + $0x180] sm:$0xff]
    %v413 = vld [vmem:[#allocation2 + $0x188] sm:$0xff]
    %v414 = vld [vmem:[#allocation2 + $0x190] sm:$0xff]
    %v415 = vld [vmem:[#allocation2 + $0x198] sm:$0xff]
    %v416 = vld [vmem:[#allocation2 + $0x1a0] sm:$0xff]
    %v417 = vld [vmem:[#allocation2 + $0x1a8] sm:$0xff]
    %v418 = vld [vmem:[#allocation2 + $0x1b0] sm:$0xff]
    %v419 = vld [vmem:[#allocation2 + $0x1b8] sm:$0xff]
    %v420 = vld [vmem:[#allocation2 + $0x1c0] sm:$0xff]
    %v421 = vld [vmem:[#allocation2 + $0x1c8] sm:$0xff]
    %v422 = vld [vmem:[#allocation2 + $0x1d0] sm:$0xff]
    %v423 = vld [vmem:[#allocation2 + $0x1d8] sm:$0xff]
    %v424 = vld [vmem:[#allocation2 + $0x1e0] sm:$0xff]
    %v425 = vld [vmem:[#allocation2 + $0x1e8] sm:$0xff]
    %v426 = vld [vmem:[#allocation2 + $0x1f0] sm:$0xff]
    %v427 = vld [vmem:[#allocation2 + $0x1f8] sm:$0xff]
    %v428 = vld [vmem:[#allocation2 + $0x200] sm:$0xff]
    %v429 = vld [vmem:[#allocation2 + $0x208] sm:$0xff]
    %v430 = vld [vmem:[#allocation2 + $0x210] sm:$0xff]
    %v431 = vld [vmem:[#allocation2 + $0x218] sm:$0xff]
    %v432 = vld [vmem:[#allocation2 + $0x220] sm:$0xff]
    %v433 = vld [vmem:[#allocation2 + $0x228] sm:$0xff]
    %v434 = vld [vmem:[#allocation2 + $0x230] sm:$0xff]
    %v435 = vld [vmem:[#allocation2 + $0x238] sm:$0xff]
    %v436 = vld [vmem:[#allocation2 + $0x240] sm:$0xff]
    %v437 = vld [vmem:[#allocation2 + $0x248] sm:$0xff]
    %v438 = vld [vmem:[#allocation2 + $0x250] sm:$0xff]
    %v439 = vld [vmem:[#allocation2 + $0x258] sm:$0xff]
    %v440 = vld [vmem:[#allocation2 + $0x260] sm:$0xff]
    %v441 = vld [vmem:[#allocation2 + $0x268] sm:$0xff]
    %v442 = vld [vmem:[#allocation2 + $0x270] sm:$0xff]
    %v443 = vld [vmem:[#allocation2 + $0x278] sm:$0xff]
    %v444 = vld [vmem:[#allocation2 + $0x280] sm:$0xff]
    %v445 = vld [vmem:[#allocation2 + $0x288] sm:$0xff]
    %v446 = vld [vmem:[#allocation2 + $0x290] sm:$0xff]
    %v447 = vld [vmem:[#allocation2 + $0x298] sm:$0xff]
    %v448 = vld [vmem:[#allocation2 + $0x2a0] sm:$0xff]
    %v449 = vld [vmem:[#allocation2 + $0x2a8] sm:$0xff]
    %v450 = vld [vmem:[#allocation2 + $0x2b0] sm:$0xff]
    %v451 = vld [vmem:[#allocation2 + $0x2b8] sm:$0xff]
    %v452 = vld [vmem:[#allocation2 + $0x2c0] sm:$0xff]
    %v453 = vld [vmem:[#allocation2 + $0x2c8] sm:$0xff]
    %v454 = vld [vmem:[#allocation2 + $0x2d0] sm:$0xff]
    %v455 = vld [vmem:[#allocation2 + $0x2d8] sm:$0xff]
    %v456 = vld [vmem:[#allocation2 + $0x2e0] sm:$0xff]
    %v457 = vld [vmem:[#allocation2 + $0x2e8] sm:$0xff]
    %v458 = vld [vmem:[#allocation2 + $0x2f0] sm:$0xff]
    %v459 = vld [vmem:[#allocation2 + $0x2f8] sm:$0xff]
    %v460 = vld [vmem:[#allocation2 + $0x300] sm:$0xff]
    %v461 = vld [vmem:[#allocation2 + $0x308] sm:$0xff]
    %v462 = vld [vmem:[#allocation2 + $0x310] sm:$0xff]
    %v463 = vld [vmem:[#allocation2 + $0x318] sm:$0xff]
    %v464 = vld [vmem:[#allocation2 + $0x320] sm:$0xff]
    %v465 = vld [vmem:[#allocation2 + $0x328] sm:$0xff]
    %v466 = vld [vmem:[#allocation2 + $0x330] sm:$0xff]
    %v467 = vld [vmem:[#allocation2 + $0x338] sm:$0xff]
    %v468 = vld [vmem:[#allocation2 + $0x340] sm:$0xff]
    %v469 = vld [vmem:[#allocation2 + $0x348] sm:$0xff]
    %v470 = vld [vmem:[#allocation2 + $0x350] sm:$0xff]
    %v471 = vld [vmem:[#allocation2 + $0x358] sm:$0xff]
    %v472 = vld [vmem:[#allocation2 + $0x360] sm:$0xff]
    %v473 = vld [vmem:[#allocation2 + $0x368] sm:$0xff]
    %v474 = vld [vmem:[#allocation2 + $0x370] sm:$0xff]
    %v475 = vld [vmem:[#allocation2 + $0x378] sm:$0xff]
    %v476 = vld [vmem:[#allocation2 + $0x380] sm:$0xff]
    %v477 = vld [vmem:[#allocation2 + $0x388] sm:$0xff]
    %v478 = vld [vmem:[#allocation2 + $0x390] sm:$0xff]
    %v479 = vld [vmem:[#allocation2 + $0x398] sm:$0xff]
    %v480 = vld [vmem:[#allocation2 + $0x3a0] sm:$0xff]
    %v481 = vld [vmem:[#allocation2 + $0x3a8] sm:$0xff]
    %v482 = vld [vmem:[#allocation2 + $0x3b0] sm:$0xff]
    %v483 = vld [vmem:[#allocation2 + $0x3b8] sm:$0xff]
    %v484 = vld [vmem:[#allocation2 + $0x3c0] sm:$0xff]
    %v485 = vld [vmem:[#allocation2 + $0x3c8] sm:$0xff]
    %v486 = vld [vmem:[#allocation2 + $0x3d0] sm:$0xff]
    %v487 = vld [vmem:[#allocation2 + $0x3d8] sm:$0xff]
    %v488 = vld [vmem:[#allocation2 + $0x3e0] sm:$0xff]
    %v489 = vld [vmem:[#allocation2 + $0x3e8] sm:$0xff]
    %v490 = vld [vmem:[#allocation2 + $0x3f0] sm:$0xff]
    %v491 = vld [vmem:[#allocation2 + $0x3f8] sm:$0xff]
    %v492 = vld [vmem:[#allocation2 + $0x400] sm:$0xff]
    %v493 = vld [vmem:[#allocation2 + $0x408] sm:$0xff]
    %v494 = vld [vmem:[#allocation2 + $0x410] sm:$0xff]
    %v495 = vld [vmem:[#allocation2 + $0x418] sm:$0xff]
    %v496 = vld [vmem:[#allocation2 + $0x420] sm:$0xff]
    %v497 = vld [vmem:[#allocation2 + $0x428] sm:$0xff]
    %v498 = vld [vmem:[#allocation2 + $0x430] sm:$0xff]
    %v499 = vld [vmem:[#allocation2 + $0x438] sm:$0xff]
    %v500 = vld [vmem:[#allocation2 + $0x440] sm:$0xff]
    %v501 = vld [vmem:[#allocation2 + $0x448] sm:$0xff]
    %v502 = vld [vmem:[#allocation2 + $0x450] sm:$0xff]
    %v503 = vld [vmem:[#allocation2 + $0x458] sm:$0xff]
    %v504 = vld [vmem:[#allocation2 + $0x460] sm:$0xff]
    %v505 = vld [vmem:[#allocation2 + $0x468] sm:$0xff]
    %v506 = vld [vmem:[#allocation2 + $0x470] sm:$0xff]
    %v507 = vld [vmem:[#allocation2 + $0x478] sm:$0xff]
    %v508 = vld [vmem:[#allocation2 + $0x480] sm:$0xff]
    %v509 = vld [vmem:[#allocation2 + $0x488] sm:$0xff]
    %v510 = vld [vmem:[#allocation2 + $0x490] sm:$0xff]
    %v511 = vld [vmem:[#allocation2 + $0x498] sm:$0xff]
    %v512 = vld [vmem:[#allocation2 + $0x4a0] sm:$0xff]
    %v513 = vld [vmem:[#allocation2 + $0x4a8] sm:$0xff]
    %v514 = vld [vmem:[#allocation2 + $0x4b0] sm:$0xff]
    %v515 = vld [vmem:[#allocation2 + $0x4b8] sm:$0xff]
    %v516 = vld [vmem:[#allocation2 + $0x4c0] sm:$0xff]
    %v517 = vld [vmem:[#allocation2 + $0x4c8] sm:$0xff]
    %v518 = vld [vmem:[#allocation2 + $0x4d0] sm:$0xff]
    %v519 = vld [vmem:[#allocation2 + $0x4d8] sm:$0xff]
    %v520 = vld [vmem:[#allocation2 + $0x4e0] sm:$0xff]
    %v521 = vld [vmem:[#allocation2 + $0x4e8] sm:$0xff]
    %v522 = vld [vmem:[#allocation2 + $0x4f0] sm:$0xff]
    %v523 = vld [vmem:[#allocation2 + $0x4f8] sm:$0xff]
    %v524 = vld [vmem:[#allocation2 + $0x500] sm:$0xff]
    %v525 = vld [vmem:[#allocation2 + $0x508] sm:$0xff]
    %v526 = vld [vmem:[#allocation2 + $0x510] sm:$0xff]
    %v527 = vld [vmem:[#allocation2 + $0x518] sm:$0xff]
    %v528 = vld [vmem:[#allocation2 + $0x520] sm:$0xff]
    %v529 = vld [vmem:[#allocation2 + $0x528] sm:$0xff]
    %v530 = vld [vmem:[#allocation2 + $0x530] sm:$0xff]
    %v531 = vld [vmem:[#allocation2 + $0x538] sm:$0xff]
    %v532 = vld [vmem:[#allocation2 + $0x540] sm:$0xff]
    %v533 = vld [vmem:[#allocation2 + $0x548] sm:$0xff]
    %v534 = vld [vmem:[#allocation2 + $0x550] sm:$0xff]
    %v535 = vld [vmem:[#allocation2 + $0x558] sm:$0xff]
    %v536 = vld [vmem:[#allocation2 + $0x560] sm:$0xff]
    %v537 = vld [vmem:[#allocation2 + $0x568] sm:$0xff]
    %v538 = vld [vmem:[#allocation2 + $0x570] sm:$0xff]
    %v539 = vld [vmem:[#allocation2 + $0x578] sm:$0xff]
    %v540 = vld [vmem:[#allocation2 + $0x580] sm:$0xff]
    %v541 = vld [vmem:[#allocation2 + $0x588] sm:$0xff]
    %v542 = vld [vmem:[#allocation2 + $0x590] sm:$0xff]
    %v543 = vld [vmem:[#allocation2 + $0x598] sm:$0xff]
    %v544 = vld [vmem:[#allocation2 + $0x5a0] sm:$0xff]
    %v545 = vld [vmem:[#allocation2 + $0x5a8] sm:$0xff]
    %v546 = vld [vmem:[#allocation2 + $0x5b0] sm:$0xff]
    %v547 = vld [vmem:[#allocation2 + $0x5b8] sm:$0xff]
    %v548 = vld [vmem:[#allocation2 + $0x5c0] sm:$0xff]
    %v549 = vld [vmem:[#allocation2 + $0x5c8] sm:$0xff]
    %v550 = vld [vmem:[#allocation2 + $0x5d0] sm:$0xff]
    %v551 = vld [vmem:[#allocation2 + $0x5d8] sm:$0xff]
    %v552 = vld [vmem:[#allocation2 + $0x5e0] sm:$0xff]
    %v553 = vld [vmem:[#allocation2 + $0x5e8] sm:$0xff]
    %v554 = vld [vmem:[#allocation2 + $0x5f0] sm:$0xff]
    %v555 = vld [vmem:[#allocation2 + $0x5f8] sm:$0xff]
    %v556 = vld [vmem:[#allocation2 + $0x600] sm:$0xff]
    %v557 = vld [vmem:[#allocation2 + $0x608] sm:$0xff]
    %v558 = vld [vmem:[#allocation2 + $0x610] sm:$0xff]
    %v559 = vld [vmem:[#allocation2 + $0x618] sm:$0xff]
    %v560 = vld [vmem:[#allocation2 + $0x620] sm:$0xff]
    %v561 = vld [vmem:[#allocation2 + $0x628] sm:$0xff]
    %v562 = vld [vmem:[#allocation2 + $0x630] sm:$0xff]
    %v563 = vld [vmem:[#allocation2 + $0x638] sm:$0xff]
    %v564 = vld [vmem:[#allocation2 + $0x640] sm:$0xff]
    %v565 = vld [vmem:[#allocation2 + $0x648] sm:$0xff]
    %v566 = vld [vmem:[#allocation2 + $0x650] sm:$0xff]
    %v567 = vld [vmem:[#allocation2 + $0x658] sm:$0xff]
    %v568 = vld [vmem:[#allocation2 + $0x660] sm:$0xff]
    %v569 = vld [vmem:[#allocation2 + $0x668] sm:$0xff]
    %v570 = vld [vmem:[#allocation2 + $0x670] sm:$0xff]
    %v571 = vld [vmem:[#allocation2 + $0x678] sm:$0xff]
    %v572 = vld [vmem:[#allocation2 + $0x680] sm:$0xff]
    %v573 = vld [vmem:[#allocation2 + $0x688] sm:$0xff]
    %v574 = vld [vmem:[#allocation2 + $0x690] sm:$0xff]
    %v575 = vld [vmem:[#allocation2 + $0x698] sm:$0xff]
    %v576 = vld [vmem:[#allocation2 + $0x6a0] sm:$0xff]
    %v577 = vld [vmem:[#allocation2 + $0x6a8] sm:$0xff]
    %v578 = vld [vmem:[#allocation2 + $0x6b0] sm:$0xff]
    %v579 = vld [vmem:[#allocation2 + $0x6b8] sm:$0xff]
    %v580 = vld [vmem:[#allocation2 + $0x6c0] sm:$0xff]
    %v581 = vld [vmem:[#allocation2 + $0x6c8] sm:$0xff]
    %v582 = vld [vmem:[#allocation2 + $0x6d0] sm:$0xff]
    %v583 = vld [vmem:[#allocation2 + $0x6d8] sm:$0xff]
    %v584 = vld [vmem:[#allocation2 + $0x6e0] sm:$0xff]
    %v585 = vld [vmem:[#allocation2 + $0x6e8] sm:$0xff]
    %v586 = vld [vmem:[#allocation2 + $0x6f0] sm:$0xff]
    %v587 = vld [vmem:[#allocation2 + $0x6f8] sm:$0xff]
    %v588 = vld [vmem:[#allocation2 + $0x700] sm:$0xff]
    %v589 = vld [vmem:[#allocation2 + $0x708] sm:$0xff]
    %v590 = vld [vmem:[#allocation2 + $0x710] sm:$0xff]
    %v591 = vld [vmem:[#allocation2 + $0x718] sm:$0xff]
    %v592 = vld [vmem:[#allocation2 + $0x720] sm:$0xff]
    %v593 = vld [vmem:[#allocation2 + $0x728] sm:$0xff]
    %v594 = vld [vmem:[#allocation2 + $0x730] sm:$0xff]
    %v595 = vld [vmem:[#allocation2 + $0x738] sm:$0xff]
    %v596 = vld [vmem:[#allocation2 + $0x740] sm:$0xff]
    %v597 = vld [vmem:[#allocation2 + $0x748] sm:$0xff]
    %v598 = vld [vmem:[#allocation2 + $0x750] sm:$0xff]
    %v599 = vld [vmem:[#allocation2 + $0x758] sm:$0xff]
    %v600 = vld [vmem:[#allocation2 + $0x760] sm:$0xff]
    %v601 = vld [vmem:[#allocation2 + $0x768] sm:$0xff]
    %v602 = vld [vmem:[#allocation2 + $0x770] sm:$0xff]
    %v603 = vld [vmem:[#allocation2 + $0x778] sm:$0xff]
    %v604 = vld [vmem:[#allocation2 + $0x780] sm:$0xff]
    %v605 = vld [vmem:[#allocation2 + $0x788] sm:$0xff]
    %v606 = vld [vmem:[#allocation2 + $0x790] sm:$0xff]
    %v607 = vld [vmem:[#allocation2 + $0x798] sm:$0xff]
    %v608 = vld [vmem:[#allocation2 + $0x7a0] sm:$0xff]
    %v609 = vld [vmem:[#allocation2 + $0x7a8] sm:$0xff]
    %v610 = vld [vmem:[#allocation2 + $0x7b0] sm:$0xff]
    %v611 = vld [vmem:[#allocation2 + $0x7b8] sm:$0xff]
    %v612 = vld [vmem:[#allocation2 + $0x7c0] sm:$0xff]
    %v613 = vld [vmem:[#allocation2 + $0x7c8] sm:$0xff]
    %v614 = vld [vmem:[#allocation2 + $0x7d0] sm:$0xff]
    %v615 = vld [vmem:[#allocation2 + $0x7d8] sm:$0xff]
    %v616 = vld [vmem:[#allocation2 + $0x7e0] sm:$0xff]
    %v617 = vld [vmem:[#allocation2 + $0x7e8] sm:$0xff]
    %v618 = vld [vmem:[#allocation2 + $0x7f0] sm:$0xff]
    %v619 = vld [vmem:[#allocation2 + $0x7f8] sm:$0xff]
    %v620 = vld [vmem:[#allocation9] sm:$0xf]
    %v622 = vlaneseq
    %v623 = vshrl.u32 %v622, 7
    %v624 = vsub.s32 0, %v623
    %v625 = vrot.slane %v620, %v624
    %v626 = vlaneseq
    %v627 = vshrl.u32 %v626, 7
    %v628 = vsub.s32 1, %v627
    %v629 = vrot.slane %v620, %v628
    %v630 = vlaneseq
    %v631 = vshrl.u32 %v630, 7
    %v632 = vsub.s32 2, %v631
    %v633 = vrot.slane %v620, %v632
    %v634 = vlaneseq
    %v635 = vshrl.u32 %v634, 7
    %v636 = vsub.s32 3, %v635
    %v637 = vrot.slane %v620, %v636
    %v898 = vunpack.c.l.b16 %v364
    %v899 = vunpack.c.h.b16 %v364
    %v900 = vunpack.c.l.b16 %v365
    %v901 = vunpack.c.h.b16 %v365
    %v902 = vunpack.c.l.b16 %v366
    %v903 = vunpack.c.h.b16 %v366
    %v904 = vunpack.c.l.b16 %v367
    %v905 = vunpack.c.h.b16 %v367
    %v906 = vunpack.c.l.b16 %v368
    %v907 = vunpack.c.h.b16 %v368
    %v908 = vunpack.c.l.b16 %v369
    %v909 = vunpack.c.h.b16 %v369
    %v910 = vunpack.c.l.b16 %v370
    %v911 = vunpack.c.h.b16 %v370
    %v912 = vunpack.c.l.b16 %v371
    %v913 = vunpack.c.h.b16 %v371
    %v914 = vunpack.c.l.b16 %v372
    %v915 = vunpack.c.h.b16 %v372
    %v916 = vunpack.c.l.b16 %v373
    %v917 = vunpack.c.h.b16 %v373
    %v918 = vunpack.c.l.b16 %v374
    %v919 = vunpack.c.h.b16 %v374
    %v920 = vunpack.c.l.b16 %v375
    %v921 = vunpack.c.h.b16 %v375
    %v922 = vunpack.c.l.b16 %v376
    %v923 = vunpack.c.h.b16 %v376
    %v924 = vunpack.c.l.b16 %v377
    %v925 = vunpack.c.h.b16 %v377
    %v926 = vunpack.c.l.b16 %v378
    %v927 = vunpack.c.h.b16 %v378
    %v928 = vunpack.c.l.b16 %v379
    %v929 = vunpack.c.h.b16 %v379
    %v930 = vunpack.c.l.b16 %v380
    %v931 = vunpack.c.h.b16 %v380
    %v932 = vunpack.c.l.b16 %v381
    %v933 = vunpack.c.h.b16 %v381
    %v934 = vunpack.c.l.b16 %v382
    %v935 = vunpack.c.h.b16 %v382
    %v936 = vunpack.c.l.b16 %v383
    %v937 = vunpack.c.h.b16 %v383
    %v938 = vunpack.c.l.b16 %v384
    %v939 = vunpack.c.h.b16 %v384
    %v940 = vunpack.c.l.b16 %v385
    %v941 = vunpack.c.h.b16 %v385
    %v942 = vunpack.c.l.b16 %v386
    %v943 = vunpack.c.h.b16 %v386
    %v944 = vunpack.c.l.b16 %v387
    %v945 = vunpack.c.h.b16 %v387
    %v946 = vunpack.c.l.b16 %v388
    %v947 = vunpack.c.h.b16 %v388
    %v948 = vunpack.c.l.b16 %v389
    %v949 = vunpack.c.h.b16 %v389
    %v950 = vunpack.c.l.b16 %v390
    %v951 = vunpack.c.h.b16 %v390
    %v952 = vunpack.c.l.b16 %v391
    %v953 = vunpack.c.h.b16 %v391
    %v954 = vunpack.c.l.b16 %v392
    %v955 = vunpack.c.h.b16 %v392
    %v956 = vunpack.c.l.b16 %v393
    %v957 = vunpack.c.h.b16 %v393
    %v958 = vunpack.c.l.b16 %v394
    %v959 = vunpack.c.h.b16 %v394
    %v960 = vunpack.c.l.b16 %v395
    %v961 = vunpack.c.h.b16 %v395
    %v962 = vunpack.c.l.b16 %v396
    %v963 = vunpack.c.h.b16 %v396
    %v964 = vunpack.c.l.b16 %v397
    %v965 = vunpack.c.h.b16 %v397
    %v966 = vunpack.c.l.b16 %v398
    %v967 = vunpack.c.h.b16 %v398
    %v968 = vunpack.c.l.b16 %v399
    %v969 = vunpack.c.h.b16 %v399
    %v970 = vunpack.c.l.b16 %v400
    %v971 = vunpack.c.h.b16 %v400
    %v972 = vunpack.c.l.b16 %v401
    %v973 = vunpack.c.h.b16 %v401
    %v974 = vunpack.c.l.b16 %v402
    %v975 = vunpack.c.h.b16 %v402
    %v976 = vunpack.c.l.b16 %v403
    %v977 = vunpack.c.h.b16 %v403
    %v978 = vunpack.c.l.b16 %v404
    %v979 = vunpack.c.h.b16 %v404
    %v980 = vunpack.c.l.b16 %v405
    %v981 = vunpack.c.h.b16 %v405
    %v982 = vunpack.c.l.b16 %v406
    %v983 = vunpack.c.h.b16 %v406
    %v984 = vunpack.c.l.b16 %v407
    %v985 = vunpack.c.h.b16 %v407
    %v986 = vunpack.c.l.b16 %v408
    %v987 = vunpack.c.h.b16 %v408
    %v988 = vunpack.c.l.b16 %v409
    %v989 = vunpack.c.h.b16 %v409
    %v990 = vunpack.c.l.b16 %v410
    %v991 = vunpack.c.h.b16 %v410
    %v992 = vunpack.c.l.b16 %v411
    %v993 = vunpack.c.h.b16 %v411
    %v994 = vunpack.c.l.b16 %v412
    %v995 = vunpack.c.h.b16 %v412
    %v996 = vunpack.c.l.b16 %v413
    %v997 = vunpack.c.h.b16 %v413
    %v998 = vunpack.c.l.b16 %v414
    %v999 = vunpack.c.h.b16 %v414
    %v1000 = vunpack.c.l.b16 %v415
    %v1001 = vunpack.c.h.b16 %v415
    %v1002 = vunpack.c.l.b16 %v416
    %v1003 = vunpack.c.h.b16 %v416
    %v1004 = vunpack.c.l.b16 %v417
    %v1005 = vunpack.c.h.b16 %v417
    %v1006 = vunpack.c.l.b16 %v418
    %v1007 = vunpack.c.h.b16 %v418
    %v1008 = vunpack.c.l.b16 %v419
    %v1009 = vunpack.c.h.b16 %v419
    %v1010 = vunpack.c.l.b16 %v420
    %v1011 = vunpack.c.h.b16 %v420
    %v1012 = vunpack.c.l.b16 %v421
    %v1013 = vunpack.c.h.b16 %v421
    %v1014 = vunpack.c.l.b16 %v422
    %v1015 = vunpack.c.h.b16 %v422
    %v1016 = vunpack.c.l.b16 %v423
    %v1017 = vunpack.c.h.b16 %v423
    %v1018 = vunpack.c.l.b16 %v424
    %v1019 = vunpack.c.h.b16 %v424
    %v1020 = vunpack.c.l.b16 %v425
    %v1021 = vunpack.c.h.b16 %v425
    %v1022 = vunpack.c.l.b16 %v426
    %v1023 = vunpack.c.h.b16 %v426
    %v1024 = vunpack.c.l.b16 %v427
    %v1025 = vunpack.c.h.b16 %v427
    %v1026 = vunpack.c.l.b16 %v428
    %v1027 = vunpack.c.h.b16 %v428
    %v1028 = vunpack.c.l.b16 %v429
    %v1029 = vunpack.c.h.b16 %v429
    %v1030 = vunpack.c.l.b16 %v430
    %v1031 = vunpack.c.h.b16 %v430
    %v1032 = vunpack.c.l.b16 %v431
    %v1033 = vunpack.c.h.b16 %v431
    %v1034 = vunpack.c.l.b16 %v432
    %v1035 = vunpack.c.h.b16 %v432
    %v1036 = vunpack.c.l.b16 %v433
    %v1037 = vunpack.c.h.b16 %v433
    %v1038 = vunpack.c.l.b16 %v434
    %v1039 = vunpack.c.h.b16 %v434
    %v1040 = vunpack.c.l.b16 %v435
    %v1041 = vunpack.c.h.b16 %v435
    %v1042 = vunpack.c.l.b16 %v436
    %v1043 = vunpack.c.h.b16 %v436
    %v1044 = vunpack.c.l.b16 %v437
    %v1045 = vunpack.c.h.b16 %v437
    %v1046 = vunpack.c.l.b16 %v438
    %v1047 = vunpack.c.h.b16 %v438
    %v1048 = vunpack.c.l.b16 %v439
    %v1049 = vunpack.c.h.b16 %v439
    %v1050 = vunpack.c.l.b16 %v440
    %v1051 = vunpack.c.h.b16 %v440
    %v1052 = vunpack.c.l.b16 %v441
    %v1053 = vunpack.c.h.b16 %v441
    %v1054 = vunpack.c.l.b16 %v442
    %v1055 = vunpack.c.h.b16 %v442
    %v1056 = vunpack.c.l.b16 %v443
    %v1057 = vunpack.c.h.b16 %v443
    %v1058 = vunpack.c.l.b16 %v444
    %v1059 = vunpack.c.h.b16 %v444
    %v1060 = vunpack.c.l.b16 %v445
    %v1061 = vunpack.c.h.b16 %v445
    %v1062 = vunpack.c.l.b16 %v446
    %v1063 = vunpack.c.h.b16 %v446
    %v1064 = vunpack.c.l.b16 %v447
    %v1065 = vunpack.c.h.b16 %v447
    %v1066 = vunpack.c.l.b16 %v448
    %v1067 = vunpack.c.h.b16 %v448
    %v1068 = vunpack.c.l.b16 %v449
    %v1069 = vunpack.c.h.b16 %v449
    %v1070 = vunpack.c.l.b16 %v450
    %v1071 = vunpack.c.h.b16 %v450
    %v1072 = vunpack.c.l.b16 %v451
    %v1073 = vunpack.c.h.b16 %v451
    %v1074 = vunpack.c.l.b16 %v452
    %v1075 = vunpack.c.h.b16 %v452
    %v1076 = vunpack.c.l.b16 %v453
    %v1077 = vunpack.c.h.b16 %v453
    %v1078 = vunpack.c.l.b16 %v454
    %v1079 = vunpack.c.h.b16 %v454
    %v1080 = vunpack.c.l.b16 %v455
    %v1081 = vunpack.c.h.b16 %v455
    %v1082 = vunpack.c.l.b16 %v456
    %v1083 = vunpack.c.h.b16 %v456
    %v1084 = vunpack.c.l.b16 %v457
    %v1085 = vunpack.c.h.b16 %v457
    %v1086 = vunpack.c.l.b16 %v458
    %v1087 = vunpack.c.h.b16 %v458
    %v1088 = vunpack.c.l.b16 %v459
    %v1089 = vunpack.c.h.b16 %v459
    %v1090 = vunpack.c.l.b16 %v460
    %v1091 = vunpack.c.h.b16 %v460
    %v1092 = vunpack.c.l.b16 %v461
    %v1093 = vunpack.c.h.b16 %v461
    %v1094 = vunpack.c.l.b16 %v462
    %v1095 = vunpack.c.h.b16 %v462
    %v1096 = vunpack.c.l.b16 %v463
    %v1097 = vunpack.c.h.b16 %v463
    %v1098 = vunpack.c.l.b16 %v464
    %v1099 = vunpack.c.h.b16 %v464
    %v1100 = vunpack.c.l.b16 %v465
    %v1101 = vunpack.c.h.b16 %v465
    %v1102 = vunpack.c.l.b16 %v466
    %v1103 = vunpack.c.h.b16 %v466
    %v1104 = vunpack.c.l.b16 %v467
    %v1105 = vunpack.c.h.b16 %v467
    %v1106 = vunpack.c.l.b16 %v468
    %v1107 = vunpack.c.h.b16 %v468
    %v1108 = vunpack.c.l.b16 %v469
    %v1109 = vunpack.c.h.b16 %v469
    %v1110 = vunpack.c.l.b16 %v470
    %v1111 = vunpack.c.h.b16 %v470
    %v1112 = vunpack.c.l.b16 %v471
    %v1113 = vunpack.c.h.b16 %v471
    %v1114 = vunpack.c.l.b16 %v472
    %v1115 = vunpack.c.h.b16 %v472
    %v1116 = vunpack.c.l.b16 %v473
    %v1117 = vunpack.c.h.b16 %v473
    %v1118 = vunpack.c.l.b16 %v474
    %v1119 = vunpack.c.h.b16 %v474
    %v1120 = vunpack.c.l.b16 %v475
    %v1121 = vunpack.c.h.b16 %v475
    %v1122 = vunpack.c.l.b16 %v476
    %v1123 = vunpack.c.h.b16 %v476
    %v1124 = vunpack.c.l.b16 %v477
    %v1125 = vunpack.c.h.b16 %v477
    %v1126 = vunpack.c.l.b16 %v478
    %v1127 = vunpack.c.h.b16 %v478
    %v1128 = vunpack.c.l.b16 %v479
    %v1129 = vunpack.c.h.b16 %v479
    %v1130 = vunpack.c.l.b16 %v480
    %v1131 = vunpack.c.h.b16 %v480
    %v1132 = vunpack.c.l.b16 %v481
    %v1133 = vunpack.c.h.b16 %v481
    %v1134 = vunpack.c.l.b16 %v482
    %v1135 = vunpack.c.h.b16 %v482
    %v1136 = vunpack.c.l.b16 %v483
    %v1137 = vunpack.c.h.b16 %v483
    %v1138 = vunpack.c.l.b16 %v484
    %v1139 = vunpack.c.h.b16 %v484
    %v1140 = vunpack.c.l.b16 %v485
    %v1141 = vunpack.c.h.b16 %v485
    %v1142 = vunpack.c.l.b16 %v486
    %v1143 = vunpack.c.h.b16 %v486
    %v1144 = vunpack.c.l.b16 %v487
    %v1145 = vunpack.c.h.b16 %v487
    %v1146 = vunpack.c.l.b16 %v488
    %v1147 = vunpack.c.h.b16 %v488
    %v1148 = vunpack.c.l.b16 %v489
    %v1149 = vunpack.c.h.b16 %v489
    %v1150 = vunpack.c.l.b16 %v490
    %v1151 = vunpack.c.h.b16 %v490
    %v1152 = vunpack.c.l.b16 %v491
    %v1153 = vunpack.c.h.b16 %v491
    %v1154 = vunpack.c.l.b16 %v492
    %v1155 = vunpack.c.h.b16 %v492
    %v1156 = vunpack.c.l.b16 %v493
    %v1157 = vunpack.c.h.b16 %v493
    %v1158 = vunpack.c.l.b16 %v494
    %v1159 = vunpack.c.h.b16 %v494
    %v1160 = vunpack.c.l.b16 %v495
    %v1161 = vunpack.c.h.b16 %v495
    %v1162 = vunpack.c.l.b16 %v496
    %v1163 = vunpack.c.h.b16 %v496
    %v1164 = vunpack.c.l.b16 %v497
    %v1165 = vunpack.c.h.b16 %v497
    %v1166 = vunpack.c.l.b16 %v498
    %v1167 = vunpack.c.h.b16 %v498
    %v1168 = vunpack.c.l.b16 %v499
    %v1169 = vunpack.c.h.b16 %v499
    %v1170 = vunpack.c.l.b16 %v500
    %v1171 = vunpack.c.h.b16 %v500
    %v1172 = vunpack.c.l.b16 %v501
    %v1173 = vunpack.c.h.b16 %v501
    %v1174 = vunpack.c.l.b16 %v502
    %v1175 = vunpack.c.h.b16 %v502
    %v1176 = vunpack.c.l.b16 %v503
    %v1177 = vunpack.c.h.b16 %v503
    %v1178 = vunpack.c.l.b16 %v504
    %v1179 = vunpack.c.h.b16 %v504
    %v1180 = vunpack.c.l.b16 %v505
    %v1181 = vunpack.c.h.b16 %v505
    %v1182 = vunpack.c.l.b16 %v506
    %v1183 = vunpack.c.h.b16 %v506
    %v1184 = vunpack.c.l.b16 %v507
    %v1185 = vunpack.c.h.b16 %v507
    %v1186 = vunpack.c.l.b16 %v508
    %v1187 = vunpack.c.h.b16 %v508
    %v1188 = vunpack.c.l.b16 %v509
    %v1189 = vunpack.c.h.b16 %v509
    %v1190 = vunpack.c.l.b16 %v510
    %v1191 = vunpack.c.h.b16 %v510
    %v1192 = vunpack.c.l.b16 %v511
    %v1193 = vunpack.c.h.b16 %v511
    %v1194 = vunpack.c.l.b16 %v512
    %v1195 = vunpack.c.h.b16 %v512
    %v1196 = vunpack.c.l.b16 %v513
    %v1197 = vunpack.c.h.b16 %v513
    %v1198 = vunpack.c.l.b16 %v514
    %v1199 = vunpack.c.h.b16 %v514
    %v1200 = vunpack.c.l.b16 %v515
    %v1201 = vunpack.c.h.b16 %v515
    %v1202 = vunpack.c.l.b16 %v516
    %v1203 = vunpack.c.h.b16 %v516
    %v1204 = vunpack.c.l.b16 %v517
    %v1205 = vunpack.c.h.b16 %v517
    %v1206 = vunpack.c.l.b16 %v518
    %v1207 = vunpack.c.h.b16 %v518
    %v1208 = vunpack.c.l.b16 %v519
    %v1209 = vunpack.c.h.b16 %v519
    %v1210 = vunpack.c.l.b16 %v520
    %v1211 = vunpack.c.h.b16 %v520
    %v1212 = vunpack.c.l.b16 %v521
    %v1213 = vunpack.c.h.b16 %v521
    %v1214 = vunpack.c.l.b16 %v522
    %v1215 = vunpack.c.h.b16 %v522
    %v1216 = vunpack.c.l.b16 %v523
    %v1217 = vunpack.c.h.b16 %v523
    %v1218 = vunpack.c.l.b16 %v524
    %v1219 = vunpack.c.h.b16 %v524
    %v1220 = vunpack.c.l.b16 %v525
    %v1221 = vunpack.c.h.b16 %v525
    %v1222 = vunpack.c.l.b16 %v526
    %v1223 = vunpack.c.h.b16 %v526
    %v1224 = vunpack.c.l.b16 %v527
    %v1225 = vunpack.c.h.b16 %v527
    %v1226 = vunpack.c.l.b16 %v528
    %v1227 = vunpack.c.h.b16 %v528
    %v1228 = vunpack.c.l.b16 %v529
    %v1229 = vunpack.c.h.b16 %v529
    %v1230 = vunpack.c.l.b16 %v530
    %v1231 = vunpack.c.h.b16 %v530
    %v1232 = vunpack.c.l.b16 %v531
    %v1233 = vunpack.c.h.b16 %v531
    %v1234 = vunpack.c.l.b16 %v532
    %v1235 = vunpack.c.h.b16 %v532
    %v1236 = vunpack.c.l.b16 %v533
    %v1237 = vunpack.c.h.b16 %v533
    %v1238 = vunpack.c.l.b16 %v534
    %v1239 = vunpack.c.h.b16 %v534
    %v1240 = vunpack.c.l.b16 %v535
    %v1241 = vunpack.c.h.b16 %v535
    %v1242 = vunpack.c.l.b16 %v536
    %v1243 = vunpack.c.h.b16 %v536
    %v1244 = vunpack.c.l.b16 %v537
    %v1245 = vunpack.c.h.b16 %v537
    %v1246 = vunpack.c.l.b16 %v538
    %v1247 = vunpack.c.h.b16 %v538
    %v1248 = vunpack.c.l.b16 %v539
    %v1249 = vunpack.c.h.b16 %v539
    %v1250 = vunpack.c.l.b16 %v540
    %v1251 = vunpack.c.h.b16 %v540
    %v1252 = vunpack.c.l.b16 %v541
    %v1253 = vunpack.c.h.b16 %v541
    %v1254 = vunpack.c.l.b16 %v542
    %v1255 = vunpack.c.h.b16 %v542
    %v1256 = vunpack.c.l.b16 %v543
    %v1257 = vunpack.c.h.b16 %v543
    %v1258 = vunpack.c.l.b16 %v544
    %v1259 = vunpack.c.h.b16 %v544
    %v1260 = vunpack.c.l.b16 %v545
    %v1261 = vunpack.c.h.b16 %v545
    %v1262 = vunpack.c.l.b16 %v546
    %v1263 = vunpack.c.h.b16 %v546
    %v1264 = vunpack.c.l.b16 %v547
    %v1265 = vunpack.c.h.b16 %v547
    %v1266 = vunpack.c.l.b16 %v548
    %v1267 = vunpack.c.h.b16 %v548
    %v1268 = vunpack.c.l.b16 %v549
    %v1269 = vunpack.c.h.b16 %v549
    %v1270 = vunpack.c.l.b16 %v550
    %v1271 = vunpack.c.h.b16 %v550
    %v1272 = vunpack.c.l.b16 %v551
    %v1273 = vunpack.c.h.b16 %v551
    %v1274 = vunpack.c.l.b16 %v552
    %v1275 = vunpack.c.h.b16 %v552
    %v1276 = vunpack.c.l.b16 %v553
    %v1277 = vunpack.c.h.b16 %v553
    %v1278 = vunpack.c.l.b16 %v554
    %v1279 = vunpack.c.h.b16 %v554
    %v1280 = vunpack.c.l.b16 %v555
    %v1281 = vunpack.c.h.b16 %v555
    %v1282 = vunpack.c.l.b16 %v556
    %v1283 = vunpack.c.h.b16 %v556
    %v1284 = vunpack.c.l.b16 %v557
    %v1285 = vunpack.c.h.b16 %v557
    %v1286 = vunpack.c.l.b16 %v558
    %v1287 = vunpack.c.h.b16 %v558
    %v1288 = vunpack.c.l.b16 %v559
    %v1289 = vunpack.c.h.b16 %v559
    %v1290 = vunpack.c.l.b16 %v560
    %v1291 = vunpack.c.h.b16 %v560
    %v1292 = vunpack.c.l.b16 %v561
    %v1293 = vunpack.c.h.b16 %v561
    %v1294 = vunpack.c.l.b16 %v562
    %v1295 = vunpack.c.h.b16 %v562
    %v1296 = vunpack.c.l.b16 %v563
    %v1297 = vunpack.c.h.b16 %v563
    %v1298 = vunpack.c.l.b16 %v564
    %v1299 = vunpack.c.h.b16 %v564
    %v1300 = vunpack.c.l.b16 %v565
    %v1301 = vunpack.c.h.b16 %v565
    %v1302 = vunpack.c.l.b16 %v566
    %v1303 = vunpack.c.h.b16 %v566
    %v1304 = vunpack.c.l.b16 %v567
    %v1305 = vunpack.c.h.b16 %v567
    %v1306 = vunpack.c.l.b16 %v568
    %v1307 = vunpack.c.h.b16 %v568
    %v1308 = vunpack.c.l.b16 %v569
    %v1309 = vunpack.c.h.b16 %v569
    %v1310 = vunpack.c.l.b16 %v570
    %v1311 = vunpack.c.h.b16 %v570
    %v1312 = vunpack.c.l.b16 %v571
    %v1313 = vunpack.c.h.b16 %v571
    %v1314 = vunpack.c.l.b16 %v572
    %v1315 = vunpack.c.h.b16 %v572
    %v1316 = vunpack.c.l.b16 %v573
    %v1317 = vunpack.c.h.b16 %v573
    %v1318 = vunpack.c.l.b16 %v574
    %v1319 = vunpack.c.h.b16 %v574
    %v1320 = vunpack.c.l.b16 %v575
    %v1321 = vunpack.c.h.b16 %v575
    %v1322 = vunpack.c.l.b16 %v576
    %v1323 = vunpack.c.h.b16 %v576
    %v1324 = vunpack.c.l.b16 %v577
    %v1325 = vunpack.c.h.b16 %v577
    %v1326 = vunpack.c.l.b16 %v578
    %v1327 = vunpack.c.h.b16 %v578
    %v1328 = vunpack.c.l.b16 %v579
    %v1329 = vunpack.c.h.b16 %v579
    %v1330 = vunpack.c.l.b16 %v580
    %v1331 = vunpack.c.h.b16 %v580
    %v1332 = vunpack.c.l.b16 %v581
    %v1333 = vunpack.c.h.b16 %v581
    %v1334 = vunpack.c.l.b16 %v582
    %v1335 = vunpack.c.h.b16 %v582
    %v1336 = vunpack.c.l.b16 %v583
    %v1337 = vunpack.c.h.b16 %v583
    %v1338 = vunpack.c.l.b16 %v584
    %v1339 = vunpack.c.h.b16 %v584
    %v1340 = vunpack.c.l.b16 %v585
    %v1341 = vunpack.c.h.b16 %v585
    %v1342 = vunpack.c.l.b16 %v586
    %v1343 = vunpack.c.h.b16 %v586
    %v1344 = vunpack.c.l.b16 %v587
    %v1345 = vunpack.c.h.b16 %v587
    %v1346 = vunpack.c.l.b16 %v588
    %v1347 = vunpack.c.h.b16 %v588
    %v1348 = vunpack.c.l.b16 %v589
    %v1349 = vunpack.c.h.b16 %v589
    %v1350 = vunpack.c.l.b16 %v590
    %v1351 = vunpack.c.h.b16 %v590
    %v1352 = vunpack.c.l.b16 %v591
    %v1353 = vunpack.c.h.b16 %v591
    %v1354 = vunpack.c.l.b16 %v592
    %v1355 = vunpack.c.h.b16 %v592
    %v1356 = vunpack.c.l.b16 %v593
    %v1357 = vunpack.c.h.b16 %v593
    %v1358 = vunpack.c.l.b16 %v594
    %v1359 = vunpack.c.h.b16 %v594
    %v1360 = vunpack.c.l.b16 %v595
    %v1361 = vunpack.c.h.b16 %v595
    %v1362 = vunpack.c.l.b16 %v596
    %v1363 = vunpack.c.h.b16 %v596
    %v1364 = vunpack.c.l.b16 %v597
    %v1365 = vunpack.c.h.b16 %v597
    %v1366 = vunpack.c.l.b16 %v598
    %v1367 = vunpack.c.h.b16 %v598
    %v1368 = vunpack.c.l.b16 %v599
    %v1369 = vunpack.c.h.b16 %v599
    %v1370 = vunpack.c.l.b16 %v600
    %v1371 = vunpack.c.h.b16 %v600
    %v1372 = vunpack.c.l.b16 %v601
    %v1373 = vunpack.c.h.b16 %v601
    %v1374 = vunpack.c.l.b16 %v602
    %v1375 = vunpack.c.h.b16 %v602
    %v1376 = vunpack.c.l.b16 %v603
    %v1377 = vunpack.c.h.b16 %v603
    %v1378 = vunpack.c.l.b16 %v604
    %v1379 = vunpack.c.h.b16 %v604
    %v1380 = vunpack.c.l.b16 %v605
    %v1381 = vunpack.c.h.b16 %v605
    %v1382 = vunpack.c.l.b16 %v606
    %v1383 = vunpack.c.h.b16 %v606
    %v1384 = vunpack.c.l.b16 %v607
    %v1385 = vunpack.c.h.b16 %v607
    %v1386 = vunpack.c.l.b16 %v608
    %v1387 = vunpack.c.h.b16 %v608
    %v1388 = vunpack.c.l.b16 %v609
    %v1389 = vunpack.c.h.b16 %v609
    %v1390 = vunpack.c.l.b16 %v610
    %v1391 = vunpack.c.h.b16 %v610
    %v1392 = vunpack.c.l.b16 %v611
    %v1393 = vunpack.c.h.b16 %v611
    %v1394 = vunpack.c.l.b16 %v612
    %v1395 = vunpack.c.h.b16 %v612
    %v1396 = vunpack.c.l.b16 %v613
    %v1397 = vunpack.c.h.b16 %v613
    %v1398 = vunpack.c.l.b16 %v614
    %v1399 = vunpack.c.h.b16 %v614
    %v1400 = vunpack.c.l.b16 %v615
    %v1401 = vunpack.c.h.b16 %v615
    %v1402 = vunpack.c.l.b16 %v616
    %v1403 = vunpack.c.h.b16 %v616
    %v1404 = vunpack.c.l.b16 %v617
    %v1405 = vunpack.c.h.b16 %v617
    %v1406 = vunpack.c.l.b16 %v618
    %v1407 = vunpack.c.h.b16 %v618
    %v1408 = vunpack.c.l.b16 %v619
    %v1409 = vunpack.c.h.b16 %v619
    %v1410 = vpack.c.b16 %v902, %v898
    %v1411 = vpack.c.b16 %v903, %v899
    %v1412 = vpack.c.b16 %v904, %v900
    %v1413 = vpack.c.b16 %v905, %v901
    %v1414 = vpack.c.b16 %v910, %v906
    %v1415 = vpack.c.b16 %v911, %v907
    %v1416 = vpack.c.b16 %v912, %v908
    %v1417 = vpack.c.b16 %v913, %v909
    %v1418 = vpack.c.b16 %v918, %v914
    %v1419 = vpack.c.b16 %v919, %v915
    %v1420 = vpack.c.b16 %v920, %v916
    %v1421 = vpack.c.b16 %v921, %v917
    %v1422 = vpack.c.b16 %v926, %v922
    %v1423 = vpack.c.b16 %v927, %v923
    %v1424 = vpack.c.b16 %v928, %v924
    %v1425 = vpack.c.b16 %v929, %v925
    %v1426 = vpack.c.b16 %v934, %v930
    %v1427 = vpack.c.b16 %v935, %v931
    %v1428 = vpack.c.b16 %v936, %v932
    %v1429 = vpack.c.b16 %v937, %v933
    %v1430 = vpack.c.b16 %v942, %v938
    %v1431 = vpack.c.b16 %v943, %v939
    %v1432 = vpack.c.b16 %v944, %v940
    %v1433 = vpack.c.b16 %v945, %v941
    %v1434 = vpack.c.b16 %v950, %v946
    %v1435 = vpack.c.b16 %v951, %v947
    %v1436 = vpack.c.b16 %v952, %v948
    %v1437 = vpack.c.b16 %v953, %v949
    %v1438 = vpack.c.b16 %v958, %v954
    %v1439 = vpack.c.b16 %v959, %v955
    %v1440 = vpack.c.b16 %v960, %v956
    %v1441 = vpack.c.b16 %v961, %v957
    %v1442 = vpack.c.b16 %v966, %v962
    %v1443 = vpack.c.b16 %v967, %v963
    %v1444 = vpack.c.b16 %v968, %v964
    %v1445 = vpack.c.b16 %v969, %v965
    %v1446 = vpack.c.b16 %v974, %v970
    %v1447 = vpack.c.b16 %v975, %v971
    %v1448 = vpack.c.b16 %v976, %v972
    %v1449 = vpack.c.b16 %v977, %v973
    %v1450 = vpack.c.b16 %v982, %v978
    %v1451 = vpack.c.b16 %v983, %v979
    %v1452 = vpack.c.b16 %v984, %v980
    %v1453 = vpack.c.b16 %v985, %v981
    %v1454 = vpack.c.b16 %v990, %v986
    %v1455 = vpack.c.b16 %v991, %v987
    %v1456 = vpack.c.b16 %v992, %v988
    %v1457 = vpack.c.b16 %v993, %v989
    %v1458 = vpack.c.b16 %v998, %v994
    %v1459 = vpack.c.b16 %v999, %v995
    %v1460 = vpack.c.b16 %v1000, %v996
    %v1461 = vpack.c.b16 %v1001, %v997
    %v1462 = vpack.c.b16 %v1006, %v1002
    %v1463 = vpack.c.b16 %v1007, %v1003
    %v1464 = vpack.c.b16 %v1008, %v1004
    %v1465 = vpack.c.b16 %v1009, %v1005
    %v1466 = vpack.c.b16 %v1014, %v1010
    %v1467 = vpack.c.b16 %v1015, %v1011
    %v1468 = vpack.c.b16 %v1016, %v1012
    %v1469 = vpack.c.b16 %v1017, %v1013
    %v1470 = vpack.c.b16 %v1022, %v1018
    %v1471 = vpack.c.b16 %v1023, %v1019
    %v1472 = vpack.c.b16 %v1024, %v1020
    %v1473 = vpack.c.b16 %v1025, %v1021
    %v1474 = vpack.c.b16 %v1030, %v1026
    %v1475 = vpack.c.b16 %v1031, %v1027
    %v1476 = vpack.c.b16 %v1032, %v1028
    %v1477 = vpack.c.b16 %v1033, %v1029
    %v1478 = vpack.c.b16 %v1038, %v1034
    %v1479 = vpack.c.b16 %v1039, %v1035
    %v1480 = vpack.c.b16 %v1040, %v1036
    %v1481 = vpack.c.b16 %v1041, %v1037
    %v1482 = vpack.c.b16 %v1046, %v1042
    %v1483 = vpack.c.b16 %v1047, %v1043
    %v1484 = vpack.c.b16 %v1048, %v1044
    %v1485 = vpack.c.b16 %v1049, %v1045
    %v1486 = vpack.c.b16 %v1054, %v1050
    %v1487 = vpack.c.b16 %v1055, %v1051
    %v1488 = vpack.c.b16 %v1056, %v1052
    %v1489 = vpack.c.b16 %v1057, %v1053
    %v1490 = vpack.c.b16 %v1062, %v1058
    %v1491 = vpack.c.b16 %v1063, %v1059
    %v1492 = vpack.c.b16 %v1064, %v1060
    %v1493 = vpack.c.b16 %v1065, %v1061
    %v1494 = vpack.c.b16 %v1070, %v1066
    %v1495 = vpack.c.b16 %v1071, %v1067
    %v1496 = vpack.c.b16 %v1072, %v1068
    %v1497 = vpack.c.b16 %v1073, %v1069
    %v1498 = vpack.c.b16 %v1078, %v1074
    %v1499 = vpack.c.b16 %v1079, %v1075
    %v1500 = vpack.c.b16 %v1080, %v1076
    %v1501 = vpack.c.b16 %v1081, %v1077
    %v1502 = vpack.c.b16 %v1086, %v1082
    %v1503 = vpack.c.b16 %v1087, %v1083
    %v1504 = vpack.c.b16 %v1088, %v1084
    %v1505 = vpack.c.b16 %v1089, %v1085
    %v1506 = vpack.c.b16 %v1094, %v1090
    %v1507 = vpack.c.b16 %v1095, %v1091
    %v1508 = vpack.c.b16 %v1096, %v1092
    %v1509 = vpack.c.b16 %v1097, %v1093
    %v1510 = vpack.c.b16 %v1102, %v1098
    %v1511 = vpack.c.b16 %v1103, %v1099
    %v1512 = vpack.c.b16 %v1104, %v1100
    %v1513 = vpack.c.b16 %v1105, %v1101
    %v1514 = vpack.c.b16 %v1110, %v1106
    %v1515 = vpack.c.b16 %v1111, %v1107
    %v1516 = vpack.c.b16 %v1112, %v1108
    %v1517 = vpack.c.b16 %v1113, %v1109
    %v1518 = vpack.c.b16 %v1118, %v1114
    %v1519 = vpack.c.b16 %v1119, %v1115
    %v1520 = vpack.c.b16 %v1120, %v1116
    %v1521 = vpack.c.b16 %v1121, %v1117
    %v1522 = vpack.c.b16 %v1126, %v1122
    %v1523 = vpack.c.b16 %v1127, %v1123
    %v1524 = vpack.c.b16 %v1128, %v1124
    %v1525 = vpack.c.b16 %v1129, %v1125
    %v1526 = vpack.c.b16 %v1134, %v1130
    %v1527 = vpack.c.b16 %v1135, %v1131
    %v1528 = vpack.c.b16 %v1136, %v1132
    %v1529 = vpack.c.b16 %v1137, %v1133
    %v1530 = vpack.c.b16 %v1142, %v1138
    %v1531 = vpack.c.b16 %v1143, %v1139
    %v1532 = vpack.c.b16 %v1144, %v1140
    %v1533 = vpack.c.b16 %v1145, %v1141
    %v1534 = vpack.c.b16 %v1150, %v1146
    %v1535 = vpack.c.b16 %v1151, %v1147
    %v1536 = vpack.c.b16 %v1152, %v1148
    %v1537 = vpack.c.b16 %v1153, %v1149
    %v1538 = vpack.c.b16 %v1158, %v1154
    %v1539 = vpack.c.b16 %v1159, %v1155
    %v1540 = vpack.c.b16 %v1160, %v1156
    %v1541 = vpack.c.b16 %v1161, %v1157
    %v1542 = vpack.c.b16 %v1166, %v1162
    %v1543 = vpack.c.b16 %v1167, %v1163
    %v1544 = vpack.c.b16 %v1168, %v1164
    %v1545 = vpack.c.b16 %v1169, %v1165
    %v1546 = vpack.c.b16 %v1174, %v1170
    %v1547 = vpack.c.b16 %v1175, %v1171
    %v1548 = vpack.c.b16 %v1176, %v1172
    %v1549 = vpack.c.b16 %v1177, %v1173
    %v1550 = vpack.c.b16 %v1182, %v1178
    %v1551 = vpack.c.b16 %v1183, %v1179
    %v1552 = vpack.c.b16 %v1184, %v1180
    %v1553 = vpack.c.b16 %v1185, %v1181
    %v1554 = vpack.c.b16 %v1190, %v1186
    %v1555 = vpack.c.b16 %v1191, %v1187
    %v1556 = vpack.c.b16 %v1192, %v1188
    %v1557 = vpack.c.b16 %v1193, %v1189
    %v1558 = vpack.c.b16 %v1198, %v1194
    %v1559 = vpack.c.b16 %v1199, %v1195
    %v1560 = vpack.c.b16 %v1200, %v1196
    %v1561 = vpack.c.b16 %v1201, %v1197
    %v1562 = vpack.c.b16 %v1206, %v1202
    %v1563 = vpack.c.b16 %v1207, %v1203
    %v1564 = vpack.c.b16 %v1208, %v1204
    %v1565 = vpack.c.b16 %v1209, %v1205
    %v1566 = vpack.c.b16 %v1214, %v1210
    %v1567 = vpack.c.b16 %v1215, %v1211
    %v1568 = vpack.c.b16 %v1216, %v1212
    %v1569 = vpack.c.b16 %v1217, %v1213
    %v1570 = vpack.c.b16 %v1222, %v1218
    %v1571 = vpack.c.b16 %v1223, %v1219
    %v1572 = vpack.c.b16 %v1224, %v1220
    %v1573 = vpack.c.b16 %v1225, %v1221
    %v1574 = vpack.c.b16 %v1230, %v1226
    %v1575 = vpack.c.b16 %v1231, %v1227
    %v1576 = vpack.c.b16 %v1232, %v1228
    %v1577 = vpack.c.b16 %v1233, %v1229
    %v1578 = vpack.c.b16 %v1238, %v1234
    %v1579 = vpack.c.b16 %v1239, %v1235
    %v1580 = vpack.c.b16 %v1240, %v1236
    %v1581 = vpack.c.b16 %v1241, %v1237
    %v1582 = vpack.c.b16 %v1246, %v1242
    %v1583 = vpack.c.b16 %v1247, %v1243
    %v1584 = vpack.c.b16 %v1248, %v1244
    %v1585 = vpack.c.b16 %v1249, %v1245
    %v1586 = vpack.c.b16 %v1254, %v1250
    %v1587 = vpack.c.b16 %v1255, %v1251
    %v1588 = vpack.c.b16 %v1256, %v1252
    %v1589 = vpack.c.b16 %v1257, %v1253
    %v1590 = vpack.c.b16 %v1262, %v1258
    %v1591 = vpack.c.b16 %v1263, %v1259
    %v1592 = vpack.c.b16 %v1264, %v1260
    %v1593 = vpack.c.b16 %v1265, %v1261
    %v1594 = vpack.c.b16 %v1270, %v1266
    %v1595 = vpack.c.b16 %v1271, %v1267
    %v1596 = vpack.c.b16 %v1272, %v1268
    %v1597 = vpack.c.b16 %v1273, %v1269
    %v1598 = vpack.c.b16 %v1278, %v1274
    %v1599 = vpack.c.b16 %v1279, %v1275
    %v1600 = vpack.c.b16 %v1280, %v1276
    %v1601 = vpack.c.b16 %v1281, %v1277
    %v1602 = vpack.c.b16 %v1286, %v1282
    %v1603 = vpack.c.b16 %v1287, %v1283
    %v1604 = vpack.c.b16 %v1288, %v1284
    %v1605 = vpack.c.b16 %v1289, %v1285
    %v1606 = vpack.c.b16 %v1294, %v1290
    %v1607 = vpack.c.b16 %v1295, %v1291
    %v1608 = vpack.c.b16 %v1296, %v1292
    %v1609 = vpack.c.b16 %v1297, %v1293
    %v1610 = vpack.c.b16 %v1302, %v1298
    %v1611 = vpack.c.b16 %v1303, %v1299
    %v1612 = vpack.c.b16 %v1304, %v1300
    %v1613 = vpack.c.b16 %v1305, %v1301
    %v1614 = vpack.c.b16 %v1310, %v1306
    %v1615 = vpack.c.b16 %v1311, %v1307
    %v1616 = vpack.c.b16 %v1312, %v1308
    %v1617 = vpack.c.b16 %v1313, %v1309
    %v1618 = vpack.c.b16 %v1318, %v1314
    %v1619 = vpack.c.b16 %v1319, %v1315
    %v1620 = vpack.c.b16 %v1320, %v1316
    %v1621 = vpack.c.b16 %v1321, %v1317
    %v1622 = vpack.c.b16 %v1326, %v1322
    %v1623 = vpack.c.b16 %v1327, %v1323
    %v1624 = vpack.c.b16 %v1328, %v1324
    %v1625 = vpack.c.b16 %v1329, %v1325
    %v1626 = vpack.c.b16 %v1334, %v1330
    %v1627 = vpack.c.b16 %v1335, %v1331
    %v1628 = vpack.c.b16 %v1336, %v1332
    %v1629 = vpack.c.b16 %v1337, %v1333
    %v1630 = vpack.c.b16 %v1342, %v1338
    %v1631 = vpack.c.b16 %v1343, %v1339
    %v1632 = vpack.c.b16 %v1344, %v1340
    %v1633 = vpack.c.b16 %v1345, %v1341
    %v1634 = vpack.c.b16 %v1350, %v1346
    %v1635 = vpack.c.b16 %v1351, %v1347
    %v1636 = vpack.c.b16 %v1352, %v1348
    %v1637 = vpack.c.b16 %v1353, %v1349
    %v1638 = vpack.c.b16 %v1358, %v1354
    %v1639 = vpack.c.b16 %v1359, %v1355
    %v1640 = vpack.c.b16 %v1360, %v1356
    %v1641 = vpack.c.b16 %v1361, %v1357
    %v1642 = vpack.c.b16 %v1366, %v1362
    %v1643 = vpack.c.b16 %v1367, %v1363
    %v1644 = vpack.c.b16 %v1368, %v1364
    %v1645 = vpack.c.b16 %v1369, %v1365
    %v1646 = vpack.c.b16 %v1374, %v1370
    %v1647 = vpack.c.b16 %v1375, %v1371
    %v1648 = vpack.c.b16 %v1376, %v1372
    %v1649 = vpack.c.b16 %v1377, %v1373
    %v1650 = vpack.c.b16 %v1382, %v1378
    %v1651 = vpack.c.b16 %v1383, %v1379
    %v1652 = vpack.c.b16 %v1384, %v1380
    %v1653 = vpack.c.b16 %v1385, %v1381
    %v1654 = vpack.c.b16 %v1390, %v1386
    %v1655 = vpack.c.b16 %v1391, %v1387
    %v1656 = vpack.c.b16 %v1392, %v1388
    %v1657 = vpack.c.b16 %v1393, %v1389
    %v1658 = vpack.c.b16 %v1398, %v1394
    %v1659 = vpack.c.b16 %v1399, %v1395
    %v1660 = vpack.c.b16 %v1400, %v1396
    %v1661 = vpack.c.b16 %v1401, %v1397
    %v1662 = vpack.c.b16 %v1406, %v1402
    %v1663 = vpack.c.b16 %v1407, %v1403
    %v1664 = vpack.c.b16 %v1408, %v1404
    %v1665 = vpack.c.b16 %v1409, %v1405
    %1922 = vmatprep.subr.bf16.mxu0 %v1411
    %1923 = vmatpush1.bf16.msra.mxu0 %v1410
    %1924 = vmatprep.subr.bf16.mxu0 %v1415
    %1925 = vmatpush1.bf16.msra.mxu0 %v1414
    %1926 = vmatprep.subr.bf16.mxu0 %v1419
    %1927 = vmatpush1.bf16.msra.mxu0 %v1418
    %1928 = vmatprep.subr.bf16.mxu0 %v1423
    %1929 = vmatpush1.bf16.msra.mxu0 %v1422
    %1930 = vmatprep.subr.bf16.mxu0 %v1427
    %1931 = vmatpush1.bf16.msra.mxu0 %v1426
    %1932 = vmatprep.subr.bf16.mxu0 %v1431
    %1933 = vmatpush1.bf16.msra.mxu0 %v1430
    %1934 = vmatprep.subr.bf16.mxu0 %v1435
    %1935 = vmatpush1.bf16.msra.mxu0 %v1434
    %1936 = vmatprep.subr.bf16.mxu0 %v1439
    %1937 = vmatpush1.bf16.msra.mxu0 %v1438
    %1938 = vmatprep.subr.bf16.mxu0 %v1443
    %1939 = vmatpush1.bf16.msra.mxu0 %v1442
    %1940 = vmatprep.subr.bf16.mxu0 %v1447
    %1941 = vmatpush1.bf16.msra.mxu0 %v1446
    %1942 = vmatprep.subr.bf16.mxu0 %v1451
    %1943 = vmatpush1.bf16.msra.mxu0 %v1450
    %1944 = vmatprep.subr.bf16.mxu0 %v1455
    %1945 = vmatpush1.bf16.msra.mxu0 %v1454
    %1946 = vmatprep.subr.bf16.mxu0 %v1459
    %1947 = vmatpush1.bf16.msra.mxu0 %v1458
    %1948 = vmatprep.subr.bf16.mxu0 %v1463
    %1949 = vmatpush1.bf16.msra.mxu0 %v1462
    %1950 = vmatprep.subr.bf16.mxu0 %v1467
    %1951 = vmatpush1.bf16.msra.mxu0 %v1466
    %1952 = vmatprep.subr.bf16.mxu0 %v1471
    %1953 = vmatpush1.bf16.msra.mxu0 %v1470
    %1954 = vmatprep.mubr.bf16.mxu0 %v357
    %1955 = vmatmul.mubr.bf16.gmra.mrb[0].mxu0 %v356
    %v1956 = vpop.f32.mrb[0].mxu0
    %v1957 = vadd.f32 %v625, %v1956
    %v1958 = vpop.f32.mrb[0].mxu0
    %v1959 = vadd.f32 %v629, %v1958
    %v1960 = vpop.f32.mrb[0].mxu0
    %v1961 = vpop.f32.mrb[0].mxu0
    %1962 = vdwg.mxu0
    %1963 = vmatprep.subr.bf16.mxu0 %v1475
    %1964 = vmatpush1.bf16.msra.mxu0 %v1474
    %1965 = vmatprep.subr.bf16.mxu0 %v1479
    %1966 = vmatpush1.bf16.msra.mxu0 %v1478
    %1967 = vmatprep.subr.bf16.mxu0 %v1483
    %1968 = vmatpush1.bf16.msra.mxu0 %v1482
    %1969 = vmatprep.subr.bf16.mxu0 %v1487
    %1970 = vmatpush1.bf16.msra.mxu0 %v1486
    %1971 = vmatprep.subr.bf16.mxu0 %v1491
    %1972 = vmatpush1.bf16.msra.mxu0 %v1490
    %1973 = vmatprep.subr.bf16.mxu0 %v1495
    %1974 = vmatpush1.bf16.msra.mxu0 %v1494
    %1975 = vmatprep.subr.bf16.mxu0 %v1499
    %1976 = vmatpush1.bf16.msra.mxu0 %v1498
    %1977 = vmatprep.subr.bf16.mxu0 %v1503
    %1978 = vmatpush1.bf16.msra.mxu0 %v1502
    %1979 = vmatprep.subr.bf16.mxu0 %v1507
    %1980 = vmatpush1.bf16.msra.mxu0 %v1506
    %1981 = vmatprep.subr.bf16.mxu0 %v1511
    %1982 = vmatpush1.bf16.msra.mxu0 %v1510
    %1983 = vmatprep.subr.bf16.mxu0 %v1515
    %1984 = vmatpush1.bf16.msra.mxu0 %v1514
    %1985 = vmatprep.subr.bf16.mxu0 %v1519
    %1986 = vmatpush1.bf16.msra.mxu0 %v1518
    %1987 = vmatprep.subr.bf16.mxu0 %v1523
    %1988 = vmatpush1.bf16.msra.mxu0 %v1522
    %1989 = vmatprep.subr.bf16.mxu0 %v1527
    %1990 = vmatpush1.bf16.msra.mxu0 %v1526
    %1991 = vmatprep.subr.bf16.mxu0 %v1531
    %1992 = vmatpush1.bf16.msra.mxu0 %v1530
    %1993 = vmatprep.subr.bf16.mxu0 %v1535
    %1994 = vmatpush1.bf16.msra.mxu0 %v1534
    %1995 = vmatprep.mubr.bf16.mxu0 %v359
    %1996 = vmatmul.mubr.bf16.gmra.mrb[0].mxu0 %v358
    %v1997 = vpop.f32.mrb[0].mxu0
    %v1998 = vadd.f32 %v1957, %v1997
    %v1999 = vpop.f32.mrb[0].mxu0
    %v2000 = vadd.f32 %v1959, %v1999
    %v2001 = vpop.f32.mrb[0].mxu0
    %v2002 = vpop.f32.mrb[0].mxu0
    %2003 = vdwg.mxu0
    %2004 = vmatprep.subr.bf16.mxu0 %v1539
    %2005 = vmatpush1.bf16.msra.mxu0 %v1538
    %2006 = vmatprep.subr.bf16.mxu0 %v1543
    %2007 = vmatpush1.bf16.msra.mxu0 %v1542
    %2008 = vmatprep.subr.bf16.mxu0 %v1547
    %2009 = vmatpush1.bf16.msra.mxu0 %v1546
    %2010 = vmatprep.subr.bf16.mxu0 %v1551
    %2011 = vmatpush1.bf16.msra.mxu0 %v1550
    %2012 = vmatprep.subr.bf16.mxu0 %v1555
    %2013 = vmatpush1.bf16.msra.mxu0 %v1554
    %2014 = vmatprep.subr.bf16.mxu0 %v1559
    %2015 = vmatpush1.bf16.msra.mxu0 %v1558
    %2016 = vmatprep.subr.bf16.mxu0 %v1563
    %2017 = vmatpush1.bf16.msra.mxu0 %v1562
    %2018 = vmatprep.subr.bf16.mxu0 %v1567
    %2019 = vmatpush1.bf16.msra.mxu0 %v1566
    %2020 = vmatprep.subr.bf16.mxu0 %v1571
    %2021 = vmatpush1.bf16.msra.mxu0 %v1570
    %2022 = vmatprep.subr.bf16.mxu0 %v1575
    %2023 = vmatpush1.bf16.msra.mxu0 %v1574
    %2024 = vmatprep.subr.bf16.mxu0 %v1579
    %2025 = vmatpush1.bf16.msra.mxu0 %v1578
    %2026 = vmatprep.subr.bf16.mxu0 %v1583
    %2027 = vmatpush1.bf16.msra.mxu0 %v1582
    %2028 = vmatprep.subr.bf16.mxu0 %v1587
    %2029 = vmatpush1.bf16.msra.mxu0 %v1586
    %2030 = vmatprep.subr.bf16.mxu0 %v1591
    %2031 = vmatpush1.bf16.msra.mxu0 %v1590
    %2032 = vmatprep.subr.bf16.mxu0 %v1595
    %2033 = vmatpush1.bf16.msra.mxu0 %v1594
    %2034 = vmatprep.subr.bf16.mxu0 %v1599
    %2035 = vmatpush1.bf16.msra.mxu0 %v1598
    %2036 = vmatprep.mubr.bf16.mxu0 %v361
    %2037 = vmatmul.mubr.bf16.gmra.mrb[0].mxu0 %v360
    %v2038 = vpop.f32.mrb[0].mxu0
    %v2039 = vadd.f32 %v1998, %v2038
    %v2040 = vpop.f32.mrb[0].mxu0
    %v2041 = vadd.f32 %v2000, %v2040
    %v2042 = vpop.f32.mrb[0].mxu0
    %v2043 = vpop.f32.mrb[0].mxu0
    %2044 = vdwg.mxu0
    %2045 = vmatprep.subr.bf16.mxu0 %v1603
    %2046 = vmatpush1.bf16.msra.mxu0 %v1602
    %2047 = vmatprep.subr.bf16.mxu0 %v1607
    %2048 = vmatpush1.bf16.msra.mxu0 %v1606
    %2049 = vmatprep.subr.bf16.mxu0 %v1611
    %2050 = vmatpush1.bf16.msra.mxu0 %v1610
    %2051 = vmatprep.subr.bf16.mxu0 %v1615
    %2052 = vmatpush1.bf16.msra.mxu0 %v1614
    %2053 = vmatprep.subr.bf16.mxu0 %v1619
    %2054 = vmatpush1.bf16.msra.mxu0 %v1618
    %2055 = vmatprep.subr.bf16.mxu0 %v1623
    %2056 = vmatpush1.bf16.msra.mxu0 %v1622
    %2057 = vmatprep.subr.bf16.mxu0 %v1627
    %2058 = vmatpush1.bf16.msra.mxu0 %v1626
    %2059 = vmatprep.subr.bf16.mxu0 %v1631
    %2060 = vmatpush1.bf16.msra.mxu0 %v1630
    %2061 = vmatprep.subr.bf16.mxu0 %v1635
    %2062 = vmatpush1.bf16.msra.mxu0 %v1634
    %2063 = vmatprep.subr.bf16.mxu0 %v1639
    %2064 = vmatpush1.bf16.msra.mxu0 %v1638
    %2065 = vmatprep.subr.bf16.mxu0 %v1643
    %2066 = vmatpush1.bf16.msra.mxu0 %v1642
    %2067 = vmatprep.subr.bf16.mxu0 %v1647
    %2068 = vmatpush1.bf16.msra.mxu0 %v1646
    %2069 = vmatprep.subr.bf16.mxu0 %v1651
    %2070 = vmatpush1.bf16.msra.mxu0 %v1650
    %2071 = vmatprep.subr.bf16.mxu0 %v1655
    %2072 = vmatpush1.bf16.msra.mxu0 %v1654
    %2073 = vmatprep.subr.bf16.mxu0 %v1659
    %2074 = vmatpush1.bf16.msra.mxu0 %v1658
    %2075 = vmatprep.subr.bf16.mxu0 %v1663
    %2076 = vmatpush1.bf16.msra.mxu0 %v1662
    %2077 = vmatprep.mubr.bf16.mxu0 %v363
    %2078 = vmatmul.mubr.bf16.gmra.mrb[0].mxu0 %v362
    %v2079 = vpop.f32.mrb[0].mxu0
    %v2080 = vadd.f32 %v2039, %v2079
    %v2081 = vpop.f32.mrb[0].mxu0
    %v2082 = vadd.f32 %v2041, %v2081
    %v2083 = vpop.f32.mrb[0].mxu0
    %v2084 = vpop.f32.mrb[0].mxu0
    %2085 = vdwg.mxu0
    %2086 = vmatprep.subr.bf16.mxu0 %v1413
    %2087 = vmatpush1.bf16.msra.mxu0 %v1412
    %2088 = vmatprep.subr.bf16.mxu0 %v1417
    %2089 = vmatpush1.bf16.msra.mxu0 %v1416
    %2090 = vmatprep.subr.bf16.mxu0 %v1421
    %2091 = vmatpush1.bf16.msra.mxu0 %v1420
    %2092 = vmatprep.subr.bf16.mxu0 %v1425
    %2093 = vmatpush1.bf16.msra.mxu0 %v1424
    %2094 = vmatprep.subr.bf16.mxu0 %v1429
    %2095 = vmatpush1.bf16.msra.mxu0 %v1428
    %2096 = vmatprep.subr.bf16.mxu0 %v1433
    %2097 = vmatpush1.bf16.msra.mxu0 %v1432
    %2098 = vmatprep.subr.bf16.mxu0 %v1437
    %2099 = vmatpush1.bf16.msra.mxu0 %v1436
    %2100 = vmatprep.subr.bf16.mxu0 %v1441
    %2101 = vmatpush1.bf16.msra.mxu0 %v1440
    %2102 = vmatprep.subr.bf16.mxu0 %v1445
    %2103 = vmatpush1.bf16.msra.mxu0 %v1444
    %2104 = vmatprep.subr.bf16.mxu0 %v1449
    %2105 = vmatpush1.bf16.msra.mxu0 %v1448
    %2106 = vmatprep.subr.bf16.mxu0 %v1453
    %2107 = vmatpush1.bf16.msra.mxu0 %v1452
    %2108 = vmatprep.subr.bf16.mxu0 %v1457
    %2109 = vmatpush1.bf16.msra.mxu0 %v1456
    %2110 = vmatprep.subr.bf16.mxu0 %v1461
    %2111 = vmatpush1.bf16.msra.mxu0 %v1460
    %2112 = vmatprep.subr.bf16.mxu0 %v1465
    %2113 = vmatpush1.bf16.msra.mxu0 %v1464
    %2114 = vmatprep.subr.bf16.mxu0 %v1469
    %2115 = vmatpush1.bf16.msra.mxu0 %v1468
    %2116 = vmatprep.subr.bf16.mxu0 %v1473
    %2117 = vmatpush1.bf16.msra.mxu0 %v1472
    %2118 = vmatprep.mubr.bf16.mxu0 %v357
    %2119 = vmatmul.mubr.bf16.gmra.mrb[0].mxu0 %v356
    %v2120 = vpop.f32.mrb[0].mxu0
    %v2121 = vadd.f32 %v633, %v2120
    %v2122 = vpop.f32.mrb[0].mxu0
    %v2123 = vadd.f32 %v637, %v2122
    %v2124 = vpop.f32.mrb[0].mxu0
    %v2125 = vpop.f32.mrb[0].mxu0
    %2126 = vdwg.mxu0
    %2127 = vmatprep.subr.bf16.mxu0 %v1477
    %2128 = vmatpush1.bf16.msra.mxu0 %v1476
    %2129 = vmatprep.subr.bf16.mxu0 %v1481
    %2130 = vmatpush1.bf16.msra.mxu0 %v1480
    %2131 = vmatprep.subr.bf16.mxu0 %v1485
    %2132 = vmatpush1.bf16.msra.mxu0 %v1484
    %2133 = vmatprep.subr.bf16.mxu0 %v1489
    %2134 = vmatpush1.bf16.msra.mxu0 %v1488
    %2135 = vmatprep.subr.bf16.mxu0 %v1493
    %2136 = vmatpush1.bf16.msra.mxu0 %v1492
    %2137 = vmatprep.subr.bf16.mxu0 %v1497
    %2138 = vmatpush1.bf16.msra.mxu0 %v1496
    %2139 = vmatprep.subr.bf16.mxu0 %v1501
    %2140 = vmatpush1.bf16.msra.mxu0 %v1500
    %2141 = vmatprep.subr.bf16.mxu0 %v1505
    %2142 = vmatpush1.bf16.msra.mxu0 %v1504
    %2143 = vmatprep.subr.bf16.mxu0 %v1509
    %2144 = vmatpush1.bf16.msra.mxu0 %v1508
    %2145 = vmatprep.subr.bf16.mxu0 %v1513
    %2146 = vmatpush1.bf16.msra.mxu0 %v1512
    %2147 = vmatprep.subr.bf16.mxu0 %v1517
    %2148 = vmatpush1.bf16.msra.mxu0 %v1516
    %2149 = vmatprep.subr.bf16.mxu0 %v1521
    %2150 = vmatpush1.bf16.msra.mxu0 %v1520
    %2151 = vmatprep.subr.bf16.mxu0 %v1525
    %2152 = vmatpush1.bf16.msra.mxu0 %v1524
    %2153 = vmatprep.subr.bf16.mxu0 %v1529
    %2154 = vmatpush1.bf16.msra.mxu0 %v1528
    %2155 = vmatprep.subr.bf16.mxu0 %v1533
    %2156 = vmatpush1.bf16.msra.mxu0 %v1532
    %2157 = vmatprep.subr.bf16.mxu0 %v1537
    %2158 = vmatpush1.bf16.msra.mxu0 %v1536
    %2159 = vmatprep.mubr.bf16.mxu0 %v359
    %2160 = vmatmul.mubr.bf16.gmra.mrb[0].mxu0 %v358
    %v2161 = vpop.f32.mrb[0].mxu0
    %v2162 = vadd.f32 %v2121, %v2161
    %v2163 = vpop.f32.mrb[0].mxu0
    %v2164 = vadd.f32 %v2123, %v2163
    %v2165 = vpop.f32.mrb[0].mxu0
    %v2166 = vpop.f32.mrb[0].mxu0
    %2167 = vdwg.mxu0
    %2168 = vmatprep.subr.bf16.mxu0 %v1541
    %2169 = vmatpush1.bf16.msra.mxu0 %v1540
    %2170 = vmatprep.subr.bf16.mxu0 %v1545
    %2171 = vmatpush1.bf16.msra.mxu0 %v1544
    %2172 = vmatprep.subr.bf16.mxu0 %v1549
    %2173 = vmatpush1.bf16.msra.mxu0 %v1548
    %2174 = vmatprep.subr.bf16.mxu0 %v1553
    %2175 = vmatpush1.bf16.msra.mxu0 %v1552
    %2176 = vmatprep.subr.bf16.mxu0 %v1557
    %2177 = vmatpush1.bf16.msra.mxu0 %v1556
    %2178 = vmatprep.subr.bf16.mxu0 %v1561
    %2179 = vmatpush1.bf16.msra.mxu0 %v1560
    %2180 = vmatprep.subr.bf16.mxu0 %v1565
    %2181 = vmatpush1.bf16.msra.mxu0 %v1564
    %2182 = vmatprep.subr.bf16.mxu0 %v1569
    %2183 = vmatpush1.bf16.msra.mxu0 %v1568
    %2184 = vmatprep.subr.bf16.mxu0 %v1573
    %2185 = vmatpush1.bf16.msra.mxu0 %v1572
    %2186 = vmatprep.subr.bf16.mxu0 %v1577
    %2187 = vmatpush1.bf16.msra.mxu0 %v1576
    %2188 = vmatprep.subr.bf16.mxu0 %v1581
    %2189 = vmatpush1.bf16.msra.mxu0 %v1580
    %2190 = vmatprep.subr.bf16.mxu0 %v1585
    %2191 = vmatpush1.bf16.msra.mxu0 %v1584
    %2192 = vmatprep.subr.bf16.mxu0 %v1589
    %2193 = vmatpush1.bf16.msra.mxu0 %v1588
    %2194 = vmatprep.subr.bf16.mxu0 %v1593
    %2195 = vmatpush1.bf16.msra.mxu0 %v1592
    %2196 = vmatprep.subr.bf16.mxu0 %v1597
    %2197 = vmatpush1.bf16.msra.mxu0 %v1596
    %2198 = vmatprep.subr.bf16.mxu0 %v1601
    %2199 = vmatpush1.bf16.msra.mxu0 %v1600
    %2200 = vmatprep.mubr.bf16.mxu0 %v361
    %2201 = vmatmul.mubr.bf16.gmra.mrb[0].mxu0 %v360
    %v2202 = vpop.f32.mrb[0].mxu0
    %v2203 = vadd.f32 %v2162, %v2202
    %v2204 = vpop.f32.mrb[0].mxu0
    %v2205 = vadd.f32 %v2164, %v2204
    %v2206 = vpop.f32.mrb[0].mxu0
    %v2207 = vpop.f32.mrb[0].mxu0
    %2208 = vdwg.mxu0
    %2209 = vmatprep.subr.bf16.mxu0 %v1605
    %2210 = vmatpush1.bf16.msra.mxu0 %v1604
    %2211 = vmatprep.subr.bf16.mxu0 %v1609
    %2212 = vmatpush1.bf16.msra.mxu0 %v1608
    %2213 = vmatprep.subr.bf16.mxu0 %v1613
    %2214 = vmatpush1.bf16.msra.mxu0 %v1612
    %2215 = vmatprep.subr.bf16.mxu0 %v1617
    %2216 = vmatpush1.bf16.msra.mxu0 %v1616
    %2217 = vmatprep.subr.bf16.mxu0 %v1621
    %2218 = vmatpush1.bf16.msra.mxu0 %v1620
    %2219 = vmatprep.subr.bf16.mxu0 %v1625
    %2220 = vmatpush1.bf16.msra.mxu0 %v1624
    %2221 = vmatprep.subr.bf16.mxu0 %v1629
    %2222 = vmatpush1.bf16.msra.mxu0 %v1628
    %2223 = vmatprep.subr.bf16.mxu0 %v1633
    %2224 = vmatpush1.bf16.msra.mxu0 %v1632
    %2225 = vmatprep.subr.bf16.mxu0 %v1637
    %2226 = vmatpush1.bf16.msra.mxu0 %v1636
    %2227 = vmatprep.subr.bf16.mxu0 %v1641
    %2228 = vmatpush1.bf16.msra.mxu0 %v1640
    %2229 = vmatprep.subr.bf16.mxu0 %v1645
    %2230 = vmatpush1.bf16.msra.mxu0 %v1644
    %2231 = vmatprep.subr.bf16.mxu0 %v1649
    %2232 = vmatpush1.bf16.msra.mxu0 %v1648
    %2233 = vmatprep.subr.bf16.mxu0 %v1653
    %2234 = vmatpush1.bf16.msra.mxu0 %v1652
    %2235 = vmatprep.subr.bf16.mxu0 %v1657
    %2236 = vmatpush1.bf16.msra.mxu0 %v1656
    %2237 = vmatprep.subr.bf16.mxu0 %v1661
    %2238 = vmatpush1.bf16.msra.mxu0 %v1660
    %2239 = vmatprep.subr.bf16.mxu0 %v1665
    %2240 = vmatpush1.bf16.msra.mxu0 %v1664
    %2241 = vmatprep.mubr.bf16.mxu0 %v363
    %2242 = vmatmul.mubr.bf16.gmra.mrb[0].mxu0 %v362
    %v2243 = vpop.f32.mrb[0].mxu0
    %v2244 = vadd.f32 %v2203, %v2243
    %v2245 = vpop.f32.mrb[0].mxu0
    %v2246 = vadd.f32 %v2205, %v2245
    %v2247 = vpop.f32.mrb[0].mxu0
    %v2248 = vpop.f32.mrb[0].mxu0
    %2249 = vdwg.mxu0
    %vm2250 = vcmp.gt.f32.partialorder %v2080, 0.0
    %vm2251 = vcmp.gt.f32.partialorder %v2082, 0.0
    %vm2252 = vcmp.gt.f32.partialorder %v2244, 0.0
    %vm2253 = vcmp.gt.f32.partialorder %v2246, 0.0
    %v2254 = vmul.f32 %v2080, 0.01
    %v2255 = vmul.f32 %v2082, 0.01
    %v2256 = vmul.f32 %v2244, 0.01
    %v2257 = vmul.f32 %v2246, 0.01
    %v2258 = vsel %vm2250, %v2080, %v2254
    %v2259 = vsel %vm2251, %v2082, %v2255
    %v2260 = vsel %vm2252, %v2244, %v2256
    %v2261 = vsel %vm2253, %v2246, %v2257
    %v2262 = vpack.c.bf16 %v2258, %v2258
    %v2263 = vpack.c.bf16 %v2259, %v2259
    %v2264 = vpack.c.bf16 %v2260, %v2260
    %v2265 = vpack.c.bf16 %v2261, %v2261
    %v2266 = vld [vmem:[#allocation4] sm:$0xff]
    %v2267 = vld [vmem:[#allocation4 + $0x8] sm:$0xff]
    %v2268 = vld [vmem:[#allocation4 + $0x10] sm:$0xff]
    %v2269 = vld [vmem:[#allocation4 + $0x18] sm:$0xff]
    %v2270 = vld [vmem:[#allocation4 + $0x20] sm:$0xff]
    %v2271 = vld [vmem:[#allocation4 + $0x28] sm:$0xff]
    %v2272 = vld [vmem:[#allocation4 + $0x30] sm:$0xff]
    %v2273 = vld [vmem:[#allocation4 + $0x38] sm:$0xff]
    %v2274 = vld [vmem:[#allocation4 + $0x40] sm:$0xff]
    %v2275 = vld [vmem:[#allocation4 + $0x48] sm:$0xff]
    %v2276 = vld [vmem:[#allocation4 + $0x50] sm:$0xff]
    %v2277 = vld [vmem:[#allocation4 + $0x58] sm:$0xff]
    %v2278 = vld [vmem:[#allocation4 + $0x60] sm:$0xff]
    %v2279 = vld [vmem:[#allocation4 + $0x68] sm:$0xff]
    %v2280 = vld [vmem:[#allocation4 + $0x70] sm:$0xff]
    %v2281 = vld [vmem:[#allocation4 + $0x78] sm:$0xff]
    %v2282 = vld [vmem:[#allocation4 + $0x80] sm:$0xff]
    %v2283 = vld [vmem:[#allocation4 + $0x88] sm:$0xff]
    %v2284 = vld [vmem:[#allocation4 + $0x90] sm:$0xff]
    %v2285 = vld [vmem:[#allocation4 + $0x98] sm:$0xff]
    %v2286 = vld [vmem:[#allocation4 + $0xa0] sm:$0xff]
    %v2287 = vld [vmem:[#allocation4 + $0xa8] sm:$0xff]
    %v2288 = vld [vmem:[#allocation4 + $0xb0] sm:$0xff]
    %v2289 = vld [vmem:[#allocation4 + $0xb8] sm:$0xff]
    %v2290 = vld [vmem:[#allocation4 + $0xc0] sm:$0xff]
    %v2291 = vld [vmem:[#allocation4 + $0xc8] sm:$0xff]
    %v2292 = vld [vmem:[#allocation4 + $0xd0] sm:$0xff]
    %v2293 = vld [vmem:[#allocation4 + $0xd8] sm:$0xff]
    %v2294 = vld [vmem:[#allocation4 + $0xe0] sm:$0xff]
    %v2295 = vld [vmem:[#allocation4 + $0xe8] sm:$0xff]
    %v2296 = vld [vmem:[#allocation4 + $0xf0] sm:$0xff]
    %v2297 = vld [vmem:[#allocation4 + $0xf8] sm:$0xff]
    %v2298 = vld [vmem:[#allocation4 + $0x100] sm:$0xff]
    %v2299 = vld [vmem:[#allocation4 + $0x108] sm:$0xff]
    %v2300 = vld [vmem:[#allocation4 + $0x110] sm:$0xff]
    %v2301 = vld [vmem:[#allocation4 + $0x118] sm:$0xff]
    %v2302 = vld [vmem:[#allocation4 + $0x120] sm:$0xff]
    %v2303 = vld [vmem:[#allocation4 + $0x128] sm:$0xff]
    %v2304 = vld [vmem:[#allocation4 + $0x130] sm:$0xff]
    %v2305 = vld [vmem:[#allocation4 + $0x138] sm:$0xff]
    %v2306 = vld [vmem:[#allocation4 + $0x140] sm:$0xff]
    %v2307 = vld [vmem:[#allocation4 + $0x148] sm:$0xff]
    %v2308 = vld [vmem:[#allocation4 + $0x150] sm:$0xff]
    %v2309 = vld [vmem:[#allocation4 + $0x158] sm:$0xff]
    %v2310 = vld [vmem:[#allocation4 + $0x160] sm:$0xff]
    %v2311 = vld [vmem:[#allocation4 + $0x168] sm:$0xff]
    %v2312 = vld [vmem:[#allocation4 + $0x170] sm:$0xff]
    %v2313 = vld [vmem:[#allocation4 + $0x178] sm:$0xff]
    %v2314 = vld [vmem:[#allocation4 + $0x180] sm:$0xff]
    %v2315 = vld [vmem:[#allocation4 + $0x188] sm:$0xff]
    %v2316 = vld [vmem:[#allocation4 + $0x190] sm:$0xff]
    %v2317 = vld [vmem:[#allocation4 + $0x198] sm:$0xff]
    %v2318 = vld [vmem:[#allocation4 + $0x1a0] sm:$0xff]
    %v2319 = vld [vmem:[#allocation4 + $0x1a8] sm:$0xff]
    %v2320 = vld [vmem:[#allocation4 + $0x1b0] sm:$0xff]
    %v2321 = vld [vmem:[#allocation4 + $0x1b8] sm:$0xff]
    %v2322 = vld [vmem:[#allocation4 + $0x1c0] sm:$0xff]
    %v2323 = vld [vmem:[#allocation4 + $0x1c8] sm:$0xff]
    %v2324 = vld [vmem:[#allocation4 + $0x1d0] sm:$0xff]
    %v2325 = vld [vmem:[#allocation4 + $0x1d8] sm:$0xff]
    %v2326 = vld [vmem:[#allocation4 + $0x1e0] sm:$0xff]
    %v2327 = vld [vmem:[#allocation4 + $0x1e8] sm:$0xff]
    %v2328 = vld [vmem:[#allocation4 + $0x1f0] sm:$0xff]
    %v2329 = vld [vmem:[#allocation4 + $0x1f8] sm:$0xff]
    %v2330 = vld [vmem:[%s9] sm:$0x3]
    %v2332 = vlaneseq
    %v2333 = vshrl.u32 %v2332, 7
    %v2334 = vsub.s32 0, %v2333
    %v2335 = vrot.slane %v2330, %v2334
    %v2336 = vlaneseq
    %v2337 = vshrl.u32 %v2336, 7
    %v2338 = vsub.s32 1, %v2337
    %v2339 = vrot.slane %v2330, %v2338
    %v2406 = vunpack.c.l.b16 %v2266
    %v2407 = vunpack.c.h.b16 %v2266
    %v2408 = vunpack.c.l.b16 %v2267
    %v2409 = vunpack.c.h.b16 %v2267
    %v2410 = vunpack.c.l.b16 %v2268
    %v2411 = vunpack.c.h.b16 %v2268
    %v2412 = vunpack.c.l.b16 %v2269
    %v2413 = vunpack.c.h.b16 %v2269
    %v2414 = vunpack.c.l.b16 %v2270
    %v2415 = vunpack.c.h.b16 %v2270
    %v2416 = vunpack.c.l.b16 %v2271
    %v2417 = vunpack.c.h.b16 %v2271
    %v2418 = vunpack.c.l.b16 %v2272
    %v2419 = vunpack.c.h.b16 %v2272
    %v2420 = vunpack.c.l.b16 %v2273
    %v2421 = vunpack.c.h.b16 %v2273
    %v2422 = vunpack.c.l.b16 %v2274
    %v2423 = vunpack.c.h.b16 %v2274
    %v2424 = vunpack.c.l.b16 %v2275
    %v2425 = vunpack.c.h.b16 %v2275
    %v2426 = vunpack.c.l.b16 %v2276
    %v2427 = vunpack.c.h.b16 %v2276
    %v2428 = vunpack.c.l.b16 %v2277
    %v2429 = vunpack.c.h.b16 %v2277
    %v2430 = vunpack.c.l.b16 %v2278
    %v2431 = vunpack.c.h.b16 %v2278
    %v2432 = vunpack.c.l.b16 %v2279
    %v2433 = vunpack.c.h.b16 %v2279
    %v2434 = vunpack.c.l.b16 %v2280
    %v2435 = vunpack.c.h.b16 %v2280
    %v2436 = vunpack.c.l.b16 %v2281
    %v2437 = vunpack.c.h.b16 %v2281
    %v2438 = vunpack.c.l.b16 %v2282
    %v2439 = vunpack.c.h.b16 %v2282
    %v2440 = vunpack.c.l.b16 %v2283
    %v2441 = vunpack.c.h.b16 %v2283
    %v2442 = vunpack.c.l.b16 %v2284
    %v2443 = vunpack.c.h.b16 %v2284
    %v2444 = vunpack.c.l.b16 %v2285
    %v2445 = vunpack.c.h.b16 %v2285
    %v2446 = vunpack.c.l.b16 %v2286
    %v2447 = vunpack.c.h.b16 %v2286
    %v2448 = vunpack.c.l.b16 %v2287
    %v2449 = vunpack.c.h.b16 %v2287
    %v2450 = vunpack.c.l.b16 %v2288
    %v2451 = vunpack.c.h.b16 %v2288
    %v2452 = vunpack.c.l.b16 %v2289
    %v2453 = vunpack.c.h.b16 %v2289
    %v2454 = vunpack.c.l.b16 %v2290
    %v2455 = vunpack.c.h.b16 %v2290
    %v2456 = vunpack.c.l.b16 %v2291
    %v2457 = vunpack.c.h.b16 %v2291
    %v2458 = vunpack.c.l.b16 %v2292
    %v2459 = vunpack.c.h.b16 %v2292
    %v2460 = vunpack.c.l.b16 %v2293
    %v2461 = vunpack.c.h.b16 %v2293
    %v2462 = vunpack.c.l.b16 %v2294
    %v2463 = vunpack.c.h.b16 %v2294
    %v2464 = vunpack.c.l.b16 %v2295
    %v2465 = vunpack.c.h.b16 %v2295
    %v2466 = vunpack.c.l.b16 %v2296
    %v2467 = vunpack.c.h.b16 %v2296
    %v2468 = vunpack.c.l.b16 %v2297
    %v2469 = vunpack.c.h.b16 %v2297
    %v2470 = vunpack.c.l.b16 %v2298
    %v2471 = vunpack.c.h.b16 %v2298
    %v2472 = vunpack.c.l.b16 %v2299
    %v2473 = vunpack.c.h.b16 %v2299
    %v2474 = vunpack.c.l.b16 %v2300
    %v2475 = vunpack.c.h.b16 %v2300
    %v2476 = vunpack.c.l.b16 %v2301
    %v2477 = vunpack.c.h.b16 %v2301
    %v2478 = vunpack.c.l.b16 %v2302
    %v2479 = vunpack.c.h.b16 %v2302
    %v2480 = vunpack.c.l.b16 %v2303
    %v2481 = vunpack.c.h.b16 %v2303
    %v2482 = vunpack.c.l.b16 %v2304
    %v2483 = vunpack.c.h.b16 %v2304
    %v2484 = vunpack.c.l.b16 %v2305
    %v2485 = vunpack.c.h.b16 %v2305
    %v2486 = vunpack.c.l.b16 %v2306
    %v2487 = vunpack.c.h.b16 %v2306
    %v2488 = vunpack.c.l.b16 %v2307
    %v2489 = vunpack.c.h.b16 %v2307
    %v2490 = vunpack.c.l.b16 %v2308
    %v2491 = vunpack.c.h.b16 %v2308
    %v2492 = vunpack.c.l.b16 %v2309
    %v2493 = vunpack.c.h.b16 %v2309
    %v2494 = vunpack.c.l.b16 %v2310
    %v2495 = vunpack.c.h.b16 %v2310
    %v2496 = vunpack.c.l.b16 %v2311
    %v2497 = vunpack.c.h.b16 %v2311
    %v2498 = vunpack.c.l.b16 %v2312
    %v2499 = vunpack.c.h.b16 %v2312
    %v2500 = vunpack.c.l.b16 %v2313
    %v2501 = vunpack.c.h.b16 %v2313
    %v2502 = vunpack.c.l.b16 %v2314
    %v2503 = vunpack.c.h.b16 %v2314
    %v2504 = vunpack.c.l.b16 %v2315
    %v2505 = vunpack.c.h.b16 %v2315
    %v2506 = vunpack.c.l.b16 %v2316
    %v2507 = vunpack.c.h.b16 %v2316
    %v2508 = vunpack.c.l.b16 %v2317
    %v2509 = vunpack.c.h.b16 %v2317
    %v2510 = vunpack.c.l.b16 %v2318
    %v2511 = vunpack.c.h.b16 %v2318
    %v2512 = vunpack.c.l.b16 %v2319
    %v2513 = vunpack.c.h.b16 %v2319
    %v2514 = vunpack.c.l.b16 %v2320
    %v2515 = vunpack.c.h.b16 %v2320
    %v2516 = vunpack.c.l.b16 %v2321
    %v2517 = vunpack.c.h.b16 %v2321
    %v2518 = vunpack.c.l.b16 %v2322
    %v2519 = vunpack.c.h.b16 %v2322
    %v2520 = vunpack.c.l.b16 %v2323
    %v2521 = vunpack.c.h.b16 %v2323
    %v2522 = vunpack.c.l.b16 %v2324
    %v2523 = vunpack.c.h.b16 %v2324
    %v2524 = vunpack.c.l.b16 %v2325
    %v2525 = vunpack.c.h.b16 %v2325
    %v2526 = vunpack.c.l.b16 %v2326
    %v2527 = vunpack.c.h.b16 %v2326
    %v2528 = vunpack.c.l.b16 %v2327
    %v2529 = vunpack.c.h.b16 %v2327
    %v2530 = vunpack.c.l.b16 %v2328
    %v2531 = vunpack.c.h.b16 %v2328
    %v2532 = vunpack.c.l.b16 %v2329
    %v2533 = vunpack.c.h.b16 %v2329
    %v2534 = vpack.c.b16 %v2408, %v2406
    %v2535 = vpack.c.b16 %v2409, %v2407
    %v2536 = vpack.c.b16 %v2412, %v2410
    %v2537 = vpack.c.b16 %v2413, %v2411
    %v2538 = vpack.c.b16 %v2416, %v2414
    %v2539 = vpack.c.b16 %v2417, %v2415
    %v2540 = vpack.c.b16 %v2420, %v2418
    %v2541 = vpack.c.b16 %v2421, %v2419
    %v2542 = vpack.c.b16 %v2424, %v2422
    %v2543 = vpack.c.b16 %v2425, %v2423
    %v2544 = vpack.c.b16 %v2428, %v2426
    %v2545 = vpack.c.b16 %v2429, %v2427
    %v2546 = vpack.c.b16 %v2432, %v2430
    %v2547 = vpack.c.b16 %v2433, %v2431
    %v2548 = vpack.c.b16 %v2436, %v2434
    %v2549 = vpack.c.b16 %v2437, %v2435
    %v2550 = vpack.c.b16 %v2440, %v2438
    %v2551 = vpack.c.b16 %v2441, %v2439
    %v2552 = vpack.c.b16 %v2444, %v2442
    %v2553 = vpack.c.b16 %v2445, %v2443
    %v2554 = vpack.c.b16 %v2448, %v2446
    %v2555 = vpack.c.b16 %v2449, %v2447
    %v2556 = vpack.c.b16 %v2452, %v2450
    %v2557 = vpack.c.b16 %v2453, %v2451
    %v2558 = vpack.c.b16 %v2456, %v2454
    %v2559 = vpack.c.b16 %v2457, %v2455
    %v2560 = vpack.c.b16 %v2460, %v2458
    %v2561 = vpack.c.b16 %v2461, %v2459
    %v2562 = vpack.c.b16 %v2464, %v2462
    %v2563 = vpack.c.b16 %v2465, %v2463
    %v2564 = vpack.c.b16 %v2468, %v2466
    %v2565 = vpack.c.b16 %v2469, %v2467
    %v2566 = vpack.c.b16 %v2472, %v2470
    %v2567 = vpack.c.b16 %v2473, %v2471
    %v2568 = vpack.c.b16 %v2476, %v2474
    %v2569 = vpack.c.b16 %v2477, %v2475
    %v2570 = vpack.c.b16 %v2480, %v2478
    %v2571 = vpack.c.b16 %v2481, %v2479
    %v2572 = vpack.c.b16 %v2484, %v2482
    %v2573 = vpack.c.b16 %v2485, %v2483
    %v2574 = vpack.c.b16 %v2488, %v2486
    %v2575 = vpack.c.b16 %v2489, %v2487
    %v2576 = vpack.c.b16 %v2492, %v2490
    %v2577 = vpack.c.b16 %v2493, %v2491
    %v2578 = vpack.c.b16 %v2496, %v2494
    %v2579 = vpack.c.b16 %v2497, %v2495
    %v2580 = vpack.c.b16 %v2500, %v2498
    %v2581 = vpack.c.b16 %v2501, %v2499
    %v2582 = vpack.c.b16 %v2504, %v2502
    %v2583 = vpack.c.b16 %v2505, %v2503
    %v2584 = vpack.c.b16 %v2508, %v2506
    %v2585 = vpack.c.b16 %v2509, %v2507
    %v2586 = vpack.c.b16 %v2512, %v2510
    %v2587 = vpack.c.b16 %v2513, %v2511
    %v2588 = vpack.c.b16 %v2516, %v2514
    %v2589 = vpack.c.b16 %v2517, %v2515
    %v2590 = vpack.c.b16 %v2520, %v2518
    %v2591 = vpack.c.b16 %v2521, %v2519
    %v2592 = vpack.c.b16 %v2524, %v2522
    %v2593 = vpack.c.b16 %v2525, %v2523
    %v2594 = vpack.c.b16 %v2528, %v2526
    %v2595 = vpack.c.b16 %v2529, %v2527
    %v2596 = vpack.c.b16 %v2532, %v2530
    %v2597 = vpack.c.b16 %v2533, %v2531
    %2662 = vmatprep.subr.bf16.mxu0 %v2535
    %2663 = vmatpush1.bf16.msra.mxu0 %v2534
    %2664 = vmatprep.subr.bf16.mxu0 %v2537
    %2665 = vmatpush1.bf16.msra.mxu0 %v2536
    %2666 = vmatprep.subr.bf16.mxu0 %v2539
    %2667 = vmatpush1.bf16.msra.mxu0 %v2538
    %2668 = vmatprep.subr.bf16.mxu0 %v2541
    %2669 = vmatpush1.bf16.msra.mxu0 %v2540
    %2670 = vmatprep.subr.bf16.mxu0 %v2543
    %2671 = vmatpush1.bf16.msra.mxu0 %v2542
    %2672 = vmatprep.subr.bf16.mxu0 %v2545
    %2673 = vmatpush1.bf16.msra.mxu0 %v2544
    %2674 = vmatprep.subr.bf16.mxu0 %v2547
    %2675 = vmatpush1.bf16.msra.mxu0 %v2546
    %2676 = vmatprep.subr.bf16.mxu0 %v2549
    %2677 = vmatpush1.bf16.msra.mxu0 %v2548
    %2678 = vmatprep.subr.bf16.mxu0 %v2551
    %2679 = vmatpush1.bf16.msra.mxu0 %v2550
    %2680 = vmatprep.subr.bf16.mxu0 %v2553
    %2681 = vmatpush1.bf16.msra.mxu0 %v2552
    %2682 = vmatprep.subr.bf16.mxu0 %v2555
    %2683 = vmatpush1.bf16.msra.mxu0 %v2554
    %2684 = vmatprep.subr.bf16.mxu0 %v2557
    %2685 = vmatpush1.bf16.msra.mxu0 %v2556
    %2686 = vmatprep.subr.bf16.mxu0 %v2559
    %2687 = vmatpush1.bf16.msra.mxu0 %v2558
    %2688 = vmatprep.subr.bf16.mxu0 %v2561
    %2689 = vmatpush1.bf16.msra.mxu0 %v2560
    %2690 = vmatprep.subr.bf16.mxu0 %v2563
    %2691 = vmatpush1.bf16.msra.mxu0 %v2562
    %2692 = vmatprep.subr.bf16.mxu0 %v2565
    %2693 = vmatpush1.bf16.msra.mxu0 %v2564
    %2694 = vmatprep.mubr.bf16.mxu0 %v2263
    %2695 = vmatmul.mubr.bf16.gmra.mrb[0].mxu0 %v2262
    %v2696 = vpop.f32.mrb[0].mxu0
    %v2697 = vadd.f32 %v2335, %v2696
    %v2698 = vpop.f32.mrb[0].mxu0
    %v2699 = vadd.f32 %v2339, %v2698
    %v2700 = vpop.f32.mrb[0].mxu0
    %v2701 = vpop.f32.mrb[0].mxu0
    %2702 = vdwg.mxu0
    %2703 = vmatprep.subr.bf16.mxu0 %v2567
    %2704 = vmatpush1.bf16.msra.mxu0 %v2566
    %2705 = vmatprep.subr.bf16.mxu0 %v2569
    %2706 = vmatpush1.bf16.msra.mxu0 %v2568
    %2707 = vmatprep.subr.bf16.mxu0 %v2571
    %2708 = vmatpush1.bf16.msra.mxu0 %v2570
    %2709 = vmatprep.subr.bf16.mxu0 %v2573
    %2710 = vmatpush1.bf16.msra.mxu0 %v2572
    %2711 = vmatprep.subr.bf16.mxu0 %v2575
    %2712 = vmatpush1.bf16.msra.mxu0 %v2574
    %2713 = vmatprep.subr.bf16.mxu0 %v2577
    %2714 = vmatpush1.bf16.msra.mxu0 %v2576
    %2715 = vmatprep.subr.bf16.mxu0 %v2579
    %2716 = vmatpush1.bf16.msra.mxu0 %v2578
    %2717 = vmatprep.subr.bf16.mxu0 %v2581
    %2718 = vmatpush1.bf16.msra.mxu0 %v2580
    %2719 = vmatprep.subr.bf16.mxu0 %v2583
    %2720 = vmatpush1.bf16.msra.mxu0 %v2582
    %2721 = vmatprep.subr.bf16.mxu0 %v2585
    %2722 = vmatpush1.bf16.msra.mxu0 %v2584
    %2723 = vmatprep.subr.bf16.mxu0 %v2587
    %2724 = vmatpush1.bf16.msra.mxu0 %v2586
    %2725 = vmatprep.subr.bf16.mxu0 %v2589
    %2726 = vmatpush1.bf16.msra.mxu0 %v2588
    %2727 = vmatprep.subr.bf16.mxu0 %v2591
    %2728 = vmatpush1.bf16.msra.mxu0 %v2590
    %2729 = vmatprep.subr.bf16.mxu0 %v2593
    %2730 = vmatpush1.bf16.msra.mxu0 %v2592
    %2731 = vmatprep.subr.bf16.mxu0 %v2595
    %2732 = vmatpush1.bf16.msra.mxu0 %v2594
    %2733 = vmatprep.subr.bf16.mxu0 %v2597
    %2734 = vmatpush1.bf16.msra.mxu0 %v2596
    %2735 = vmatprep.mubr.bf16.mxu0 %v2265
    %2736 = vmatmul.mubr.bf16.gmra.mrb[0].mxu0 %v2264
    %v2737 = vpop.f32.mrb[0].mxu0
    %v2738 = vadd.f32 %v2697, %v2737
    %v2739 = vpop.f32.mrb[0].mxu0
    %v2740 = vadd.f32 %v2699, %v2739
    %v2741 = vpop.f32.mrb[0].mxu0
    %v2742 = vpop.f32.mrb[0].mxu0
    %2743 = vdwg.mxu0
    %vm2744 = vcmp.gt.f32.partialorder %v2738, 0.0
    %vm2745 = vcmp.gt.f32.partialorder %v2740, 0.0
    %v2746 = vmul.f32 %v2738, 0.01
    %v2747 = vmul.f32 %v2740, 0.01
    %v2748 = vsel %vm2744, %v2738, %v2746
    %v2749 = vsel %vm2745, %v2740, %v2747
    %v2750 = vpack.c.bf16 %v2748, %v2748
    %v2751 = vpack.c.bf16 %v2749, %v2749
    %v2752 = vld [vmem:[%s4] sm:$0xf]
    %v2753 = vld [vmem:[%s4 + $0x4] sm:$0xf]
    %v2754 = vld [vmem:[%s4 + $0x8] sm:$0xf]
    %v2755 = vld [vmem:[%s4 + $0xc] sm:$0xf]
    %v2756 = vld [vmem:[%s4 + $0x10] sm:$0xf]
    %v2757 = vld [vmem:[%s4 + $0x14] sm:$0xf]
    %v2758 = vld [vmem:[%s4 + $0x18] sm:$0xf]
    %v2759 = vld [vmem:[%s4 + $0x1c] sm:$0xf]
    %v2760 = vld [vmem:[%s4 + $0x20] sm:$0xf]
    %v2761 = vld [vmem:[%s4 + $0x24] sm:$0xf]
    %v2762 = vld [vmem:[%s4 + $0x28] sm:$0xf]
    %v2763 = vld [vmem:[%s4 + $0x2c] sm:$0xf]
    %v2764 = vld [vmem:[%s4 + $0x30] sm:$0xf]
    %v2765 = vld [vmem:[%s4 + $0x34] sm:$0xf]
    %v2766 = vld [vmem:[%s4 + $0x38] sm:$0xf]
    %v2767 = vld [vmem:[%s4 + $0x3c] sm:$0xf]
    %v2768 = vld [vmem:[%s4 + $0x40] sm:$0xf]
    %v2769 = vld [vmem:[%s4 + $0x44] sm:$0xf]
    %v2770 = vld [vmem:[%s4 + $0x48] sm:$0xf]
    %v2771 = vld [vmem:[%s4 + $0x4c] sm:$0xf]
    %v2772 = vld [vmem:[%s4 + $0x50] sm:$0xf]
    %v2773 = vld [vmem:[%s4 + $0x54] sm:$0xf]
    %v2774 = vld [vmem:[%s4 + $0x58] sm:$0xf]
    %v2775 = vld [vmem:[%s4 + $0x5c] sm:$0xf]
    %v2776 = vld [vmem:[%s4 + $0x60] sm:$0xf]
    %v2777 = vld [vmem:[%s4 + $0x64] sm:$0xf]
    %v2778 = vld [vmem:[%s4 + $0x68] sm:$0xf]
    %v2779 = vld [vmem:[%s4 + $0x6c] sm:$0xf]
    %v2780 = vld [vmem:[%s4 + $0x70] sm:$0xf]
    %v2781 = vld [vmem:[%s4 + $0x74] sm:$0xf]
    %v2782 = vld [vmem:[%s4 + $0x78] sm:$0xf]
    %v2783 = vld [vmem:[%s4 + $0x7c] sm:$0xf]
    %v2784 = vld [vmem:[#allocation10] sm:$0x1]
    %v2786 = vlaneseq
    %v2787 = vshrl.u32 %v2786, 7
    %v2788 = vsub.s32 0, %v2787
    %v2789 = vrot.slane %v2784, %v2788
    %v2823 = vunpack.c.l.b16 %v2752
    %v2824 = vunpack.c.l.b16 %v2753
    %v2825 = vunpack.c.l.b16 %v2754
    %v2826 = vunpack.c.l.b16 %v2755
    %v2827 = vunpack.c.l.b16 %v2756
    %v2828 = vunpack.c.l.b16 %v2757
    %v2829 = vunpack.c.l.b16 %v2758
    %v2830 = vunpack.c.l.b16 %v2759
    %v2831 = vunpack.c.l.b16 %v2760
    %v2832 = vunpack.c.l.b16 %v2761
    %v2833 = vunpack.c.l.b16 %v2762
    %v2834 = vunpack.c.l.b16 %v2763
    %v2835 = vunpack.c.l.b16 %v2764
    %v2836 = vunpack.c.l.b16 %v2765
    %v2837 = vunpack.c.l.b16 %v2766
    %v2838 = vunpack.c.l.b16 %v2767
    %v2839 = vunpack.c.l.b16 %v2768
    %v2840 = vunpack.c.l.b16 %v2769
    %v2841 = vunpack.c.l.b16 %v2770
    %v2842 = vunpack.c.l.b16 %v2771
    %v2843 = vunpack.c.l.b16 %v2772
    %v2844 = vunpack.c.l.b16 %v2773
    %v2845 = vunpack.c.l.b16 %v2774
    %v2846 = vunpack.c.l.b16 %v2775
    %v2847 = vunpack.c.l.b16 %v2776
    %v2848 = vunpack.c.l.b16 %v2777
    %v2849 = vunpack.c.l.b16 %v2778
    %v2850 = vunpack.c.l.b16 %v2779
    %v2851 = vunpack.c.l.b16 %v2780
    %v2852 = vunpack.c.l.b16 %v2781
    %v2853 = vunpack.c.l.b16 %v2782
    %v2854 = vunpack.c.l.b16 %v2783
    %v2855 = vpack.c.b16 %v2824, %v2823
    %v2856 = vpack.c.b16 %v2826, %v2825
    %v2857 = vpack.c.b16 %v2828, %v2827
    %v2858 = vpack.c.b16 %v2830, %v2829
    %v2859 = vpack.c.b16 %v2832, %v2831
    %v2860 = vpack.c.b16 %v2834, %v2833
    %v2861 = vpack.c.b16 %v2836, %v2835
    %v2862 = vpack.c.b16 %v2838, %v2837
    %v2863 = vpack.c.b16 %v2840, %v2839
    %v2864 = vpack.c.b16 %v2842, %v2841
    %v2865 = vpack.c.b16 %v2844, %v2843
    %v2866 = vpack.c.b16 %v2846, %v2845
    %v2867 = vpack.c.b16 %v2848, %v2847
    %v2868 = vpack.c.b16 %v2850, %v2849
    %v2869 = vpack.c.b16 %v2852, %v2851
    %v2870 = vpack.c.b16 %v2854, %v2853
    %2887 = vmatprep.subr.bf16.mxu0 0
    %2888 = vmatpush1.bf16.msra.mxu0 %v2855
    %2889 = vmatprep.subr.bf16.mxu0 0
    %2890 = vmatpush1.bf16.msra.mxu0 %v2856
    %2891 = vmatprep.subr.bf16.mxu0 0
    %2892 = vmatpush1.bf16.msra.mxu0 %v2857
    %2893 = vmatprep.subr.bf16.mxu0 0
    %2894 = vmatpush1.bf16.msra.mxu0 %v2858
    %2895 = vmatprep.subr.bf16.mxu0 0
    %2896 = vmatpush1.bf16.msra.mxu0 %v2859
    %2897 = vmatprep.subr.bf16.mxu0 0
    %2898 = vmatpush1.bf16.msra.mxu0 %v2860
    %2899 = vmatprep.subr.bf16.mxu0 0
    %2900 = vmatpush1.bf16.msra.mxu0 %v2861
    %2901 = vmatprep.subr.bf16.mxu0 0
    %2902 = vmatpush1.bf16.msra.mxu0 %v2862
    %2903 = vmatprep.subr.bf16.mxu0 0
    %2904 = vmatpush1.bf16.msra.mxu0 %v2863
    %2905 = vmatprep.subr.bf16.mxu0 0
    %2906 = vmatpush1.bf16.msra.mxu0 %v2864
    %2907 = vmatprep.subr.bf16.mxu0 0
    %2908 = vmatpush1.bf16.msra.mxu0 %v2865
    %2909 = vmatprep.subr.bf16.mxu0 0
    %2910 = vmatpush1.bf16.msra.mxu0 %v2866
    %2911 = vmatprep.subr.bf16.mxu0 0
    %2912 = vmatpush1.bf16.msra.mxu0 %v2867
    %2913 = vmatprep.subr.bf16.mxu0 0
    %2914 = vmatpush1.bf16.msra.mxu0 %v2868
    %2915 = vmatprep.subr.bf16.mxu0 0
    %2916 = vmatpush1.bf16.msra.mxu0 %v2869
    %2917 = vmatprep.subr.bf16.mxu0 0
    %2918 = vmatpush1.bf16.msra.mxu0 %v2870
    %2919 = vmatprep.mubr.bf16.mxu0 %v2751
    %2920 = vmatmul.mubr.bf16.gmra.mrb[0].mxu0 %v2750
    %v2921 = vpop.f32.mrb[0].mxu0
    %v2922 = vadd.f32 %v2789, %v2921
    %v2923 = vpop.f32.mrb[0].mxu0
    %v2924 = vpop.f32.mrb[0].mxu0
    %v2925 = vpop.f32.mrb[0].mxu0
    %2926 = vdwg.mxu0
    %v2927 = vpack.c.bf16 %v2922, %v2922
    %v2928 = vld [vmem:[%s5] sm:$0xff]
    %v2929 = vld [vmem:[%s5 + $0x8] sm:$0xff]
    %v2930 = vld [vmem:[%s5 + $0x10] sm:$0xff]
    %v2931 = vld [vmem:[%s5 + $0x18] sm:$0xff]
    %v2932 = vld [vmem:[%s5 + $0x20] sm:$0xff]
    %v2933 = vld [vmem:[%s5 + $0x28] sm:$0xff]
    %v2934 = vld [vmem:[%s5 + $0x30] sm:$0xff]
    %v2935 = vld [vmem:[%s5 + $0x38] sm:$0xff]
    %v2936 = vld [vmem:[%s5 + $0x40] sm:$0xff]
    %v2937 = vld [vmem:[%s5 + $0x48] sm:$0xff]
    %v2938 = vld [vmem:[%s5 + $0x50] sm:$0xff]
    %v2939 = vld [vmem:[%s5 + $0x58] sm:$0xff]
    %v2940 = vld [vmem:[%s5 + $0x60] sm:$0xff]
    %v2941 = vld [vmem:[%s5 + $0x68] sm:$0xff]
    %v2942 = vld [vmem:[%s5 + $0x70] sm:$0xff]
    %v2943 = vld [vmem:[%s5 + $0x78] sm:$0xff]
    %v2944 = vld [vmem:[#allocation12] sm:$0x3]
    %v2946 = vlaneseq
    %v2947 = vshrl.u32 %v2946, 7
    %v2948 = vsub.s32 0, %v2947
    %v2949 = vrot.slane %v2944, %v2948
    %v2950 = vlaneseq
    %v2951 = vshrl.u32 %v2950, 7
    %v2952 = vsub.s32 1, %v2951
    %v2953 = vrot.slane %v2944, %v2952
    %v2972 = vunpack.c.l.b16 %v2928
    %v2973 = vunpack.c.h.b16 %v2928
    %v2974 = vunpack.c.l.b16 %v2929
    %v2975 = vunpack.c.h.b16 %v2929
    %v2976 = vunpack.c.l.b16 %v2930
    %v2977 = vunpack.c.h.b16 %v2930
    %v2978 = vunpack.c.l.b16 %v2931
    %v2979 = vunpack.c.h.b16 %v2931
    %v2980 = vunpack.c.l.b16 %v2932
    %v2981 = vunpack.c.h.b16 %v2932
    %v2982 = vunpack.c.l.b16 %v2933
    %v2983 = vunpack.c.h.b16 %v2933
    %v2984 = vunpack.c.l.b16 %v2934
    %v2985 = vunpack.c.h.b16 %v2934
    %v2986 = vunpack.c.l.b16 %v2935
    %v2987 = vunpack.c.h.b16 %v2935
    %v2988 = vunpack.c.l.b16 %v2936
    %v2989 = vunpack.c.h.b16 %v2936
    %v2990 = vunpack.c.l.b16 %v2937
    %v2991 = vunpack.c.h.b16 %v2937
    %v2992 = vunpack.c.l.b16 %v2938
    %v2993 = vunpack.c.h.b16 %v2938
    %v2994 = vunpack.c.l.b16 %v2939
    %v2995 = vunpack.c.h.b16 %v2939
    %v2996 = vunpack.c.l.b16 %v2940
    %v2997 = vunpack.c.h.b16 %v2940
    %v2998 = vunpack.c.l.b16 %v2941
    %v2999 = vunpack.c.h.b16 %v2941
    %v3000 = vunpack.c.l.b16 %v2942
    %v3001 = vunpack.c.h.b16 %v2942
    %v3002 = vunpack.c.l.b16 %v2943
    %v3003 = vunpack.c.h.b16 %v2943
    %v3004 = vpack.c.b16 %v2974, %v2972
    %v3005 = vpack.c.b16 %v2975, %v2973
    %v3006 = vpack.c.b16 %v2978, %v2976
    %v3007 = vpack.c.b16 %v2979, %v2977
    %v3008 = vpack.c.b16 %v2982, %v2980
    %v3009 = vpack.c.b16 %v2983, %v2981
    %v3010 = vpack.c.b16 %v2986, %v2984
    %v3011 = vpack.c.b16 %v2987, %v2985
    %v3012 = vpack.c.b16 %v2990, %v2988
    %v3013 = vpack.c.b16 %v2991, %v2989
    %v3014 = vpack.c.b16 %v2994, %v2992
    %v3015 = vpack.c.b16 %v2995, %v2993
    %v3016 = vpack.c.b16 %v2998, %v2996
    %v3017 = vpack.c.b16 %v2999, %v2997
    %v3018 = vpack.c.b16 %v3002, %v3000
    %v3019 = vpack.c.b16 %v3003, %v3001
    %3036 = vmatprep.subr.bf16.mxu0 %v3005
    %3037 = vmatpush1.bf16.msra.mxu0 %v3004
    %3038 = vmatprep.subr.bf16.mxu0 %v3007
    %3039 = vmatpush1.bf16.msra.mxu0 %v3006
    %3040 = vmatprep.subr.bf16.mxu0 %v3009
    %3041 = vmatpush1.bf16.msra.mxu0 %v3008
    %3042 = vmatprep.subr.bf16.mxu0 %v3011
    %3043 = vmatpush1.bf16.msra.mxu0 %v3010
    %3044 = vmatprep.subr.bf16.mxu0 %v3013
    %3045 = vmatpush1.bf16.msra.mxu0 %v3012
    %3046 = vmatprep.subr.bf16.mxu0 %v3015
    %3047 = vmatpush1.bf16.msra.mxu0 %v3014
    %3048 = vmatprep.subr.bf16.mxu0 %v3017
    %3049 = vmatpush1.bf16.msra.mxu0 %v3016
    %3050 = vmatprep.subr.bf16.mxu0 %v3019
    %3051 = vmatpush1.bf16.msra.mxu0 %v3018
    %3052 = vmatprep.subr.bf16.mxu0 0
    %3053 = vmatpush1.bf16.msra.mxu0 0
    %3054 = vmatprep.subr.bf16.mxu0 0
    %3055 = vmatpush1.bf16.msra.mxu0 0
    %3056 = vmatprep.subr.bf16.mxu0 0
    %3057 = vmatpush1.bf16.msra.mxu0 0
    %3058 = vmatprep.subr.bf16.mxu0 0
    %3059 = vmatpush1.bf16.msra.mxu0 0
    %3060 = vmatprep.subr.bf16.mxu0 0
    %3061 = vmatpush1.bf16.msra.mxu0 0
    %3062 = vmatprep.subr.bf16.mxu0 0
    %3063 = vmatpush1.bf16.msra.mxu0 0
    %3064 = vmatprep.subr.bf16.mxu0 0
    %3065 = vmatpush1.bf16.msra.mxu0 0
    %3066 = vmatprep.subr.bf16.mxu0 0
    %3067 = vmatpush1.bf16.msra.mxu0 0
    %3068 = vmatprep.mubr.bf16.mxu0 0
    %3069 = vmatmul.mubr.bf16.gmra.mrb[0].mxu0 %v2927
    %v3070 = vpop.f32.mrb[0].mxu0
    %v3071 = vadd.f32 %v2949, %v3070
    %v3072 = vpop.f32.mrb[0].mxu0
    %v3073 = vadd.f32 %v2953, %v3072
    %v3074 = vpop.f32.mrb[0].mxu0
    %v3075 = vpop.f32.mrb[0].mxu0
    %3076 = vdwg.mxu0
    %v3077 = vmax.f32 %v3071, 0.0
    %v3078 = vmax.f32 %v3073, 0.0
    %v3079 = vpack.c.bf16 %v3077, %v3077
    %v3080 = vpack.c.bf16 %v3078, %v3078
    %v3081 = vld [vmem:[#allocation6] sm:$0xff]
    %v3082 = vld [vmem:[#allocation6 + $0x8] sm:$0xff]
    %v3083 = vld [vmem:[#allocation6 + $0x10] sm:$0xff]
    %v3084 = vld [vmem:[#allocation6 + $0x18] sm:$0xff]
    %v3085 = vld [vmem:[#allocation6 + $0x20] sm:$0xff]
    %v3086 = vld [vmem:[#allocation6 + $0x28] sm:$0xff]
    %v3087 = vld [vmem:[#allocation6 + $0x30] sm:$0xff]
    %v3088 = vld [vmem:[#allocation6 + $0x38] sm:$0xff]
    %v3089 = vld [vmem:[#allocation6 + $0x40] sm:$0xff]
    %v3090 = vld [vmem:[#allocation6 + $0x48] sm:$0xff]
    %v3091 = vld [vmem:[#allocation6 + $0x50] sm:$0xff]
    %v3092 = vld [vmem:[#allocation6 + $0x58] sm:$0xff]
    %v3093 = vld [vmem:[#allocation6 + $0x60] sm:$0xff]
    %v3094 = vld [vmem:[#allocation6 + $0x68] sm:$0xff]
    %v3095 = vld [vmem:[#allocation6 + $0x70] sm:$0xff]
    %v3096 = vld [vmem:[#allocation6 + $0x78] sm:$0xff]
    %v3097 = vld [vmem:[#allocation6 + $0x80] sm:$0xff]
    %v3098 = vld [vmem:[#allocation6 + $0x88] sm:$0xff]
    %v3099 = vld [vmem:[#allocation6 + $0x90] sm:$0xff]
    %v3100 = vld [vmem:[#allocation6 + $0x98] sm:$0xff]
    %v3101 = vld [vmem:[#allocation6 + $0xa0] sm:$0xff]
    %v3102 = vld [vmem:[#allocation6 + $0xa8] sm:$0xff]
    %v3103 = vld [vmem:[#allocation6 + $0xb0] sm:$0xff]
    %v3104 = vld [vmem:[#allocation6 + $0xb8] sm:$0xff]
    %v3105 = vld [vmem:[#allocation6 + $0xc0] sm:$0xff]
    %v3106 = vld [vmem:[#allocation6 + $0xc8] sm:$0xff]
    %v3107 = vld [vmem:[#allocation6 + $0xd0] sm:$0xff]
    %v3108 = vld [vmem:[#allocation6 + $0xd8] sm:$0xff]
    %v3109 = vld [vmem:[#allocation6 + $0xe0] sm:$0xff]
    %v3110 = vld [vmem:[#allocation6 + $0xe8] sm:$0xff]
    %v3111 = vld [vmem:[#allocation6 + $0xf0] sm:$0xff]
    %v3112 = vld [vmem:[#allocation6 + $0xf8] sm:$0xff]
    %v3113 = vld [vmem:[#allocation6 + $0x100] sm:$0xff]
    %v3114 = vld [vmem:[#allocation6 + $0x108] sm:$0xff]
    %v3115 = vld [vmem:[#allocation6 + $0x110] sm:$0xff]
    %v3116 = vld [vmem:[#allocation6 + $0x118] sm:$0xff]
    %v3117 = vld [vmem:[#allocation6 + $0x120] sm:$0xff]
    %v3118 = vld [vmem:[#allocation6 + $0x128] sm:$0xff]
    %v3119 = vld [vmem:[#allocation6 + $0x130] sm:$0xff]
    %v3120 = vld [vmem:[#allocation6 + $0x138] sm:$0xff]
    %v3121 = vld [vmem:[#allocation6 + $0x140] sm:$0xff]
    %v3122 = vld [vmem:[#allocation6 + $0x148] sm:$0xff]
    %v3123 = vld [vmem:[#allocation6 + $0x150] sm:$0xff]
    %v3124 = vld [vmem:[#allocation6 + $0x158] sm:$0xff]
    %v3125 = vld [vmem:[#allocation6 + $0x160] sm:$0xff]
    %v3126 = vld [vmem:[#allocation6 + $0x168] sm:$0xff]
    %v3127 = vld [vmem:[#allocation6 + $0x170] sm:$0xff]
    %v3128 = vld [vmem:[#allocation6 + $0x178] sm:$0xff]
    %v3129 = vld [vmem:[#allocation6 + $0x180] sm:$0xff]
    %v3130 = vld [vmem:[#allocation6 + $0x188] sm:$0xff]
    %v3131 = vld [vmem:[#allocation6 + $0x190] sm:$0xff]
    %v3132 = vld [vmem:[#allocation6 + $0x198] sm:$0xff]
    %v3133 = vld [vmem:[#allocation6 + $0x1a0] sm:$0xff]
    %v3134 = vld [vmem:[#allocation6 + $0x1a8] sm:$0xff]
    %v3135 = vld [vmem:[#allocation6 + $0x1b0] sm:$0xff]
    %v3136 = vld [vmem:[#allocation6 + $0x1b8] sm:$0xff]
    %v3137 = vld [vmem:[#allocation6 + $0x1c0] sm:$0xff]
    %v3138 = vld [vmem:[#allocation6 + $0x1c8] sm:$0xff]
    %v3139 = vld [vmem:[#allocation6 + $0x1d0] sm:$0xff]
    %v3140 = vld [vmem:[#allocation6 + $0x1d8] sm:$0xff]
    %v3141 = vld [vmem:[#allocation6 + $0x1e0] sm:$0xff]
    %v3142 = vld [vmem:[#allocation6 + $0x1e8] sm:$0xff]
    %v3143 = vld [vmem:[#allocation6 + $0x1f0] sm:$0xff]
    %v3144 = vld [vmem:[#allocation6 + $0x1f8] sm:$0xff]
    %v3145 = vld [vmem:[#allocation13] sm:$0xf]
    %v3147 = vlaneseq
    %v3148 = vshrl.u32 %v3147, 7
    %v3149 = vsub.s32 0, %v3148
    %v3150 = vrot.slane %v3145, %v3149
    %v3151 = vlaneseq
    %v3152 = vshrl.u32 %v3151, 7
    %v3153 = vsub.s32 1, %v3152
    %v3154 = vrot.slane %v3145, %v3153
    %v3155 = vlaneseq
    %v3156 = vshrl.u32 %v3155, 7
    %v3157 = vsub.s32 2, %v3156
    %v3158 = vrot.slane %v3145, %v3157
    %v3159 = vlaneseq
    %v3160 = vshrl.u32 %v3159, 7
    %v3161 = vsub.s32 3, %v3160
    %v3162 = vrot.slane %v3145, %v3161
    %v3231 = vunpack.c.l.b16 %v3081
    %v3232 = vunpack.c.h.b16 %v3081
    %v3233 = vunpack.c.l.b16 %v3082
    %v3234 = vunpack.c.h.b16 %v3082
    %v3235 = vunpack.c.l.b16 %v3083
    %v3236 = vunpack.c.h.b16 %v3083
    %v3237 = vunpack.c.l.b16 %v3084
    %v3238 = vunpack.c.h.b16 %v3084
    %v3239 = vunpack.c.l.b16 %v3085
    %v3240 = vunpack.c.h.b16 %v3085
    %v3241 = vunpack.c.l.b16 %v3086
    %v3242 = vunpack.c.h.b16 %v3086
    %v3243 = vunpack.c.l.b16 %v3087
    %v3244 = vunpack.c.h.b16 %v3087
    %v3245 = vunpack.c.l.b16 %v3088
    %v3246 = vunpack.c.h.b16 %v3088
    %v3247 = vunpack.c.l.b16 %v3089
    %v3248 = vunpack.c.h.b16 %v3089
    %v3249 = vunpack.c.l.b16 %v3090
    %v3250 = vunpack.c.h.b16 %v3090
    %v3251 = vunpack.c.l.b16 %v3091
    %v3252 = vunpack.c.h.b16 %v3091
    %v3253 = vunpack.c.l.b16 %v3092
    %v3254 = vunpack.c.h.b16 %v3092
    %v3255 = vunpack.c.l.b16 %v3093
    %v3256 = vunpack.c.h.b16 %v3093
    %v3257 = vunpack.c.l.b16 %v3094
    %v3258 = vunpack.c.h.b16 %v3094
    %v3259 = vunpack.c.l.b16 %v3095
    %v3260 = vunpack.c.h.b16 %v3095
    %v3261 = vunpack.c.l.b16 %v3096
    %v3262 = vunpack.c.h.b16 %v3096
    %v3263 = vunpack.c.l.b16 %v3097
    %v3264 = vunpack.c.h.b16 %v3097
    %v3265 = vunpack.c.l.b16 %v3098
    %v3266 = vunpack.c.h.b16 %v3098
    %v3267 = vunpack.c.l.b16 %v3099
    %v3268 = vunpack.c.h.b16 %v3099
    %v3269 = vunpack.c.l.b16 %v3100
    %v3270 = vunpack.c.h.b16 %v3100
    %v3271 = vunpack.c.l.b16 %v3101
    %v3272 = vunpack.c.h.b16 %v3101
    %v3273 = vunpack.c.l.b16 %v3102
    %v3274 = vunpack.c.h.b16 %v3102
    %v3275 = vunpack.c.l.b16 %v3103
    %v3276 = vunpack.c.h.b16 %v3103
    %v3277 = vunpack.c.l.b16 %v3104
    %v3278 = vunpack.c.h.b16 %v3104
    %v3279 = vunpack.c.l.b16 %v3105
    %v3280 = vunpack.c.h.b16 %v3105
    %v3281 = vunpack.c.l.b16 %v3106
    %v3282 = vunpack.c.h.b16 %v3106
    %v3283 = vunpack.c.l.b16 %v3107
    %v3284 = vunpack.c.h.b16 %v3107
    %v3285 = vunpack.c.l.b16 %v3108
    %v3286 = vunpack.c.h.b16 %v3108
    %v3287 = vunpack.c.l.b16 %v3109
    %v3288 = vunpack.c.h.b16 %v3109
    %v3289 = vunpack.c.l.b16 %v3110
    %v3290 = vunpack.c.h.b16 %v3110
    %v3291 = vunpack.c.l.b16 %v3111
    %v3292 = vunpack.c.h.b16 %v3111
    %v3293 = vunpack.c.l.b16 %v3112
    %v3294 = vunpack.c.h.b16 %v3112
    %v3295 = vunpack.c.l.b16 %v3113
    %v3296 = vunpack.c.h.b16 %v3113
    %v3297 = vunpack.c.l.b16 %v3114
    %v3298 = vunpack.c.h.b16 %v3114
    %v3299 = vunpack.c.l.b16 %v3115
    %v3300 = vunpack.c.h.b16 %v3115
    %v3301 = vunpack.c.l.b16 %v3116
    %v3302 = vunpack.c.h.b16 %v3116
    %v3303 = vunpack.c.l.b16 %v3117
    %v3304 = vunpack.c.h.b16 %v3117
    %v3305 = vunpack.c.l.b16 %v3118
    %v3306 = vunpack.c.h.b16 %v3118
    %v3307 = vunpack.c.l.b16 %v3119
    %v3308 = vunpack.c.h.b16 %v3119
    %v3309 = vunpack.c.l.b16 %v3120
    %v3310 = vunpack.c.h.b16 %v3120
    %v3311 = vunpack.c.l.b16 %v3121
    %v3312 = vunpack.c.h.b16 %v3121
    %v3313 = vunpack.c.l.b16 %v3122
    %v3314 = vunpack.c.h.b16 %v3122
    %v3315 = vunpack.c.l.b16 %v3123
    %v3316 = vunpack.c.h.b16 %v3123
    %v3317 = vunpack.c.l.b16 %v3124
    %v3318 = vunpack.c.h.b16 %v3124
    %v3319 = vunpack.c.l.b16 %v3125
    %v3320 = vunpack.c.h.b16 %v3125
    %v3321 = vunpack.c.l.b16 %v3126
    %v3322 = vunpack.c.h.b16 %v3126
    %v3323 = vunpack.c.l.b16 %v3127
    %v3324 = vunpack.c.h.b16 %v3127
    %v3325 = vunpack.c.l.b16 %v3128
    %v3326 = vunpack.c.h.b16 %v3128
    %v3327 = vunpack.c.l.b16 %v3129
    %v3328 = vunpack.c.h.b16 %v3129
    %v3329 = vunpack.c.l.b16 %v3130
    %v3330 = vunpack.c.h.b16 %v3130
    %v3331 = vunpack.c.l.b16 %v3131
    %v3332 = vunpack.c.h.b16 %v3131
    %v3333 = vunpack.c.l.b16 %v3132
    %v3334 = vunpack.c.h.b16 %v3132
    %v3335 = vunpack.c.l.b16 %v3133
    %v3336 = vunpack.c.h.b16 %v3133
    %v3337 = vunpack.c.l.b16 %v3134
    %v3338 = vunpack.c.h.b16 %v3134
    %v3339 = vunpack.c.l.b16 %v3135
    %v3340 = vunpack.c.h.b16 %v3135
    %v3341 = vunpack.c.l.b16 %v3136
    %v3342 = vunpack.c.h.b16 %v3136
    %v3343 = vunpack.c.l.b16 %v3137
    %v3344 = vunpack.c.h.b16 %v3137
    %v3345 = vunpack.c.l.b16 %v3138
    %v3346 = vunpack.c.h.b16 %v3138
    %v3347 = vunpack.c.l.b16 %v3139
    %v3348 = vunpack.c.h.b16 %v3139
    %v3349 = vunpack.c.l.b16 %v3140
    %v3350 = vunpack.c.h.b16 %v3140
    %v3351 = vunpack.c.l.b16 %v3141
    %v3352 = vunpack.c.h.b16 %v3141
    %v3353 = vunpack.c.l.b16 %v3142
    %v3354 = vunpack.c.h.b16 %v3142
    %v3355 = vunpack.c.l.b16 %v3143
    %v3356 = vunpack.c.h.b16 %v3143
    %v3357 = vunpack.c.l.b16 %v3144
    %v3358 = vunpack.c.h.b16 %v3144
    %v3359 = vpack.c.b16 %v3235, %v3231
    %v3360 = vpack.c.b16 %v3236, %v3232
    %v3361 = vpack.c.b16 %v3237, %v3233
    %v3362 = vpack.c.b16 %v3238, %v3234
    %v3363 = vpack.c.b16 %v3243, %v3239
    %v3364 = vpack.c.b16 %v3244, %v3240
    %v3365 = vpack.c.b16 %v3245, %v3241
    %v3366 = vpack.c.b16 %v3246, %v3242
    %v3367 = vpack.c.b16 %v3251, %v3247
    %v3368 = vpack.c.b16 %v3252, %v3248
    %v3369 = vpack.c.b16 %v3253, %v3249
    %v3370 = vpack.c.b16 %v3254, %v3250
    %v3371 = vpack.c.b16 %v3259, %v3255
    %v3372 = vpack.c.b16 %v3260, %v3256
    %v3373 = vpack.c.b16 %v3261, %v3257
    %v3374 = vpack.c.b16 %v3262, %v3258
    %v3375 = vpack.c.b16 %v3267, %v3263
    %v3376 = vpack.c.b16 %v3268, %v3264
    %v3377 = vpack.c.b16 %v3269, %v3265
    %v3378 = vpack.c.b16 %v3270, %v3266
    %v3379 = vpack.c.b16 %v3275, %v3271
    %v3380 = vpack.c.b16 %v3276, %v3272
    %v3381 = vpack.c.b16 %v3277, %v3273
    %v3382 = vpack.c.b16 %v3278, %v3274
    %v3383 = vpack.c.b16 %v3283, %v3279
    %v3384 = vpack.c.b16 %v3284, %v3280
    %v3385 = vpack.c.b16 %v3285, %v3281
    %v3386 = vpack.c.b16 %v3286, %v3282
    %v3387 = vpack.c.b16 %v3291, %v3287
    %v3388 = vpack.c.b16 %v3292, %v3288
    %v3389 = vpack.c.b16 %v3293, %v3289
    %v3390 = vpack.c.b16 %v3294, %v3290
    %v3391 = vpack.c.b16 %v3299, %v3295
    %v3392 = vpack.c.b16 %v3300, %v3296
    %v3393 = vpack.c.b16 %v3301, %v3297
    %v3394 = vpack.c.b16 %v3302, %v3298
    %v3395 = vpack.c.b16 %v3307, %v3303
    %v3396 = vpack.c.b16 %v3308, %v3304
    %v3397 = vpack.c.b16 %v3309, %v3305
    %v3398 = vpack.c.b16 %v3310, %v3306
    %v3399 = vpack.c.b16 %v3315, %v3311
    %v3400 = vpack.c.b16 %v3316, %v3312
    %v3401 = vpack.c.b16 %v3317, %v3313
    %v3402 = vpack.c.b16 %v3318, %v3314
    %v3403 = vpack.c.b16 %v3323, %v3319
    %v3404 = vpack.c.b16 %v3324, %v3320
    %v3405 = vpack.c.b16 %v3325, %v3321
    %v3406 = vpack.c.b16 %v3326, %v3322
    %v3407 = vpack.c.b16 %v3331, %v3327
    %v3408 = vpack.c.b16 %v3332, %v3328
    %v3409 = vpack.c.b16 %v3333, %v3329
    %v3410 = vpack.c.b16 %v3334, %v3330
    %v3411 = vpack.c.b16 %v3339, %v3335
    %v3412 = vpack.c.b16 %v3340, %v3336
    %v3413 = vpack.c.b16 %v3341, %v3337
    %v3414 = vpack.c.b16 %v3342, %v3338
    %v3415 = vpack.c.b16 %v3347, %v3343
    %v3416 = vpack.c.b16 %v3348, %v3344
    %v3417 = vpack.c.b16 %v3349, %v3345
    %v3418 = vpack.c.b16 %v3350, %v3346
    %v3419 = vpack.c.b16 %v3355, %v3351
    %v3420 = vpack.c.b16 %v3356, %v3352
    %v3421 = vpack.c.b16 %v3357, %v3353
    %v3422 = vpack.c.b16 %v3358, %v3354
    %3487 = vmatprep.subr.bf16.mxu0 %v3360
    %3488 = vmatpush1.bf16.msra.mxu0 %v3359
    %3489 = vmatprep.subr.bf16.mxu0 %v3364
    %3490 = vmatpush1.bf16.msra.mxu0 %v3363
    %3491 = vmatprep.subr.bf16.mxu0 %v3368
    %3492 = vmatpush1.bf16.msra.mxu0 %v3367
    %3493 = vmatprep.subr.bf16.mxu0 %v3372
    %3494 = vmatpush1.bf16.msra.mxu0 %v3371
    %3495 = vmatprep.subr.bf16.mxu0 %v3376
    %3496 = vmatpush1.bf16.msra.mxu0 %v3375
    %3497 = vmatprep.subr.bf16.mxu0 %v3380
    %3498 = vmatpush1.bf16.msra.mxu0 %v3379
    %3499 = vmatprep.subr.bf16.mxu0 %v3384
    %3500 = vmatpush1.bf16.msra.mxu0 %v3383
    %3501 = vmatprep.subr.bf16.mxu0 %v3388
    %3502 = vmatpush1.bf16.msra.mxu0 %v3387
    %3503 = vmatprep.subr.bf16.mxu0 %v3392
    %3504 = vmatpush1.bf16.msra.mxu0 %v3391
    %3505 = vmatprep.subr.bf16.mxu0 %v3396
    %3506 = vmatpush1.bf16.msra.mxu0 %v3395
    %3507 = vmatprep.subr.bf16.mxu0 %v3400
    %3508 = vmatpush1.bf16.msra.mxu0 %v3399
    %3509 = vmatprep.subr.bf16.mxu0 %v3404
    %3510 = vmatpush1.bf16.msra.mxu0 %v3403
    %3511 = vmatprep.subr.bf16.mxu0 %v3408
    %3512 = vmatpush1.bf16.msra.mxu0 %v3407
    %3513 = vmatprep.subr.bf16.mxu0 %v3412
    %3514 = vmatpush1.bf16.msra.mxu0 %v3411
    %3515 = vmatprep.subr.bf16.mxu0 %v3416
    %3516 = vmatpush1.bf16.msra.mxu0 %v3415
    %3517 = vmatprep.subr.bf16.mxu0 %v3420
    %3518 = vmatpush1.bf16.msra.mxu0 %v3419
    %3519 = vmatprep.mubr.bf16.mxu0 %v3080
    %3520 = vmatmul.mubr.bf16.gmra.mrb[0].mxu0 %v3079
    %v3521 = vpop.f32.mrb[0].mxu0
    %v3522 = vadd.f32 %v3150, %v3521
    %v3523 = vpop.f32.mrb[0].mxu0
    %v3524 = vadd.f32 %v3154, %v3523
    %v3525 = vpop.f32.mrb[0].mxu0
    %v3526 = vpop.f32.mrb[0].mxu0
    %3527 = vdwg.mxu0
    %3528 = vmatprep.subr.bf16.mxu0 %v3362
    %3529 = vmatpush1.bf16.msra.mxu0 %v3361
    %3530 = vmatprep.subr.bf16.mxu0 %v3366
    %3531 = vmatpush1.bf16.msra.mxu0 %v3365
    %3532 = vmatprep.subr.bf16.mxu0 %v3370
    %3533 = vmatpush1.bf16.msra.mxu0 %v3369
    %3534 = vmatprep.subr.bf16.mxu0 %v3374
    %3535 = vmatpush1.bf16.msra.mxu0 %v3373
    %3536 = vmatprep.subr.bf16.mxu0 %v3378
    %3537 = vmatpush1.bf16.msra.mxu0 %v3377
    %3538 = vmatprep.subr.bf16.mxu0 %v3382
    %3539 = vmatpush1.bf16.msra.mxu0 %v3381
    %3540 = vmatprep.subr.bf16.mxu0 %v3386
    %3541 = vmatpush1.bf16.msra.mxu0 %v3385
    %3542 = vmatprep.subr.bf16.mxu0 %v3390
    %3543 = vmatpush1.bf16.msra.mxu0 %v3389
    %3544 = vmatprep.subr.bf16.mxu0 %v3394
    %3545 = vmatpush1.bf16.msra.mxu0 %v3393
    %3546 = vmatprep.subr.bf16.mxu0 %v3398
    %3547 = vmatpush1.bf16.msra.mxu0 %v3397
    %3548 = vmatprep.subr.bf16.mxu0 %v3402
    %3549 = vmatpush1.bf16.msra.mxu0 %v3401
    %3550 = vmatprep.subr.bf16.mxu0 %v3406
    %3551 = vmatpush1.bf16.msra.mxu0 %v3405
    %3552 = vmatprep.subr.bf16.mxu0 %v3410
    %3553 = vmatpush1.bf16.msra.mxu0 %v3409
    %3554 = vmatprep.subr.bf16.mxu0 %v3414
    %3555 = vmatpush1.bf16.msra.mxu0 %v3413
    %3556 = vmatprep.subr.bf16.mxu0 %v3418
    %3557 = vmatpush1.bf16.msra.mxu0 %v3417
    %3558 = vmatprep.subr.bf16.mxu0 %v3422
    %3559 = vmatpush1.bf16.msra.mxu0 %v3421
    %3560 = vmatprep.mubr.bf16.mxu0 %v3080
    %3561 = vmatmul.mubr.bf16.gmra.mrb[0].mxu0 %v3079
    %v3562 = vpop.f32.mrb[0].mxu0
    %v3563 = vadd.f32 %v3158, %v3562
    %v3564 = vpop.f32.mrb[0].mxu0
    %v3565 = vadd.f32 %v3162, %v3564
    %v3566 = vpop.f32.mrb[0].mxu0
    %v3567 = vpop.f32.mrb[0].mxu0
    %3568 = vdwg.mxu0
    %v3569 = vmax.f32 %v3522, 0.0
    %v3570 = vmax.f32 %v3524, 0.0
    %v3571 = vmax.f32 %v3563, 0.0
    %v3572 = vmax.f32 %v3565, 0.0
    %v3573 = vpack.c.bf16 %v3569, %v3569
    %v3574 = vpack.c.bf16 %v3570, %v3570
    %v3575 = vpack.c.bf16 %v3571, %v3571
    %v3576 = vpack.c.bf16 %v3572, %v3572
    %v3577 = vld [vmem:[#allocation7] sm:$0xff]
    %v3578 = vld [vmem:[#allocation7 + $0x8] sm:$0xff]
    %v3579 = vld [vmem:[#allocation7 + $0x10] sm:$0xff]
    %v3580 = vld [vmem:[#allocation7 + $0x18] sm:$0xff]
    %v3581 = vld [vmem:[#allocation7 + $0x20] sm:$0xff]
    %v3582 = vld [vmem:[#allocation7 + $0x28] sm:$0xff]
    %v3583 = vld [vmem:[#allocation7 + $0x30] sm:$0xff]
    %v3584 = vld [vmem:[#allocation7 + $0x38] sm:$0xff]
    %v3585 = vld [vmem:[#allocation7 + $0x40] sm:$0xff]
    %v3586 = vld [vmem:[#allocation7 + $0x48] sm:$0xff]
    %v3587 = vld [vmem:[#allocation7 + $0x50] sm:$0xff]
    %v3588 = vld [vmem:[#allocation7 + $0x58] sm:$0xff]
    %v3589 = vld [vmem:[#allocation7 + $0x60] sm:$0xff]
    %v3590 = vld [vmem:[#allocation7 + $0x68] sm:$0xff]
    %v3591 = vld [vmem:[#allocation7 + $0x70] sm:$0xff]
    %v3592 = vld [vmem:[#allocation7 + $0x78] sm:$0xff]
    %v3593 = vld [vmem:[#allocation7 + $0x80] sm:$0xff]
    %v3594 = vld [vmem:[#allocation7 + $0x88] sm:$0xff]
    %v3595 = vld [vmem:[#allocation7 + $0x90] sm:$0xff]
    %v3596 = vld [vmem:[#allocation7 + $0x98] sm:$0xff]
    %v3597 = vld [vmem:[#allocation7 + $0xa0] sm:$0xff]
    %v3598 = vld [vmem:[#allocation7 + $0xa8] sm:$0xff]
    %v3599 = vld [vmem:[#allocation7 + $0xb0] sm:$0xff]
    %v3600 = vld [vmem:[#allocation7 + $0xb8] sm:$0xff]
    %v3601 = vld [vmem:[#allocation7 + $0xc0] sm:$0xff]
    %v3602 = vld [vmem:[#allocation7 + $0xc8] sm:$0xff]
    %v3603 = vld [vmem:[#allocation7 + $0xd0] sm:$0xff]
    %v3604 = vld [vmem:[#allocation7 + $0xd8] sm:$0xff]
    %v3605 = vld [vmem:[#allocation7 + $0xe0] sm:$0xff]
    %v3606 = vld [vmem:[#allocation7 + $0xe8] sm:$0xff]
    %v3607 = vld [vmem:[#allocation7 + $0xf0] sm:$0xff]
    %v3608 = vld [vmem:[#allocation7 + $0xf8] sm:$0xff]
    %v3609 = vld [vmem:[#allocation7 + $0x100] sm:$0xff]
    %v3610 = vld [vmem:[#allocation7 + $0x108] sm:$0xff]
    %v3611 = vld [vmem:[#allocation7 + $0x110] sm:$0xff]
    %v3612 = vld [vmem:[#allocation7 + $0x118] sm:$0xff]
    %v3613 = vld [vmem:[#allocation7 + $0x120] sm:$0xff]
    %v3614 = vld [vmem:[#allocation7 + $0x128] sm:$0xff]
    %v3615 = vld [vmem:[#allocation7 + $0x130] sm:$0xff]
    %v3616 = vld [vmem:[#allocation7 + $0x138] sm:$0xff]
    %v3617 = vld [vmem:[#allocation7 + $0x140] sm:$0xff]
    %v3618 = vld [vmem:[#allocation7 + $0x148] sm:$0xff]
    %v3619 = vld [vmem:[#allocation7 + $0x150] sm:$0xff]
    %v3620 = vld [vmem:[#allocation7 + $0x158] sm:$0xff]
    %v3621 = vld [vmem:[#allocation7 + $0x160] sm:$0xff]
    %v3622 = vld [vmem:[#allocation7 + $0x168] sm:$0xff]
    %v3623 = vld [vmem:[#allocation7 + $0x170] sm:$0xff]
    %v3624 = vld [vmem:[#allocation7 + $0x178] sm:$0xff]
    %v3625 = vld [vmem:[#allocation7 + $0x180] sm:$0xff]
    %v3626 = vld [vmem:[#allocation7 + $0x188] sm:$0xff]
    %v3627 = vld [vmem:[#allocation7 + $0x190] sm:$0xff]
    %v3628 = vld [vmem:[#allocation7 + $0x198] sm:$0xff]
    %v3629 = vld [vmem:[#allocation7 + $0x1a0] sm:$0xff]
    %v3630 = vld [vmem:[#allocation7 + $0x1a8] sm:$0xff]
    %v3631 = vld [vmem:[#allocation7 + $0x1b0] sm:$0xff]
    %v3632 = vld [vmem:[#allocation7 + $0x1b8] sm:$0xff]
    %v3633 = vld [vmem:[#allocation7 + $0x1c0] sm:$0xff]
    %v3634 = vld [vmem:[#allocation7 + $0x1c8] sm:$0xff]
    %v3635 = vld [vmem:[#allocation7 + $0x1d0] sm:$0xff]
    %v3636 = vld [vmem:[#allocation7 + $0x1d8] sm:$0xff]
    %v3637 = vld [vmem:[#allocation7 + $0x1e0] sm:$0xff]
    %v3638 = vld [vmem:[#allocation7 + $0x1e8] sm:$0xff]
    %v3639 = vld [vmem:[#allocation7 + $0x1f0] sm:$0xff]
    %v3640 = vld [vmem:[#allocation7 + $0x1f8] sm:$0xff]
    %v3641 = vld [vmem:[#allocation7 + $0x200] sm:$0xff]
    %v3642 = vld [vmem:[#allocation7 + $0x208] sm:$0xff]
    %v3643 = vld [vmem:[#allocation7 + $0x210] sm:$0xff]
    %v3644 = vld [vmem:[#allocation7 + $0x218] sm:$0xff]
    %v3645 = vld [vmem:[#allocation7 + $0x220] sm:$0xff]
    %v3646 = vld [vmem:[#allocation7 + $0x228] sm:$0xff]
    %v3647 = vld [vmem:[#allocation7 + $0x230] sm:$0xff]
    %v3648 = vld [vmem:[#allocation7 + $0x238] sm:$0xff]
    %v3649 = vld [vmem:[#allocation7 + $0x240] sm:$0xff]
    %v3650 = vld [vmem:[#allocation7 + $0x248] sm:$0xff]
    %v3651 = vld [vmem:[#allocation7 + $0x250] sm:$0xff]
    %v3652 = vld [vmem:[#allocation7 + $0x258] sm:$0xff]
    %v3653 = vld [vmem:[#allocation7 + $0x260] sm:$0xff]
    %v3654 = vld [vmem:[#allocation7 + $0x268] sm:$0xff]
    %v3655 = vld [vmem:[#allocation7 + $0x270] sm:$0xff]
    %v3656 = vld [vmem:[#allocation7 + $0x278] sm:$0xff]
    %v3657 = vld [vmem:[#allocation7 + $0x280] sm:$0xff]
    %v3658 = vld [vmem:[#allocation7 + $0x288] sm:$0xff]
    %v3659 = vld [vmem:[#allocation7 + $0x290] sm:$0xff]
    %v3660 = vld [vmem:[#allocation7 + $0x298] sm:$0xff]
    %v3661 = vld [vmem:[#allocation7 + $0x2a0] sm:$0xff]
    %v3662 = vld [vmem:[#allocation7 + $0x2a8] sm:$0xff]
    %v3663 = vld [vmem:[#allocation7 + $0x2b0] sm:$0xff]
    %v3664 = vld [vmem:[#allocation7 + $0x2b8] sm:$0xff]
    %v3665 = vld [vmem:[#allocation7 + $0x2c0] sm:$0xff]
    %v3666 = vld [vmem:[#allocation7 + $0x2c8] sm:$0xff]
    %v3667 = vld [vmem:[#allocation7 + $0x2d0] sm:$0xff]
    %v3668 = vld [vmem:[#allocation7 + $0x2d8] sm:$0xff]
    %v3669 = vld [vmem:[#allocation7 + $0x2e0] sm:$0xff]
    %v3670 = vld [vmem:[#allocation7 + $0x2e8] sm:$0xff]
    %v3671 = vld [vmem:[#allocation7 + $0x2f0] sm:$0xff]
    %v3672 = vld [vmem:[#allocation7 + $0x2f8] sm:$0xff]
    %v3673 = vld [vmem:[#allocation7 + $0x300] sm:$0xff]
    %v3674 = vld [vmem:[#allocation7 + $0x308] sm:$0xff]
    %v3675 = vld [vmem:[#allocation7 + $0x310] sm:$0xff]
    %v3676 = vld [vmem:[#allocation7 + $0x318] sm:$0xff]
    %v3677 = vld [vmem:[#allocation7 + $0x320] sm:$0xff]
    %v3678 = vld [vmem:[#allocation7 + $0x328] sm:$0xff]
    %v3679 = vld [vmem:[#allocation7 + $0x330] sm:$0xff]
    %v3680 = vld [vmem:[#allocation7 + $0x338] sm:$0xff]
    %v3681 = vld [vmem:[#allocation7 + $0x340] sm:$0xff]
    %v3682 = vld [vmem:[#allocation7 + $0x348] sm:$0xff]
    %v3683 = vld [vmem:[#allocation7 + $0x350] sm:$0xff]
    %v3684 = vld [vmem:[#allocation7 + $0x358] sm:$0xff]
    %v3685 = vld [vmem:[#allocation7 + $0x360] sm:$0xff]
    %v3686 = vld [vmem:[#allocation7 + $0x368] sm:$0xff]
    %v3687 = vld [vmem:[#allocation7 + $0x370] sm:$0xff]
    %v3688 = vld [vmem:[#allocation7 + $0x378] sm:$0xff]
    %v3689 = vld [vmem:[#allocation7 + $0x380] sm:$0xff]
    %v3690 = vld [vmem:[#allocation7 + $0x388] sm:$0xff]
    %v3691 = vld [vmem:[#allocation7 + $0x390] sm:$0xff]
    %v3692 = vld [vmem:[#allocation7 + $0x398] sm:$0xff]
    %v3693 = vld [vmem:[#allocation7 + $0x3a0] sm:$0xff]
    %v3694 = vld [vmem:[#allocation7 + $0x3a8] sm:$0xff]
    %v3695 = vld [vmem:[#allocation7 + $0x3b0] sm:$0xff]
    %v3696 = vld [vmem:[#allocation7 + $0x3b8] sm:$0xff]
    %v3697 = vld [vmem:[#allocation7 + $0x3c0] sm:$0xff]
    %v3698 = vld [vmem:[#allocation7 + $0x3c8] sm:$0xff]
    %v3699 = vld [vmem:[#allocation7 + $0x3d0] sm:$0xff]
    %v3700 = vld [vmem:[#allocation7 + $0x3d8] sm:$0xff]
    %v3701 = vld [vmem:[#allocation7 + $0x3e0] sm:$0xff]
    %v3702 = vld [vmem:[#allocation7 + $0x3e8] sm:$0xff]
    %v3703 = vld [vmem:[#allocation7 + $0x3f0] sm:$0xff]
    %v3704 = vld [vmem:[#allocation7 + $0x3f8] sm:$0xff]
    %v3705 = vld [vmem:[#allocation7 + $0x400] sm:$0xff]
    %v3706 = vld [vmem:[#allocation7 + $0x408] sm:$0xff]
    %v3707 = vld [vmem:[#allocation7 + $0x410] sm:$0xff]
    %v3708 = vld [vmem:[#allocation7 + $0x418] sm:$0xff]
    %v3709 = vld [vmem:[#allocation7 + $0x420] sm:$0xff]
    %v3710 = vld [vmem:[#allocation7 + $0x428] sm:$0xff]
    %v3711 = vld [vmem:[#allocation7 + $0x430] sm:$0xff]
    %v3712 = vld [vmem:[#allocation7 + $0x438] sm:$0xff]
    %v3713 = vld [vmem:[#allocation7 + $0x440] sm:$0xff]
    %v3714 = vld [vmem:[#allocation7 + $0x448] sm:$0xff]
    %v3715 = vld [vmem:[#allocation7 + $0x450] sm:$0xff]
    %v3716 = vld [vmem:[#allocation7 + $0x458] sm:$0xff]
    %v3717 = vld [vmem:[#allocation7 + $0x460] sm:$0xff]
    %v3718 = vld [vmem:[#allocation7 + $0x468] sm:$0xff]
    %v3719 = vld [vmem:[#allocation7 + $0x470] sm:$0xff]
    %v3720 = vld [vmem:[#allocation7 + $0x478] sm:$0xff]
    %v3721 = vld [vmem:[#allocation7 + $0x480] sm:$0xff]
    %v3722 = vld [vmem:[#allocation7 + $0x488] sm:$0xff]
    %v3723 = vld [vmem:[#allocation7 + $0x490] sm:$0xff]
    %v3724 = vld [vmem:[#allocation7 + $0x498] sm:$0xff]
    %v3725 = vld [vmem:[#allocation7 + $0x4a0] sm:$0xff]
    %v3726 = vld [vmem:[#allocation7 + $0x4a8] sm:$0xff]
    %v3727 = vld [vmem:[#allocation7 + $0x4b0] sm:$0xff]
    %v3728 = vld [vmem:[#allocation7 + $0x4b8] sm:$0xff]
    %v3729 = vld [vmem:[#allocation7 + $0x4c0] sm:$0xff]
    %v3730 = vld [vmem:[#allocation7 + $0x4c8] sm:$0xff]
    %v3731 = vld [vmem:[#allocation7 + $0x4d0] sm:$0xff]
    %v3732 = vld [vmem:[#allocation7 + $0x4d8] sm:$0xff]
    %v3733 = vld [vmem:[#allocation7 + $0x4e0] sm:$0xff]
    %v3734 = vld [vmem:[#allocation7 + $0x4e8] sm:$0xff]
    %v3735 = vld [vmem:[#allocation7 + $0x4f0] sm:$0xff]
    %v3736 = vld [vmem:[#allocation7 + $0x4f8] sm:$0xff]
    %v3737 = vld [vmem:[#allocation7 + $0x500] sm:$0xff]
    %v3738 = vld [vmem:[#allocation7 + $0x508] sm:$0xff]
    %v3739 = vld [vmem:[#allocation7 + $0x510] sm:$0xff]
    %v3740 = vld [vmem:[#allocation7 + $0x518] sm:$0xff]
    %v3741 = vld [vmem:[#allocation7 + $0x520] sm:$0xff]
    %v3742 = vld [vmem:[#allocation7 + $0x528] sm:$0xff]
    %v3743 = vld [vmem:[#allocation7 + $0x530] sm:$0xff]
    %v3744 = vld [vmem:[#allocation7 + $0x538] sm:$0xff]
    %v3745 = vld [vmem:[#allocation7 + $0x540] sm:$0xff]
    %v3746 = vld [vmem:[#allocation7 + $0x548] sm:$0xff]
    %v3747 = vld [vmem:[#allocation7 + $0x550] sm:$0xff]
    %v3748 = vld [vmem:[#allocation7 + $0x558] sm:$0xff]
    %v3749 = vld [vmem:[#allocation7 + $0x560] sm:$0xff]
    %v3750 = vld [vmem:[#allocation7 + $0x568] sm:$0xff]
    %v3751 = vld [vmem:[#allocation7 + $0x570] sm:$0xff]
    %v3752 = vld [vmem:[#allocation7 + $0x578] sm:$0xff]
    %v3753 = vld [vmem:[#allocation7 + $0x580] sm:$0xff]
    %v3754 = vld [vmem:[#allocation7 + $0x588] sm:$0xff]
    %v3755 = vld [vmem:[#allocation7 + $0x590] sm:$0xff]
    %v3756 = vld [vmem:[#allocation7 + $0x598] sm:$0xff]
    %v3757 = vld [vmem:[#allocation7 + $0x5a0] sm:$0xff]
    %v3758 = vld [vmem:[#allocation7 + $0x5a8] sm:$0xff]
    %v3759 = vld [vmem:[#allocation7 + $0x5b0] sm:$0xff]
    %v3760 = vld [vmem:[#allocation7 + $0x5b8] sm:$0xff]
    %v3761 = vld [vmem:[#allocation7 + $0x5c0] sm:$0xff]
    %v3762 = vld [vmem:[#allocation7 + $0x5c8] sm:$0xff]
    %v3763 = vld [vmem:[#allocation7 + $0x5d0] sm:$0xff]
    %v3764 = vld [vmem:[#allocation7 + $0x5d8] sm:$0xff]
    %v3765 = vld [vmem:[#allocation7 + $0x5e0] sm:$0xff]
    %v3766 = vld [vmem:[#allocation7 + $0x5e8] sm:$0xff]
    %v3767 = vld [vmem:[#allocation7 + $0x5f0] sm:$0xff]
    %v3768 = vld [vmem:[#allocation7 + $0x5f8] sm:$0xff]
    %v3769 = vld [vmem:[#allocation7 + $0x600] sm:$0xff]
    %v3770 = vld [vmem:[#allocation7 + $0x608] sm:$0xff]
    %v3771 = vld [vmem:[#allocation7 + $0x610] sm:$0xff]
    %v3772 = vld [vmem:[#allocation7 + $0x618] sm:$0xff]
    %v3773 = vld [vmem:[#allocation7 + $0x620] sm:$0xff]
    %v3774 = vld [vmem:[#allocation7 + $0x628] sm:$0xff]
    %v3775 = vld [vmem:[#allocation7 + $0x630] sm:$0xff]
    %v3776 = vld [vmem:[#allocation7 + $0x638] sm:$0xff]
    %v3777 = vld [vmem:[#allocation7 + $0x640] sm:$0xff]
    %v3778 = vld [vmem:[#allocation7 + $0x648] sm:$0xff]
    %v3779 = vld [vmem:[#allocation7 + $0x650] sm:$0xff]
    %v3780 = vld [vmem:[#allocation7 + $0x658] sm:$0xff]
    %v3781 = vld [vmem:[#allocation7 + $0x660] sm:$0xff]
    %v3782 = vld [vmem:[#allocation7 + $0x668] sm:$0xff]
    %v3783 = vld [vmem:[#allocation7 + $0x670] sm:$0xff]
    %v3784 = vld [vmem:[#allocation7 + $0x678] sm:$0xff]
    %v3785 = vld [vmem:[#allocation7 + $0x680] sm:$0xff]
    %v3786 = vld [vmem:[#allocation7 + $0x688] sm:$0xff]
    %v3787 = vld [vmem:[#allocation7 + $0x690] sm:$0xff]
    %v3788 = vld [vmem:[#allocation7 + $0x698] sm:$0xff]
    %v3789 = vld [vmem:[#allocation7 + $0x6a0] sm:$0xff]
    %v3790 = vld [vmem:[#allocation7 + $0x6a8] sm:$0xff]
    %v3791 = vld [vmem:[#allocation7 + $0x6b0] sm:$0xff]
    %v3792 = vld [vmem:[#allocation7 + $0x6b8] sm:$0xff]
    %v3793 = vld [vmem:[#allocation7 + $0x6c0] sm:$0xff]
    %v3794 = vld [vmem:[#allocation7 + $0x6c8] sm:$0xff]
    %v3795 = vld [vmem:[#allocation7 + $0x6d0] sm:$0xff]
    %v3796 = vld [vmem:[#allocation7 + $0x6d8] sm:$0xff]
    %v3797 = vld [vmem:[#allocation7 + $0x6e0] sm:$0xff]
    %v3798 = vld [vmem:[#allocation7 + $0x6e8] sm:$0xff]
    %v3799 = vld [vmem:[#allocation7 + $0x6f0] sm:$0xff]
    %v3800 = vld [vmem:[#allocation7 + $0x6f8] sm:$0xff]
    %v3801 = vld [vmem:[#allocation7 + $0x700] sm:$0xff]
    %v3802 = vld [vmem:[#allocation7 + $0x708] sm:$0xff]
    %v3803 = vld [vmem:[#allocation7 + $0x710] sm:$0xff]
    %v3804 = vld [vmem:[#allocation7 + $0x718] sm:$0xff]
    %v3805 = vld [vmem:[#allocation7 + $0x720] sm:$0xff]
    %v3806 = vld [vmem:[#allocation7 + $0x728] sm:$0xff]
    %v3807 = vld [vmem:[#allocation7 + $0x730] sm:$0xff]
    %v3808 = vld [vmem:[#allocation7 + $0x738] sm:$0xff]
    %v3809 = vld [vmem:[#allocation7 + $0x740] sm:$0xff]
    %v3810 = vld [vmem:[#allocation7 + $0x748] sm:$0xff]
    %v3811 = vld [vmem:[#allocation7 + $0x750] sm:$0xff]
    %v3812 = vld [vmem:[#allocation7 + $0x758] sm:$0xff]
    %v3813 = vld [vmem:[#allocation7 + $0x760] sm:$0xff]
    %v3814 = vld [vmem:[#allocation7 + $0x768] sm:$0xff]
    %v3815 = vld [vmem:[#allocation7 + $0x770] sm:$0xff]
    %v3816 = vld [vmem:[#allocation7 + $0x778] sm:$0xff]
    %v3817 = vld [vmem:[#allocation7 + $0x780] sm:$0xff]
    %v3818 = vld [vmem:[#allocation7 + $0x788] sm:$0xff]
    %v3819 = vld [vmem:[#allocation7 + $0x790] sm:$0xff]
    %v3820 = vld [vmem:[#allocation7 + $0x798] sm:$0xff]
    %v3821 = vld [vmem:[#allocation7 + $0x7a0] sm:$0xff]
    %v3822 = vld [vmem:[#allocation7 + $0x7a8] sm:$0xff]
    %v3823 = vld [vmem:[#allocation7 + $0x7b0] sm:$0xff]
    %v3824 = vld [vmem:[#allocation7 + $0x7b8] sm:$0xff]
    %v3825 = vld [vmem:[#allocation7 + $0x7c0] sm:$0xff]
    %v3826 = vld [vmem:[#allocation7 + $0x7c8] sm:$0xff]
    %v3827 = vld [vmem:[#allocation7 + $0x7d0] sm:$0xff]
    %v3828 = vld [vmem:[#allocation7 + $0x7d8] sm:$0xff]
    %v3829 = vld [vmem:[#allocation7 + $0x7e0] sm:$0xff]
    %v3830 = vld [vmem:[#allocation7 + $0x7e8] sm:$0xff]
    %v3831 = vld [vmem:[#allocation7 + $0x7f0] sm:$0xff]
    %v3832 = vld [vmem:[#allocation7 + $0x7f8] sm:$0xff]
    %v3833 = vld [vmem:[#allocation15] sm:$0xff]
    %v3835 = vlaneseq
    %v3836 = vshrl.u32 %v3835, 7
    %v3837 = vsub.s32 0, %v3836
    %v3838 = vrot.slane %v3833, %v3837
    %v3839 = vlaneseq
    %v3840 = vshrl.u32 %v3839, 7
    %v3841 = vsub.s32 1, %v3840
    %v3842 = vrot.slane %v3833, %v3841
    %v3843 = vlaneseq
    %v3844 = vshrl.u32 %v3843, 7
    %v3845 = vsub.s32 2, %v3844
    %v3846 = vrot.slane %v3833, %v3845
    %v3847 = vlaneseq
    %v3848 = vshrl.u32 %v3847, 7
    %v3849 = vsub.s32 3, %v3848
    %v3850 = vrot.slane %v3833, %v3849
    %v3851 = vlaneseq
    %v3852 = vshrl.u32 %v3851, 7
    %v3853 = vsub.s32 4, %v3852
    %v3854 = vrot.slane %v3833, %v3853
    %v3855 = vlaneseq
    %v3856 = vshrl.u32 %v3855, 7
    %v3857 = vsub.s32 5, %v3856
    %v3858 = vrot.slane %v3833, %v3857
    %v3859 = vlaneseq
    %v3860 = vshrl.u32 %v3859, 7
    %v3861 = vsub.s32 6, %v3860
    %v3862 = vrot.slane %v3833, %v3861
    %v3863 = vlaneseq
    %v3864 = vshrl.u32 %v3863, 7
    %v3865 = vsub.s32 7, %v3864
    %v3866 = vrot.slane %v3833, %v3865
    %v4131 = vunpack.c.l.b16 %v3577
    %v4132 = vunpack.c.h.b16 %v3577
    %v4133 = vunpack.c.l.b16 %v3578
    %v4134 = vunpack.c.h.b16 %v3578
    %v4135 = vunpack.c.l.b16 %v3579
    %v4136 = vunpack.c.h.b16 %v3579
    %v4137 = vunpack.c.l.b16 %v3580
    %v4138 = vunpack.c.h.b16 %v3580
    %v4139 = vunpack.c.l.b16 %v3581
    %v4140 = vunpack.c.h.b16 %v3581
    %v4141 = vunpack.c.l.b16 %v3582
    %v4142 = vunpack.c.h.b16 %v3582
    %v4143 = vunpack.c.l.b16 %v3583
    %v4144 = vunpack.c.h.b16 %v3583
    %v4145 = vunpack.c.l.b16 %v3584
    %v4146 = vunpack.c.h.b16 %v3584
    %v4147 = vunpack.c.l.b16 %v3585
    %v4148 = vunpack.c.h.b16 %v3585
    %v4149 = vunpack.c.l.b16 %v3586
    %v4150 = vunpack.c.h.b16 %v3586
    %v4151 = vunpack.c.l.b16 %v3587
    %v4152 = vunpack.c.h.b16 %v3587
    %v4153 = vunpack.c.l.b16 %v3588
    %v4154 = vunpack.c.h.b16 %v3588
    %v4155 = vunpack.c.l.b16 %v3589
    %v4156 = vunpack.c.h.b16 %v3589
    %v4157 = vunpack.c.l.b16 %v3590
    %v4158 = vunpack.c.h.b16 %v3590
    %v4159 = vunpack.c.l.b16 %v3591
    %v4160 = vunpack.c.h.b16 %v3591
    %v4161 = vunpack.c.l.b16 %v3592
    %v4162 = vunpack.c.h.b16 %v3592
    %v4163 = vunpack.c.l.b16 %v3593
    %v4164 = vunpack.c.h.b16 %v3593
    %v4165 = vunpack.c.l.b16 %v3594
    %v4166 = vunpack.c.h.b16 %v3594
    %v4167 = vunpack.c.l.b16 %v3595
    %v4168 = vunpack.c.h.b16 %v3595
    %v4169 = vunpack.c.l.b16 %v3596
    %v4170 = vunpack.c.h.b16 %v3596
    %v4171 = vunpack.c.l.b16 %v3597
    %v4172 = vunpack.c.h.b16 %v3597
    %v4173 = vunpack.c.l.b16 %v3598
    %v4174 = vunpack.c.h.b16 %v3598
    %v4175 = vunpack.c.l.b16 %v3599
    %v4176 = vunpack.c.h.b16 %v3599
    %v4177 = vunpack.c.l.b16 %v3600
    %v4178 = vunpack.c.h.b16 %v3600
    %v4179 = vunpack.c.l.b16 %v3601
    %v4180 = vunpack.c.h.b16 %v3601
    %v4181 = vunpack.c.l.b16 %v3602
    %v4182 = vunpack.c.h.b16 %v3602
    %v4183 = vunpack.c.l.b16 %v3603
    %v4184 = vunpack.c.h.b16 %v3603
    %v4185 = vunpack.c.l.b16 %v3604
    %v4186 = vunpack.c.h.b16 %v3604
    %v4187 = vunpack.c.l.b16 %v3605
    %v4188 = vunpack.c.h.b16 %v3605
    %v4189 = vunpack.c.l.b16 %v3606
    %v4190 = vunpack.c.h.b16 %v3606
    %v4191 = vunpack.c.l.b16 %v3607
    %v4192 = vunpack.c.h.b16 %v3607
    %v4193 = vunpack.c.l.b16 %v3608
    %v4194 = vunpack.c.h.b16 %v3608
    %v4195 = vunpack.c.l.b16 %v3609
    %v4196 = vunpack.c.h.b16 %v3609
    %v4197 = vunpack.c.l.b16 %v3610
    %v4198 = vunpack.c.h.b16 %v3610
    %v4199 = vunpack.c.l.b16 %v3611
    %v4200 = vunpack.c.h.b16 %v3611
    %v4201 = vunpack.c.l.b16 %v3612
    %v4202 = vunpack.c.h.b16 %v3612
    %v4203 = vunpack.c.l.b16 %v3613
    %v4204 = vunpack.c.h.b16 %v3613
    %v4205 = vunpack.c.l.b16 %v3614
    %v4206 = vunpack.c.h.b16 %v3614
    %v4207 = vunpack.c.l.b16 %v3615
    %v4208 = vunpack.c.h.b16 %v3615
    %v4209 = vunpack.c.l.b16 %v3616
    %v4210 = vunpack.c.h.b16 %v3616
    %v4211 = vunpack.c.l.b16 %v3617
    %v4212 = vunpack.c.h.b16 %v3617
    %v4213 = vunpack.c.l.b16 %v3618
    %v4214 = vunpack.c.h.b16 %v3618
    %v4215 = vunpack.c.l.b16 %v3619
    %v4216 = vunpack.c.h.b16 %v3619
    %v4217 = vunpack.c.l.b16 %v3620
    %v4218 = vunpack.c.h.b16 %v3620
    %v4219 = vunpack.c.l.b16 %v3621
    %v4220 = vunpack.c.h.b16 %v3621
    %v4221 = vunpack.c.l.b16 %v3622
    %v4222 = vunpack.c.h.b16 %v3622
    %v4223 = vunpack.c.l.b16 %v3623
    %v4224 = vunpack.c.h.b16 %v3623
    %v4225 = vunpack.c.l.b16 %v3624
    %v4226 = vunpack.c.h.b16 %v3624
    %v4227 = vunpack.c.l.b16 %v3625
    %v4228 = vunpack.c.h.b16 %v3625
    %v4229 = vunpack.c.l.b16 %v3626
    %v4230 = vunpack.c.h.b16 %v3626
    %v4231 = vunpack.c.l.b16 %v3627
    %v4232 = vunpack.c.h.b16 %v3627
    %v4233 = vunpack.c.l.b16 %v3628
    %v4234 = vunpack.c.h.b16 %v3628
    %v4235 = vunpack.c.l.b16 %v3629
    %v4236 = vunpack.c.h.b16 %v3629
    %v4237 = vunpack.c.l.b16 %v3630
    %v4238 = vunpack.c.h.b16 %v3630
    %v4239 = vunpack.c.l.b16 %v3631
    %v4240 = vunpack.c.h.b16 %v3631
    %v4241 = vunpack.c.l.b16 %v3632
    %v4242 = vunpack.c.h.b16 %v3632
    %v4243 = vunpack.c.l.b16 %v3633
    %v4244 = vunpack.c.h.b16 %v3633
    %v4245 = vunpack.c.l.b16 %v3634
    %v4246 = vunpack.c.h.b16 %v3634
    %v4247 = vunpack.c.l.b16 %v3635
    %v4248 = vunpack.c.h.b16 %v3635
    %v4249 = vunpack.c.l.b16 %v3636
    %v4250 = vunpack.c.h.b16 %v3636
    %v4251 = vunpack.c.l.b16 %v3637
    %v4252 = vunpack.c.h.b16 %v3637
    %v4253 = vunpack.c.l.b16 %v3638
    %v4254 = vunpack.c.h.b16 %v3638
    %v4255 = vunpack.c.l.b16 %v3639
    %v4256 = vunpack.c.h.b16 %v3639
    %v4257 = vunpack.c.l.b16 %v3640
    %v4258 = vunpack.c.h.b16 %v3640
    %v4259 = vunpack.c.l.b16 %v3641
    %v4260 = vunpack.c.h.b16 %v3641
    %v4261 = vunpack.c.l.b16 %v3642
    %v4262 = vunpack.c.h.b16 %v3642
    %v4263 = vunpack.c.l.b16 %v3643
    %v4264 = vunpack.c.h.b16 %v3643
    %v4265 = vunpack.c.l.b16 %v3644
    %v4266 = vunpack.c.h.b16 %v3644
    %v4267 = vunpack.c.l.b16 %v3645
    %v4268 = vunpack.c.h.b16 %v3645
    %v4269 = vunpack.c.l.b16 %v3646
    %v4270 = vunpack.c.h.b16 %v3646
    %v4271 = vunpack.c.l.b16 %v3647
    %v4272 = vunpack.c.h.b16 %v3647
    %v4273 = vunpack.c.l.b16 %v3648
    %v4274 = vunpack.c.h.b16 %v3648
    %v4275 = vunpack.c.l.b16 %v3649
    %v4276 = vunpack.c.h.b16 %v3649
    %v4277 = vunpack.c.l.b16 %v3650
    %v4278 = vunpack.c.h.b16 %v3650
    %v4279 = vunpack.c.l.b16 %v3651
    %v4280 = vunpack.c.h.b16 %v3651
    %v4281 = vunpack.c.l.b16 %v3652
    %v4282 = vunpack.c.h.b16 %v3652
    %v4283 = vunpack.c.l.b16 %v3653
    %v4284 = vunpack.c.h.b16 %v3653
    %v4285 = vunpack.c.l.b16 %v3654
    %v4286 = vunpack.c.h.b16 %v3654
    %v4287 = vunpack.c.l.b16 %v3655
    %v4288 = vunpack.c.h.b16 %v3655
    %v4289 = vunpack.c.l.b16 %v3656
    %v4290 = vunpack.c.h.b16 %v3656
    %v4291 = vunpack.c.l.b16 %v3657
    %v4292 = vunpack.c.h.b16 %v3657
    %v4293 = vunpack.c.l.b16 %v3658
    %v4294 = vunpack.c.h.b16 %v3658
    %v4295 = vunpack.c.l.b16 %v3659
    %v4296 = vunpack.c.h.b16 %v3659
    %v4297 = vunpack.c.l.b16 %v3660
    %v4298 = vunpack.c.h.b16 %v3660
    %v4299 = vunpack.c.l.b16 %v3661
    %v4300 = vunpack.c.h.b16 %v3661
    %v4301 = vunpack.c.l.b16 %v3662
    %v4302 = vunpack.c.h.b16 %v3662
    %v4303 = vunpack.c.l.b16 %v3663
    %v4304 = vunpack.c.h.b16 %v3663
    %v4305 = vunpack.c.l.b16 %v3664
    %v4306 = vunpack.c.h.b16 %v3664
    %v4307 = vunpack.c.l.b16 %v3665
    %v4308 = vunpack.c.h.b16 %v3665
    %v4309 = vunpack.c.l.b16 %v3666
    %v4310 = vunpack.c.h.b16 %v3666
    %v4311 = vunpack.c.l.b16 %v3667
    %v4312 = vunpack.c.h.b16 %v3667
    %v4313 = vunpack.c.l.b16 %v3668
    %v4314 = vunpack.c.h.b16 %v3668
    %v4315 = vunpack.c.l.b16 %v3669
    %v4316 = vunpack.c.h.b16 %v3669
    %v4317 = vunpack.c.l.b16 %v3670
    %v4318 = vunpack.c.h.b16 %v3670
    %v4319 = vunpack.c.l.b16 %v3671
    %v4320 = vunpack.c.h.b16 %v3671
    %v4321 = vunpack.c.l.b16 %v3672
    %v4322 = vunpack.c.h.b16 %v3672
    %v4323 = vunpack.c.l.b16 %v3673
    %v4324 = vunpack.c.h.b16 %v3673
    %v4325 = vunpack.c.l.b16 %v3674
    %v4326 = vunpack.c.h.b16 %v3674
    %v4327 = vunpack.c.l.b16 %v3675
    %v4328 = vunpack.c.h.b16 %v3675
    %v4329 = vunpack.c.l.b16 %v3676
    %v4330 = vunpack.c.h.b16 %v3676
    %v4331 = vunpack.c.l.b16 %v3677
    %v4332 = vunpack.c.h.b16 %v3677
    %v4333 = vunpack.c.l.b16 %v3678
    %v4334 = vunpack.c.h.b16 %v3678
    %v4335 = vunpack.c.l.b16 %v3679
    %v4336 = vunpack.c.h.b16 %v3679
    %v4337 = vunpack.c.l.b16 %v3680
    %v4338 = vunpack.c.h.b16 %v3680
    %v4339 = vunpack.c.l.b16 %v3681
    %v4340 = vunpack.c.h.b16 %v3681
    %v4341 = vunpack.c.l.b16 %v3682
    %v4342 = vunpack.c.h.b16 %v3682
    %v4343 = vunpack.c.l.b16 %v3683
    %v4344 = vunpack.c.h.b16 %v3683
    %v4345 = vunpack.c.l.b16 %v3684
    %v4346 = vunpack.c.h.b16 %v3684
    %v4347 = vunpack.c.l.b16 %v3685
    %v4348 = vunpack.c.h.b16 %v3685
    %v4349 = vunpack.c.l.b16 %v3686
    %v4350 = vunpack.c.h.b16 %v3686
    %v4351 = vunpack.c.l.b16 %v3687
    %v4352 = vunpack.c.h.b16 %v3687
    %v4353 = vunpack.c.l.b16 %v3688
    %v4354 = vunpack.c.h.b16 %v3688
    %v4355 = vunpack.c.l.b16 %v3689
    %v4356 = vunpack.c.h.b16 %v3689
    %v4357 = vunpack.c.l.b16 %v3690
    %v4358 = vunpack.c.h.b16 %v3690
    %v4359 = vunpack.c.l.b16 %v3691
    %v4360 = vunpack.c.h.b16 %v3691
    %v4361 = vunpack.c.l.b16 %v3692
    %v4362 = vunpack.c.h.b16 %v3692
    %v4363 = vunpack.c.l.b16 %v3693
    %v4364 = vunpack.c.h.b16 %v3693
    %v4365 = vunpack.c.l.b16 %v3694
    %v4366 = vunpack.c.h.b16 %v3694
    %v4367 = vunpack.c.l.b16 %v3695
    %v4368 = vunpack.c.h.b16 %v3695
    %v4369 = vunpack.c.l.b16 %v3696
    %v4370 = vunpack.c.h.b16 %v3696
    %v4371 = vunpack.c.l.b16 %v3697
    %v4372 = vunpack.c.h.b16 %v3697
    %v4373 = vunpack.c.l.b16 %v3698
    %v4374 = vunpack.c.h.b16 %v3698
    %v4375 = vunpack.c.l.b16 %v3699
    %v4376 = vunpack.c.h.b16 %v3699
    %v4377 = vunpack.c.l.b16 %v3700
    %v4378 = vunpack.c.h.b16 %v3700
    %v4379 = vunpack.c.l.b16 %v3701
    %v4380 = vunpack.c.h.b16 %v3701
    %v4381 = vunpack.c.l.b16 %v3702
    %v4382 = vunpack.c.h.b16 %v3702
    %v4383 = vunpack.c.l.b16 %v3703
    %v4384 = vunpack.c.h.b16 %v3703
    %v4385 = vunpack.c.l.b16 %v3704
    %v4386 = vunpack.c.h.b16 %v3704
    %v4387 = vunpack.c.l.b16 %v3705
    %v4388 = vunpack.c.h.b16 %v3705
    %v4389 = vunpack.c.l.b16 %v3706
    %v4390 = vunpack.c.h.b16 %v3706
    %v4391 = vunpack.c.l.b16 %v3707
    %v4392 = vunpack.c.h.b16 %v3707
    %v4393 = vunpack.c.l.b16 %v3708
    %v4394 = vunpack.c.h.b16 %v3708
    %v4395 = vunpack.c.l.b16 %v3709
    %v4396 = vunpack.c.h.b16 %v3709
    %v4397 = vunpack.c.l.b16 %v3710
    %v4398 = vunpack.c.h.b16 %v3710
    %v4399 = vunpack.c.l.b16 %v3711
    %v4400 = vunpack.c.h.b16 %v3711
    %v4401 = vunpack.c.l.b16 %v3712
    %v4402 = vunpack.c.h.b16 %v3712
    %v4403 = vunpack.c.l.b16 %v3713
    %v4404 = vunpack.c.h.b16 %v3713
    %v4405 = vunpack.c.l.b16 %v3714
    %v4406 = vunpack.c.h.b16 %v3714
    %v4407 = vunpack.c.l.b16 %v3715
    %v4408 = vunpack.c.h.b16 %v3715
    %v4409 = vunpack.c.l.b16 %v3716
    %v4410 = vunpack.c.h.b16 %v3716
    %v4411 = vunpack.c.l.b16 %v3717
    %v4412 = vunpack.c.h.b16 %v3717
    %v4413 = vunpack.c.l.b16 %v3718
    %v4414 = vunpack.c.h.b16 %v3718
    %v4415 = vunpack.c.l.b16 %v3719
    %v4416 = vunpack.c.h.b16 %v3719
    %v4417 = vunpack.c.l.b16 %v3720
    %v4418 = vunpack.c.h.b16 %v3720
    %v4419 = vunpack.c.l.b16 %v3721
    %v4420 = vunpack.c.h.b16 %v3721
    %v4421 = vunpack.c.l.b16 %v3722
    %v4422 = vunpack.c.h.b16 %v3722
    %v4423 = vunpack.c.l.b16 %v3723
    %v4424 = vunpack.c.h.b16 %v3723
    %v4425 = vunpack.c.l.b16 %v3724
    %v4426 = vunpack.c.h.b16 %v3724
    %v4427 = vunpack.c.l.b16 %v3725
    %v4428 = vunpack.c.h.b16 %v3725
    %v4429 = vunpack.c.l.b16 %v3726
    %v4430 = vunpack.c.h.b16 %v3726
    %v4431 = vunpack.c.l.b16 %v3727
    %v4432 = vunpack.c.h.b16 %v3727
    %v4433 = vunpack.c.l.b16 %v3728
    %v4434 = vunpack.c.h.b16 %v3728
    %v4435 = vunpack.c.l.b16 %v3729
    %v4436 = vunpack.c.h.b16 %v3729
    %v4437 = vunpack.c.l.b16 %v3730
    %v4438 = vunpack.c.h.b16 %v3730
    %v4439 = vunpack.c.l.b16 %v3731
    %v4440 = vunpack.c.h.b16 %v3731
    %v4441 = vunpack.c.l.b16 %v3732
    %v4442 = vunpack.c.h.b16 %v3732
    %v4443 = vunpack.c.l.b16 %v3733
    %v4444 = vunpack.c.h.b16 %v3733
    %v4445 = vunpack.c.l.b16 %v3734
    %v4446 = vunpack.c.h.b16 %v3734
    %v4447 = vunpack.c.l.b16 %v3735
    %v4448 = vunpack.c.h.b16 %v3735
    %v4449 = vunpack.c.l.b16 %v3736
    %v4450 = vunpack.c.h.b16 %v3736
    %v4451 = vunpack.c.l.b16 %v3737
    %v4452 = vunpack.c.h.b16 %v3737
    %v4453 = vunpack.c.l.b16 %v3738
    %v4454 = vunpack.c.h.b16 %v3738
    %v4455 = vunpack.c.l.b16 %v3739
    %v4456 = vunpack.c.h.b16 %v3739
    %v4457 = vunpack.c.l.b16 %v3740
    %v4458 = vunpack.c.h.b16 %v3740
    %v4459 = vunpack.c.l.b16 %v3741
    %v4460 = vunpack.c.h.b16 %v3741
    %v4461 = vunpack.c.l.b16 %v3742
    %v4462 = vunpack.c.h.b16 %v3742
    %v4463 = vunpack.c.l.b16 %v3743
    %v4464 = vunpack.c.h.b16 %v3743
    %v4465 = vunpack.c.l.b16 %v3744
    %v4466 = vunpack.c.h.b16 %v3744
    %v4467 = vunpack.c.l.b16 %v3745
    %v4468 = vunpack.c.h.b16 %v3745
    %v4469 = vunpack.c.l.b16 %v3746
    %v4470 = vunpack.c.h.b16 %v3746
    %v4471 = vunpack.c.l.b16 %v3747
    %v4472 = vunpack.c.h.b16 %v3747
    %v4473 = vunpack.c.l.b16 %v3748
    %v4474 = vunpack.c.h.b16 %v3748
    %v4475 = vunpack.c.l.b16 %v3749
    %v4476 = vunpack.c.h.b16 %v3749
    %v4477 = vunpack.c.l.b16 %v3750
    %v4478 = vunpack.c.h.b16 %v3750
    %v4479 = vunpack.c.l.b16 %v3751
    %v4480 = vunpack.c.h.b16 %v3751
    %v4481 = vunpack.c.l.b16 %v3752
    %v4482 = vunpack.c.h.b16 %v3752
    %v4483 = vunpack.c.l.b16 %v3753
    %v4484 = vunpack.c.h.b16 %v3753
    %v4485 = vunpack.c.l.b16 %v3754
    %v4486 = vunpack.c.h.b16 %v3754
    %v4487 = vunpack.c.l.b16 %v3755
    %v4488 = vunpack.c.h.b16 %v3755
    %v4489 = vunpack.c.l.b16 %v3756
    %v4490 = vunpack.c.h.b16 %v3756
    %v4491 = vunpack.c.l.b16 %v3757
    %v4492 = vunpack.c.h.b16 %v3757
    %v4493 = vunpack.c.l.b16 %v3758
    %v4494 = vunpack.c.h.b16 %v3758
    %v4495 = vunpack.c.l.b16 %v3759
    %v4496 = vunpack.c.h.b16 %v3759
    %v4497 = vunpack.c.l.b16 %v3760
    %v4498 = vunpack.c.h.b16 %v3760
    %v4499 = vunpack.c.l.b16 %v3761
    %v4500 = vunpack.c.h.b16 %v3761
    %v4501 = vunpack.c.l.b16 %v3762
    %v4502 = vunpack.c.h.b16 %v3762
    %v4503 = vunpack.c.l.b16 %v3763
    %v4504 = vunpack.c.h.b16 %v3763
    %v4505 = vunpack.c.l.b16 %v3764
    %v4506 = vunpack.c.h.b16 %v3764
    %v4507 = vunpack.c.l.b16 %v3765
    %v4508 = vunpack.c.h.b16 %v3765
    %v4509 = vunpack.c.l.b16 %v3766
    %v4510 = vunpack.c.h.b16 %v3766
    %v4511 = vunpack.c.l.b16 %v3767
    %v4512 = vunpack.c.h.b16 %v3767
    %v4513 = vunpack.c.l.b16 %v3768
    %v4514 = vunpack.c.h.b16 %v3768
    %v4515 = vunpack.c.l.b16 %v3769
    %v4516 = vunpack.c.h.b16 %v3769
    %v4517 = vunpack.c.l.b16 %v3770
    %v4518 = vunpack.c.h.b16 %v3770
    %v4519 = vunpack.c.l.b16 %v3771
    %v4520 = vunpack.c.h.b16 %v3771
    %v4521 = vunpack.c.l.b16 %v3772
    %v4522 = vunpack.c.h.b16 %v3772
    %v4523 = vunpack.c.l.b16 %v3773
    %v4524 = vunpack.c.h.b16 %v3773
    %v4525 = vunpack.c.l.b16 %v3774
    %v4526 = vunpack.c.h.b16 %v3774
    %v4527 = vunpack.c.l.b16 %v3775
    %v4528 = vunpack.c.h.b16 %v3775
    %v4529 = vunpack.c.l.b16 %v3776
    %v4530 = vunpack.c.h.b16 %v3776
    %v4531 = vunpack.c.l.b16 %v3777
    %v4532 = vunpack.c.h.b16 %v3777
    %v4533 = vunpack.c.l.b16 %v3778
    %v4534 = vunpack.c.h.b16 %v3778
    %v4535 = vunpack.c.l.b16 %v3779
    %v4536 = vunpack.c.h.b16 %v3779
    %v4537 = vunpack.c.l.b16 %v3780
    %v4538 = vunpack.c.h.b16 %v3780
    %v4539 = vunpack.c.l.b16 %v3781
    %v4540 = vunpack.c.h.b16 %v3781
    %v4541 = vunpack.c.l.b16 %v3782
    %v4542 = vunpack.c.h.b16 %v3782
    %v4543 = vunpack.c.l.b16 %v3783
    %v4544 = vunpack.c.h.b16 %v3783
    %v4545 = vunpack.c.l.b16 %v3784
    %v4546 = vunpack.c.h.b16 %v3784
    %v4547 = vunpack.c.l.b16 %v3785
    %v4548 = vunpack.c.h.b16 %v3785
    %v4549 = vunpack.c.l.b16 %v3786
    %v4550 = vunpack.c.h.b16 %v3786
    %v4551 = vunpack.c.l.b16 %v3787
    %v4552 = vunpack.c.h.b16 %v3787
    %v4553 = vunpack.c.l.b16 %v3788
    %v4554 = vunpack.c.h.b16 %v3788
    %v4555 = vunpack.c.l.b16 %v3789
    %v4556 = vunpack.c.h.b16 %v3789
    %v4557 = vunpack.c.l.b16 %v3790
    %v4558 = vunpack.c.h.b16 %v3790
    %v4559 = vunpack.c.l.b16 %v3791
    %v4560 = vunpack.c.h.b16 %v3791
    %v4561 = vunpack.c.l.b16 %v3792
    %v4562 = vunpack.c.h.b16 %v3792
    %v4563 = vunpack.c.l.b16 %v3793
    %v4564 = vunpack.c.h.b16 %v3793
    %v4565 = vunpack.c.l.b16 %v3794
    %v4566 = vunpack.c.h.b16 %v3794
    %v4567 = vunpack.c.l.b16 %v3795
    %v4568 = vunpack.c.h.b16 %v3795
    %v4569 = vunpack.c.l.b16 %v3796
    %v4570 = vunpack.c.h.b16 %v3796
    %v4571 = vunpack.c.l.b16 %v3797
    %v4572 = vunpack.c.h.b16 %v3797
    %v4573 = vunpack.c.l.b16 %v3798
    %v4574 = vunpack.c.h.b16 %v3798
    %v4575 = vunpack.c.l.b16 %v3799
    %v4576 = vunpack.c.h.b16 %v3799
    %v4577 = vunpack.c.l.b16 %v3800
    %v4578 = vunpack.c.h.b16 %v3800
    %v4579 = vunpack.c.l.b16 %v3801
    %v4580 = vunpack.c.h.b16 %v3801
    %v4581 = vunpack.c.l.b16 %v3802
    %v4582 = vunpack.c.h.b16 %v3802
    %v4583 = vunpack.c.l.b16 %v3803
    %v4584 = vunpack.c.h.b16 %v3803
    %v4585 = vunpack.c.l.b16 %v3804
    %v4586 = vunpack.c.h.b16 %v3804
    %v4587 = vunpack.c.l.b16 %v3805
    %v4588 = vunpack.c.h.b16 %v3805
    %v4589 = vunpack.c.l.b16 %v3806
    %v4590 = vunpack.c.h.b16 %v3806
    %v4591 = vunpack.c.l.b16 %v3807
    %v4592 = vunpack.c.h.b16 %v3807
    %v4593 = vunpack.c.l.b16 %v3808
    %v4594 = vunpack.c.h.b16 %v3808
    %v4595 = vunpack.c.l.b16 %v3809
    %v4596 = vunpack.c.h.b16 %v3809
    %v4597 = vunpack.c.l.b16 %v3810
    %v4598 = vunpack.c.h.b16 %v3810
    %v4599 = vunpack.c.l.b16 %v3811
    %v4600 = vunpack.c.h.b16 %v3811
    %v4601 = vunpack.c.l.b16 %v3812
    %v4602 = vunpack.c.h.b16 %v3812
    %v4603 = vunpack.c.l.b16 %v3813
    %v4604 = vunpack.c.h.b16 %v3813
    %v4605 = vunpack.c.l.b16 %v3814
    %v4606 = vunpack.c.h.b16 %v3814
    %v4607 = vunpack.c.l.b16 %v3815
    %v4608 = vunpack.c.h.b16 %v3815
    %v4609 = vunpack.c.l.b16 %v3816
    %v4610 = vunpack.c.h.b16 %v3816
    %v4611 = vunpack.c.l.b16 %v3817
    %v4612 = vunpack.c.h.b16 %v3817
    %v4613 = vunpack.c.l.b16 %v3818
    %v4614 = vunpack.c.h.b16 %v3818
    %v4615 = vunpack.c.l.b16 %v3819
    %v4616 = vunpack.c.h.b16 %v3819
    %v4617 = vunpack.c.l.b16 %v3820
    %v4618 = vunpack.c.h.b16 %v3820
    %v4619 = vunpack.c.l.b16 %v3821
    %v4620 = vunpack.c.h.b16 %v3821
    %v4621 = vunpack.c.l.b16 %v3822
    %v4622 = vunpack.c.h.b16 %v3822
    %v4623 = vunpack.c.l.b16 %v3823
    %v4624 = vunpack.c.h.b16 %v3823
    %v4625 = vunpack.c.l.b16 %v3824
    %v4626 = vunpack.c.h.b16 %v3824
    %v4627 = vunpack.c.l.b16 %v3825
    %v4628 = vunpack.c.h.b16 %v3825
    %v4629 = vunpack.c.l.b16 %v3826
    %v4630 = vunpack.c.h.b16 %v3826
    %v4631 = vunpack.c.l.b16 %v3827
    %v4632 = vunpack.c.h.b16 %v3827
    %v4633 = vunpack.c.l.b16 %v3828
    %v4634 = vunpack.c.h.b16 %v3828
    %v4635 = vunpack.c.l.b16 %v3829
    %v4636 = vunpack.c.h.b16 %v3829
    %v4637 = vunpack.c.l.b16 %v3830
    %v4638 = vunpack.c.h.b16 %v3830
    %v4639 = vunpack.c.l.b16 %v3831
    %v4640 = vunpack.c.h.b16 %v3831
    %v4641 = vunpack.c.l.b16 %v3832
    %v4642 = vunpack.c.h.b16 %v3832
    %v4643 = vpack.c.b16 %v4139, %v4131
    %v4644 = vpack.c.b16 %v4140, %v4132
    %v4645 = vpack.c.b16 %v4141, %v4133
    %v4646 = vpack.c.b16 %v4142, %v4134
    %v4647 = vpack.c.b16 %v4143, %v4135
    %v4648 = vpack.c.b16 %v4144, %v4136
    %v4649 = vpack.c.b16 %v4145, %v4137
    %v4650 = vpack.c.b16 %v4146, %v4138
    %v4651 = vpack.c.b16 %v4155, %v4147
    %v4652 = vpack.c.b16 %v4156, %v4148
    %v4653 = vpack.c.b16 %v4157, %v4149
    %v4654 = vpack.c.b16 %v4158, %v4150
    %v4655 = vpack.c.b16 %v4159, %v4151
    %v4656 = vpack.c.b16 %v4160, %v4152
    %v4657 = vpack.c.b16 %v4161, %v4153
    %v4658 = vpack.c.b16 %v4162, %v4154
    %v4659 = vpack.c.b16 %v4171, %v4163
    %v4660 = vpack.c.b16 %v4172, %v4164
    %v4661 = vpack.c.b16 %v4173, %v4165
    %v4662 = vpack.c.b16 %v4174, %v4166
    %v4663 = vpack.c.b16 %v4175, %v4167
    %v4664 = vpack.c.b16 %v4176, %v4168
    %v4665 = vpack.c.b16 %v4177, %v4169
    %v4666 = vpack.c.b16 %v4178, %v4170
    %v4667 = vpack.c.b16 %v4187, %v4179
    %v4668 = vpack.c.b16 %v4188, %v4180
    %v4669 = vpack.c.b16 %v4189, %v4181
    %v4670 = vpack.c.b16 %v4190, %v4182
    %v4671 = vpack.c.b16 %v4191, %v4183
    %v4672 = vpack.c.b16 %v4192, %v4184
    %v4673 = vpack.c.b16 %v4193, %v4185
    %v4674 = vpack.c.b16 %v4194, %v4186
    %v4675 = vpack.c.b16 %v4203, %v4195
    %v4676 = vpack.c.b16 %v4204, %v4196
    %v4677 = vpack.c.b16 %v4205, %v4197
    %v4678 = vpack.c.b16 %v4206, %v4198
    %v4679 = vpack.c.b16 %v4207, %v4199
    %v4680 = vpack.c.b16 %v4208, %v4200
    %v4681 = vpack.c.b16 %v4209, %v4201
    %v4682 = vpack.c.b16 %v4210, %v4202
    %v4683 = vpack.c.b16 %v4219, %v4211
    %v4684 = vpack.c.b16 %v4220, %v4212
    %v4685 = vpack.c.b16 %v4221, %v4213
    %v4686 = vpack.c.b16 %v4222, %v4214
    %v4687 = vpack.c.b16 %v4223, %v4215
    %v4688 = vpack.c.b16 %v4224, %v4216
    %v4689 = vpack.c.b16 %v4225, %v4217
    %v4690 = vpack.c.b16 %v4226, %v4218
    %v4691 = vpack.c.b16 %v4235, %v4227
    %v4692 = vpack.c.b16 %v4236, %v4228
    %v4693 = vpack.c.b16 %v4237, %v4229
    %v4694 = vpack.c.b16 %v4238, %v4230
    %v4695 = vpack.c.b16 %v4239, %v4231
    %v4696 = vpack.c.b16 %v4240, %v4232
    %v4697 = vpack.c.b16 %v4241, %v4233
    %v4698 = vpack.c.b16 %v4242, %v4234
    %v4699 = vpack.c.b16 %v4251, %v4243
    %v4700 = vpack.c.b16 %v4252, %v4244
    %v4701 = vpack.c.b16 %v4253, %v4245
    %v4702 = vpack.c.b16 %v4254, %v4246
    %v4703 = vpack.c.b16 %v4255, %v4247
    %v4704 = vpack.c.b16 %v4256, %v4248
    %v4705 = vpack.c.b16 %v4257, %v4249
    %v4706 = vpack.c.b16 %v4258, %v4250
    %v4707 = vpack.c.b16 %v4267, %v4259
    %v4708 = vpack.c.b16 %v4268, %v4260
    %v4709 = vpack.c.b16 %v4269, %v4261
    %v4710 = vpack.c.b16 %v4270, %v4262
    %v4711 = vpack.c.b16 %v4271, %v4263
    %v4712 = vpack.c.b16 %v4272, %v4264
    %v4713 = vpack.c.b16 %v4273, %v4265
    %v4714 = vpack.c.b16 %v4274, %v4266
    %v4715 = vpack.c.b16 %v4283, %v4275
    %v4716 = vpack.c.b16 %v4284, %v4276
    %v4717 = vpack.c.b16 %v4285, %v4277
    %v4718 = vpack.c.b16 %v4286, %v4278
    %v4719 = vpack.c.b16 %v4287, %v4279
    %v4720 = vpack.c.b16 %v4288, %v4280
    %v4721 = vpack.c.b16 %v4289, %v4281
    %v4722 = vpack.c.b16 %v4290, %v4282
    %v4723 = vpack.c.b16 %v4299, %v4291
    %v4724 = vpack.c.b16 %v4300, %v4292
    %v4725 = vpack.c.b16 %v4301, %v4293
    %v4726 = vpack.c.b16 %v4302, %v4294
    %v4727 = vpack.c.b16 %v4303, %v4295
    %v4728 = vpack.c.b16 %v4304, %v4296
    %v4729 = vpack.c.b16 %v4305, %v4297
    %v4730 = vpack.c.b16 %v4306, %v4298
    %v4731 = vpack.c.b16 %v4315, %v4307
    %v4732 = vpack.c.b16 %v4316, %v4308
    %v4733 = vpack.c.b16 %v4317, %v4309
    %v4734 = vpack.c.b16 %v4318, %v4310
    %v4735 = vpack.c.b16 %v4319, %v4311
    %v4736 = vpack.c.b16 %v4320, %v4312
    %v4737 = vpack.c.b16 %v4321, %v4313
    %v4738 = vpack.c.b16 %v4322, %v4314
    %v4739 = vpack.c.b16 %v4331, %v4323
    %v4740 = vpack.c.b16 %v4332, %v4324
    %v4741 = vpack.c.b16 %v4333, %v4325
    %v4742 = vpack.c.b16 %v4334, %v4326
    %v4743 = vpack.c.b16 %v4335, %v4327
    %v4744 = vpack.c.b16 %v4336, %v4328
    %v4745 = vpack.c.b16 %v4337, %v4329
    %v4746 = vpack.c.b16 %v4338, %v4330
    %v4747 = vpack.c.b16 %v4347, %v4339
    %v4748 = vpack.c.b16 %v4348, %v4340
    %v4749 = vpack.c.b16 %v4349, %v4341
    %v4750 = vpack.c.b16 %v4350, %v4342
    %v4751 = vpack.c.b16 %v4351, %v4343
    %v4752 = vpack.c.b16 %v4352, %v4344
    %v4753 = vpack.c.b16 %v4353, %v4345
    %v4754 = vpack.c.b16 %v4354, %v4346
    %v4755 = vpack.c.b16 %v4363, %v4355
    %v4756 = vpack.c.b16 %v4364, %v4356
    %v4757 = vpack.c.b16 %v4365, %v4357
    %v4758 = vpack.c.b16 %v4366, %v4358
    %v4759 = vpack.c.b16 %v4367, %v4359
    %v4760 = vpack.c.b16 %v4368, %v4360
    %v4761 = vpack.c.b16 %v4369, %v4361
    %v4762 = vpack.c.b16 %v4370, %v4362
    %v4763 = vpack.c.b16 %v4379, %v4371
    %v4764 = vpack.c.b16 %v4380, %v4372
    %v4765 = vpack.c.b16 %v4381, %v4373
    %v4766 = vpack.c.b16 %v4382, %v4374
    %v4767 = vpack.c.b16 %v4383, %v4375
    %v4768 = vpack.c.b16 %v4384, %v4376
    %v4769 = vpack.c.b16 %v4385, %v4377
    %v4770 = vpack.c.b16 %v4386, %v4378
    %v4771 = vpack.c.b16 %v4395, %v4387
    %v4772 = vpack.c.b16 %v4396, %v4388
    %v4773 = vpack.c.b16 %v4397, %v4389
    %v4774 = vpack.c.b16 %v4398, %v4390
    %v4775 = vpack.c.b16 %v4399, %v4391
    %v4776 = vpack.c.b16 %v4400, %v4392
    %v4777 = vpack.c.b16 %v4401, %v4393
    %v4778 = vpack.c.b16 %v4402, %v4394
    %v4779 = vpack.c.b16 %v4411, %v4403
    %v4780 = vpack.c.b16 %v4412, %v4404
    %v4781 = vpack.c.b16 %v4413, %v4405
    %v4782 = vpack.c.b16 %v4414, %v4406
    %v4783 = vpack.c.b16 %v4415, %v4407
    %v4784 = vpack.c.b16 %v4416, %v4408
    %v4785 = vpack.c.b16 %v4417, %v4409
    %v4786 = vpack.c.b16 %v4418, %v4410
    %v4787 = vpack.c.b16 %v4427, %v4419
    %v4788 = vpack.c.b16 %v4428, %v4420
    %v4789 = vpack.c.b16 %v4429, %v4421
    %v4790 = vpack.c.b16 %v4430, %v4422
    %v4791 = vpack.c.b16 %v4431, %v4423
    %v4792 = vpack.c.b16 %v4432, %v4424
    %v4793 = vpack.c.b16 %v4433, %v4425
    %v4794 = vpack.c.b16 %v4434, %v4426
    %v4795 = vpack.c.b16 %v4443, %v4435
    %v4796 = vpack.c.b16 %v4444, %v4436
    %v4797 = vpack.c.b16 %v4445, %v4437
    %v4798 = vpack.c.b16 %v4446, %v4438
    %v4799 = vpack.c.b16 %v4447, %v4439
    %v4800 = vpack.c.b16 %v4448, %v4440
    %v4801 = vpack.c.b16 %v4449, %v4441
    %v4802 = vpack.c.b16 %v4450, %v4442
    %v4803 = vpack.c.b16 %v4459, %v4451
    %v4804 = vpack.c.b16 %v4460, %v4452
    %v4805 = vpack.c.b16 %v4461, %v4453
    %v4806 = vpack.c.b16 %v4462, %v4454
    %v4807 = vpack.c.b16 %v4463, %v4455
    %v4808 = vpack.c.b16 %v4464, %v4456
    %v4809 = vpack.c.b16 %v4465, %v4457
    %v4810 = vpack.c.b16 %v4466, %v4458
    %v4811 = vpack.c.b16 %v4475, %v4467
    %v4812 = vpack.c.b16 %v4476, %v4468
    %v4813 = vpack.c.b16 %v4477, %v4469
    %v4814 = vpack.c.b16 %v4478, %v4470
    %v4815 = vpack.c.b16 %v4479, %v4471
    %v4816 = vpack.c.b16 %v4480, %v4472
    %v4817 = vpack.c.b16 %v4481, %v4473
    %v4818 = vpack.c.b16 %v4482, %v4474
    %v4819 = vpack.c.b16 %v4491, %v4483
    %v4820 = vpack.c.b16 %v4492, %v4484
    %v4821 = vpack.c.b16 %v4493, %v4485
    %v4822 = vpack.c.b16 %v4494, %v4486
    %v4823 = vpack.c.b16 %v4495, %v4487
    %v4824 = vpack.c.b16 %v4496, %v4488
    %v4825 = vpack.c.b16 %v4497, %v4489
    %v4826 = vpack.c.b16 %v4498, %v4490
    %v4827 = vpack.c.b16 %v4507, %v4499
    %v4828 = vpack.c.b16 %v4508, %v4500
    %v4829 = vpack.c.b16 %v4509, %v4501
    %v4830 = vpack.c.b16 %v4510, %v4502
    %v4831 = vpack.c.b16 %v4511, %v4503
    %v4832 = vpack.c.b16 %v4512, %v4504
    %v4833 = vpack.c.b16 %v4513, %v4505
    %v4834 = vpack.c.b16 %v4514, %v4506
    %v4835 = vpack.c.b16 %v4523, %v4515
    %v4836 = vpack.c.b16 %v4524, %v4516
    %v4837 = vpack.c.b16 %v4525, %v4517
    %v4838 = vpack.c.b16 %v4526, %v4518
    %v4839 = vpack.c.b16 %v4527, %v4519
    %v4840 = vpack.c.b16 %v4528, %v4520
    %v4841 = vpack.c.b16 %v4529, %v4521
    %v4842 = vpack.c.b16 %v4530, %v4522
    %v4843 = vpack.c.b16 %v4539, %v4531
    %v4844 = vpack.c.b16 %v4540, %v4532
    %v4845 = vpack.c.b16 %v4541, %v4533
    %v4846 = vpack.c.b16 %v4542, %v4534
    %v4847 = vpack.c.b16 %v4543, %v4535
    %v4848 = vpack.c.b16 %v4544, %v4536
    %v4849 = vpack.c.b16 %v4545, %v4537
    %v4850 = vpack.c.b16 %v4546, %v4538
    %v4851 = vpack.c.b16 %v4555, %v4547
    %v4852 = vpack.c.b16 %v4556, %v4548
    %v4853 = vpack.c.b16 %v4557, %v4549
    %v4854 = vpack.c.b16 %v4558, %v4550
    %v4855 = vpack.c.b16 %v4559, %v4551
    %v4856 = vpack.c.b16 %v4560, %v4552
    %v4857 = vpack.c.b16 %v4561, %v4553
    %v4858 = vpack.c.b16 %v4562, %v4554
    %v4859 = vpack.c.b16 %v4571, %v4563
    %v4860 = vpack.c.b16 %v4572, %v4564
    %v4861 = vpack.c.b16 %v4573, %v4565
    %v4862 = vpack.c.b16 %v4574, %v4566
    %v4863 = vpack.c.b16 %v4575, %v4567
    %v4864 = vpack.c.b16 %v4576, %v4568
    %v4865 = vpack.c.b16 %v4577, %v4569
    %v4866 = vpack.c.b16 %v4578, %v4570
    %v4867 = vpack.c.b16 %v4587, %v4579
    %v4868 = vpack.c.b16 %v4588, %v4580
    %v4869 = vpack.c.b16 %v4589, %v4581
    %v4870 = vpack.c.b16 %v4590, %v4582
    %v4871 = vpack.c.b16 %v4591, %v4583
    %v4872 = vpack.c.b16 %v4592, %v4584
    %v4873 = vpack.c.b16 %v4593, %v4585
    %v4874 = vpack.c.b16 %v4594, %v4586
    %v4875 = vpack.c.b16 %v4603, %v4595
    %v4876 = vpack.c.b16 %v4604, %v4596
    %v4877 = vpack.c.b16 %v4605, %v4597
    %v4878 = vpack.c.b16 %v4606, %v4598
    %v4879 = vpack.c.b16 %v4607, %v4599
    %v4880 = vpack.c.b16 %v4608, %v4600
    %v4881 = vpack.c.b16 %v4609, %v4601
    %v4882 = vpack.c.b16 %v4610, %v4602
    %v4883 = vpack.c.b16 %v4619, %v4611
    %v4884 = vpack.c.b16 %v4620, %v4612
    %v4885 = vpack.c.b16 %v4621, %v4613
    %v4886 = vpack.c.b16 %v4622, %v4614
    %v4887 = vpack.c.b16 %v4623, %v4615
    %v4888 = vpack.c.b16 %v4624, %v4616
    %v4889 = vpack.c.b16 %v4625, %v4617
    %v4890 = vpack.c.b16 %v4626, %v4618
    %v4891 = vpack.c.b16 %v4635, %v4627
    %v4892 = vpack.c.b16 %v4636, %v4628
    %v4893 = vpack.c.b16 %v4637, %v4629
    %v4894 = vpack.c.b16 %v4638, %v4630
    %v4895 = vpack.c.b16 %v4639, %v4631
    %v4896 = vpack.c.b16 %v4640, %v4632
    %v4897 = vpack.c.b16 %v4641, %v4633
    %v4898 = vpack.c.b16 %v4642, %v4634
    %5155 = vmatprep.subr.bf16.mxu0 %v4644
    %5156 = vmatpush1.bf16.msra.mxu0 %v4643
    %5157 = vmatprep.subr.bf16.mxu0 %v4652
    %5158 = vmatpush1.bf16.msra.mxu0 %v4651
    %5159 = vmatprep.subr.bf16.mxu0 %v4660
    %5160 = vmatpush1.bf16.msra.mxu0 %v4659
    %5161 = vmatprep.subr.bf16.mxu0 %v4668
    %5162 = vmatpush1.bf16.msra.mxu0 %v4667
    %5163 = vmatprep.subr.bf16.mxu0 %v4676
    %5164 = vmatpush1.bf16.msra.mxu0 %v4675
    %5165 = vmatprep.subr.bf16.mxu0 %v4684
    %5166 = vmatpush1.bf16.msra.mxu0 %v4683
    %5167 = vmatprep.subr.bf16.mxu0 %v4692
    %5168 = vmatpush1.bf16.msra.mxu0 %v4691
    %5169 = vmatprep.subr.bf16.mxu0 %v4700
    %5170 = vmatpush1.bf16.msra.mxu0 %v4699
    %5171 = vmatprep.subr.bf16.mxu0 %v4708
    %5172 = vmatpush1.bf16.msra.mxu0 %v4707
    %5173 = vmatprep.subr.bf16.mxu0 %v4716
    %5174 = vmatpush1.bf16.msra.mxu0 %v4715
    %5175 = vmatprep.subr.bf16.mxu0 %v4724
    %5176 = vmatpush1.bf16.msra.mxu0 %v4723
    %5177 = vmatprep.subr.bf16.mxu0 %v4732
    %5178 = vmatpush1.bf16.msra.mxu0 %v4731
    %5179 = vmatprep.subr.bf16.mxu0 %v4740
    %5180 = vmatpush1.bf16.msra.mxu0 %v4739
    %5181 = vmatprep.subr.bf16.mxu0 %v4748
    %5182 = vmatpush1.bf16.msra.mxu0 %v4747
    %5183 = vmatprep.subr.bf16.mxu0 %v4756
    %5184 = vmatpush1.bf16.msra.mxu0 %v4755
    %5185 = vmatprep.subr.bf16.mxu0 %v4764
    %5186 = vmatpush1.bf16.msra.mxu0 %v4763
    %5187 = vmatprep.mubr.bf16.mxu0 %v3574
    %5188 = vmatmul.mubr.bf16.gmra.mrb[0].mxu0 %v3573
    %v5189 = vpop.f32.mrb[0].mxu0
    %v5190 = vadd.f32 %v3838, %v5189
    %v5191 = vpop.f32.mrb[0].mxu0
    %v5192 = vadd.f32 %v3842, %v5191
    %v5193 = vpop.f32.mrb[0].mxu0
    %v5194 = vpop.f32.mrb[0].mxu0
    %5195 = vdwg.mxu0
    %5196 = vmatprep.subr.bf16.mxu0 %v4772
    %5197 = vmatpush1.bf16.msra.mxu0 %v4771
    %5198 = vmatprep.subr.bf16.mxu0 %v4780
    %5199 = vmatpush1.bf16.msra.mxu0 %v4779
    %5200 = vmatprep.subr.bf16.mxu0 %v4788
    %5201 = vmatpush1.bf16.msra.mxu0 %v4787
    %5202 = vmatprep.subr.bf16.mxu0 %v4796
    %5203 = vmatpush1.bf16.msra.mxu0 %v4795
    %5204 = vmatprep.subr.bf16.mxu0 %v4804
    %5205 = vmatpush1.bf16.msra.mxu0 %v4803
    %5206 = vmatprep.subr.bf16.mxu0 %v4812
    %5207 = vmatpush1.bf16.msra.mxu0 %v4811
    %5208 = vmatprep.subr.bf16.mxu0 %v4820
    %5209 = vmatpush1.bf16.msra.mxu0 %v4819
    %5210 = vmatprep.subr.bf16.mxu0 %v4828
    %5211 = vmatpush1.bf16.msra.mxu0 %v4827
    %5212 = vmatprep.subr.bf16.mxu0 %v4836
    %5213 = vmatpush1.bf16.msra.mxu0 %v4835
    %5214 = vmatprep.subr.bf16.mxu0 %v4844
    %5215 = vmatpush1.bf16.msra.mxu0 %v4843
    %5216 = vmatprep.subr.bf16.mxu0 %v4852
    %5217 = vmatpush1.bf16.msra.mxu0 %v4851
    %5218 = vmatprep.subr.bf16.mxu0 %v4860
    %5219 = vmatpush1.bf16.msra.mxu0 %v4859
    %5220 = vmatprep.subr.bf16.mxu0 %v4868
    %5221 = vmatpush1.bf16.msra.mxu0 %v4867
    %5222 = vmatprep.subr.bf16.mxu0 %v4876
    %5223 = vmatpush1.bf16.msra.mxu0 %v4875
    %5224 = vmatprep.subr.bf16.mxu0 %v4884
    %5225 = vmatpush1.bf16.msra.mxu0 %v4883
    %5226 = vmatprep.subr.bf16.mxu0 %v4892
    %5227 = vmatpush1.bf16.msra.mxu0 %v4891
    %5228 = vmatprep.mubr.bf16.mxu0 %v3576
    %5229 = vmatmul.mubr.bf16.gmra.mrb[0].mxu0 %v3575
    %v5230 = vpop.f32.mrb[0].mxu0
    %v5231 = vadd.f32 %v5190, %v5230
    %v5232 = vpop.f32.mrb[0].mxu0
    %v5233 = vadd.f32 %v5192, %v5232
    %v5234 = vpop.f32.mrb[0].mxu0
    %v5235 = vpop.f32.mrb[0].mxu0
    %5236 = vdwg.mxu0
    %5237 = vmatprep.subr.bf16.mxu0 %v4646
    %5238 = vmatpush1.bf16.msra.mxu0 %v4645
    %5239 = vmatprep.subr.bf16.mxu0 %v4654
    %5240 = vmatpush1.bf16.msra.mxu0 %v4653
    %5241 = vmatprep.subr.bf16.mxu0 %v4662
    %5242 = vmatpush1.bf16.msra.mxu0 %v4661
    %5243 = vmatprep.subr.bf16.mxu0 %v4670
    %5244 = vmatpush1.bf16.msra.mxu0 %v4669
    %5245 = vmatprep.subr.bf16.mxu0 %v4678
    %5246 = vmatpush1.bf16.msra.mxu0 %v4677
    %5247 = vmatprep.subr.bf16.mxu0 %v4686
    %5248 = vmatpush1.bf16.msra.mxu0 %v4685
    %5249 = vmatprep.subr.bf16.mxu0 %v4694
    %5250 = vmatpush1.bf16.msra.mxu0 %v4693
    %5251 = vmatprep.subr.bf16.mxu0 %v4702
    %5252 = vmatpush1.bf16.msra.mxu0 %v4701
    %5253 = vmatprep.subr.bf16.mxu0 %v4710
    %5254 = vmatpush1.bf16.msra.mxu0 %v4709
    %5255 = vmatprep.subr.bf16.mxu0 %v4718
    %5256 = vmatpush1.bf16.msra.mxu0 %v4717
    %5257 = vmatprep.subr.bf16.mxu0 %v4726
    %5258 = vmatpush1.bf16.msra.mxu0 %v4725
    %5259 = vmatprep.subr.bf16.mxu0 %v4734
    %5260 = vmatpush1.bf16.msra.mxu0 %v4733
    %5261 = vmatprep.subr.bf16.mxu0 %v4742
    %5262 = vmatpush1.bf16.msra.mxu0 %v4741
    %5263 = vmatprep.subr.bf16.mxu0 %v4750
    %5264 = vmatpush1.bf16.msra.mxu0 %v4749
    %5265 = vmatprep.subr.bf16.mxu0 %v4758
    %5266 = vmatpush1.bf16.msra.mxu0 %v4757
    %5267 = vmatprep.subr.bf16.mxu0 %v4766
    %5268 = vmatpush1.bf16.msra.mxu0 %v4765
    %5269 = vmatprep.mubr.bf16.mxu0 %v3574
    %5270 = vmatmul.mubr.bf16.gmra.mrb[0].mxu0 %v3573
    %v5271 = vpop.f32.mrb[0].mxu0
    %v5272 = vadd.f32 %v3846, %v5271
    %v5273 = vpop.f32.mrb[0].mxu0
    %v5274 = vadd.f32 %v3850, %v5273
    %v5275 = vpop.f32.mrb[0].mxu0
    %v5276 = vpop.f32.mrb[0].mxu0
    %5277 = vdwg.mxu0
    %5278 = vmatprep.subr.bf16.mxu0 %v4774
    %5279 = vmatpush1.bf16.msra.mxu0 %v4773
    %5280 = vmatprep.subr.bf16.mxu0 %v4782
    %5281 = vmatpush1.bf16.msra.mxu0 %v4781
    %5282 = vmatprep.subr.bf16.mxu0 %v4790
    %5283 = vmatpush1.bf16.msra.mxu0 %v4789
    %5284 = vmatprep.subr.bf16.mxu0 %v4798
    %5285 = vmatpush1.bf16.msra.mxu0 %v4797
    %5286 = vmatprep.subr.bf16.mxu0 %v4806
    %5287 = vmatpush1.bf16.msra.mxu0 %v4805
    %5288 = vmatprep.subr.bf16.mxu0 %v4814
    %5289 = vmatpush1.bf16.msra.mxu0 %v4813
    %5290 = vmatprep.subr.bf16.mxu0 %v4822
    %5291 = vmatpush1.bf16.msra.mxu0 %v4821
    %5292 = vmatprep.subr.bf16.mxu0 %v4830
    %5293 = vmatpush1.bf16.msra.mxu0 %v4829
    %5294 = vmatprep.subr.bf16.mxu0 %v4838
    %5295 = vmatpush1.bf16.msra.mxu0 %v4837
    %5296 = vmatprep.subr.bf16.mxu0 %v4846
    %5297 = vmatpush1.bf16.msra.mxu0 %v4845
    %5298 = vmatprep.subr.bf16.mxu0 %v4854
    %5299 = vmatpush1.bf16.msra.mxu0 %v4853
    %5300 = vmatprep.subr.bf16.mxu0 %v4862
    %5301 = vmatpush1.bf16.msra.mxu0 %v4861
    %5302 = vmatprep.subr.bf16.mxu0 %v4870
    %5303 = vmatpush1.bf16.msra.mxu0 %v4869
    %5304 = vmatprep.subr.bf16.mxu0 %v4878
    %5305 = vmatpush1.bf16.msra.mxu0 %v4877
    %5306 = vmatprep.subr.bf16.mxu0 %v4886
    %5307 = vmatpush1.bf16.msra.mxu0 %v4885
    %5308 = vmatprep.subr.bf16.mxu0 %v4894
    %5309 = vmatpush1.bf16.msra.mxu0 %v4893
    %5310 = vmatprep.mubr.bf16.mxu0 %v3576
    %5311 = vmatmul.mubr.bf16.gmra.mrb[0].mxu0 %v3575
    %v5312 = vpop.f32.mrb[0].mxu0
    %v5313 = vadd.f32 %v5272, %v5312
    %v5314 = vpop.f32.mrb[0].mxu0
    %v5315 = vadd.f32 %v5274, %v5314
    %v5316 = vpop.f32.mrb[0].mxu0
    %v5317 = vpop.f32.mrb[0].mxu0
    %5318 = vdwg.mxu0
    %5319 = vmatprep.subr.bf16.mxu0 %v4648
    %5320 = vmatpush1.bf16.msra.mxu0 %v4647
    %5321 = vmatprep.subr.bf16.mxu0 %v4656
    %5322 = vmatpush1.bf16.msra.mxu0 %v4655
    %5323 = vmatprep.subr.bf16.mxu0 %v4664
    %5324 = vmatpush1.bf16.msra.mxu0 %v4663
    %5325 = vmatprep.subr.bf16.mxu0 %v4672
    %5326 = vmatpush1.bf16.msra.mxu0 %v4671
    %5327 = vmatprep.subr.bf16.mxu0 %v4680
    %5328 = vmatpush1.bf16.msra.mxu0 %v4679
    %5329 = vmatprep.subr.bf16.mxu0 %v4688
    %5330 = vmatpush1.bf16.msra.mxu0 %v4687
    %5331 = vmatprep.subr.bf16.mxu0 %v4696
    %5332 = vmatpush1.bf16.msra.mxu0 %v4695
    %5333 = vmatprep.subr.bf16.mxu0 %v4704
    %5334 = vmatpush1.bf16.msra.mxu0 %v4703
    %5335 = vmatprep.subr.bf16.mxu0 %v4712
    %5336 = vmatpush1.bf16.msra.mxu0 %v4711
    %5337 = vmatprep.subr.bf16.mxu0 %v4720
    %5338 = vmatpush1.bf16.msra.mxu0 %v4719
    %5339 = vmatprep.subr.bf16.mxu0 %v4728
    %5340 = vmatpush1.bf16.msra.mxu0 %v4727
    %5341 = vmatprep.subr.bf16.mxu0 %v4736
    %5342 = vmatpush1.bf16.msra.mxu0 %v4735
    %5343 = vmatprep.subr.bf16.mxu0 %v4744
    %5344 = vmatpush1.bf16.msra.mxu0 %v4743
    %5345 = vmatprep.subr.bf16.mxu0 %v4752
    %5346 = vmatpush1.bf16.msra.mxu0 %v4751
    %5347 = vmatprep.subr.bf16.mxu0 %v4760
    %5348 = vmatpush1.bf16.msra.mxu0 %v4759
    %5349 = vmatprep.subr.bf16.mxu0 %v4768
    %5350 = vmatpush1.bf16.msra.mxu0 %v4767
    %5351 = vmatprep.mubr.bf16.mxu0 %v3574
    %5352 = vmatmul.mubr.bf16.gmra.mrb[0].mxu0 %v3573
    %v5353 = vpop.f32.mrb[0].mxu0
    %v5354 = vadd.f32 %v3854, %v5353
    %v5355 = vpop.f32.mrb[0].mxu0
    %v5356 = vadd.f32 %v3858, %v5355
    %v5357 = vpop.f32.mrb[0].mxu0
    %v5358 = vpop.f32.mrb[0].mxu0
    %5359 = vdwg.mxu0
    %5360 = vmatprep.subr.bf16.mxu0 %v4776
    %5361 = vmatpush1.bf16.msra.mxu0 %v4775
    %5362 = vmatprep.subr.bf16.mxu0 %v4784
    %5363 = vmatpush1.bf16.msra.mxu0 %v4783
    %5364 = vmatprep.subr.bf16.mxu0 %v4792
    %5365 = vmatpush1.bf16.msra.mxu0 %v4791
    %5366 = vmatprep.subr.bf16.mxu0 %v4800
    %5367 = vmatpush1.bf16.msra.mxu0 %v4799
    %5368 = vmatprep.subr.bf16.mxu0 %v4808
    %5369 = vmatpush1.bf16.msra.mxu0 %v4807
    %5370 = vmatprep.subr.bf16.mxu0 %v4816
    %5371 = vmatpush1.bf16.msra.mxu0 %v4815
    %5372 = vmatprep.subr.bf16.mxu0 %v4824
    %5373 = vmatpush1.bf16.msra.mxu0 %v4823
    %5374 = vmatprep.subr.bf16.mxu0 %v4832
    %5375 = vmatpush1.bf16.msra.mxu0 %v4831
    %5376 = vmatprep.subr.bf16.mxu0 %v4840
    %5377 = vmatpush1.bf16.msra.mxu0 %v4839
    %5378 = vmatprep.subr.bf16.mxu0 %v4848
    %5379 = vmatpush1.bf16.msra.mxu0 %v4847
    %5380 = vmatprep.subr.bf16.mxu0 %v4856
    %5381 = vmatpush1.bf16.msra.mxu0 %v4855
    %5382 = vmatprep.subr.bf16.mxu0 %v4864
    %5383 = vmatpush1.bf16.msra.mxu0 %v4863
    %5384 = vmatprep.subr.bf16.mxu0 %v4872
    %5385 = vmatpush1.bf16.msra.mxu0 %v4871
    %5386 = vmatprep.subr.bf16.mxu0 %v4880
    %5387 = vmatpush1.bf16.msra.mxu0 %v4879
    %5388 = vmatprep.subr.bf16.mxu0 %v4888
    %5389 = vmatpush1.bf16.msra.mxu0 %v4887
    %5390 = vmatprep.subr.bf16.mxu0 %v4896
    %5391 = vmatpush1.bf16.msra.mxu0 %v4895
    %5392 = vmatprep.mubr.bf16.mxu0 %v3576
    %5393 = vmatmul.mubr.bf16.gmra.mrb[0].mxu0 %v3575
    %v5394 = vpop.f32.mrb[0].mxu0
    %v5395 = vadd.f32 %v5354, %v5394
    %v5396 = vpop.f32.mrb[0].mxu0
    %v5397 = vadd.f32 %v5356, %v5396
    %v5398 = vpop.f32.mrb[0].mxu0
    %v5399 = vpop.f32.mrb[0].mxu0
    %5400 = vdwg.mxu0
    %5401 = vmatprep.subr.bf16.mxu0 %v4650
    %5402 = vmatpush1.bf16.msra.mxu0 %v4649
    %5403 = vmatprep.subr.bf16.mxu0 %v4658
    %5404 = vmatpush1.bf16.msra.mxu0 %v4657
    %5405 = vmatprep.subr.bf16.mxu0 %v4666
    %5406 = vmatpush1.bf16.msra.mxu0 %v4665
    %5407 = vmatprep.subr.bf16.mxu0 %v4674
    %5408 = vmatpush1.bf16.msra.mxu0 %v4673
    %5409 = vmatprep.subr.bf16.mxu0 %v4682
    %5410 = vmatpush1.bf16.msra.mxu0 %v4681
    %5411 = vmatprep.subr.bf16.mxu0 %v4690
    %5412 = vmatpush1.bf16.msra.mxu0 %v4689
    %5413 = vmatprep.subr.bf16.mxu0 %v4698
    %5414 = vmatpush1.bf16.msra.mxu0 %v4697
    %5415 = vmatprep.subr.bf16.mxu0 %v4706
    %5416 = vmatpush1.bf16.msra.mxu0 %v4705
    %5417 = vmatprep.subr.bf16.mxu0 %v4714
    %5418 = vmatpush1.bf16.msra.mxu0 %v4713
    %5419 = vmatprep.subr.bf16.mxu0 %v4722
    %5420 = vmatpush1.bf16.msra.mxu0 %v4721
    %5421 = vmatprep.subr.bf16.mxu0 %v4730
    %5422 = vmatpush1.bf16.msra.mxu0 %v4729
    %5423 = vmatprep.subr.bf16.mxu0 %v4738
    %5424 = vmatpush1.bf16.msra.mxu0 %v4737
    %5425 = vmatprep.subr.bf16.mxu0 %v4746
    %5426 = vmatpush1.bf16.msra.mxu0 %v4745
    %5427 = vmatprep.subr.bf16.mxu0 %v4754
    %5428 = vmatpush1.bf16.msra.mxu0 %v4753
    %5429 = vmatprep.subr.bf16.mxu0 %v4762
    %5430 = vmatpush1.bf16.msra.mxu0 %v4761
    %5431 = vmatprep.subr.bf16.mxu0 %v4770
    %5432 = vmatpush1.bf16.msra.mxu0 %v4769
    %5433 = vmatprep.mubr.bf16.mxu0 %v3574
    %5434 = vmatmul.mubr.bf16.gmra.mrb[0].mxu0 %v3573
    %v5435 = vpop.f32.mrb[0].mxu0
    %v5436 = vadd.f32 %v3862, %v5435
    %v5437 = vpop.f32.mrb[0].mxu0
    %v5438 = vadd.f32 %v3866, %v5437
    %v5439 = vpop.f32.mrb[0].mxu0
    %v5440 = vpop.f32.mrb[0].mxu0
    %5441 = vdwg.mxu0
    %5442 = vmatprep.subr.bf16.mxu0 %v4778
    %5443 = vmatpush1.bf16.msra.mxu0 %v4777
    %5444 = vmatprep.subr.bf16.mxu0 %v4786
    %5445 = vmatpush1.bf16.msra.mxu0 %v4785
    %5446 = vmatprep.subr.bf16.mxu0 %v4794
    %5447 = vmatpush1.bf16.msra.mxu0 %v4793
    %5448 = vmatprep.subr.bf16.mxu0 %v4802
    %5449 = vmatpush1.bf16.msra.mxu0 %v4801
    %5450 = vmatprep.subr.bf16.mxu0 %v4810
    %5451 = vmatpush1.bf16.msra.mxu0 %v4809
    %5452 = vmatprep.subr.bf16.mxu0 %v4818
    %5453 = vmatpush1.bf16.msra.mxu0 %v4817
    %5454 = vmatprep.subr.bf16.mxu0 %v4826
    %5455 = vmatpush1.bf16.msra.mxu0 %v4825
    %5456 = vmatprep.subr.bf16.mxu0 %v4834
    %5457 = vmatpush1.bf16.msra.mxu0 %v4833
    %5458 = vmatprep.subr.bf16.mxu0 %v4842
    %5459 = vmatpush1.bf16.msra.mxu0 %v4841
    %5460 = vmatprep.subr.bf16.mxu0 %v4850
    %5461 = vmatpush1.bf16.msra.mxu0 %v4849
    %5462 = vmatprep.subr.bf16.mxu0 %v4858
    %5463 = vmatpush1.bf16.msra.mxu0 %v4857
    %5464 = vmatprep.subr.bf16.mxu0 %v4866
    %5465 = vmatpush1.bf16.msra.mxu0 %v4865
    %5466 = vmatprep.subr.bf16.mxu0 %v4874
    %5467 = vmatpush1.bf16.msra.mxu0 %v4873
    %5468 = vmatprep.subr.bf16.mxu0 %v4882
    %5469 = vmatpush1.bf16.msra.mxu0 %v4881
    %5470 = vmatprep.subr.bf16.mxu0 %v4890
    %5471 = vmatpush1.bf16.msra.mxu0 %v4889
    %5472 = vmatprep.subr.bf16.mxu0 %v4898
    %5473 = vmatpush1.bf16.msra.mxu0 %v4897
    %5474 = vmatprep.mubr.bf16.mxu0 %v3576
    %5475 = vmatmul.mubr.bf16.gmra.mrb[0].mxu0 %v3575
    %v5476 = vpop.f32.mrb[0].mxu0
    %v5477 = vadd.f32 %v5436, %v5476
    %v5478 = vpop.f32.mrb[0].mxu0
    %v5479 = vadd.f32 %v5438, %v5478
    %v5480 = vpop.f32.mrb[0].mxu0
    %v5481 = vpop.f32.mrb[0].mxu0
    %5482 = vdwg.mxu0
    %v5483 = vld [vmem:[%s1] sm:$0xff]
    %v5484 = vld [vmem:[%s1 + $0x8] sm:$0xff]
    %v5485 = vld [vmem:[%s1 + $0x10] sm:$0xff]
    %v5486 = vld [vmem:[%s1 + $0x18] sm:$0xff]
    %v5487 = vld [vmem:[%s1 + $0x20] sm:$0xff]
    %v5488 = vld [vmem:[%s1 + $0x28] sm:$0xff]
    %v5489 = vld [vmem:[%s1 + $0x30] sm:$0xff]
    %v5490 = vld [vmem:[%s1 + $0x38] sm:$0xff]
    %v5491 = vpack.c.bf16 %v5483, %v5483
    %v5492 = vpack.c.bf16 %v5484, %v5484
    %v5493 = vpack.c.bf16 %v5485, %v5485
    %v5494 = vpack.c.bf16 %v5486, %v5486
    %v5495 = vpack.c.bf16 %v5487, %v5487
    %v5496 = vpack.c.bf16 %v5488, %v5488
    %v5497 = vpack.c.bf16 %v5489, %v5489
    %v5498 = vpack.c.bf16 %v5490, %v5490
    %v5499 = vld [vmem:[#allocation16] sm:$0xff]
    %v5500 = vld [vmem:[#allocation16 + $0x8] sm:$0xff]
    %v5501 = vld [vmem:[#allocation16 + $0x10] sm:$0xff]
    %v5502 = vld [vmem:[#allocation16 + $0x18] sm:$0xff]
    %v5503 = vld [vmem:[#allocation16 + $0x20] sm:$0xff]
    %v5504 = vld [vmem:[#allocation16 + $0x28] sm:$0xff]
    %v5505 = vld [vmem:[#allocation16 + $0x30] sm:$0xff]
    %v5506 = vld [vmem:[#allocation16 + $0x38] sm:$0xff]
    %v5507 = vld [vmem:[#allocation16 + $0x40] sm:$0xff]
    %v5508 = vld [vmem:[#allocation16 + $0x48] sm:$0xff]
    %v5509 = vld [vmem:[#allocation16 + $0x50] sm:$0xff]
    %v5510 = vld [vmem:[#allocation16 + $0x58] sm:$0xff]
    %v5511 = vld [vmem:[#allocation16 + $0x60] sm:$0xff]
    %v5512 = vld [vmem:[#allocation16 + $0x68] sm:$0xff]
    %v5513 = vld [vmem:[#allocation16 + $0x70] sm:$0xff]
    %v5514 = vld [vmem:[#allocation16 + $0x78] sm:$0xff]
    %v5515 = vld [vmem:[#allocation16 + $0x80] sm:$0xff]
    %v5516 = vld [vmem:[#allocation16 + $0x88] sm:$0xff]
    %v5517 = vld [vmem:[#allocation16 + $0x90] sm:$0xff]
    %v5518 = vld [vmem:[#allocation16 + $0x98] sm:$0xff]
    %v5519 = vld [vmem:[#allocation16 + $0xa0] sm:$0xff]
    %v5520 = vld [vmem:[#allocation16 + $0xa8] sm:$0xff]
    %v5521 = vld [vmem:[#allocation16 + $0xb0] sm:$0xff]
    %v5522 = vld [vmem:[#allocation16 + $0xb8] sm:$0xff]
    %v5523 = vld [vmem:[#allocation16 + $0xc0] sm:$0xff]
    %v5524 = vld [vmem:[#allocation16 + $0xc8] sm:$0xff]
    %v5525 = vld [vmem:[#allocation16 + $0xd0] sm:$0xff]
    %v5526 = vld [vmem:[#allocation16 + $0xd8] sm:$0xff]
    %v5527 = vld [vmem:[#allocation16 + $0xe0] sm:$0xff]
    %v5528 = vld [vmem:[#allocation16 + $0xe8] sm:$0xff]
    %v5529 = vld [vmem:[#allocation16 + $0xf0] sm:$0xff]
    %v5530 = vld [vmem:[#allocation16 + $0xf8] sm:$0xff]
    %v5531 = vld [vmem:[#allocation16 + $0x100] sm:$0xff]
    %v5532 = vld [vmem:[#allocation16 + $0x108] sm:$0xff]
    %v5533 = vld [vmem:[#allocation16 + $0x110] sm:$0xff]
    %v5534 = vld [vmem:[#allocation16 + $0x118] sm:$0xff]
    %v5535 = vld [vmem:[#allocation16 + $0x120] sm:$0xff]
    %v5536 = vld [vmem:[#allocation16 + $0x128] sm:$0xff]
    %v5537 = vld [vmem:[#allocation16 + $0x130] sm:$0xff]
    %v5538 = vld [vmem:[#allocation16 + $0x138] sm:$0xff]
    %v5539 = vld [vmem:[#allocation16 + $0x140] sm:$0xff]
    %v5540 = vld [vmem:[#allocation16 + $0x148] sm:$0xff]
    %v5541 = vld [vmem:[#allocation16 + $0x150] sm:$0xff]
    %v5542 = vld [vmem:[#allocation16 + $0x158] sm:$0xff]
    %v5543 = vld [vmem:[#allocation16 + $0x160] sm:$0xff]
    %v5544 = vld [vmem:[#allocation16 + $0x168] sm:$0xff]
    %v5545 = vld [vmem:[#allocation16 + $0x170] sm:$0xff]
    %v5546 = vld [vmem:[#allocation16 + $0x178] sm:$0xff]
    %v5547 = vld [vmem:[#allocation16 + $0x180] sm:$0xff]
    %v5548 = vld [vmem:[#allocation16 + $0x188] sm:$0xff]
    %v5549 = vld [vmem:[#allocation16 + $0x190] sm:$0xff]
    %v5550 = vld [vmem:[#allocation16 + $0x198] sm:$0xff]
    %v5551 = vld [vmem:[#allocation16 + $0x1a0] sm:$0xff]
    %v5552 = vld [vmem:[#allocation16 + $0x1a8] sm:$0xff]
    %v5553 = vld [vmem:[#allocation16 + $0x1b0] sm:$0xff]
    %v5554 = vld [vmem:[#allocation16 + $0x1b8] sm:$0xff]
    %v5555 = vld [vmem:[#allocation16 + $0x1c0] sm:$0xff]
    %v5556 = vld [vmem:[#allocation16 + $0x1c8] sm:$0xff]
    %v5557 = vld [vmem:[#allocation16 + $0x1d0] sm:$0xff]
    %v5558 = vld [vmem:[#allocation16 + $0x1d8] sm:$0xff]
    %v5559 = vld [vmem:[#allocation16 + $0x1e0] sm:$0xff]
    %v5560 = vld [vmem:[#allocation16 + $0x1e8] sm:$0xff]
    %v5561 = vld [vmem:[#allocation16 + $0x1f0] sm:$0xff]
    %v5562 = vld [vmem:[#allocation16 + $0x1f8] sm:$0xff]
    %v5563 = vld [vmem:[#allocation16 + $0x200] sm:$0xff]
    %v5564 = vld [vmem:[#allocation16 + $0x208] sm:$0xff]
    %v5565 = vld [vmem:[#allocation16 + $0x210] sm:$0xff]
    %v5566 = vld [vmem:[#allocation16 + $0x218] sm:$0xff]
    %v5567 = vld [vmem:[#allocation16 + $0x220] sm:$0xff]
    %v5568 = vld [vmem:[#allocation16 + $0x228] sm:$0xff]
    %v5569 = vld [vmem:[#allocation16 + $0x230] sm:$0xff]
    %v5570 = vld [vmem:[#allocation16 + $0x238] sm:$0xff]
    %v5571 = vld [vmem:[#allocation16 + $0x240] sm:$0xff]
    %v5572 = vld [vmem:[#allocation16 + $0x248] sm:$0xff]
    %v5573 = vld [vmem:[#allocation16 + $0x250] sm:$0xff]
    %v5574 = vld [vmem:[#allocation16 + $0x258] sm:$0xff]
    %v5575 = vld [vmem:[#allocation16 + $0x260] sm:$0xff]
    %v5576 = vld [vmem:[#allocation16 + $0x268] sm:$0xff]
    %v5577 = vld [vmem:[#allocation16 + $0x270] sm:$0xff]
    %v5578 = vld [vmem:[#allocation16 + $0x278] sm:$0xff]
    %v5579 = vld [vmem:[#allocation16 + $0x280] sm:$0xff]
    %v5580 = vld [vmem:[#allocation16 + $0x288] sm:$0xff]
    %v5581 = vld [vmem:[#allocation16 + $0x290] sm:$0xff]
    %v5582 = vld [vmem:[#allocation16 + $0x298] sm:$0xff]
    %v5583 = vld [vmem:[#allocation16 + $0x2a0] sm:$0xff]
    %v5584 = vld [vmem:[#allocation16 + $0x2a8] sm:$0xff]
    %v5585 = vld [vmem:[#allocation16 + $0x2b0] sm:$0xff]
    %v5586 = vld [vmem:[#allocation16 + $0x2b8] sm:$0xff]
    %v5587 = vld [vmem:[#allocation16 + $0x2c0] sm:$0xff]
    %v5588 = vld [vmem:[#allocation16 + $0x2c8] sm:$0xff]
    %v5589 = vld [vmem:[#allocation16 + $0x2d0] sm:$0xff]
    %v5590 = vld [vmem:[#allocation16 + $0x2d8] sm:$0xff]
    %v5591 = vld [vmem:[#allocation16 + $0x2e0] sm:$0xff]
    %v5592 = vld [vmem:[#allocation16 + $0x2e8] sm:$0xff]
    %v5593 = vld [vmem:[#allocation16 + $0x2f0] sm:$0xff]
    %v5594 = vld [vmem:[#allocation16 + $0x2f8] sm:$0xff]
    %v5595 = vld [vmem:[#allocation16 + $0x300] sm:$0xff]
    %v5596 = vld [vmem:[#allocation16 + $0x308] sm:$0xff]
    %v5597 = vld [vmem:[#allocation16 + $0x310] sm:$0xff]
    %v5598 = vld [vmem:[#allocation16 + $0x318] sm:$0xff]
    %v5599 = vld [vmem:[#allocation16 + $0x320] sm:$0xff]
    %v5600 = vld [vmem:[#allocation16 + $0x328] sm:$0xff]
    %v5601 = vld [vmem:[#allocation16 + $0x330] sm:$0xff]
    %v5602 = vld [vmem:[#allocation16 + $0x338] sm:$0xff]
    %v5603 = vld [vmem:[#allocation16 + $0x340] sm:$0xff]
    %v5604 = vld [vmem:[#allocation16 + $0x348] sm:$0xff]
    %v5605 = vld [vmem:[#allocation16 + $0x350] sm:$0xff]
    %v5606 = vld [vmem:[#allocation16 + $0x358] sm:$0xff]
    %v5607 = vld [vmem:[#allocation16 + $0x360] sm:$0xff]
    %v5608 = vld [vmem:[#allocation16 + $0x368] sm:$0xff]
    %v5609 = vld [vmem:[#allocation16 + $0x370] sm:$0xff]
    %v5610 = vld [vmem:[#allocation16 + $0x378] sm:$0xff]
    %v5611 = vld [vmem:[#allocation16 + $0x380] sm:$0xff]
    %v5612 = vld [vmem:[#allocation16 + $0x388] sm:$0xff]
    %v5613 = vld [vmem:[#allocation16 + $0x390] sm:$0xff]
    %v5614 = vld [vmem:[#allocation16 + $0x398] sm:$0xff]
    %v5615 = vld [vmem:[#allocation16 + $0x3a0] sm:$0xff]
    %v5616 = vld [vmem:[#allocation16 + $0x3a8] sm:$0xff]
    %v5617 = vld [vmem:[#allocation16 + $0x3b0] sm:$0xff]
    %v5618 = vld [vmem:[#allocation16 + $0x3b8] sm:$0xff]
    %v5619 = vld [vmem:[#allocation16 + $0x3c0] sm:$0xff]
    %v5620 = vld [vmem:[#allocation16 + $0x3c8] sm:$0xff]
    %v5621 = vld [vmem:[#allocation16 + $0x3d0] sm:$0xff]
    %v5622 = vld [vmem:[#allocation16 + $0x3d8] sm:$0xff]
    %v5623 = vld [vmem:[#allocation16 + $0x3e0] sm:$0xff]
    %v5624 = vld [vmem:[#allocation16 + $0x3e8] sm:$0xff]
    %v5625 = vld [vmem:[#allocation16 + $0x3f0] sm:$0xff]
    %v5626 = vld [vmem:[#allocation16 + $0x3f8] sm:$0xff]
    %v5627 = vld [vmem:[#allocation16 + $0x400] sm:$0xff]
    %v5628 = vld [vmem:[#allocation16 + $0x408] sm:$0xff]
    %v5629 = vld [vmem:[#allocation16 + $0x410] sm:$0xff]
    %v5630 = vld [vmem:[#allocation16 + $0x418] sm:$0xff]
    %v5631 = vld [vmem:[#allocation16 + $0x420] sm:$0xff]
    %v5632 = vld [vmem:[#allocation16 + $0x428] sm:$0xff]
    %v5633 = vld [vmem:[#allocation16 + $0x430] sm:$0xff]
    %v5634 = vld [vmem:[#allocation16 + $0x438] sm:$0xff]
    %v5635 = vld [vmem:[#allocation16 + $0x440] sm:$0xff]
    %v5636 = vld [vmem:[#allocation16 + $0x448] sm:$0xff]
    %v5637 = vld [vmem:[#allocation16 + $0x450] sm:$0xff]
    %v5638 = vld [vmem:[#allocation16 + $0x458] sm:$0xff]
    %v5639 = vld [vmem:[#allocation16 + $0x460] sm:$0xff]
    %v5640 = vld [vmem:[#allocation16 + $0x468] sm:$0xff]
    %v5641 = vld [vmem:[#allocation16 + $0x470] sm:$0xff]
    %v5642 = vld [vmem:[#allocation16 + $0x478] sm:$0xff]
    %v5643 = vld [vmem:[#allocation16 + $0x480] sm:$0xff]
    %v5644 = vld [vmem:[#allocation16 + $0x488] sm:$0xff]
    %v5645 = vld [vmem:[#allocation16 + $0x490] sm:$0xff]
    %v5646 = vld [vmem:[#allocation16 + $0x498] sm:$0xff]
    %v5647 = vld [vmem:[#allocation16 + $0x4a0] sm:$0xff]
    %v5648 = vld [vmem:[#allocation16 + $0x4a8] sm:$0xff]
    %v5649 = vld [vmem:[#allocation16 + $0x4b0] sm:$0xff]
    %v5650 = vld [vmem:[#allocation16 + $0x4b8] sm:$0xff]
    %v5651 = vld [vmem:[#allocation16 + $0x4c0] sm:$0xff]
    %v5652 = vld [vmem:[#allocation16 + $0x4c8] sm:$0xff]
    %v5653 = vld [vmem:[#allocation16 + $0x4d0] sm:$0xff]
    %v5654 = vld [vmem:[#allocation16 + $0x4d8] sm:$0xff]
    %v5655 = vld [vmem:[#allocation16 + $0x4e0] sm:$0xff]
    %v5656 = vld [vmem:[#allocation16 + $0x4e8] sm:$0xff]
    %v5657 = vld [vmem:[#allocation16 + $0x4f0] sm:$0xff]
    %v5658 = vld [vmem:[#allocation16 + $0x4f8] sm:$0xff]
    %v5659 = vld [vmem:[#allocation16 + $0x500] sm:$0xff]
    %v5660 = vld [vmem:[#allocation16 + $0x508] sm:$0xff]
    %v5661 = vld [vmem:[#allocation16 + $0x510] sm:$0xff]
    %v5662 = vld [vmem:[#allocation16 + $0x518] sm:$0xff]
    %v5663 = vld [vmem:[#allocation16 + $0x520] sm:$0xff]
    %v5664 = vld [vmem:[#allocation16 + $0x528] sm:$0xff]
    %v5665 = vld [vmem:[#allocation16 + $0x530] sm:$0xff]
    %v5666 = vld [vmem:[#allocation16 + $0x538] sm:$0xff]
    %v5667 = vld [vmem:[#allocation16 + $0x540] sm:$0xff]
    %v5668 = vld [vmem:[#allocation16 + $0x548] sm:$0xff]
    %v5669 = vld [vmem:[#allocation16 + $0x550] sm:$0xff]
    %v5670 = vld [vmem:[#allocation16 + $0x558] sm:$0xff]
    %v5671 = vld [vmem:[#allocation16 + $0x560] sm:$0xff]
    %v5672 = vld [vmem:[#allocation16 + $0x568] sm:$0xff]
    %v5673 = vld [vmem:[#allocation16 + $0x570] sm:$0xff]
    %v5674 = vld [vmem:[#allocation16 + $0x578] sm:$0xff]
    %v5675 = vld [vmem:[#allocation16 + $0x580] sm:$0xff]
    %v5676 = vld [vmem:[#allocation16 + $0x588] sm:$0xff]
    %v5677 = vld [vmem:[#allocation16 + $0x590] sm:$0xff]
    %v5678 = vld [vmem:[#allocation16 + $0x598] sm:$0xff]
    %v5679 = vld [vmem:[#allocation16 + $0x5a0] sm:$0xff]
    %v5680 = vld [vmem:[#allocation16 + $0x5a8] sm:$0xff]
    %v5681 = vld [vmem:[#allocation16 + $0x5b0] sm:$0xff]
    %v5682 = vld [vmem:[#allocation16 + $0x5b8] sm:$0xff]
    %v5683 = vld [vmem:[#allocation16 + $0x5c0] sm:$0xff]
    %v5684 = vld [vmem:[#allocation16 + $0x5c8] sm:$0xff]
    %v5685 = vld [vmem:[#allocation16 + $0x5d0] sm:$0xff]
    %v5686 = vld [vmem:[#allocation16 + $0x5d8] sm:$0xff]
    %v5687 = vld [vmem:[#allocation16 + $0x5e0] sm:$0xff]
    %v5688 = vld [vmem:[#allocation16 + $0x5e8] sm:$0xff]
    %v5689 = vld [vmem:[#allocation16 + $0x5f0] sm:$0xff]
    %v5690 = vld [vmem:[#allocation16 + $0x5f8] sm:$0xff]
    %v5691 = vld [vmem:[#allocation16 + $0x600] sm:$0xff]
    %v5692 = vld [vmem:[#allocation16 + $0x608] sm:$0xff]
    %v5693 = vld [vmem:[#allocation16 + $0x610] sm:$0xff]
    %v5694 = vld [vmem:[#allocation16 + $0x618] sm:$0xff]
    %v5695 = vld [vmem:[#allocation16 + $0x620] sm:$0xff]
    %v5696 = vld [vmem:[#allocation16 + $0x628] sm:$0xff]
    %v5697 = vld [vmem:[#allocation16 + $0x630] sm:$0xff]
    %v5698 = vld [vmem:[#allocation16 + $0x638] sm:$0xff]
    %v5699 = vld [vmem:[#allocation16 + $0x640] sm:$0xff]
    %v5700 = vld [vmem:[#allocation16 + $0x648] sm:$0xff]
    %v5701 = vld [vmem:[#allocation16 + $0x650] sm:$0xff]
    %v5702 = vld [vmem:[#allocation16 + $0x658] sm:$0xff]
    %v5703 = vld [vmem:[#allocation16 + $0x660] sm:$0xff]
    %v5704 = vld [vmem:[#allocation16 + $0x668] sm:$0xff]
    %v5705 = vld [vmem:[#allocation16 + $0x670] sm:$0xff]
    %v5706 = vld [vmem:[#allocation16 + $0x678] sm:$0xff]
    %v5707 = vld [vmem:[#allocation16 + $0x680] sm:$0xff]
    %v5708 = vld [vmem:[#allocation16 + $0x688] sm:$0xff]
    %v5709 = vld [vmem:[#allocation16 + $0x690] sm:$0xff]
    %v5710 = vld [vmem:[#allocation16 + $0x698] sm:$0xff]
    %v5711 = vld [vmem:[#allocation16 + $0x6a0] sm:$0xff]
    %v5712 = vld [vmem:[#allocation16 + $0x6a8] sm:$0xff]
    %v5713 = vld [vmem:[#allocation16 + $0x6b0] sm:$0xff]
    %v5714 = vld [vmem:[#allocation16 + $0x6b8] sm:$0xff]
    %v5715 = vld [vmem:[#allocation16 + $0x6c0] sm:$0xff]
    %v5716 = vld [vmem:[#allocation16 + $0x6c8] sm:$0xff]
    %v5717 = vld [vmem:[#allocation16 + $0x6d0] sm:$0xff]
    %v5718 = vld [vmem:[#allocation16 + $0x6d8] sm:$0xff]
    %v5719 = vld [vmem:[#allocation16 + $0x6e0] sm:$0xff]
    %v5720 = vld [vmem:[#allocation16 + $0x6e8] sm:$0xff]
    %v5721 = vld [vmem:[#allocation16 + $0x6f0] sm:$0xff]
    %v5722 = vld [vmem:[#allocation16 + $0x6f8] sm:$0xff]
    %v5723 = vld [vmem:[#allocation16 + $0x700] sm:$0xff]
    %v5724 = vld [vmem:[#allocation16 + $0x708] sm:$0xff]
    %v5725 = vld [vmem:[#allocation16 + $0x710] sm:$0xff]
    %v5726 = vld [vmem:[#allocation16 + $0x718] sm:$0xff]
    %v5727 = vld [vmem:[#allocation16 + $0x720] sm:$0xff]
    %v5728 = vld [vmem:[#allocation16 + $0x728] sm:$0xff]
    %v5729 = vld [vmem:[#allocation16 + $0x730] sm:$0xff]
    %v5730 = vld [vmem:[#allocation16 + $0x738] sm:$0xff]
    %v5731 = vld [vmem:[#allocation16 + $0x740] sm:$0xff]
    %v5732 = vld [vmem:[#allocation16 + $0x748] sm:$0xff]
    %v5733 = vld [vmem:[#allocation16 + $0x750] sm:$0xff]
    %v5734 = vld [vmem:[#allocation16 + $0x758] sm:$0xff]
    %v5735 = vld [vmem:[#allocation16 + $0x760] sm:$0xff]
    %v5736 = vld [vmem:[#allocation16 + $0x768] sm:$0xff]
    %v5737 = vld [vmem:[#allocation16 + $0x770] sm:$0xff]
    %v5738 = vld [vmem:[#allocation16 + $0x778] sm:$0xff]
    %v5739 = vld [vmem:[#allocation16 + $0x780] sm:$0xff]
    %v5740 = vld [vmem:[#allocation16 + $0x788] sm:$0xff]
    %v5741 = vld [vmem:[#allocation16 + $0x790] sm:$0xff]
    %v5742 = vld [vmem:[#allocation16 + $0x798] sm:$0xff]
    %v5743 = vld [vmem:[#allocation16 + $0x7a0] sm:$0xff]
    %v5744 = vld [vmem:[#allocation16 + $0x7a8] sm:$0xff]
    %v5745 = vld [vmem:[#allocation16 + $0x7b0] sm:$0xff]
    %v5746 = vld [vmem:[#allocation16 + $0x7b8] sm:$0xff]
    %v5747 = vld [vmem:[#allocation16 + $0x7c0] sm:$0xff]
    %v5748 = vld [vmem:[#allocation16 + $0x7c8] sm:$0xff]
    %v5749 = vld [vmem:[#allocation16 + $0x7d0] sm:$0xff]
    %v5750 = vld [vmem:[#allocation16 + $0x7d8] sm:$0xff]
    %v5751 = vld [vmem:[#allocation16 + $0x7e0] sm:$0xff]
    %v5752 = vld [vmem:[#allocation16 + $0x7e8] sm:$0xff]
    %v5753 = vld [vmem:[#allocation16 + $0x7f0] sm:$0xff]
    %v5754 = vld [vmem:[#allocation16 + $0x7f8] sm:$0xff]
    %v5755 = vld [vmem:[#allocation25] sm:$0xf]
    %v5757 = vlaneseq
    %v5758 = vshrl.u32 %v5757, 7
    %v5759 = vsub.s32 0, %v5758
    %v5760 = vrot.slane %v5755, %v5759
    %v5761 = vlaneseq
    %v5762 = vshrl.u32 %v5761, 7
    %v5763 = vsub.s32 1, %v5762
    %v5764 = vrot.slane %v5755, %v5763
    %v5765 = vlaneseq
    %v5766 = vshrl.u32 %v5765, 7
    %v5767 = vsub.s32 2, %v5766
    %v5768 = vrot.slane %v5755, %v5767
    %v5769 = vlaneseq
    %v5770 = vshrl.u32 %v5769, 7
    %v5771 = vsub.s32 3, %v5770
    %v5772 = vrot.slane %v5755, %v5771
    %v6033 = vunpack.c.l.b16 %v5499
    %v6034 = vunpack.c.h.b16 %v5499
    %v6035 = vunpack.c.l.b16 %v5500
    %v6036 = vunpack.c.h.b16 %v5500
    %v6037 = vunpack.c.l.b16 %v5501
    %v6038 = vunpack.c.h.b16 %v5501
    %v6039 = vunpack.c.l.b16 %v5502
    %v6040 = vunpack.c.h.b16 %v5502
    %v6041 = vunpack.c.l.b16 %v5503
    %v6042 = vunpack.c.h.b16 %v5503
    %v6043 = vunpack.c.l.b16 %v5504
    %v6044 = vunpack.c.h.b16 %v5504
    %v6045 = vunpack.c.l.b16 %v5505
    %v6046 = vunpack.c.h.b16 %v5505
    %v6047 = vunpack.c.l.b16 %v5506
    %v6048 = vunpack.c.h.b16 %v5506
    %v6049 = vunpack.c.l.b16 %v5507
    %v6050 = vunpack.c.h.b16 %v5507
    %v6051 = vunpack.c.l.b16 %v5508
    %v6052 = vunpack.c.h.b16 %v5508
    %v6053 = vunpack.c.l.b16 %v5509
    %v6054 = vunpack.c.h.b16 %v5509
    %v6055 = vunpack.c.l.b16 %v5510
    %v6056 = vunpack.c.h.b16 %v5510
    %v6057 = vunpack.c.l.b16 %v5511
    %v6058 = vunpack.c.h.b16 %v5511
    %v6059 = vunpack.c.l.b16 %v5512
    %v6060 = vunpack.c.h.b16 %v5512
    %v6061 = vunpack.c.l.b16 %v5513
    %v6062 = vunpack.c.h.b16 %v5513
    %v6063 = vunpack.c.l.b16 %v5514
    %v6064 = vunpack.c.h.b16 %v5514
    %v6065 = vunpack.c.l.b16 %v5515
    %v6066 = vunpack.c.h.b16 %v5515
    %v6067 = vunpack.c.l.b16 %v5516
    %v6068 = vunpack.c.h.b16 %v5516
    %v6069 = vunpack.c.l.b16 %v5517
    %v6070 = vunpack.c.h.b16 %v5517
    %v6071 = vunpack.c.l.b16 %v5518
    %v6072 = vunpack.c.h.b16 %v5518
    %v6073 = vunpack.c.l.b16 %v5519
    %v6074 = vunpack.c.h.b16 %v5519
    %v6075 = vunpack.c.l.b16 %v5520
    %v6076 = vunpack.c.h.b16 %v5520
    %v6077 = vunpack.c.l.b16 %v5521
    %v6078 = vunpack.c.h.b16 %v5521
    %v6079 = vunpack.c.l.b16 %v5522
    %v6080 = vunpack.c.h.b16 %v5522
    %v6081 = vunpack.c.l.b16 %v5523
    %v6082 = vunpack.c.h.b16 %v5523
    %v6083 = vunpack.c.l.b16 %v5524
    %v6084 = vunpack.c.h.b16 %v5524
    %v6085 = vunpack.c.l.b16 %v5525
    %v6086 = vunpack.c.h.b16 %v5525
    %v6087 = vunpack.c.l.b16 %v5526
    %v6088 = vunpack.c.h.b16 %v5526
    %v6089 = vunpack.c.l.b16 %v5527
    %v6090 = vunpack.c.h.b16 %v5527
    %v6091 = vunpack.c.l.b16 %v5528
    %v6092 = vunpack.c.h.b16 %v5528
    %v6093 = vunpack.c.l.b16 %v5529
    %v6094 = vunpack.c.h.b16 %v5529
    %v6095 = vunpack.c.l.b16 %v5530
    %v6096 = vunpack.c.h.b16 %v5530
    %v6097 = vunpack.c.l.b16 %v5531
    %v6098 = vunpack.c.h.b16 %v5531
    %v6099 = vunpack.c.l.b16 %v5532
    %v6100 = vunpack.c.h.b16 %v5532
    %v6101 = vunpack.c.l.b16 %v5533
    %v6102 = vunpack.c.h.b16 %v5533
    %v6103 = vunpack.c.l.b16 %v5534
    %v6104 = vunpack.c.h.b16 %v5534
    %v6105 = vunpack.c.l.b16 %v5535
    %v6106 = vunpack.c.h.b16 %v5535
    %v6107 = vunpack.c.l.b16 %v5536
    %v6108 = vunpack.c.h.b16 %v5536
    %v6109 = vunpack.c.l.b16 %v5537
    %v6110 = vunpack.c.h.b16 %v5537
    %v6111 = vunpack.c.l.b16 %v5538
    %v6112 = vunpack.c.h.b16 %v5538
    %v6113 = vunpack.c.l.b16 %v5539
    %v6114 = vunpack.c.h.b16 %v5539
    %v6115 = vunpack.c.l.b16 %v5540
    %v6116 = vunpack.c.h.b16 %v5540
    %v6117 = vunpack.c.l.b16 %v5541
    %v6118 = vunpack.c.h.b16 %v5541
    %v6119 = vunpack.c.l.b16 %v5542
    %v6120 = vunpack.c.h.b16 %v5542
    %v6121 = vunpack.c.l.b16 %v5543
    %v6122 = vunpack.c.h.b16 %v5543
    %v6123 = vunpack.c.l.b16 %v5544
    %v6124 = vunpack.c.h.b16 %v5544
    %v6125 = vunpack.c.l.b16 %v5545
    %v6126 = vunpack.c.h.b16 %v5545
    %v6127 = vunpack.c.l.b16 %v5546
    %v6128 = vunpack.c.h.b16 %v5546
    %v6129 = vunpack.c.l.b16 %v5547
    %v6130 = vunpack.c.h.b16 %v5547
    %v6131 = vunpack.c.l.b16 %v5548
    %v6132 = vunpack.c.h.b16 %v5548
    %v6133 = vunpack.c.l.b16 %v5549
    %v6134 = vunpack.c.h.b16 %v5549
    %v6135 = vunpack.c.l.b16 %v5550
    %v6136 = vunpack.c.h.b16 %v5550
    %v6137 = vunpack.c.l.b16 %v5551
    %v6138 = vunpack.c.h.b16 %v5551
    %v6139 = vunpack.c.l.b16 %v5552
    %v6140 = vunpack.c.h.b16 %v5552
    %v6141 = vunpack.c.l.b16 %v5553
    %v6142 = vunpack.c.h.b16 %v5553
    %v6143 = vunpack.c.l.b16 %v5554
    %v6144 = vunpack.c.h.b16 %v5554
    %v6145 = vunpack.c.l.b16 %v5555
    %v6146 = vunpack.c.h.b16 %v5555
    %v6147 = vunpack.c.l.b16 %v5556
    %v6148 = vunpack.c.h.b16 %v5556
    %v6149 = vunpack.c.l.b16 %v5557
    %v6150 = vunpack.c.h.b16 %v5557
    %v6151 = vunpack.c.l.b16 %v5558
    %v6152 = vunpack.c.h.b16 %v5558
    %v6153 = vunpack.c.l.b16 %v5559
    %v6154 = vunpack.c.h.b16 %v5559
    %v6155 = vunpack.c.l.b16 %v5560
    %v6156 = vunpack.c.h.b16 %v5560
    %v6157 = vunpack.c.l.b16 %v5561
    %v6158 = vunpack.c.h.b16 %v5561
    %v6159 = vunpack.c.l.b16 %v5562
    %v6160 = vunpack.c.h.b16 %v5562
    %v6161 = vunpack.c.l.b16 %v5563
    %v6162 = vunpack.c.h.b16 %v5563
    %v6163 = vunpack.c.l.b16 %v5564
    %v6164 = vunpack.c.h.b16 %v5564
    %v6165 = vunpack.c.l.b16 %v5565
    %v6166 = vunpack.c.h.b16 %v5565
    %v6167 = vunpack.c.l.b16 %v5566
    %v6168 = vunpack.c.h.b16 %v5566
    %v6169 = vunpack.c.l.b16 %v5567
    %v6170 = vunpack.c.h.b16 %v5567
    %v6171 = vunpack.c.l.b16 %v5568
    %v6172 = vunpack.c.h.b16 %v5568
    %v6173 = vunpack.c.l.b16 %v5569
    %v6174 = vunpack.c.h.b16 %v5569
    %v6175 = vunpack.c.l.b16 %v5570
    %v6176 = vunpack.c.h.b16 %v5570
    %v6177 = vunpack.c.l.b16 %v5571
    %v6178 = vunpack.c.h.b16 %v5571
    %v6179 = vunpack.c.l.b16 %v5572
    %v6180 = vunpack.c.h.b16 %v5572
    %v6181 = vunpack.c.l.b16 %v5573
    %v6182 = vunpack.c.h.b16 %v5573
    %v6183 = vunpack.c.l.b16 %v5574
    %v6184 = vunpack.c.h.b16 %v5574
    %v6185 = vunpack.c.l.b16 %v5575
    %v6186 = vunpack.c.h.b16 %v5575
    %v6187 = vunpack.c.l.b16 %v5576
    %v6188 = vunpack.c.h.b16 %v5576
    %v6189 = vunpack.c.l.b16 %v5577
    %v6190 = vunpack.c.h.b16 %v5577
    %v6191 = vunpack.c.l.b16 %v5578
    %v6192 = vunpack.c.h.b16 %v5578
    %v6193 = vunpack.c.l.b16 %v5579
    %v6194 = vunpack.c.h.b16 %v5579
    %v6195 = vunpack.c.l.b16 %v5580
    %v6196 = vunpack.c.h.b16 %v5580
    %v6197 = vunpack.c.l.b16 %v5581
    %v6198 = vunpack.c.h.b16 %v5581
    %v6199 = vunpack.c.l.b16 %v5582
    %v6200 = vunpack.c.h.b16 %v5582
    %v6201 = vunpack.c.l.b16 %v5583
    %v6202 = vunpack.c.h.b16 %v5583
    %v6203 = vunpack.c.l.b16 %v5584
    %v6204 = vunpack.c.h.b16 %v5584
    %v6205 = vunpack.c.l.b16 %v5585
    %v6206 = vunpack.c.h.b16 %v5585
    %v6207 = vunpack.c.l.b16 %v5586
    %v6208 = vunpack.c.h.b16 %v5586
    %v6209 = vunpack.c.l.b16 %v5587
    %v6210 = vunpack.c.h.b16 %v5587
    %v6211 = vunpack.c.l.b16 %v5588
    %v6212 = vunpack.c.h.b16 %v5588
    %v6213 = vunpack.c.l.b16 %v5589
    %v6214 = vunpack.c.h.b16 %v5589
    %v6215 = vunpack.c.l.b16 %v5590
    %v6216 = vunpack.c.h.b16 %v5590
    %v6217 = vunpack.c.l.b16 %v5591
    %v6218 = vunpack.c.h.b16 %v5591
    %v6219 = vunpack.c.l.b16 %v5592
    %v6220 = vunpack.c.h.b16 %v5592
    %v6221 = vunpack.c.l.b16 %v5593
    %v6222 = vunpack.c.h.b16 %v5593
    %v6223 = vunpack.c.l.b16 %v5594
    %v6224 = vunpack.c.h.b16 %v5594
    %v6225 = vunpack.c.l.b16 %v5595
    %v6226 = vunpack.c.h.b16 %v5595
    %v6227 = vunpack.c.l.b16 %v5596
    %v6228 = vunpack.c.h.b16 %v5596
    %v6229 = vunpack.c.l.b16 %v5597
    %v6230 = vunpack.c.h.b16 %v5597
    %v6231 = vunpack.c.l.b16 %v5598
    %v6232 = vunpack.c.h.b16 %v5598
    %v6233 = vunpack.c.l.b16 %v5599
    %v6234 = vunpack.c.h.b16 %v5599
    %v6235 = vunpack.c.l.b16 %v5600
    %v6236 = vunpack.c.h.b16 %v5600
    %v6237 = vunpack.c.l.b16 %v5601
    %v6238 = vunpack.c.h.b16 %v5601
    %v6239 = vunpack.c.l.b16 %v5602
    %v6240 = vunpack.c.h.b16 %v5602
    %v6241 = vunpack.c.l.b16 %v5603
    %v6242 = vunpack.c.h.b16 %v5603
    %v6243 = vunpack.c.l.b16 %v5604
    %v6244 = vunpack.c.h.b16 %v5604
    %v6245 = vunpack.c.l.b16 %v5605
    %v6246 = vunpack.c.h.b16 %v5605
    %v6247 = vunpack.c.l.b16 %v5606
    %v6248 = vunpack.c.h.b16 %v5606
    %v6249 = vunpack.c.l.b16 %v5607
    %v6250 = vunpack.c.h.b16 %v5607
    %v6251 = vunpack.c.l.b16 %v5608
    %v6252 = vunpack.c.h.b16 %v5608
    %v6253 = vunpack.c.l.b16 %v5609
    %v6254 = vunpack.c.h.b16 %v5609
    %v6255 = vunpack.c.l.b16 %v5610
    %v6256 = vunpack.c.h.b16 %v5610
    %v6257 = vunpack.c.l.b16 %v5611
    %v6258 = vunpack.c.h.b16 %v5611
    %v6259 = vunpack.c.l.b16 %v5612
    %v6260 = vunpack.c.h.b16 %v5612
    %v6261 = vunpack.c.l.b16 %v5613
    %v6262 = vunpack.c.h.b16 %v5613
    %v6263 = vunpack.c.l.b16 %v5614
    %v6264 = vunpack.c.h.b16 %v5614
    %v6265 = vunpack.c.l.b16 %v5615
    %v6266 = vunpack.c.h.b16 %v5615
    %v6267 = vunpack.c.l.b16 %v5616
    %v6268 = vunpack.c.h.b16 %v5616
    %v6269 = vunpack.c.l.b16 %v5617
    %v6270 = vunpack.c.h.b16 %v5617
    %v6271 = vunpack.c.l.b16 %v5618
    %v6272 = vunpack.c.h.b16 %v5618
    %v6273 = vunpack.c.l.b16 %v5619
    %v6274 = vunpack.c.h.b16 %v5619
    %v6275 = vunpack.c.l.b16 %v5620
    %v6276 = vunpack.c.h.b16 %v5620
    %v6277 = vunpack.c.l.b16 %v5621
    %v6278 = vunpack.c.h.b16 %v5621
    %v6279 = vunpack.c.l.b16 %v5622
    %v6280 = vunpack.c.h.b16 %v5622
    %v6281 = vunpack.c.l.b16 %v5623
    %v6282 = vunpack.c.h.b16 %v5623
    %v6283 = vunpack.c.l.b16 %v5624
    %v6284 = vunpack.c.h.b16 %v5624
    %v6285 = vunpack.c.l.b16 %v5625
    %v6286 = vunpack.c.h.b16 %v5625
    %v6287 = vunpack.c.l.b16 %v5626
    %v6288 = vunpack.c.h.b16 %v5626
    %v6289 = vunpack.c.l.b16 %v5627
    %v6290 = vunpack.c.h.b16 %v5627
    %v6291 = vunpack.c.l.b16 %v5628
    %v6292 = vunpack.c.h.b16 %v5628
    %v6293 = vunpack.c.l.b16 %v5629
    %v6294 = vunpack.c.h.b16 %v5629
    %v6295 = vunpack.c.l.b16 %v5630
    %v6296 = vunpack.c.h.b16 %v5630
    %v6297 = vunpack.c.l.b16 %v5631
    %v6298 = vunpack.c.h.b16 %v5631
    %v6299 = vunpack.c.l.b16 %v5632
    %v6300 = vunpack.c.h.b16 %v5632
    %v6301 = vunpack.c.l.b16 %v5633
    %v6302 = vunpack.c.h.b16 %v5633
    %v6303 = vunpack.c.l.b16 %v5634
    %v6304 = vunpack.c.h.b16 %v5634
    %v6305 = vunpack.c.l.b16 %v5635
    %v6306 = vunpack.c.h.b16 %v5635
    %v6307 = vunpack.c.l.b16 %v5636
    %v6308 = vunpack.c.h.b16 %v5636
    %v6309 = vunpack.c.l.b16 %v5637
    %v6310 = vunpack.c.h.b16 %v5637
    %v6311 = vunpack.c.l.b16 %v5638
    %v6312 = vunpack.c.h.b16 %v5638
    %v6313 = vunpack.c.l.b16 %v5639
    %v6314 = vunpack.c.h.b16 %v5639
    %v6315 = vunpack.c.l.b16 %v5640
    %v6316 = vunpack.c.h.b16 %v5640
    %v6317 = vunpack.c.l.b16 %v5641
    %v6318 = vunpack.c.h.b16 %v5641
    %v6319 = vunpack.c.l.b16 %v5642
    %v6320 = vunpack.c.h.b16 %v5642
    %v6321 = vunpack.c.l.b16 %v5643
    %v6322 = vunpack.c.h.b16 %v5643
    %v6323 = vunpack.c.l.b16 %v5644
    %v6324 = vunpack.c.h.b16 %v5644
    %v6325 = vunpack.c.l.b16 %v5645
    %v6326 = vunpack.c.h.b16 %v5645
    %v6327 = vunpack.c.l.b16 %v5646
    %v6328 = vunpack.c.h.b16 %v5646
    %v6329 = vunpack.c.l.b16 %v5647
    %v6330 = vunpack.c.h.b16 %v5647
    %v6331 = vunpack.c.l.b16 %v5648
    %v6332 = vunpack.c.h.b16 %v5648
    %v6333 = vunpack.c.l.b16 %v5649
    %v6334 = vunpack.c.h.b16 %v5649
    %v6335 = vunpack.c.l.b16 %v5650
    %v6336 = vunpack.c.h.b16 %v5650
    %v6337 = vunpack.c.l.b16 %v5651
    %v6338 = vunpack.c.h.b16 %v5651
    %v6339 = vunpack.c.l.b16 %v5652
    %v6340 = vunpack.c.h.b16 %v5652
    %v6341 = vunpack.c.l.b16 %v5653
    %v6342 = vunpack.c.h.b16 %v5653
    %v6343 = vunpack.c.l.b16 %v5654
    %v6344 = vunpack.c.h.b16 %v5654
    %v6345 = vunpack.c.l.b16 %v5655
    %v6346 = vunpack.c.h.b16 %v5655
    %v6347 = vunpack.c.l.b16 %v5656
    %v6348 = vunpack.c.h.b16 %v5656
    %v6349 = vunpack.c.l.b16 %v5657
    %v6350 = vunpack.c.h.b16 %v5657
    %v6351 = vunpack.c.l.b16 %v5658
    %v6352 = vunpack.c.h.b16 %v5658
    %v6353 = vunpack.c.l.b16 %v5659
    %v6354 = vunpack.c.h.b16 %v5659
    %v6355 = vunpack.c.l.b16 %v5660
    %v6356 = vunpack.c.h.b16 %v5660
    %v6357 = vunpack.c.l.b16 %v5661
    %v6358 = vunpack.c.h.b16 %v5661
    %v6359 = vunpack.c.l.b16 %v5662
    %v6360 = vunpack.c.h.b16 %v5662
    %v6361 = vunpack.c.l.b16 %v5663
    %v6362 = vunpack.c.h.b16 %v5663
    %v6363 = vunpack.c.l.b16 %v5664
    %v6364 = vunpack.c.h.b16 %v5664
    %v6365 = vunpack.c.l.b16 %v5665
    %v6366 = vunpack.c.h.b16 %v5665
    %v6367 = vunpack.c.l.b16 %v5666
    %v6368 = vunpack.c.h.b16 %v5666
    %v6369 = vunpack.c.l.b16 %v5667
    %v6370 = vunpack.c.h.b16 %v5667
    %v6371 = vunpack.c.l.b16 %v5668
    %v6372 = vunpack.c.h.b16 %v5668
    %v6373 = vunpack.c.l.b16 %v5669
    %v6374 = vunpack.c.h.b16 %v5669
    %v6375 = vunpack.c.l.b16 %v5670
    %v6376 = vunpack.c.h.b16 %v5670
    %v6377 = vunpack.c.l.b16 %v5671
    %v6378 = vunpack.c.h.b16 %v5671
    %v6379 = vunpack.c.l.b16 %v5672
    %v6380 = vunpack.c.h.b16 %v5672
    %v6381 = vunpack.c.l.b16 %v5673
    %v6382 = vunpack.c.h.b16 %v5673
    %v6383 = vunpack.c.l.b16 %v5674
    %v6384 = vunpack.c.h.b16 %v5674
    %v6385 = vunpack.c.l.b16 %v5675
    %v6386 = vunpack.c.h.b16 %v5675
    %v6387 = vunpack.c.l.b16 %v5676
    %v6388 = vunpack.c.h.b16 %v5676
    %v6389 = vunpack.c.l.b16 %v5677
    %v6390 = vunpack.c.h.b16 %v5677
    %v6391 = vunpack.c.l.b16 %v5678
    %v6392 = vunpack.c.h.b16 %v5678
    %v6393 = vunpack.c.l.b16 %v5679
    %v6394 = vunpack.c.h.b16 %v5679
    %v6395 = vunpack.c.l.b16 %v5680
    %v6396 = vunpack.c.h.b16 %v5680
    %v6397 = vunpack.c.l.b16 %v5681
    %v6398 = vunpack.c.h.b16 %v5681
    %v6399 = vunpack.c.l.b16 %v5682
    %v6400 = vunpack.c.h.b16 %v5682
    %v6401 = vunpack.c.l.b16 %v5683
    %v6402 = vunpack.c.h.b16 %v5683
    %v6403 = vunpack.c.l.b16 %v5684
    %v6404 = vunpack.c.h.b16 %v5684
    %v6405 = vunpack.c.l.b16 %v5685
    %v6406 = vunpack.c.h.b16 %v5685
    %v6407 = vunpack.c.l.b16 %v5686
    %v6408 = vunpack.c.h.b16 %v5686
    %v6409 = vunpack.c.l.b16 %v5687
    %v6410 = vunpack.c.h.b16 %v5687
    %v6411 = vunpack.c.l.b16 %v5688
    %v6412 = vunpack.c.h.b16 %v5688
    %v6413 = vunpack.c.l.b16 %v5689
    %v6414 = vunpack.c.h.b16 %v5689
    %v6415 = vunpack.c.l.b16 %v5690
    %v6416 = vunpack.c.h.b16 %v5690
    %v6417 = vunpack.c.l.b16 %v5691
    %v6418 = vunpack.c.h.b16 %v5691
    %v6419 = vunpack.c.l.b16 %v5692
    %v6420 = vunpack.c.h.b16 %v5692
    %v6421 = vunpack.c.l.b16 %v5693
    %v6422 = vunpack.c.h.b16 %v5693
    %v6423 = vunpack.c.l.b16 %v5694
    %v6424 = vunpack.c.h.b16 %v5694
    %v6425 = vunpack.c.l.b16 %v5695
    %v6426 = vunpack.c.h.b16 %v5695
    %v6427 = vunpack.c.l.b16 %v5696
    %v6428 = vunpack.c.h.b16 %v5696
    %v6429 = vunpack.c.l.b16 %v5697
    %v6430 = vunpack.c.h.b16 %v5697
    %v6431 = vunpack.c.l.b16 %v5698
    %v6432 = vunpack.c.h.b16 %v5698
    %v6433 = vunpack.c.l.b16 %v5699
    %v6434 = vunpack.c.h.b16 %v5699
    %v6435 = vunpack.c.l.b16 %v5700
    %v6436 = vunpack.c.h.b16 %v5700
    %v6437 = vunpack.c.l.b16 %v5701
    %v6438 = vunpack.c.h.b16 %v5701
    %v6439 = vunpack.c.l.b16 %v5702
    %v6440 = vunpack.c.h.b16 %v5702
    %v6441 = vunpack.c.l.b16 %v5703
    %v6442 = vunpack.c.h.b16 %v5703
    %v6443 = vunpack.c.l.b16 %v5704
    %v6444 = vunpack.c.h.b16 %v5704
    %v6445 = vunpack.c.l.b16 %v5705
    %v6446 = vunpack.c.h.b16 %v5705
    %v6447 = vunpack.c.l.b16 %v5706
    %v6448 = vunpack.c.h.b16 %v5706
    %v6449 = vunpack.c.l.b16 %v5707
    %v6450 = vunpack.c.h.b16 %v5707
    %v6451 = vunpack.c.l.b16 %v5708
    %v6452 = vunpack.c.h.b16 %v5708
    %v6453 = vunpack.c.l.b16 %v5709
    %v6454 = vunpack.c.h.b16 %v5709
    %v6455 = vunpack.c.l.b16 %v5710
    %v6456 = vunpack.c.h.b16 %v5710
    %v6457 = vunpack.c.l.b16 %v5711
    %v6458 = vunpack.c.h.b16 %v5711
    %v6459 = vunpack.c.l.b16 %v5712
    %v6460 = vunpack.c.h.b16 %v5712
    %v6461 = vunpack.c.l.b16 %v5713
    %v6462 = vunpack.c.h.b16 %v5713
    %v6463 = vunpack.c.l.b16 %v5714
    %v6464 = vunpack.c.h.b16 %v5714
    %v6465 = vunpack.c.l.b16 %v5715
    %v6466 = vunpack.c.h.b16 %v5715
    %v6467 = vunpack.c.l.b16 %v5716
    %v6468 = vunpack.c.h.b16 %v5716
    %v6469 = vunpack.c.l.b16 %v5717
    %v6470 = vunpack.c.h.b16 %v5717
    %v6471 = vunpack.c.l.b16 %v5718
    %v6472 = vunpack.c.h.b16 %v5718
    %v6473 = vunpack.c.l.b16 %v5719
    %v6474 = vunpack.c.h.b16 %v5719
    %v6475 = vunpack.c.l.b16 %v5720
    %v6476 = vunpack.c.h.b16 %v5720
    %v6477 = vunpack.c.l.b16 %v5721
    %v6478 = vunpack.c.h.b16 %v5721
    %v6479 = vunpack.c.l.b16 %v5722
    %v6480 = vunpack.c.h.b16 %v5722
    %v6481 = vunpack.c.l.b16 %v5723
    %v6482 = vunpack.c.h.b16 %v5723
    %v6483 = vunpack.c.l.b16 %v5724
    %v6484 = vunpack.c.h.b16 %v5724
    %v6485 = vunpack.c.l.b16 %v5725
    %v6486 = vunpack.c.h.b16 %v5725
    %v6487 = vunpack.c.l.b16 %v5726
    %v6488 = vunpack.c.h.b16 %v5726
    %v6489 = vunpack.c.l.b16 %v5727
    %v6490 = vunpack.c.h.b16 %v5727
    %v6491 = vunpack.c.l.b16 %v5728
    %v6492 = vunpack.c.h.b16 %v5728
    %v6493 = vunpack.c.l.b16 %v5729
    %v6494 = vunpack.c.h.b16 %v5729
    %v6495 = vunpack.c.l.b16 %v5730
    %v6496 = vunpack.c.h.b16 %v5730
    %v6497 = vunpack.c.l.b16 %v5731
    %v6498 = vunpack.c.h.b16 %v5731
    %v6499 = vunpack.c.l.b16 %v5732
    %v6500 = vunpack.c.h.b16 %v5732
    %v6501 = vunpack.c.l.b16 %v5733
    %v6502 = vunpack.c.h.b16 %v5733
    %v6503 = vunpack.c.l.b16 %v5734
    %v6504 = vunpack.c.h.b16 %v5734
    %v6505 = vunpack.c.l.b16 %v5735
    %v6506 = vunpack.c.h.b16 %v5735
    %v6507 = vunpack.c.l.b16 %v5736
    %v6508 = vunpack.c.h.b16 %v5736
    %v6509 = vunpack.c.l.b16 %v5737
    %v6510 = vunpack.c.h.b16 %v5737
    %v6511 = vunpack.c.l.b16 %v5738
    %v6512 = vunpack.c.h.b16 %v5738
    %v6513 = vunpack.c.l.b16 %v5739
    %v6514 = vunpack.c.h.b16 %v5739
    %v6515 = vunpack.c.l.b16 %v5740
    %v6516 = vunpack.c.h.b16 %v5740
    %v6517 = vunpack.c.l.b16 %v5741
    %v6518 = vunpack.c.h.b16 %v5741
    %v6519 = vunpack.c.l.b16 %v5742
    %v6520 = vunpack.c.h.b16 %v5742
    %v6521 = vunpack.c.l.b16 %v5743
    %v6522 = vunpack.c.h.b16 %v5743
    %v6523 = vunpack.c.l.b16 %v5744
    %v6524 = vunpack.c.h.b16 %v5744
    %v6525 = vunpack.c.l.b16 %v5745
    %v6526 = vunpack.c.h.b16 %v5745
    %v6527 = vunpack.c.l.b16 %v5746
    %v6528 = vunpack.c.h.b16 %v5746
    %v6529 = vunpack.c.l.b16 %v5747
    %v6530 = vunpack.c.h.b16 %v5747
    %v6531 = vunpack.c.l.b16 %v5748
    %v6532 = vunpack.c.h.b16 %v5748
    %v6533 = vunpack.c.l.b16 %v5749
    %v6534 = vunpack.c.h.b16 %v5749
    %v6535 = vunpack.c.l.b16 %v5750
    %v6536 = vunpack.c.h.b16 %v5750
    %v6537 = vunpack.c.l.b16 %v5751
    %v6538 = vunpack.c.h.b16 %v5751
    %v6539 = vunpack.c.l.b16 %v5752
    %v6540 = vunpack.c.h.b16 %v5752
    %v6541 = vunpack.c.l.b16 %v5753
    %v6542 = vunpack.c.h.b16 %v5753
    %v6543 = vunpack.c.l.b16 %v5754
    %v6544 = vunpack.c.h.b16 %v5754
    %v6545 = vpack.c.b16 %v6037, %v6033
    %v6546 = vpack.c.b16 %v6038, %v6034
    %v6547 = vpack.c.b16 %v6039, %v6035
    %v6548 = vpack.c.b16 %v6040, %v6036
    %v6549 = vpack.c.b16 %v6045, %v6041
    %v6550 = vpack.c.b16 %v6046, %v6042
    %v6551 = vpack.c.b16 %v6047, %v6043
    %v6552 = vpack.c.b16 %v6048, %v6044
    %v6553 = vpack.c.b16 %v6053, %v6049
    %v6554 = vpack.c.b16 %v6054, %v6050
    %v6555 = vpack.c.b16 %v6055, %v6051
    %v6556 = vpack.c.b16 %v6056, %v6052
    %v6557 = vpack.c.b16 %v6061, %v6057
    %v6558 = vpack.c.b16 %v6062, %v6058
    %v6559 = vpack.c.b16 %v6063, %v6059
    %v6560 = vpack.c.b16 %v6064, %v6060
    %v6561 = vpack.c.b16 %v6069, %v6065
    %v6562 = vpack.c.b16 %v6070, %v6066
    %v6563 = vpack.c.b16 %v6071, %v6067
    %v6564 = vpack.c.b16 %v6072, %v6068
    %v6565 = vpack.c.b16 %v6077, %v6073
    %v6566 = vpack.c.b16 %v6078, %v6074
    %v6567 = vpack.c.b16 %v6079, %v6075
    %v6568 = vpack.c.b16 %v6080, %v6076
    %v6569 = vpack.c.b16 %v6085, %v6081
    %v6570 = vpack.c.b16 %v6086, %v6082
    %v6571 = vpack.c.b16 %v6087, %v6083
    %v6572 = vpack.c.b16 %v6088, %v6084
    %v6573 = vpack.c.b16 %v6093, %v6089
    %v6574 = vpack.c.b16 %v6094, %v6090
    %v6575 = vpack.c.b16 %v6095, %v6091
    %v6576 = vpack.c.b16 %v6096, %v6092
    %v6577 = vpack.c.b16 %v6101, %v6097
    %v6578 = vpack.c.b16 %v6102, %v6098
    %v6579 = vpack.c.b16 %v6103, %v6099
    %v6580 = vpack.c.b16 %v6104, %v6100
    %v6581 = vpack.c.b16 %v6109, %v6105
    %v6582 = vpack.c.b16 %v6110, %v6106
    %v6583 = vpack.c.b16 %v6111, %v6107
    %v6584 = vpack.c.b16 %v6112, %v6108
    %v6585 = vpack.c.b16 %v6117, %v6113
    %v6586 = vpack.c.b16 %v6118, %v6114
    %v6587 = vpack.c.b16 %v6119, %v6115
    %v6588 = vpack.c.b16 %v6120, %v6116
    %v6589 = vpack.c.b16 %v6125, %v6121
    %v6590 = vpack.c.b16 %v6126, %v6122
    %v6591 = vpack.c.b16 %v6127, %v6123
    %v6592 = vpack.c.b16 %v6128, %v6124
    %v6593 = vpack.c.b16 %v6133, %v6129
    %v6594 = vpack.c.b16 %v6134, %v6130
    %v6595 = vpack.c.b16 %v6135, %v6131
    %v6596 = vpack.c.b16 %v6136, %v6132
    %v6597 = vpack.c.b16 %v6141, %v6137
    %v6598 = vpack.c.b16 %v6142, %v6138
    %v6599 = vpack.c.b16 %v6143, %v6139
    %v6600 = vpack.c.b16 %v6144, %v6140
    %v6601 = vpack.c.b16 %v6149, %v6145
    %v6602 = vpack.c.b16 %v6150, %v6146
    %v6603 = vpack.c.b16 %v6151, %v6147
    %v6604 = vpack.c.b16 %v6152, %v6148
    %v6605 = vpack.c.b16 %v6157, %v6153
    %v6606 = vpack.c.b16 %v6158, %v6154
    %v6607 = vpack.c.b16 %v6159, %v6155
    %v6608 = vpack.c.b16 %v6160, %v6156
    %v6609 = vpack.c.b16 %v6165, %v6161
    %v6610 = vpack.c.b16 %v6166, %v6162
    %v6611 = vpack.c.b16 %v6167, %v6163
    %v6612 = vpack.c.b16 %v6168, %v6164
    %v6613 = vpack.c.b16 %v6173, %v6169
    %v6614 = vpack.c.b16 %v6174, %v6170
    %v6615 = vpack.c.b16 %v6175, %v6171
    %v6616 = vpack.c.b16 %v6176, %v6172
    %v6617 = vpack.c.b16 %v6181, %v6177
    %v6618 = vpack.c.b16 %v6182, %v6178
    %v6619 = vpack.c.b16 %v6183, %v6179
    %v6620 = vpack.c.b16 %v6184, %v6180
    %v6621 = vpack.c.b16 %v6189, %v6185
    %v6622 = vpack.c.b16 %v6190, %v6186
    %v6623 = vpack.c.b16 %v6191, %v6187
    %v6624 = vpack.c.b16 %v6192, %v6188
    %v6625 = vpack.c.b16 %v6197, %v6193
    %v6626 = vpack.c.b16 %v6198, %v6194
    %v6627 = vpack.c.b16 %v6199, %v6195
    %v6628 = vpack.c.b16 %v6200, %v6196
    %v6629 = vpack.c.b16 %v6205, %v6201
    %v6630 = vpack.c.b16 %v6206, %v6202
    %v6631 = vpack.c.b16 %v6207, %v6203
    %v6632 = vpack.c.b16 %v6208, %v6204
    %v6633 = vpack.c.b16 %v6213, %v6209
    %v6634 = vpack.c.b16 %v6214, %v6210
    %v6635 = vpack.c.b16 %v6215, %v6211
    %v6636 = vpack.c.b16 %v6216, %v6212
    %v6637 = vpack.c.b16 %v6221, %v6217
    %v6638 = vpack.c.b16 %v6222, %v6218
    %v6639 = vpack.c.b16 %v6223, %v6219
    %v6640 = vpack.c.b16 %v6224, %v6220
    %v6641 = vpack.c.b16 %v6229, %v6225
    %v6642 = vpack.c.b16 %v6230, %v6226
    %v6643 = vpack.c.b16 %v6231, %v6227
    %v6644 = vpack.c.b16 %v6232, %v6228
    %v6645 = vpack.c.b16 %v6237, %v6233
    %v6646 = vpack.c.b16 %v6238, %v6234
    %v6647 = vpack.c.b16 %v6239, %v6235
    %v6648 = vpack.c.b16 %v6240, %v6236
    %v6649 = vpack.c.b16 %v6245, %v6241
    %v6650 = vpack.c.b16 %v6246, %v6242
    %v6651 = vpack.c.b16 %v6247, %v6243
    %v6652 = vpack.c.b16 %v6248, %v6244
    %v6653 = vpack.c.b16 %v6253, %v6249
    %v6654 = vpack.c.b16 %v6254, %v6250
    %v6655 = vpack.c.b16 %v6255, %v6251
    %v6656 = vpack.c.b16 %v6256, %v6252
    %v6657 = vpack.c.b16 %v6261, %v6257
    %v6658 = vpack.c.b16 %v6262, %v6258
    %v6659 = vpack.c.b16 %v6263, %v6259
    %v6660 = vpack.c.b16 %v6264, %v6260
    %v6661 = vpack.c.b16 %v6269, %v6265
    %v6662 = vpack.c.b16 %v6270, %v6266
    %v6663 = vpack.c.b16 %v6271, %v6267
    %v6664 = vpack.c.b16 %v6272, %v6268
    %v6665 = vpack.c.b16 %v6277, %v6273
    %v6666 = vpack.c.b16 %v6278, %v6274
    %v6667 = vpack.c.b16 %v6279, %v6275
    %v6668 = vpack.c.b16 %v6280, %v6276
    %v6669 = vpack.c.b16 %v6285, %v6281
    %v6670 = vpack.c.b16 %v6286, %v6282
    %v6671 = vpack.c.b16 %v6287, %v6283
    %v6672 = vpack.c.b16 %v6288, %v6284
    %v6673 = vpack.c.b16 %v6293, %v6289
    %v6674 = vpack.c.b16 %v6294, %v6290
    %v6675 = vpack.c.b16 %v6295, %v6291
    %v6676 = vpack.c.b16 %v6296, %v6292
    %v6677 = vpack.c.b16 %v6301, %v6297
    %v6678 = vpack.c.b16 %v6302, %v6298
    %v6679 = vpack.c.b16 %v6303, %v6299
    %v6680 = vpack.c.b16 %v6304, %v6300
    %v6681 = vpack.c.b16 %v6309, %v6305
    %v6682 = vpack.c.b16 %v6310, %v6306
    %v6683 = vpack.c.b16 %v6311, %v6307
    %v6684 = vpack.c.b16 %v6312, %v6308
    %v6685 = vpack.c.b16 %v6317, %v6313
    %v6686 = vpack.c.b16 %v6318, %v6314
    %v6687 = vpack.c.b16 %v6319, %v6315
    %v6688 = vpack.c.b16 %v6320, %v6316
    %v6689 = vpack.c.b16 %v6325, %v6321
    %v6690 = vpack.c.b16 %v6326, %v6322
    %v6691 = vpack.c.b16 %v6327, %v6323
    %v6692 = vpack.c.b16 %v6328, %v6324
    %v6693 = vpack.c.b16 %v6333, %v6329
    %v6694 = vpack.c.b16 %v6334, %v6330
    %v6695 = vpack.c.b16 %v6335, %v6331
    %v6696 = vpack.c.b16 %v6336, %v6332
    %v6697 = vpack.c.b16 %v6341, %v6337
    %v6698 = vpack.c.b16 %v6342, %v6338
    %v6699 = vpack.c.b16 %v6343, %v6339
    %v6700 = vpack.c.b16 %v6344, %v6340
    %v6701 = vpack.c.b16 %v6349, %v6345
    %v6702 = vpack.c.b16 %v6350, %v6346
    %v6703 = vpack.c.b16 %v6351, %v6347
    %v6704 = vpack.c.b16 %v6352, %v6348
    %v6705 = vpack.c.b16 %v6357, %v6353
    %v6706 = vpack.c.b16 %v6358, %v6354
    %v6707 = vpack.c.b16 %v6359, %v6355
    %v6708 = vpack.c.b16 %v6360, %v6356
    %v6709 = vpack.c.b16 %v6365, %v6361
    %v6710 = vpack.c.b16 %v6366, %v6362
    %v6711 = vpack.c.b16 %v6367, %v6363
    %v6712 = vpack.c.b16 %v6368, %v6364
    %v6713 = vpack.c.b16 %v6373, %v6369
    %v6714 = vpack.c.b16 %v6374, %v6370
    %v6715 = vpack.c.b16 %v6375, %v6371
    %v6716 = vpack.c.b16 %v6376, %v6372
    %v6717 = vpack.c.b16 %v6381, %v6377
    %v6718 = vpack.c.b16 %v6382, %v6378
    %v6719 = vpack.c.b16 %v6383, %v6379
    %v6720 = vpack.c.b16 %v6384, %v6380
    %v6721 = vpack.c.b16 %v6389, %v6385
    %v6722 = vpack.c.b16 %v6390, %v6386
    %v6723 = vpack.c.b16 %v6391, %v6387
    %v6724 = vpack.c.b16 %v6392, %v6388
    %v6725 = vpack.c.b16 %v6397, %v6393
    %v6726 = vpack.c.b16 %v6398, %v6394
    %v6727 = vpack.c.b16 %v6399, %v6395
    %v6728 = vpack.c.b16 %v6400, %v6396
    %v6729 = vpack.c.b16 %v6405, %v6401
    %v6730 = vpack.c.b16 %v6406, %v6402
    %v6731 = vpack.c.b16 %v6407, %v6403
    %v6732 = vpack.c.b16 %v6408, %v6404
    %v6733 = vpack.c.b16 %v6413, %v6409
    %v6734 = vpack.c.b16 %v6414, %v6410
    %v6735 = vpack.c.b16 %v6415, %v6411
    %v6736 = vpack.c.b16 %v6416, %v6412
    %v6737 = vpack.c.b16 %v6421, %v6417
    %v6738 = vpack.c.b16 %v6422, %v6418
    %v6739 = vpack.c.b16 %v6423, %v6419
    %v6740 = vpack.c.b16 %v6424, %v6420
    %v6741 = vpack.c.b16 %v6429, %v6425
    %v6742 = vpack.c.b16 %v6430, %v6426
    %v6743 = vpack.c.b16 %v6431, %v6427
    %v6744 = vpack.c.b16 %v6432, %v6428
    %v6745 = vpack.c.b16 %v6437, %v6433
    %v6746 = vpack.c.b16 %v6438, %v6434
    %v6747 = vpack.c.b16 %v6439, %v6435
    %v6748 = vpack.c.b16 %v6440, %v6436
    %v6749 = vpack.c.b16 %v6445, %v6441
    %v6750 = vpack.c.b16 %v6446, %v6442
    %v6751 = vpack.c.b16 %v6447, %v6443
    %v6752 = vpack.c.b16 %v6448, %v6444
    %v6753 = vpack.c.b16 %v6453, %v6449
    %v6754 = vpack.c.b16 %v6454, %v6450
    %v6755 = vpack.c.b16 %v6455, %v6451
    %v6756 = vpack.c.b16 %v6456, %v6452
    %v6757 = vpack.c.b16 %v6461, %v6457
    %v6758 = vpack.c.b16 %v6462, %v6458
    %v6759 = vpack.c.b16 %v6463, %v6459
    %v6760 = vpack.c.b16 %v6464, %v6460
    %v6761 = vpack.c.b16 %v6469, %v6465
    %v6762 = vpack.c.b16 %v6470, %v6466
    %v6763 = vpack.c.b16 %v6471, %v6467
    %v6764 = vpack.c.b16 %v6472, %v6468
    %v6765 = vpack.c.b16 %v6477, %v6473
    %v6766 = vpack.c.b16 %v6478, %v6474
    %v6767 = vpack.c.b16 %v6479, %v6475
    %v6768 = vpack.c.b16 %v6480, %v6476
    %v6769 = vpack.c.b16 %v6485, %v6481
    %v6770 = vpack.c.b16 %v6486, %v6482
    %v6771 = vpack.c.b16 %v6487, %v6483
    %v6772 = vpack.c.b16 %v6488, %v6484
    %v6773 = vpack.c.b16 %v6493, %v6489
    %v6774 = vpack.c.b16 %v6494, %v6490
    %v6775 = vpack.c.b16 %v6495, %v6491
    %v6776 = vpack.c.b16 %v6496, %v6492
    %v6777 = vpack.c.b16 %v6501, %v6497
    %v6778 = vpack.c.b16 %v6502, %v6498
    %v6779 = vpack.c.b16 %v6503, %v6499
    %v6780 = vpack.c.b16 %v6504, %v6500
    %v6781 = vpack.c.b16 %v6509, %v6505
    %v6782 = vpack.c.b16 %v6510, %v6506
    %v6783 = vpack.c.b16 %v6511, %v6507
    %v6784 = vpack.c.b16 %v6512, %v6508
    %v6785 = vpack.c.b16 %v6517, %v6513
    %v6786 = vpack.c.b16 %v6518, %v6514
    %v6787 = vpack.c.b16 %v6519, %v6515
    %v6788 = vpack.c.b16 %v6520, %v6516
    %v6789 = vpack.c.b16 %v6525, %v6521
    %v6790 = vpack.c.b16 %v6526, %v6522
    %v6791 = vpack.c.b16 %v6527, %v6523
    %v6792 = vpack.c.b16 %v6528, %v6524
    %v6793 = vpack.c.b16 %v6533, %v6529
    %v6794 = vpack.c.b16 %v6534, %v6530
    %v6795 = vpack.c.b16 %v6535, %v6531
    %v6796 = vpack.c.b16 %v6536, %v6532
    %v6797 = vpack.c.b16 %v6541, %v6537
    %v6798 = vpack.c.b16 %v6542, %v6538
    %v6799 = vpack.c.b16 %v6543, %v6539
    %v6800 = vpack.c.b16 %v6544, %v6540
    %7057 = vmatprep.subr.bf16.mxu0 %v6546
    %7058 = vmatpush1.bf16.msra.mxu0 %v6545
    %7059 = vmatprep.subr.bf16.mxu0 %v6550
    %7060 = vmatpush1.bf16.msra.mxu0 %v6549
    %7061 = vmatprep.subr.bf16.mxu0 %v6554
    %7062 = vmatpush1.bf16.msra.mxu0 %v6553
    %7063 = vmatprep.subr.bf16.mxu0 %v6558
    %7064 = vmatpush1.bf16.msra.mxu0 %v6557
    %7065 = vmatprep.subr.bf16.mxu0 %v6562
    %7066 = vmatpush1.bf16.msra.mxu0 %v6561
    %7067 = vmatprep.subr.bf16.mxu0 %v6566
    %7068 = vmatpush1.bf16.msra.mxu0 %v6565
    %7069 = vmatprep.subr.bf16.mxu0 %v6570
    %7070 = vmatpush1.bf16.msra.mxu0 %v6569
    %7071 = vmatprep.subr.bf16.mxu0 %v6574
    %7072 = vmatpush1.bf16.msra.mxu0 %v6573
    %7073 = vmatprep.subr.bf16.mxu0 %v6578
    %7074 = vmatpush1.bf16.msra.mxu0 %v6577
    %7075 = vmatprep.subr.bf16.mxu0 %v6582
    %7076 = vmatpush1.bf16.msra.mxu0 %v6581
    %7077 = vmatprep.subr.bf16.mxu0 %v6586
    %7078 = vmatpush1.bf16.msra.mxu0 %v6585
    %7079 = vmatprep.subr.bf16.mxu0 %v6590
    %7080 = vmatpush1.bf16.msra.mxu0 %v6589
    %7081 = vmatprep.subr.bf16.mxu0 %v6594
    %7082 = vmatpush1.bf16.msra.mxu0 %v6593
    %7083 = vmatprep.subr.bf16.mxu0 %v6598
    %7084 = vmatpush1.bf16.msra.mxu0 %v6597
    %7085 = vmatprep.subr.bf16.mxu0 %v6602
    %7086 = vmatpush1.bf16.msra.mxu0 %v6601
    %7087 = vmatprep.subr.bf16.mxu0 %v6606
    %7088 = vmatpush1.bf16.msra.mxu0 %v6605
    %7089 = vmatprep.mubr.bf16.mxu0 %v5492
    %7090 = vmatmul.mubr.bf16.gmra.mrb[0].mxu0 %v5491
    %v7091 = vpop.f32.mrb[0].mxu0
    %v7092 = vadd.f32 %v5760, %v7091
    %v7093 = vpop.f32.mrb[0].mxu0
    %v7094 = vadd.f32 %v5764, %v7093
    %v7095 = vpop.f32.mrb[0].mxu0
    %v7096 = vpop.f32.mrb[0].mxu0
    %7097 = vdwg.mxu0
    %7098 = vmatprep.subr.bf16.mxu0 %v6610
    %7099 = vmatpush1.bf16.msra.mxu0 %v6609
    %7100 = vmatprep.subr.bf16.mxu0 %v6614
    %7101 = vmatpush1.bf16.msra.mxu0 %v6613
    %7102 = vmatprep.subr.bf16.mxu0 %v6618
    %7103 = vmatpush1.bf16.msra.mxu0 %v6617
    %7104 = vmatprep.subr.bf16.mxu0 %v6622
    %7105 = vmatpush1.bf16.msra.mxu0 %v6621
    %7106 = vmatprep.subr.bf16.mxu0 %v6626
    %7107 = vmatpush1.bf16.msra.mxu0 %v6625
    %7108 = vmatprep.subr.bf16.mxu0 %v6630
    %7109 = vmatpush1.bf16.msra.mxu0 %v6629
    %7110 = vmatprep.subr.bf16.mxu0 %v6634
    %7111 = vmatpush1.bf16.msra.mxu0 %v6633
    %7112 = vmatprep.subr.bf16.mxu0 %v6638
    %7113 = vmatpush1.bf16.msra.mxu0 %v6637
    %7114 = vmatprep.subr.bf16.mxu0 %v6642
    %7115 = vmatpush1.bf16.msra.mxu0 %v6641
    %7116 = vmatprep.subr.bf16.mxu0 %v6646
    %7117 = vmatpush1.bf16.msra.mxu0 %v6645
    %7118 = vmatprep.subr.bf16.mxu0 %v6650
    %7119 = vmatpush1.bf16.msra.mxu0 %v6649
    %7120 = vmatprep.subr.bf16.mxu0 %v6654
    %7121 = vmatpush1.bf16.msra.mxu0 %v6653
    %7122 = vmatprep.subr.bf16.mxu0 %v6658
    %7123 = vmatpush1.bf16.msra.mxu0 %v6657
    %7124 = vmatprep.subr.bf16.mxu0 %v6662
    %7125 = vmatpush1.bf16.msra.mxu0 %v6661
    %7126 = vmatprep.subr.bf16.mxu0 %v6666
    %7127 = vmatpush1.bf16.msra.mxu0 %v6665
    %7128 = vmatprep.subr.bf16.mxu0 %v6670
    %7129 = vmatpush1.bf16.msra.mxu0 %v6669
    %7130 = vmatprep.mubr.bf16.mxu0 %v5494
    %7131 = vmatmul.mubr.bf16.gmra.mrb[0].mxu0 %v5493
    %v7132 = vpop.f32.mrb[0].mxu0
    %v7133 = vadd.f32 %v7092, %v7132
    %v7134 = vpop.f32.mrb[0].mxu0
    %v7135 = vadd.f32 %v7094, %v7134
    %v7136 = vpop.f32.mrb[0].mxu0
    %v7137 = vpop.f32.mrb[0].mxu0
    %7138 = vdwg.mxu0
    %7139 = vmatprep.subr.bf16.mxu0 %v6674
    %7140 = vmatpush1.bf16.msra.mxu0 %v6673
    %7141 = vmatprep.subr.bf16.mxu0 %v6678
    %7142 = vmatpush1.bf16.msra.mxu0 %v6677
    %7143 = vmatprep.subr.bf16.mxu0 %v6682
    %7144 = vmatpush1.bf16.msra.mxu0 %v6681
    %7145 = vmatprep.subr.bf16.mxu0 %v6686
    %7146 = vmatpush1.bf16.msra.mxu0 %v6685
    %7147 = vmatprep.subr.bf16.mxu0 %v6690
    %7148 = vmatpush1.bf16.msra.mxu0 %v6689
    %7149 = vmatprep.subr.bf16.mxu0 %v6694
    %7150 = vmatpush1.bf16.msra.mxu0 %v6693
    %7151 = vmatprep.subr.bf16.mxu0 %v6698
    %7152 = vmatpush1.bf16.msra.mxu0 %v6697
    %7153 = vmatprep.subr.bf16.mxu0 %v6702
    %7154 = vmatpush1.bf16.msra.mxu0 %v6701
    %7155 = vmatprep.subr.bf16.mxu0 %v6706
    %7156 = vmatpush1.bf16.msra.mxu0 %v6705
    %7157 = vmatprep.subr.bf16.mxu0 %v6710
    %7158 = vmatpush1.bf16.msra.mxu0 %v6709
    %7159 = vmatprep.subr.bf16.mxu0 %v6714
    %7160 = vmatpush1.bf16.msra.mxu0 %v6713
    %7161 = vmatprep.subr.bf16.mxu0 %v6718
    %7162 = vmatpush1.bf16.msra.mxu0 %v6717
    %7163 = vmatprep.subr.bf16.mxu0 %v6722
    %7164 = vmatpush1.bf16.msra.mxu0 %v6721
    %7165 = vmatprep.subr.bf16.mxu0 %v6726
    %7166 = vmatpush1.bf16.msra.mxu0 %v6725
    %7167 = vmatprep.subr.bf16.mxu0 %v6730
    %7168 = vmatpush1.bf16.msra.mxu0 %v6729
    %7169 = vmatprep.subr.bf16.mxu0 %v6734
    %7170 = vmatpush1.bf16.msra.mxu0 %v6733
    %7171 = vmatprep.mubr.bf16.mxu0 %v5496
    %7172 = vmatmul.mubr.bf16.gmra.mrb[0].mxu0 %v5495
    %v7173 = vpop.f32.mrb[0].mxu0
    %v7174 = vadd.f32 %v7133, %v7173
    %v7175 = vpop.f32.mrb[0].mxu0
    %v7176 = vadd.f32 %v7135, %v7175
    %v7177 = vpop.f32.mrb[0].mxu0
    %v7178 = vpop.f32.mrb[0].mxu0
    %7179 = vdwg.mxu0
    %7180 = vmatprep.subr.bf16.mxu0 %v6738
    %7181 = vmatpush1.bf16.msra.mxu0 %v6737
    %7182 = vmatprep.subr.bf16.mxu0 %v6742
    %7183 = vmatpush1.bf16.msra.mxu0 %v6741
    %7184 = vmatprep.subr.bf16.mxu0 %v6746
    %7185 = vmatpush1.bf16.msra.mxu0 %v6745
    %7186 = vmatprep.subr.bf16.mxu0 %v6750
    %7187 = vmatpush1.bf16.msra.mxu0 %v6749
    %7188 = vmatprep.subr.bf16.mxu0 %v6754
    %7189 = vmatpush1.bf16.msra.mxu0 %v6753
    %7190 = vmatprep.subr.bf16.mxu0 %v6758
    %7191 = vmatpush1.bf16.msra.mxu0 %v6757
    %7192 = vmatprep.subr.bf16.mxu0 %v6762
    %7193 = vmatpush1.bf16.msra.mxu0 %v6761
    %7194 = vmatprep.subr.bf16.mxu0 %v6766
    %7195 = vmatpush1.bf16.msra.mxu0 %v6765
    %7196 = vmatprep.subr.bf16.mxu0 %v6770
    %7197 = vmatpush1.bf16.msra.mxu0 %v6769
    %7198 = vmatprep.subr.bf16.mxu0 %v6774
    %7199 = vmatpush1.bf16.msra.mxu0 %v6773
    %7200 = vmatprep.subr.bf16.mxu0 %v6778
    %7201 = vmatpush1.bf16.msra.mxu0 %v6777
    %7202 = vmatprep.subr.bf16.mxu0 %v6782
    %7203 = vmatpush1.bf16.msra.mxu0 %v6781
    %7204 = vmatprep.subr.bf16.mxu0 %v6786
    %7205 = vmatpush1.bf16.msra.mxu0 %v6785
    %7206 = vmatprep.subr.bf16.mxu0 %v6790
    %7207 = vmatpush1.bf16.msra.mxu0 %v6789
    %7208 = vmatprep.subr.bf16.mxu0 %v6794
    %7209 = vmatpush1.bf16.msra.mxu0 %v6793
    %7210 = vmatprep.subr.bf16.mxu0 %v6798
    %7211 = vmatpush1.bf16.msra.mxu0 %v6797
    %7212 = vmatprep.mubr.bf16.mxu0 %v5498
    %7213 = vmatmul.mubr.bf16.gmra.mrb[0].mxu0 %v5497
    %v7214 = vpop.f32.mrb[0].mxu0
    %v7215 = vadd.f32 %v7174, %v7214
    %v7216 = vpop.f32.mrb[0].mxu0
    %v7217 = vadd.f32 %v7176, %v7216
    %v7218 = vpop.f32.mrb[0].mxu0
    %v7219 = vpop.f32.mrb[0].mxu0
    %7220 = vdwg.mxu0
    %7221 = vmatprep.subr.bf16.mxu0 %v6548
    %7222 = vmatpush1.bf16.msra.mxu0 %v6547
    %7223 = vmatprep.subr.bf16.mxu0 %v6552
    %7224 = vmatpush1.bf16.msra.mxu0 %v6551
    %7225 = vmatprep.subr.bf16.mxu0 %v6556
    %7226 = vmatpush1.bf16.msra.mxu0 %v6555
    %7227 = vmatprep.subr.bf16.mxu0 %v6560
    %7228 = vmatpush1.bf16.msra.mxu0 %v6559
    %7229 = vmatprep.subr.bf16.mxu0 %v6564
    %7230 = vmatpush1.bf16.msra.mxu0 %v6563
    %7231 = vmatprep.subr.bf16.mxu0 %v6568
    %7232 = vmatpush1.bf16.msra.mxu0 %v6567
    %7233 = vmatprep.subr.bf16.mxu0 %v6572
    %7234 = vmatpush1.bf16.msra.mxu0 %v6571
    %7235 = vmatprep.subr.bf16.mxu0 %v6576
    %7236 = vmatpush1.bf16.msra.mxu0 %v6575
    %7237 = vmatprep.subr.bf16.mxu0 %v6580
    %7238 = vmatpush1.bf16.msra.mxu0 %v6579
    %7239 = vmatprep.subr.bf16.mxu0 %v6584
    %7240 = vmatpush1.bf16.msra.mxu0 %v6583
    %7241 = vmatprep.subr.bf16.mxu0 %v6588
    %7242 = vmatpush1.bf16.msra.mxu0 %v6587
    %7243 = vmatprep.subr.bf16.mxu0 %v6592
    %7244 = vmatpush1.bf16.msra.mxu0 %v6591
    %7245 = vmatprep.subr.bf16.mxu0 %v6596
    %7246 = vmatpush1.bf16.msra.mxu0 %v6595
    %7247 = vmatprep.subr.bf16.mxu0 %v6600
    %7248 = vmatpush1.bf16.msra.mxu0 %v6599
    %7249 = vmatprep.subr.bf16.mxu0 %v6604
    %7250 = vmatpush1.bf16.msra.mxu0 %v6603
    %7251 = vmatprep.subr.bf16.mxu0 %v6608
    %7252 = vmatpush1.bf16.msra.mxu0 %v6607
    %7253 = vmatprep.mubr.bf16.mxu0 %v5492
    %7254 = vmatmul.mubr.bf16.gmra.mrb[0].mxu0 %v5491
    %v7255 = vpop.f32.mrb[0].mxu0
    %v7256 = vadd.f32 %v5768, %v7255
    %v7257 = vpop.f32.mrb[0].mxu0
    %v7258 = vadd.f32 %v5772, %v7257
    %v7259 = vpop.f32.mrb[0].mxu0
    %v7260 = vpop.f32.mrb[0].mxu0
    %7261 = vdwg.mxu0
    %7262 = vmatprep.subr.bf16.mxu0 %v6612
    %7263 = vmatpush1.bf16.msra.mxu0 %v6611
    %7264 = vmatprep.subr.bf16.mxu0 %v6616
    %7265 = vmatpush1.bf16.msra.mxu0 %v6615
    %7266 = vmatprep.subr.bf16.mxu0 %v6620
    %7267 = vmatpush1.bf16.msra.mxu0 %v6619
    %7268 = vmatprep.subr.bf16.mxu0 %v6624
    %7269 = vmatpush1.bf16.msra.mxu0 %v6623
    %7270 = vmatprep.subr.bf16.mxu0 %v6628
    %7271 = vmatpush1.bf16.msra.mxu0 %v6627
    %7272 = vmatprep.subr.bf16.mxu0 %v6632
    %7273 = vmatpush1.bf16.msra.mxu0 %v6631
    %7274 = vmatprep.subr.bf16.mxu0 %v6636
    %7275 = vmatpush1.bf16.msra.mxu0 %v6635
    %7276 = vmatprep.subr.bf16.mxu0 %v6640
    %7277 = vmatpush1.bf16.msra.mxu0 %v6639
    %7278 = vmatprep.subr.bf16.mxu0 %v6644
    %7279 = vmatpush1.bf16.msra.mxu0 %v6643
    %7280 = vmatprep.subr.bf16.mxu0 %v6648
    %7281 = vmatpush1.bf16.msra.mxu0 %v6647
    %7282 = vmatprep.subr.bf16.mxu0 %v6652
    %7283 = vmatpush1.bf16.msra.mxu0 %v6651
    %7284 = vmatprep.subr.bf16.mxu0 %v6656
    %7285 = vmatpush1.bf16.msra.mxu0 %v6655
    %7286 = vmatprep.subr.bf16.mxu0 %v6660
    %7287 = vmatpush1.bf16.msra.mxu0 %v6659
    %7288 = vmatprep.subr.bf16.mxu0 %v6664
    %7289 = vmatpush1.bf16.msra.mxu0 %v6663
    %7290 = vmatprep.subr.bf16.mxu0 %v6668
    %7291 = vmatpush1.bf16.msra.mxu0 %v6667
    %7292 = vmatprep.subr.bf16.mxu0 %v6672
    %7293 = vmatpush1.bf16.msra.mxu0 %v6671
    %7294 = vmatprep.mubr.bf16.mxu0 %v5494
    %7295 = vmatmul.mubr.bf16.gmra.mrb[0].mxu0 %v5493
    %v7296 = vpop.f32.mrb[0].mxu0
    %v7297 = vadd.f32 %v7256, %v7296
    %v7298 = vpop.f32.mrb[0].mxu0
    %v7299 = vadd.f32 %v7258, %v7298
    %v7300 = vpop.f32.mrb[0].mxu0
    %v7301 = vpop.f32.mrb[0].mxu0
    %7302 = vdwg.mxu0
    %7303 = vmatprep.subr.bf16.mxu0 %v6676
    %7304 = vmatpush1.bf16.msra.mxu0 %v6675
    %7305 = vmatprep.subr.bf16.mxu0 %v6680
    %7306 = vmatpush1.bf16.msra.mxu0 %v6679
    %7307 = vmatprep.subr.bf16.mxu0 %v6684
    %7308 = vmatpush1.bf16.msra.mxu0 %v6683
    %7309 = vmatprep.subr.bf16.mxu0 %v6688
    %7310 = vmatpush1.bf16.msra.mxu0 %v6687
    %7311 = vmatprep.subr.bf16.mxu0 %v6692
    %7312 = vmatpush1.bf16.msra.mxu0 %v6691
    %7313 = vmatprep.subr.bf16.mxu0 %v6696
    %7314 = vmatpush1.bf16.msra.mxu0 %v6695
    %7315 = vmatprep.subr.bf16.mxu0 %v6700
    %7316 = vmatpush1.bf16.msra.mxu0 %v6699
    %7317 = vmatprep.subr.bf16.mxu0 %v6704
    %7318 = vmatpush1.bf16.msra.mxu0 %v6703
    %7319 = vmatprep.subr.bf16.mxu0 %v6708
    %7320 = vmatpush1.bf16.msra.mxu0 %v6707
    %7321 = vmatprep.subr.bf16.mxu0 %v6712
    %7322 = vmatpush1.bf16.msra.mxu0 %v6711
    %7323 = vmatprep.subr.bf16.mxu0 %v6716
    %7324 = vmatpush1.bf16.msra.mxu0 %v6715
    %7325 = vmatprep.subr.bf16.mxu0 %v6720
    %7326 = vmatpush1.bf16.msra.mxu0 %v6719
    %7327 = vmatprep.subr.bf16.mxu0 %v6724
    %7328 = vmatpush1.bf16.msra.mxu0 %v6723
    %7329 = vmatprep.subr.bf16.mxu0 %v6728
    %7330 = vmatpush1.bf16.msra.mxu0 %v6727
    %7331 = vmatprep.subr.bf16.mxu0 %v6732
    %7332 = vmatpush1.bf16.msra.mxu0 %v6731
    %7333 = vmatprep.subr.bf16.mxu0 %v6736
    %7334 = vmatpush1.bf16.msra.mxu0 %v6735
    %7335 = vmatprep.mubr.bf16.mxu0 %v5496
    %7336 = vmatmul.mubr.bf16.gmra.mrb[0].mxu0 %v5495
    %v7337 = vpop.f32.mrb[0].mxu0
    %v7338 = vadd.f32 %v7297, %v7337
    %v7339 = vpop.f32.mrb[0].mxu0
    %v7340 = vadd.f32 %v7299, %v7339
    %v7341 = vpop.f32.mrb[0].mxu0
    %v7342 = vpop.f32.mrb[0].mxu0
    %7343 = vdwg.mxu0
    %7344 = vmatprep.subr.bf16.mxu0 %v6740
    %7345 = vmatpush1.bf16.msra.mxu0 %v6739
    %7346 = vmatprep.subr.bf16.mxu0 %v6744
    %7347 = vmatpush1.bf16.msra.mxu0 %v6743
    %7348 = vmatprep.subr.bf16.mxu0 %v6748
    %7349 = vmatpush1.bf16.msra.mxu0 %v6747
    %7350 = vmatprep.subr.bf16.mxu0 %v6752
    %7351 = vmatpush1.bf16.msra.mxu0 %v6751
    %7352 = vmatprep.subr.bf16.mxu0 %v6756
    %7353 = vmatpush1.bf16.msra.mxu0 %v6755
    %7354 = vmatprep.subr.bf16.mxu0 %v6760
    %7355 = vmatpush1.bf16.msra.mxu0 %v6759
    %7356 = vmatprep.subr.bf16.mxu0 %v6764
    %7357 = vmatpush1.bf16.msra.mxu0 %v6763
    %7358 = vmatprep.subr.bf16.mxu0 %v6768
    %7359 = vmatpush1.bf16.msra.mxu0 %v6767
    %7360 = vmatprep.subr.bf16.mxu0 %v6772
    %7361 = vmatpush1.bf16.msra.mxu0 %v6771
    %7362 = vmatprep.subr.bf16.mxu0 %v6776
    %7363 = vmatpush1.bf16.msra.mxu0 %v6775
    %7364 = vmatprep.subr.bf16.mxu0 %v6780
    %7365 = vmatpush1.bf16.msra.mxu0 %v6779
    %7366 = vmatprep.subr.bf16.mxu0 %v6784
    %7367 = vmatpush1.bf16.msra.mxu0 %v6783
    %7368 = vmatprep.subr.bf16.mxu0 %v6788
    %7369 = vmatpush1.bf16.msra.mxu0 %v6787
    %7370 = vmatprep.subr.bf16.mxu0 %v6792
    %7371 = vmatpush1.bf16.msra.mxu0 %v6791
    %7372 = vmatprep.subr.bf16.mxu0 %v6796
    %7373 = vmatpush1.bf16.msra.mxu0 %v6795
    %7374 = vmatprep.subr.bf16.mxu0 %v6800
    %7375 = vmatpush1.bf16.msra.mxu0 %v6799
    %7376 = vmatprep.mubr.bf16.mxu0 %v5498
    %7377 = vmatmul.mubr.bf16.gmra.mrb[0].mxu0 %v5497
    %v7378 = vpop.f32.mrb[0].mxu0
    %v7379 = vadd.f32 %v7338, %v7378
    %v7380 = vpop.f32.mrb[0].mxu0
    %v7381 = vadd.f32 %v7340, %v7380
    %v7382 = vpop.f32.mrb[0].mxu0
    %v7383 = vpop.f32.mrb[0].mxu0
    %7384 = vdwg.mxu0
    %vm7385 = vcmp.gt.f32.partialorder %v7215, 0.0
    %vm7386 = vcmp.gt.f32.partialorder %v7217, 0.0
    %vm7387 = vcmp.gt.f32.partialorder %v7379, 0.0
    %vm7388 = vcmp.gt.f32.partialorder %v7381, 0.0
    %v7389 = vmul.f32 %v7215, 0.01
    %v7390 = vmul.f32 %v7217, 0.01
    %v7391 = vmul.f32 %v7379, 0.01
    %v7392 = vmul.f32 %v7381, 0.01
    %v7393 = vsel %vm7385, %v7215, %v7389
    %v7394 = vsel %vm7386, %v7217, %v7390
    %v7395 = vsel %vm7387, %v7379, %v7391
    %v7396 = vsel %vm7388, %v7381, %v7392
    %v7397 = vpack.c.bf16 %v7393, %v7393
    %v7398 = vpack.c.bf16 %v7394, %v7394
    %v7399 = vpack.c.bf16 %v7395, %v7395
    %v7400 = vpack.c.bf16 %v7396, %v7396
    %v7401 = vld [vmem:[#allocation18] sm:$0xff]
    %v7402 = vld [vmem:[#allocation18 + $0x8] sm:$0xff]
    %v7403 = vld [vmem:[#allocation18 + $0x10] sm:$0xff]
    %v7404 = vld [vmem:[#allocation18 + $0x18] sm:$0xff]
    %v7405 = vld [vmem:[#allocation18 + $0x20] sm:$0xff]
    %v7406 = vld [vmem:[#allocation18 + $0x28] sm:$0xff]
    %v7407 = vld [vmem:[#allocation18 + $0x30] sm:$0xff]
    %v7408 = vld [vmem:[#allocation18 + $0x38] sm:$0xff]
    %v7409 = vld [vmem:[#allocation18 + $0x40] sm:$0xff]
    %v7410 = vld [vmem:[#allocation18 + $0x48] sm:$0xff]
    %v7411 = vld [vmem:[#allocation18 + $0x50] sm:$0xff]
    %v7412 = vld [vmem:[#allocation18 + $0x58] sm:$0xff]
    %v7413 = vld [vmem:[#allocation18 + $0x60] sm:$0xff]
    %v7414 = vld [vmem:[#allocation18 + $0x68] sm:$0xff]
    %v7415 = vld [vmem:[#allocation18 + $0x70] sm:$0xff]
    %v7416 = vld [vmem:[#allocation18 + $0x78] sm:$0xff]
    %v7417 = vld [vmem:[#allocation18 + $0x80] sm:$0xff]
    %v7418 = vld [vmem:[#allocation18 + $0x88] sm:$0xff]
    %v7419 = vld [vmem:[#allocation18 + $0x90] sm:$0xff]
    %v7420 = vld [vmem:[#allocation18 + $0x98] sm:$0xff]
    %v7421 = vld [vmem:[#allocation18 + $0xa0] sm:$0xff]
    %v7422 = vld [vmem:[#allocation18 + $0xa8] sm:$0xff]
    %v7423 = vld [vmem:[#allocation18 + $0xb0] sm:$0xff]
    %v7424 = vld [vmem:[#allocation18 + $0xb8] sm:$0xff]
    %v7425 = vld [vmem:[#allocation18 + $0xc0] sm:$0xff]
    %v7426 = vld [vmem:[#allocation18 + $0xc8] sm:$0xff]
    %v7427 = vld [vmem:[#allocation18 + $0xd0] sm:$0xff]
    %v7428 = vld [vmem:[#allocation18 + $0xd8] sm:$0xff]
    %v7429 = vld [vmem:[#allocation18 + $0xe0] sm:$0xff]
    %v7430 = vld [vmem:[#allocation18 + $0xe8] sm:$0xff]
    %v7431 = vld [vmem:[#allocation18 + $0xf0] sm:$0xff]
    %v7432 = vld [vmem:[#allocation18 + $0xf8] sm:$0xff]
    %v7433 = vld [vmem:[#allocation18 + $0x100] sm:$0xff]
    %v7434 = vld [vmem:[#allocation18 + $0x108] sm:$0xff]
    %v7435 = vld [vmem:[#allocation18 + $0x110] sm:$0xff]
    %v7436 = vld [vmem:[#allocation18 + $0x118] sm:$0xff]
    %v7437 = vld [vmem:[#allocation18 + $0x120] sm:$0xff]
    %v7438 = vld [vmem:[#allocation18 + $0x128] sm:$0xff]
    %v7439 = vld [vmem:[#allocation18 + $0x130] sm:$0xff]
    %v7440 = vld [vmem:[#allocation18 + $0x138] sm:$0xff]
    %v7441 = vld [vmem:[#allocation18 + $0x140] sm:$0xff]
    %v7442 = vld [vmem:[#allocation18 + $0x148] sm:$0xff]
    %v7443 = vld [vmem:[#allocation18 + $0x150] sm:$0xff]
    %v7444 = vld [vmem:[#allocation18 + $0x158] sm:$0xff]
    %v7445 = vld [vmem:[#allocation18 + $0x160] sm:$0xff]
    %v7446 = vld [vmem:[#allocation18 + $0x168] sm:$0xff]
    %v7447 = vld [vmem:[#allocation18 + $0x170] sm:$0xff]
    %v7448 = vld [vmem:[#allocation18 + $0x178] sm:$0xff]
    %v7449 = vld [vmem:[#allocation18 + $0x180] sm:$0xff]
    %v7450 = vld [vmem:[#allocation18 + $0x188] sm:$0xff]
    %v7451 = vld [vmem:[#allocation18 + $0x190] sm:$0xff]
    %v7452 = vld [vmem:[#allocation18 + $0x198] sm:$0xff]
    %v7453 = vld [vmem:[#allocation18 + $0x1a0] sm:$0xff]
    %v7454 = vld [vmem:[#allocation18 + $0x1a8] sm:$0xff]
    %v7455 = vld [vmem:[#allocation18 + $0x1b0] sm:$0xff]
    %v7456 = vld [vmem:[#allocation18 + $0x1b8] sm:$0xff]
    %v7457 = vld [vmem:[#allocation18 + $0x1c0] sm:$0xff]
    %v7458 = vld [vmem:[#allocation18 + $0x1c8] sm:$0xff]
    %v7459 = vld [vmem:[#allocation18 + $0x1d0] sm:$0xff]
    %v7460 = vld [vmem:[#allocation18 + $0x1d8] sm:$0xff]
    %v7461 = vld [vmem:[#allocation18 + $0x1e0] sm:$0xff]
    %v7462 = vld [vmem:[#allocation18 + $0x1e8] sm:$0xff]
    %v7463 = vld [vmem:[#allocation18 + $0x1f0] sm:$0xff]
    %v7464 = vld [vmem:[#allocation18 + $0x1f8] sm:$0xff]
    %v7465 = vld [vmem:[#allocation27] sm:$0x3]
    %v7467 = vlaneseq
    %v7468 = vshrl.u32 %v7467, 7
    %v7469 = vsub.s32 0, %v7468
    %v7470 = vrot.slane %v7465, %v7469
    %v7471 = vlaneseq
    %v7472 = vshrl.u32 %v7471, 7
    %v7473 = vsub.s32 1, %v7472
    %v7474 = vrot.slane %v7465, %v7473
    %v7541 = vunpack.c.l.b16 %v7401
    %v7542 = vunpack.c.h.b16 %v7401
    %v7543 = vunpack.c.l.b16 %v7402
    %v7544 = vunpack.c.h.b16 %v7402
    %v7545 = vunpack.c.l.b16 %v7403
    %v7546 = vunpack.c.h.b16 %v7403
    %v7547 = vunpack.c.l.b16 %v7404
    %v7548 = vunpack.c.h.b16 %v7404
    %v7549 = vunpack.c.l.b16 %v7405
    %v7550 = vunpack.c.h.b16 %v7405
    %v7551 = vunpack.c.l.b16 %v7406
    %v7552 = vunpack.c.h.b16 %v7406
    %v7553 = vunpack.c.l.b16 %v7407
    %v7554 = vunpack.c.h.b16 %v7407
    %v7555 = vunpack.c.l.b16 %v7408
    %v7556 = vunpack.c.h.b16 %v7408
    %v7557 = vunpack.c.l.b16 %v7409
    %v7558 = vunpack.c.h.b16 %v7409
    %v7559 = vunpack.c.l.b16 %v7410
    %v7560 = vunpack.c.h.b16 %v7410
    %v7561 = vunpack.c.l.b16 %v7411
    %v7562 = vunpack.c.h.b16 %v7411
    %v7563 = vunpack.c.l.b16 %v7412
    %v7564 = vunpack.c.h.b16 %v7412
    %v7565 = vunpack.c.l.b16 %v7413
    %v7566 = vunpack.c.h.b16 %v7413
    %v7567 = vunpack.c.l.b16 %v7414
    %v7568 = vunpack.c.h.b16 %v7414
    %v7569 = vunpack.c.l.b16 %v7415
    %v7570 = vunpack.c.h.b16 %v7415
    %v7571 = vunpack.c.l.b16 %v7416
    %v7572 = vunpack.c.h.b16 %v7416
    %v7573 = vunpack.c.l.b16 %v7417
    %v7574 = vunpack.c.h.b16 %v7417
    %v7575 = vunpack.c.l.b16 %v7418
    %v7576 = vunpack.c.h.b16 %v7418
    %v7577 = vunpack.c.l.b16 %v7419
    %v7578 = vunpack.c.h.b16 %v7419
    %v7579 = vunpack.c.l.b16 %v7420
    %v7580 = vunpack.c.h.b16 %v7420
    %v7581 = vunpack.c.l.b16 %v7421
    %v7582 = vunpack.c.h.b16 %v7421
    %v7583 = vunpack.c.l.b16 %v7422
    %v7584 = vunpack.c.h.b16 %v7422
    %v7585 = vunpack.c.l.b16 %v7423
    %v7586 = vunpack.c.h.b16 %v7423
    %v7587 = vunpack.c.l.b16 %v7424
    %v7588 = vunpack.c.h.b16 %v7424
    %v7589 = vunpack.c.l.b16 %v7425
    %v7590 = vunpack.c.h.b16 %v7425
    %v7591 = vunpack.c.l.b16 %v7426
    %v7592 = vunpack.c.h.b16 %v7426
    %v7593 = vunpack.c.l.b16 %v7427
    %v7594 = vunpack.c.h.b16 %v7427
    %v7595 = vunpack.c.l.b16 %v7428
    %v7596 = vunpack.c.h.b16 %v7428
    %v7597 = vunpack.c.l.b16 %v7429
    %v7598 = vunpack.c.h.b16 %v7429
    %v7599 = vunpack.c.l.b16 %v7430
    %v7600 = vunpack.c.h.b16 %v7430
    %v7601 = vunpack.c.l.b16 %v7431
    %v7602 = vunpack.c.h.b16 %v7431
    %v7603 = vunpack.c.l.b16 %v7432
    %v7604 = vunpack.c.h.b16 %v7432
    %v7605 = vunpack.c.l.b16 %v7433
    %v7606 = vunpack.c.h.b16 %v7433
    %v7607 = vunpack.c.l.b16 %v7434
    %v7608 = vunpack.c.h.b16 %v7434
    %v7609 = vunpack.c.l.b16 %v7435
    %v7610 = vunpack.c.h.b16 %v7435
    %v7611 = vunpack.c.l.b16 %v7436
    %v7612 = vunpack.c.h.b16 %v7436
    %v7613 = vunpack.c.l.b16 %v7437
    %v7614 = vunpack.c.h.b16 %v7437
    %v7615 = vunpack.c.l.b16 %v7438
    %v7616 = vunpack.c.h.b16 %v7438
    %v7617 = vunpack.c.l.b16 %v7439
    %v7618 = vunpack.c.h.b16 %v7439
    %v7619 = vunpack.c.l.b16 %v7440
    %v7620 = vunpack.c.h.b16 %v7440
    %v7621 = vunpack.c.l.b16 %v7441
    %v7622 = vunpack.c.h.b16 %v7441
    %v7623 = vunpack.c.l.b16 %v7442
    %v7624 = vunpack.c.h.b16 %v7442
    %v7625 = vunpack.c.l.b16 %v7443
    %v7626 = vunpack.c.h.b16 %v7443
    %v7627 = vunpack.c.l.b16 %v7444
    %v7628 = vunpack.c.h.b16 %v7444
    %v7629 = vunpack.c.l.b16 %v7445
    %v7630 = vunpack.c.h.b16 %v7445
    %v7631 = vunpack.c.l.b16 %v7446
    %v7632 = vunpack.c.h.b16 %v7446
    %v7633 = vunpack.c.l.b16 %v7447
    %v7634 = vunpack.c.h.b16 %v7447
    %v7635 = vunpack.c.l.b16 %v7448
    %v7636 = vunpack.c.h.b16 %v7448
    %v7637 = vunpack.c.l.b16 %v7449
    %v7638 = vunpack.c.h.b16 %v7449
    %v7639 = vunpack.c.l.b16 %v7450
    %v7640 = vunpack.c.h.b16 %v7450
    %v7641 = vunpack.c.l.b16 %v7451
    %v7642 = vunpack.c.h.b16 %v7451
    %v7643 = vunpack.c.l.b16 %v7452
    %v7644 = vunpack.c.h.b16 %v7452
    %v7645 = vunpack.c.l.b16 %v7453
    %v7646 = vunpack.c.h.b16 %v7453
    %v7647 = vunpack.c.l.b16 %v7454
    %v7648 = vunpack.c.h.b16 %v7454
    %v7649 = vunpack.c.l.b16 %v7455
    %v7650 = vunpack.c.h.b16 %v7455
    %v7651 = vunpack.c.l.b16 %v7456
    %v7652 = vunpack.c.h.b16 %v7456
    %v7653 = vunpack.c.l.b16 %v7457
    %v7654 = vunpack.c.h.b16 %v7457
    %v7655 = vunpack.c.l.b16 %v7458
    %v7656 = vunpack.c.h.b16 %v7458
    %v7657 = vunpack.c.l.b16 %v7459
    %v7658 = vunpack.c.h.b16 %v7459
    %v7659 = vunpack.c.l.b16 %v7460
    %v7660 = vunpack.c.h.b16 %v7460
    %v7661 = vunpack.c.l.b16 %v7461
    %v7662 = vunpack.c.h.b16 %v7461
    %v7663 = vunpack.c.l.b16 %v7462
    %v7664 = vunpack.c.h.b16 %v7462
    %v7665 = vunpack.c.l.b16 %v7463
    %v7666 = vunpack.c.h.b16 %v7463
    %v7667 = vunpack.c.l.b16 %v7464
    %v7668 = vunpack.c.h.b16 %v7464
    %v7669 = vpack.c.b16 %v7543, %v7541
    %v7670 = vpack.c.b16 %v7544, %v7542
    %v7671 = vpack.c.b16 %v7547, %v7545
    %v7672 = vpack.c.b16 %v7548, %v7546
    %v7673 = vpack.c.b16 %v7551, %v7549
    %v7674 = vpack.c.b16 %v7552, %v7550
    %v7675 = vpack.c.b16 %v7555, %v7553
    %v7676 = vpack.c.b16 %v7556, %v7554
    %v7677 = vpack.c.b16 %v7559, %v7557
    %v7678 = vpack.c.b16 %v7560, %v7558
    %v7679 = vpack.c.b16 %v7563, %v7561
    %v7680 = vpack.c.b16 %v7564, %v7562
    %v7681 = vpack.c.b16 %v7567, %v7565
    %v7682 = vpack.c.b16 %v7568, %v7566
    %v7683 = vpack.c.b16 %v7571, %v7569
    %v7684 = vpack.c.b16 %v7572, %v7570
    %v7685 = vpack.c.b16 %v7575, %v7573
    %v7686 = vpack.c.b16 %v7576, %v7574
    %v7687 = vpack.c.b16 %v7579, %v7577
    %v7688 = vpack.c.b16 %v7580, %v7578
    %v7689 = vpack.c.b16 %v7583, %v7581
    %v7690 = vpack.c.b16 %v7584, %v7582
    %v7691 = vpack.c.b16 %v7587, %v7585
    %v7692 = vpack.c.b16 %v7588, %v7586
    %v7693 = vpack.c.b16 %v7591, %v7589
    %v7694 = vpack.c.b16 %v7592, %v7590
    %v7695 = vpack.c.b16 %v7595, %v7593
    %v7696 = vpack.c.b16 %v7596, %v7594
    %v7697 = vpack.c.b16 %v7599, %v7597
    %v7698 = vpack.c.b16 %v7600, %v7598
    %v7699 = vpack.c.b16 %v7603, %v7601
    %v7700 = vpack.c.b16 %v7604, %v7602
    %v7701 = vpack.c.b16 %v7607, %v7605
    %v7702 = vpack.c.b16 %v7608, %v7606
    %v7703 = vpack.c.b16 %v7611, %v7609
    %v7704 = vpack.c.b16 %v7612, %v7610
    %v7705 = vpack.c.b16 %v7615, %v7613
    %v7706 = vpack.c.b16 %v7616, %v7614
    %v7707 = vpack.c.b16 %v7619, %v7617
    %v7708 = vpack.c.b16 %v7620, %v7618
    %v7709 = vpack.c.b16 %v7623, %v7621
    %v7710 = vpack.c.b16 %v7624, %v7622
    %v7711 = vpack.c.b16 %v7627, %v7625
    %v7712 = vpack.c.b16 %v7628, %v7626
    %v7713 = vpack.c.b16 %v7631, %v7629
    %v7714 = vpack.c.b16 %v7632, %v7630
    %v7715 = vpack.c.b16 %v7635, %v7633
    %v7716 = vpack.c.b16 %v7636, %v7634
    %v7717 = vpack.c.b16 %v7639, %v7637
    %v7718 = vpack.c.b16 %v7640, %v7638
    %v7719 = vpack.c.b16 %v7643, %v7641
    %v7720 = vpack.c.b16 %v7644, %v7642
    %v7721 = vpack.c.b16 %v7647, %v7645
    %v7722 = vpack.c.b16 %v7648, %v7646
    %v7723 = vpack.c.b16 %v7651, %v7649
    %v7724 = vpack.c.b16 %v7652, %v7650
    %v7725 = vpack.c.b16 %v7655, %v7653
    %v7726 = vpack.c.b16 %v7656, %v7654
    %v7727 = vpack.c.b16 %v7659, %v7657
    %v7728 = vpack.c.b16 %v7660, %v7658
    %v7729 = vpack.c.b16 %v7663, %v7661
    %v7730 = vpack.c.b16 %v7664, %v7662
    %v7731 = vpack.c.b16 %v7667, %v7665
    %v7732 = vpack.c.b16 %v7668, %v7666
    %7797 = vmatprep.subr.bf16.mxu0 %v7670
    %7798 = vmatpush1.bf16.msra.mxu0 %v7669
    %7799 = vmatprep.subr.bf16.mxu0 %v7672
    %7800 = vmatpush1.bf16.msra.mxu0 %v7671
    %7801 = vmatprep.subr.bf16.mxu0 %v7674
    %7802 = vmatpush1.bf16.msra.mxu0 %v7673
    %7803 = vmatprep.subr.bf16.mxu0 %v7676
    %7804 = vmatpush1.bf16.msra.mxu0 %v7675
    %7805 = vmatprep.subr.bf16.mxu0 %v7678
    %7806 = vmatpush1.bf16.msra.mxu0 %v7677
    %7807 = vmatprep.subr.bf16.mxu0 %v7680
    %7808 = vmatpush1.bf16.msra.mxu0 %v7679
    %7809 = vmatprep.subr.bf16.mxu0 %v7682
    %7810 = vmatpush1.bf16.msra.mxu0 %v7681
    %7811 = vmatprep.subr.bf16.mxu0 %v7684
    %7812 = vmatpush1.bf16.msra.mxu0 %v7683
    %7813 = vmatprep.subr.bf16.mxu0 %v7686
    %7814 = vmatpush1.bf16.msra.mxu0 %v7685
    %7815 = vmatprep.subr.bf16.mxu0 %v7688
    %7816 = vmatpush1.bf16.msra.mxu0 %v7687
    %7817 = vmatprep.subr.bf16.mxu0 %v7690
    %7818 = vmatpush1.bf16.msra.mxu0 %v7689
    %7819 = vmatprep.subr.bf16.mxu0 %v7692
    %7820 = vmatpush1.bf16.msra.mxu0 %v7691
    %7821 = vmatprep.subr.bf16.mxu0 %v7694
    %7822 = vmatpush1.bf16.msra.mxu0 %v7693
    %7823 = vmatprep.subr.bf16.mxu0 %v7696
    %7824 = vmatpush1.bf16.msra.mxu0 %v7695
    %7825 = vmatprep.subr.bf16.mxu0 %v7698
    %7826 = vmatpush1.bf16.msra.mxu0 %v7697
    %7827 = vmatprep.subr.bf16.mxu0 %v7700
    %7828 = vmatpush1.bf16.msra.mxu0 %v7699
    %7829 = vmatprep.mubr.bf16.mxu0 %v7398
    %7830 = vmatmul.mubr.bf16.gmra.mrb[0].mxu0 %v7397
    %v7831 = vpop.f32.mrb[0].mxu0
    %v7832 = vadd.f32 %v7470, %v7831
    %v7833 = vpop.f32.mrb[0].mxu0
    %v7834 = vadd.f32 %v7474, %v7833
    %v7835 = vpop.f32.mrb[0].mxu0
    %v7836 = vpop.f32.mrb[0].mxu0
    %7837 = vdwg.mxu0
    %7838 = vmatprep.subr.bf16.mxu0 %v7702
    %7839 = vmatpush1.bf16.msra.mxu0 %v7701
    %7840 = vmatprep.subr.bf16.mxu0 %v7704
    %7841 = vmatpush1.bf16.msra.mxu0 %v7703
    %7842 = vmatprep.subr.bf16.mxu0 %v7706
    %7843 = vmatpush1.bf16.msra.mxu0 %v7705
    %7844 = vmatprep.subr.bf16.mxu0 %v7708
    %7845 = vmatpush1.bf16.msra.mxu0 %v7707
    %7846 = vmatprep.subr.bf16.mxu0 %v7710
    %7847 = vmatpush1.bf16.msra.mxu0 %v7709
    %7848 = vmatprep.subr.bf16.mxu0 %v7712
    %7849 = vmatpush1.bf16.msra.mxu0 %v7711
    %7850 = vmatprep.subr.bf16.mxu0 %v7714
    %7851 = vmatpush1.bf16.msra.mxu0 %v7713
    %7852 = vmatprep.subr.bf16.mxu0 %v7716
    %7853 = vmatpush1.bf16.msra.mxu0 %v7715
    %7854 = vmatprep.subr.bf16.mxu0 %v7718
    %7855 = vmatpush1.bf16.msra.mxu0 %v7717
    %7856 = vmatprep.subr.bf16.mxu0 %v7720
    %7857 = vmatpush1.bf16.msra.mxu0 %v7719
    %7858 = vmatprep.subr.bf16.mxu0 %v7722
    %7859 = vmatpush1.bf16.msra.mxu0 %v7721
    %7860 = vmatprep.subr.bf16.mxu0 %v7724
    %7861 = vmatpush1.bf16.msra.mxu0 %v7723
    %7862 = vmatprep.subr.bf16.mxu0 %v7726
    %7863 = vmatpush1.bf16.msra.mxu0 %v7725
    %7864 = vmatprep.subr.bf16.mxu0 %v7728
    %7865 = vmatpush1.bf16.msra.mxu0 %v7727
    %7866 = vmatprep.subr.bf16.mxu0 %v7730
    %7867 = vmatpush1.bf16.msra.mxu0 %v7729
    %7868 = vmatprep.subr.bf16.mxu0 %v7732
    %7869 = vmatpush1.bf16.msra.mxu0 %v7731
    %7870 = vmatprep.mubr.bf16.mxu0 %v7400
    %7871 = vmatmul.mubr.bf16.gmra.mrb[0].mxu0 %v7399
    %v7872 = vpop.f32.mrb[0].mxu0
    %v7873 = vadd.f32 %v7832, %v7872
    %v7874 = vpop.f32.mrb[0].mxu0
    %v7875 = vadd.f32 %v7834, %v7874
    %v7876 = vpop.f32.mrb[0].mxu0
    %v7877 = vpop.f32.mrb[0].mxu0
    %7878 = vdwg.mxu0
    %vm7879 = vcmp.gt.f32.partialorder %v7873, 0.0
    %vm7880 = vcmp.gt.f32.partialorder %v7875, 0.0
    %v7881 = vmul.f32 %v7873, 0.01
    %v7882 = vmul.f32 %v7875, 0.01
    %v7883 = vsel %vm7879, %v7873, %v7881
    %v7884 = vsel %vm7880, %v7875, %v7882
    %v7885 = vpack.c.bf16 %v7883, %v7883
    %v7886 = vpack.c.bf16 %v7884, %v7884
    %v7887 = vld [vmem:[#allocation19] sm:$0xf]
    %v7888 = vld [vmem:[#allocation19 + $0x4] sm:$0xf]
    %v7889 = vld [vmem:[#allocation19 + $0x8] sm:$0xf]
    %v7890 = vld [vmem:[#allocation19 + $0xc] sm:$0xf]
    %v7891 = vld [vmem:[#allocation19 + $0x10] sm:$0xf]
    %v7892 = vld [vmem:[#allocation19 + $0x14] sm:$0xf]
    %v7893 = vld [vmem:[#allocation19 + $0x18] sm:$0xf]
    %v7894 = vld [vmem:[#allocation19 + $0x1c] sm:$0xf]
    %v7895 = vld [vmem:[#allocation19 + $0x20] sm:$0xf]
    %v7896 = vld [vmem:[#allocation19 + $0x24] sm:$0xf]
    %v7897 = vld [vmem:[#allocation19 + $0x28] sm:$0xf]
    %v7898 = vld [vmem:[#allocation19 + $0x2c] sm:$0xf]
    %v7899 = vld [vmem:[#allocation19 + $0x30] sm:$0xf]
    %v7900 = vld [vmem:[#allocation19 + $0x34] sm:$0xf]
    %v7901 = vld [vmem:[#allocation19 + $0x38] sm:$0xf]
    %v7902 = vld [vmem:[#allocation19 + $0x3c] sm:$0xf]
    %v7903 = vld [vmem:[#allocation19 + $0x40] sm:$0xf]
    %v7904 = vld [vmem:[#allocation19 + $0x44] sm:$0xf]
    %v7905 = vld [vmem:[#allocation19 + $0x48] sm:$0xf]
    %v7906 = vld [vmem:[#allocation19 + $0x4c] sm:$0xf]
    %v7907 = vld [vmem:[#allocation19 + $0x50] sm:$0xf]
    %v7908 = vld [vmem:[#allocation19 + $0x54] sm:$0xf]
    %v7909 = vld [vmem:[#allocation19 + $0x58] sm:$0xf]
    %v7910 = vld [vmem:[#allocation19 + $0x5c] sm:$0xf]
    %v7911 = vld [vmem:[#allocation19 + $0x60] sm:$0xf]
    %v7912 = vld [vmem:[#allocation19 + $0x64] sm:$0xf]
    %v7913 = vld [vmem:[#allocation19 + $0x68] sm:$0xf]
    %v7914 = vld [vmem:[#allocation19 + $0x6c] sm:$0xf]
    %v7915 = vld [vmem:[#allocation19 + $0x70] sm:$0xf]
    %v7916 = vld [vmem:[#allocation19 + $0x74] sm:$0xf]
    %v7917 = vld [vmem:[#allocation19 + $0x78] sm:$0xf]
    %v7918 = vld [vmem:[#allocation19 + $0x7c] sm:$0xf]
    %v7919 = vld [vmem:[#allocation28] sm:$0x1]
    %v7921 = vlaneseq
    %v7922 = vshrl.u32 %v7921, 7
    %v7923 = vsub.s32 0, %v7922
    %v7924 = vrot.slane %v7919, %v7923
    %v7958 = vunpack.c.l.b16 %v7887
    %v7959 = vunpack.c.l.b16 %v7888
    %v7960 = vunpack.c.l.b16 %v7889
    %v7961 = vunpack.c.l.b16 %v7890
    %v7962 = vunpack.c.l.b16 %v7891
    %v7963 = vunpack.c.l.b16 %v7892
    %v7964 = vunpack.c.l.b16 %v7893
    %v7965 = vunpack.c.l.b16 %v7894
    %v7966 = vunpack.c.l.b16 %v7895
    %v7967 = vunpack.c.l.b16 %v7896
    %v7968 = vunpack.c.l.b16 %v7897
    %v7969 = vunpack.c.l.b16 %v7898
    %v7970 = vunpack.c.l.b16 %v7899
    %v7971 = vunpack.c.l.b16 %v7900
    %v7972 = vunpack.c.l.b16 %v7901
    %v7973 = vunpack.c.l.b16 %v7902
    %v7974 = vunpack.c.l.b16 %v7903
    %v7975 = vunpack.c.l.b16 %v7904
    %v7976 = vunpack.c.l.b16 %v7905
    %v7977 = vunpack.c.l.b16 %v7906
    %v7978 = vunpack.c.l.b16 %v7907
    %v7979 = vunpack.c.l.b16 %v7908
    %v7980 = vunpack.c.l.b16 %v7909
    %v7981 = vunpack.c.l.b16 %v7910
    %v7982 = vunpack.c.l.b16 %v7911
    %v7983 = vunpack.c.l.b16 %v7912
    %v7984 = vunpack.c.l.b16 %v7913
    %v7985 = vunpack.c.l.b16 %v7914
    %v7986 = vunpack.c.l.b16 %v7915
    %v7987 = vunpack.c.l.b16 %v7916
    %v7988 = vunpack.c.l.b16 %v7917
    %v7989 = vunpack.c.l.b16 %v7918
    %v7990 = vpack.c.b16 %v7959, %v7958
    %v7991 = vpack.c.b16 %v7961, %v7960
    %v7992 = vpack.c.b16 %v7963, %v7962
    %v7993 = vpack.c.b16 %v7965, %v7964
    %v7994 = vpack.c.b16 %v7967, %v7966
    %v7995 = vpack.c.b16 %v7969, %v7968
    %v7996 = vpack.c.b16 %v7971, %v7970
    %v7997 = vpack.c.b16 %v7973, %v7972
    %v7998 = vpack.c.b16 %v7975, %v7974
    %v7999 = vpack.c.b16 %v7977, %v7976
    %v8000 = vpack.c.b16 %v7979, %v7978
    %v8001 = vpack.c.b16 %v7981, %v7980
    %v8002 = vpack.c.b16 %v7983, %v7982
    %v8003 = vpack.c.b16 %v7985, %v7984
    %v8004 = vpack.c.b16 %v7987, %v7986
    %v8005 = vpack.c.b16 %v7989, %v7988
    %8022 = vmatprep.subr.bf16.mxu0 0
    %8023 = vmatpush1.bf16.msra.mxu0 %v7990
    %8024 = vmatprep.subr.bf16.mxu0 0
    %8025 = vmatpush1.bf16.msra.mxu0 %v7991
    %8026 = vmatprep.subr.bf16.mxu0 0
    %8027 = vmatpush1.bf16.msra.mxu0 %v7992
    %8028 = vmatprep.subr.bf16.mxu0 0
    %8029 = vmatpush1.bf16.msra.mxu0 %v7993
    %8030 = vmatprep.subr.bf16.mxu0 0
    %8031 = vmatpush1.bf16.msra.mxu0 %v7994
    %8032 = vmatprep.subr.bf16.mxu0 0
    %8033 = vmatpush1.bf16.msra.mxu0 %v7995
    %8034 = vmatprep.subr.bf16.mxu0 0
    %8035 = vmatpush1.bf16.msra.mxu0 %v7996
    %8036 = vmatprep.subr.bf16.mxu0 0
    %8037 = vmatpush1.bf16.msra.mxu0 %v7997
    %8038 = vmatprep.subr.bf16.mxu0 0
    %8039 = vmatpush1.bf16.msra.mxu0 %v7998
    %8040 = vmatprep.subr.bf16.mxu0 0
    %8041 = vmatpush1.bf16.msra.mxu0 %v7999
    %8042 = vmatprep.subr.bf16.mxu0 0
    %8043 = vmatpush1.bf16.msra.mxu0 %v8000
    %8044 = vmatprep.subr.bf16.mxu0 0
    %8045 = vmatpush1.bf16.msra.mxu0 %v8001
    %8046 = vmatprep.subr.bf16.mxu0 0
    %8047 = vmatpush1.bf16.msra.mxu0 %v8002
    %8048 = vmatprep.subr.bf16.mxu0 0
    %8049 = vmatpush1.bf16.msra.mxu0 %v8003
    %8050 = vmatprep.subr.bf16.mxu0 0
    %8051 = vmatpush1.bf16.msra.mxu0 %v8004
    %8052 = vmatprep.subr.bf16.mxu0 0
    %8053 = vmatpush1.bf16.msra.mxu0 %v8005
    %8054 = vmatprep.mubr.bf16.mxu0 %v7886
    %8055 = vmatmul.mubr.bf16.gmra.mrb[0].mxu0 %v7885
    %v8056 = vpop.f32.mrb[0].mxu0
    %v8057 = vadd.f32 %v7924, %v8056
    %v8058 = vpop.f32.mrb[0].mxu0
    %v8059 = vpop.f32.mrb[0].mxu0
    %v8060 = vpop.f32.mrb[0].mxu0
    %8061 = vdwg.mxu0
    %v8062 = vpack.c.bf16 %v8057, %v8057
    %v8063 = vld [vmem:[#allocation21] sm:$0xff]
    %v8064 = vld [vmem:[#allocation21 + $0x8] sm:$0xff]
    %v8065 = vld [vmem:[#allocation21 + $0x10] sm:$0xff]
    %v8066 = vld [vmem:[#allocation21 + $0x18] sm:$0xff]
    %v8067 = vld [vmem:[#allocation21 + $0x20] sm:$0xff]
    %v8068 = vld [vmem:[#allocation21 + $0x28] sm:$0xff]
    %v8069 = vld [vmem:[#allocation21 + $0x30] sm:$0xff]
    %v8070 = vld [vmem:[#allocation21 + $0x38] sm:$0xff]
    %v8071 = vld [vmem:[#allocation21 + $0x40] sm:$0xff]
    %v8072 = vld [vmem:[#allocation21 + $0x48] sm:$0xff]
    %v8073 = vld [vmem:[#allocation21 + $0x50] sm:$0xff]
    %v8074 = vld [vmem:[#allocation21 + $0x58] sm:$0xff]
    %v8075 = vld [vmem:[#allocation21 + $0x60] sm:$0xff]
    %v8076 = vld [vmem:[#allocation21 + $0x68] sm:$0xff]
    %v8077 = vld [vmem:[#allocation21 + $0x70] sm:$0xff]
    %v8078 = vld [vmem:[#allocation21 + $0x78] sm:$0xff]
    %v8079 = vld [vmem:[#allocation30] sm:$0x3]
    %v8081 = vlaneseq
    %v8082 = vshrl.u32 %v8081, 7
    %v8083 = vsub.s32 0, %v8082
    %v8084 = vrot.slane %v8079, %v8083
    %v8085 = vlaneseq
    %v8086 = vshrl.u32 %v8085, 7
    %v8087 = vsub.s32 1, %v8086
    %v8088 = vrot.slane %v8079, %v8087
    %v8107 = vunpack.c.l.b16 %v8063
    %v8108 = vunpack.c.h.b16 %v8063
    %v8109 = vunpack.c.l.b16 %v8064
    %v8110 = vunpack.c.h.b16 %v8064
    %v8111 = vunpack.c.l.b16 %v8065
    %v8112 = vunpack.c.h.b16 %v8065
    %v8113 = vunpack.c.l.b16 %v8066
    %v8114 = vunpack.c.h.b16 %v8066
    %v8115 = vunpack.c.l.b16 %v8067
    %v8116 = vunpack.c.h.b16 %v8067
    %v8117 = vunpack.c.l.b16 %v8068
    %v8118 = vunpack.c.h.b16 %v8068
    %v8119 = vunpack.c.l.b16 %v8069
    %v8120 = vunpack.c.h.b16 %v8069
    %v8121 = vunpack.c.l.b16 %v8070
    %v8122 = vunpack.c.h.b16 %v8070
    %v8123 = vunpack.c.l.b16 %v8071
    %v8124 = vunpack.c.h.b16 %v8071
    %v8125 = vunpack.c.l.b16 %v8072
    %v8126 = vunpack.c.h.b16 %v8072
    %v8127 = vunpack.c.l.b16 %v8073
    %v8128 = vunpack.c.h.b16 %v8073
    %v8129 = vunpack.c.l.b16 %v8074
    %v8130 = vunpack.c.h.b16 %v8074
    %v8131 = vunpack.c.l.b16 %v8075
    %v8132 = vunpack.c.h.b16 %v8075
    %v8133 = vunpack.c.l.b16 %v8076
    %v8134 = vunpack.c.h.b16 %v8076
    %v8135 = vunpack.c.l.b16 %v8077
    %v8136 = vunpack.c.h.b16 %v8077
    %v8137 = vunpack.c.l.b16 %v8078
    %v8138 = vunpack.c.h.b16 %v8078
    %v8139 = vpack.c.b16 %v8109, %v8107
    %v8140 = vpack.c.b16 %v8110, %v8108
    %v8141 = vpack.c.b16 %v8113, %v8111
    %v8142 = vpack.c.b16 %v8114, %v8112
    %v8143 = vpack.c.b16 %v8117, %v8115
    %v8144 = vpack.c.b16 %v8118, %v8116
    %v8145 = vpack.c.b16 %v8121, %v8119
    %v8146 = vpack.c.b16 %v8122, %v8120
    %v8147 = vpack.c.b16 %v8125, %v8123
    %v8148 = vpack.c.b16 %v8126, %v8124
    %v8149 = vpack.c.b16 %v8129, %v8127
    %v8150 = vpack.c.b16 %v8130, %v8128
    %v8151 = vpack.c.b16 %v8133, %v8131
    %v8152 = vpack.c.b16 %v8134, %v8132
    %v8153 = vpack.c.b16 %v8137, %v8135
    %v8154 = vpack.c.b16 %v8138, %v8136
    %8171 = vmatprep.subr.bf16.mxu0 %v8140
    %8172 = vmatpush1.bf16.msra.mxu0 %v8139
    %8173 = vmatprep.subr.bf16.mxu0 %v8142
    %8174 = vmatpush1.bf16.msra.mxu0 %v8141
    %8175 = vmatprep.subr.bf16.mxu0 %v8144
    %8176 = vmatpush1.bf16.msra.mxu0 %v8143
    %8177 = vmatprep.subr.bf16.mxu0 %v8146
    %8178 = vmatpush1.bf16.msra.mxu0 %v8145
    %8179 = vmatprep.subr.bf16.mxu0 %v8148
    %8180 = vmatpush1.bf16.msra.mxu0 %v8147
    %8181 = vmatprep.subr.bf16.mxu0 %v8150
    %8182 = vmatpush1.bf16.msra.mxu0 %v8149
    %8183 = vmatprep.subr.bf16.mxu0 %v8152
    %8184 = vmatpush1.bf16.msra.mxu0 %v8151
    %8185 = vmatprep.subr.bf16.mxu0 %v8154
    %8186 = vmatpush1.bf16.msra.mxu0 %v8153
    %8187 = vmatprep.subr.bf16.mxu0 0
    %8188 = vmatpush1.bf16.msra.mxu0 0
    %8189 = vmatprep.subr.bf16.mxu0 0
    %8190 = vmatpush1.bf16.msra.mxu0 0
    %8191 = vmatprep.subr.bf16.mxu0 0
    %8192 = vmatpush1.bf16.msra.mxu0 0
    %8193 = vmatprep.subr.bf16.mxu0 0
    %8194 = vmatpush1.bf16.msra.mxu0 0
    %8195 = vmatprep.subr.bf16.mxu0 0
    %8196 = vmatpush1.bf16.msra.mxu0 0
    %8197 = vmatprep.subr.bf16.mxu0 0
    %8198 = vmatpush1.bf16.msra.mxu0 0
    %8199 = vmatprep.subr.bf16.mxu0 0
    %8200 = vmatpush1.bf16.msra.mxu0 0
    %8201 = vmatprep.subr.bf16.mxu0 0
    %8202 = vmatpush1.bf16.msra.mxu0 0
    %8203 = vmatprep.mubr.bf16.mxu0 0
    %8204 = vmatmul.mubr.bf16.gmra.mrb[0].mxu0 %v8062
    %v8205 = vpop.f32.mrb[0].mxu0
    %v8206 = vadd.f32 %v8084, %v8205
    %v8207 = vpop.f32.mrb[0].mxu0
    %v8208 = vadd.f32 %v8088, %v8207
    %v8209 = vpop.f32.mrb[0].mxu0
    %v8210 = vpop.f32.mrb[0].mxu0
    %8211 = vdwg.mxu0
    %v8212 = vmax.f32 %v8206, 0.0
    %v8213 = vmax.f32 %v8208, 0.0
    %v8214 = vpack.c.bf16 %v8212, %v8212
    %v8215 = vpack.c.bf16 %v8213, %v8213
    %v8216 = vld [vmem:[#allocation22] sm:$0xff]
    %v8217 = vld [vmem:[#allocation22 + $0x8] sm:$0xff]
    %v8218 = vld [vmem:[#allocation22 + $0x10] sm:$0xff]
    %v8219 = vld [vmem:[#allocation22 + $0x18] sm:$0xff]
    %v8220 = vld [vmem:[#allocation22 + $0x20] sm:$0xff]
    %v8221 = vld [vmem:[#allocation22 + $0x28] sm:$0xff]
    %v8222 = vld [vmem:[#allocation22 + $0x30] sm:$0xff]
    %v8223 = vld [vmem:[#allocation22 + $0x38] sm:$0xff]
    %v8224 = vld [vmem:[#allocation22 + $0x40] sm:$0xff]
    %v8225 = vld [vmem:[#allocation22 + $0x48] sm:$0xff]
    %v8226 = vld [vmem:[#allocation22 + $0x50] sm:$0xff]
    %v8227 = vld [vmem:[#allocation22 + $0x58] sm:$0xff]
    %v8228 = vld [vmem:[#allocation22 + $0x60] sm:$0xff]
    %v8229 = vld [vmem:[#allocation22 + $0x68] sm:$0xff]
    %v8230 = vld [vmem:[#allocation22 + $0x70] sm:$0xff]
    %v8231 = vld [vmem:[#allocation22 + $0x78] sm:$0xff]
    %v8232 = vld [vmem:[#allocation22 + $0x80] sm:$0xff]
    %v8233 = vld [vmem:[#allocation22 + $0x88] sm:$0xff]
    %v8234 = vld [vmem:[#allocation22 + $0x90] sm:$0xff]
    %v8235 = vld [vmem:[#allocation22 + $0x98] sm:$0xff]
    %v8236 = vld [vmem:[#allocation22 + $0xa0] sm:$0xff]
    %v8237 = vld [vmem:[#allocation22 + $0xa8] sm:$0xff]
    %v8238 = vld [vmem:[#allocation22 + $0xb0] sm:$0xff]
    %v8239 = vld [vmem:[#allocation22 + $0xb8] sm:$0xff]
    %v8240 = vld [vmem:[#allocation22 + $0xc0] sm:$0xff]
    %v8241 = vld [vmem:[#allocation22 + $0xc8] sm:$0xff]
    %v8242 = vld [vmem:[#allocation22 + $0xd0] sm:$0xff]
    %v8243 = vld [vmem:[#allocation22 + $0xd8] sm:$0xff]
    %v8244 = vld [vmem:[#allocation22 + $0xe0] sm:$0xff]
    %v8245 = vld [vmem:[#allocation22 + $0xe8] sm:$0xff]
    %v8246 = vld [vmem:[#allocation22 + $0xf0] sm:$0xff]
    %v8247 = vld [vmem:[#allocation22 + $0xf8] sm:$0xff]
    %v8248 = vld [vmem:[#allocation22 + $0x100] sm:$0xff]
    %v8249 = vld [vmem:[#allocation22 + $0x108] sm:$0xff]
    %v8250 = vld [vmem:[#allocation22 + $0x110] sm:$0xff]
    %v8251 = vld [vmem:[#allocation22 + $0x118] sm:$0xff]
    %v8252 = vld [vmem:[#allocation22 + $0x120] sm:$0xff]
    %v8253 = vld [vmem:[#allocation22 + $0x128] sm:$0xff]
    %v8254 = vld [vmem:[#allocation22 + $0x130] sm:$0xff]
    %v8255 = vld [vmem:[#allocation22 + $0x138] sm:$0xff]
    %v8256 = vld [vmem:[#allocation22 + $0x140] sm:$0xff]
    %v8257 = vld [vmem:[#allocation22 + $0x148] sm:$0xff]
    %v8258 = vld [vmem:[#allocation22 + $0x150] sm:$0xff]
    %v8259 = vld [vmem:[#allocation22 + $0x158] sm:$0xff]
    %v8260 = vld [vmem:[#allocation22 + $0x160] sm:$0xff]
    %v8261 = vld [vmem:[#allocation22 + $0x168] sm:$0xff]
    %v8262 = vld [vmem:[#allocation22 + $0x170] sm:$0xff]
    %v8263 = vld [vmem:[#allocation22 + $0x178] sm:$0xff]
    %v8264 = vld [vmem:[#allocation22 + $0x180] sm:$0xff]
    %v8265 = vld [vmem:[#allocation22 + $0x188] sm:$0xff]
    %v8266 = vld [vmem:[#allocation22 + $0x190] sm:$0xff]
    %v8267 = vld [vmem:[#allocation22 + $0x198] sm:$0xff]
    %v8268 = vld [vmem:[#allocation22 + $0x1a0] sm:$0xff]
    %v8269 = vld [vmem:[#allocation22 + $0x1a8] sm:$0xff]
    %v8270 = vld [vmem:[#allocation22 + $0x1b0] sm:$0xff]
    %v8271 = vld [vmem:[#allocation22 + $0x1b8] sm:$0xff]
    %v8272 = vld [vmem:[#allocation22 + $0x1c0] sm:$0xff]
    %v8273 = vld [vmem:[#allocation22 + $0x1c8] sm:$0xff]
    %v8274 = vld [vmem:[#allocation22 + $0x1d0] sm:$0xff]
    %v8275 = vld [vmem:[#allocation22 + $0x1d8] sm:$0xff]
    %v8276 = vld [vmem:[#allocation22 + $0x1e0] sm:$0xff]
    %v8277 = vld [vmem:[#allocation22 + $0x1e8] sm:$0xff]
    %v8278 = vld [vmem:[#allocation22 + $0x1f0] sm:$0xff]
    %v8279 = vld [vmem:[#allocation22 + $0x1f8] sm:$0xff]
    %v8280 = vld [vmem:[#allocation31] sm:$0xf]
    %v8282 = vlaneseq
    %v8283 = vshrl.u32 %v8282, 7
    %v8284 = vsub.s32 0, %v8283
    %v8285 = vrot.slane %v8280, %v8284
    %v8286 = vlaneseq
    %v8287 = vshrl.u32 %v8286, 7
    %v8288 = vsub.s32 1, %v8287
    %v8289 = vrot.slane %v8280, %v8288
    %v8290 = vlaneseq
    %v8291 = vshrl.u32 %v8290, 7
    %v8292 = vsub.s32 2, %v8291
    %v8293 = vrot.slane %v8280, %v8292
    %v8294 = vlaneseq
    %v8295 = vshrl.u32 %v8294, 7
    %v8296 = vsub.s32 3, %v8295
    %v8297 = vrot.slane %v8280, %v8296
    %v8366 = vunpack.c.l.b16 %v8216
    %v8367 = vunpack.c.h.b16 %v8216
    %v8368 = vunpack.c.l.b16 %v8217
    %v8369 = vunpack.c.h.b16 %v8217
    %v8370 = vunpack.c.l.b16 %v8218
    %v8371 = vunpack.c.h.b16 %v8218
    %v8372 = vunpack.c.l.b16 %v8219
    %v8373 = vunpack.c.h.b16 %v8219
    %v8374 = vunpack.c.l.b16 %v8220
    %v8375 = vunpack.c.h.b16 %v8220
    %v8376 = vunpack.c.l.b16 %v8221
    %v8377 = vunpack.c.h.b16 %v8221
    %v8378 = vunpack.c.l.b16 %v8222
    %v8379 = vunpack.c.h.b16 %v8222
    %v8380 = vunpack.c.l.b16 %v8223
    %v8381 = vunpack.c.h.b16 %v8223
    %v8382 = vunpack.c.l.b16 %v8224
    %v8383 = vunpack.c.h.b16 %v8224
    %v8384 = vunpack.c.l.b16 %v8225
    %v8385 = vunpack.c.h.b16 %v8225
    %v8386 = vunpack.c.l.b16 %v8226
    %v8387 = vunpack.c.h.b16 %v8226
    %v8388 = vunpack.c.l.b16 %v8227
    %v8389 = vunpack.c.h.b16 %v8227
    %v8390 = vunpack.c.l.b16 %v8228
    %v8391 = vunpack.c.h.b16 %v8228
    %v8392 = vunpack.c.l.b16 %v8229
    %v8393 = vunpack.c.h.b16 %v8229
    %v8394 = vunpack.c.l.b16 %v8230
    %v8395 = vunpack.c.h.b16 %v8230
    %v8396 = vunpack.c.l.b16 %v8231
    %v8397 = vunpack.c.h.b16 %v8231
    %v8398 = vunpack.c.l.b16 %v8232
    %v8399 = vunpack.c.h.b16 %v8232
    %v8400 = vunpack.c.l.b16 %v8233
    %v8401 = vunpack.c.h.b16 %v8233
    %v8402 = vunpack.c.l.b16 %v8234
    %v8403 = vunpack.c.h.b16 %v8234
    %v8404 = vunpack.c.l.b16 %v8235
    %v8405 = vunpack.c.h.b16 %v8235
    %v8406 = vunpack.c.l.b16 %v8236
    %v8407 = vunpack.c.h.b16 %v8236
    %v8408 = vunpack.c.l.b16 %v8237
    %v8409 = vunpack.c.h.b16 %v8237
    %v8410 = vunpack.c.l.b16 %v8238
    %v8411 = vunpack.c.h.b16 %v8238
    %v8412 = vunpack.c.l.b16 %v8239
    %v8413 = vunpack.c.h.b16 %v8239
    %v8414 = vunpack.c.l.b16 %v8240
    %v8415 = vunpack.c.h.b16 %v8240
    %v8416 = vunpack.c.l.b16 %v8241
    %v8417 = vunpack.c.h.b16 %v8241
    %v8418 = vunpack.c.l.b16 %v8242
    %v8419 = vunpack.c.h.b16 %v8242
    %v8420 = vunpack.c.l.b16 %v8243
    %v8421 = vunpack.c.h.b16 %v8243
    %v8422 = vunpack.c.l.b16 %v8244
    %v8423 = vunpack.c.h.b16 %v8244
    %v8424 = vunpack.c.l.b16 %v8245
    %v8425 = vunpack.c.h.b16 %v8245
    %v8426 = vunpack.c.l.b16 %v8246
    %v8427 = vunpack.c.h.b16 %v8246
    %v8428 = vunpack.c.l.b16 %v8247
    %v8429 = vunpack.c.h.b16 %v8247
    %v8430 = vunpack.c.l.b16 %v8248
    %v8431 = vunpack.c.h.b16 %v8248
    %v8432 = vunpack.c.l.b16 %v8249
    %v8433 = vunpack.c.h.b16 %v8249
    %v8434 = vunpack.c.l.b16 %v8250
    %v8435 = vunpack.c.h.b16 %v8250
    %v8436 = vunpack.c.l.b16 %v8251
    %v8437 = vunpack.c.h.b16 %v8251
    %v8438 = vunpack.c.l.b16 %v8252
    %v8439 = vunpack.c.h.b16 %v8252
    %v8440 = vunpack.c.l.b16 %v8253
    %v8441 = vunpack.c.h.b16 %v8253
    %v8442 = vunpack.c.l.b16 %v8254
    %v8443 = vunpack.c.h.b16 %v8254
    %v8444 = vunpack.c.l.b16 %v8255
    %v8445 = vunpack.c.h.b16 %v8255
    %v8446 = vunpack.c.l.b16 %v8256
    %v8447 = vunpack.c.h.b16 %v8256
    %v8448 = vunpack.c.l.b16 %v8257
    %v8449 = vunpack.c.h.b16 %v8257
    %v8450 = vunpack.c.l.b16 %v8258
    %v8451 = vunpack.c.h.b16 %v8258
    %v8452 = vunpack.c.l.b16 %v8259
    %v8453 = vunpack.c.h.b16 %v8259
    %v8454 = vunpack.c.l.b16 %v8260
    %v8455 = vunpack.c.h.b16 %v8260
    %v8456 = vunpack.c.l.b16 %v8261
    %v8457 = vunpack.c.h.b16 %v8261
    %v8458 = vunpack.c.l.b16 %v8262
    %v8459 = vunpack.c.h.b16 %v8262
    %v8460 = vunpack.c.l.b16 %v8263
    %v8461 = vunpack.c.h.b16 %v8263
    %v8462 = vunpack.c.l.b16 %v8264
    %v8463 = vunpack.c.h.b16 %v8264
    %v8464 = vunpack.c.l.b16 %v8265
    %v8465 = vunpack.c.h.b16 %v8265
    %v8466 = vunpack.c.l.b16 %v8266
    %v8467 = vunpack.c.h.b16 %v8266
    %v8468 = vunpack.c.l.b16 %v8267
    %v8469 = vunpack.c.h.b16 %v8267
    %v8470 = vunpack.c.l.b16 %v8268
    %v8471 = vunpack.c.h.b16 %v8268
    %v8472 = vunpack.c.l.b16 %v8269
    %v8473 = vunpack.c.h.b16 %v8269
    %v8474 = vunpack.c.l.b16 %v8270
    %v8475 = vunpack.c.h.b16 %v8270
    %v8476 = vunpack.c.l.b16 %v8271
    %v8477 = vunpack.c.h.b16 %v8271
    %v8478 = vunpack.c.l.b16 %v8272
    %v8479 = vunpack.c.h.b16 %v8272
    %v8480 = vunpack.c.l.b16 %v8273
    %v8481 = vunpack.c.h.b16 %v8273
    %v8482 = vunpack.c.l.b16 %v8274
    %v8483 = vunpack.c.h.b16 %v8274
    %v8484 = vunpack.c.l.b16 %v8275
    %v8485 = vunpack.c.h.b16 %v8275
    %v8486 = vunpack.c.l.b16 %v8276
    %v8487 = vunpack.c.h.b16 %v8276
    %v8488 = vunpack.c.l.b16 %v8277
    %v8489 = vunpack.c.h.b16 %v8277
    %v8490 = vunpack.c.l.b16 %v8278
    %v8491 = vunpack.c.h.b16 %v8278
    %v8492 = vunpack.c.l.b16 %v8279
    %v8493 = vunpack.c.h.b16 %v8279
    %v8494 = vpack.c.b16 %v8370, %v8366
    %v8495 = vpack.c.b16 %v8371, %v8367
    %v8496 = vpack.c.b16 %v8372, %v8368
    %v8497 = vpack.c.b16 %v8373, %v8369
    %v8498 = vpack.c.b16 %v8378, %v8374
    %v8499 = vpack.c.b16 %v8379, %v8375
    %v8500 = vpack.c.b16 %v8380, %v8376
    %v8501 = vpack.c.b16 %v8381, %v8377
    %v8502 = vpack.c.b16 %v8386, %v8382
    %v8503 = vpack.c.b16 %v8387, %v8383
    %v8504 = vpack.c.b16 %v8388, %v8384
    %v8505 = vpack.c.b16 %v8389, %v8385
    %v8506 = vpack.c.b16 %v8394, %v8390
    %v8507 = vpack.c.b16 %v8395, %v8391
    %v8508 = vpack.c.b16 %v8396, %v8392
    %v8509 = vpack.c.b16 %v8397, %v8393
    %v8510 = vpack.c.b16 %v8402, %v8398
    %v8511 = vpack.c.b16 %v8403, %v8399
    %v8512 = vpack.c.b16 %v8404, %v8400
    %v8513 = vpack.c.b16 %v8405, %v8401
    %v8514 = vpack.c.b16 %v8410, %v8406
    %v8515 = vpack.c.b16 %v8411, %v8407
    %v8516 = vpack.c.b16 %v8412, %v8408
    %v8517 = vpack.c.b16 %v8413, %v8409
    %v8518 = vpack.c.b16 %v8418, %v8414
    %v8519 = vpack.c.b16 %v8419, %v8415
    %v8520 = vpack.c.b16 %v8420, %v8416
    %v8521 = vpack.c.b16 %v8421, %v8417
    %v8522 = vpack.c.b16 %v8426, %v8422
    %v8523 = vpack.c.b16 %v8427, %v8423
    %v8524 = vpack.c.b16 %v8428, %v8424
    %v8525 = vpack.c.b16 %v8429, %v8425
    %v8526 = vpack.c.b16 %v8434, %v8430
    %v8527 = vpack.c.b16 %v8435, %v8431
    %v8528 = vpack.c.b16 %v8436, %v8432
    %v8529 = vpack.c.b16 %v8437, %v8433
    %v8530 = vpack.c.b16 %v8442, %v8438
    %v8531 = vpack.c.b16 %v8443, %v8439
    %v8532 = vpack.c.b16 %v8444, %v8440
    %v8533 = vpack.c.b16 %v8445, %v8441
    %v8534 = vpack.c.b16 %v8450, %v8446
    %v8535 = vpack.c.b16 %v8451, %v8447
    %v8536 = vpack.c.b16 %v8452, %v8448
    %v8537 = vpack.c.b16 %v8453, %v8449
    %v8538 = vpack.c.b16 %v8458, %v8454
    %v8539 = vpack.c.b16 %v8459, %v8455
    %v8540 = vpack.c.b16 %v8460, %v8456
    %v8541 = vpack.c.b16 %v8461, %v8457
    %v8542 = vpack.c.b16 %v8466, %v8462
    %v8543 = vpack.c.b16 %v8467, %v8463
    %v8544 = vpack.c.b16 %v8468, %v8464
    %v8545 = vpack.c.b16 %v8469, %v8465
    %v8546 = vpack.c.b16 %v8474, %v8470
    %v8547 = vpack.c.b16 %v8475, %v8471
    %v8548 = vpack.c.b16 %v8476, %v8472
    %v8549 = vpack.c.b16 %v8477, %v8473
    %v8550 = vpack.c.b16 %v8482, %v8478
    %v8551 = vpack.c.b16 %v8483, %v8479
    %v8552 = vpack.c.b16 %v8484, %v8480
    %v8553 = vpack.c.b16 %v8485, %v8481
    %v8554 = vpack.c.b16 %v8490, %v8486
    %v8555 = vpack.c.b16 %v8491, %v8487
    %v8556 = vpack.c.b16 %v8492, %v8488
    %v8557 = vpack.c.b16 %v8493, %v8489
    %8622 = vmatprep.subr.bf16.mxu0 %v8495
    %8623 = vmatpush1.bf16.msra.mxu0 %v8494
    %8624 = vmatprep.subr.bf16.mxu0 %v8499
    %8625 = vmatpush1.bf16.msra.mxu0 %v8498
    %8626 = vmatprep.subr.bf16.mxu0 %v8503
    %8627 = vmatpush1.bf16.msra.mxu0 %v8502
    %8628 = vmatprep.subr.bf16.mxu0 %v8507
    %8629 = vmatpush1.bf16.msra.mxu0 %v8506
    %8630 = vmatprep.subr.bf16.mxu0 %v8511
    %8631 = vmatpush1.bf16.msra.mxu0 %v8510
    %8632 = vmatprep.subr.bf16.mxu0 %v8515
    %8633 = vmatpush1.bf16.msra.mxu0 %v8514
    %8634 = vmatprep.subr.bf16.mxu0 %v8519
    %8635 = vmatpush1.bf16.msra.mxu0 %v8518
    %8636 = vmatprep.subr.bf16.mxu0 %v8523
    %8637 = vmatpush1.bf16.msra.mxu0 %v8522
    %8638 = vmatprep.subr.bf16.mxu0 %v8527
    %8639 = vmatpush1.bf16.msra.mxu0 %v8526
    %8640 = vmatprep.subr.bf16.mxu0 %v8531
    %8641 = vmatpush1.bf16.msra.mxu0 %v8530
    %8642 = vmatprep.subr.bf16.mxu0 %v8535
    %8643 = vmatpush1.bf16.msra.mxu0 %v8534
    %8644 = vmatprep.subr.bf16.mxu0 %v8539
    %8645 = vmatpush1.bf16.msra.mxu0 %v8538
    %8646 = vmatprep.subr.bf16.mxu0 %v8543
    %8647 = vmatpush1.bf16.msra.mxu0 %v8542
    %8648 = vmatprep.subr.bf16.mxu0 %v8547
    %8649 = vmatpush1.bf16.msra.mxu0 %v8546
    %8650 = vmatprep.subr.bf16.mxu0 %v8551
    %8651 = vmatpush1.bf16.msra.mxu0 %v8550
    %8652 = vmatprep.subr.bf16.mxu0 %v8555
    %8653 = vmatpush1.bf16.msra.mxu0 %v8554
    %8654 = vmatprep.mubr.bf16.mxu0 %v8215
    %8655 = vmatmul.mubr.bf16.gmra.mrb[0].mxu0 %v8214
    %v8656 = vpop.f32.mrb[0].mxu0
    %v8657 = vadd.f32 %v8285, %v8656
    %v8658 = vpop.f32.mrb[0].mxu0
    %v8659 = vadd.f32 %v8289, %v8658
    %v8660 = vpop.f32.mrb[0].mxu0
    %v8661 = vpop.f32.mrb[0].mxu0
    %8662 = vdwg.mxu0
    %8663 = vmatprep.subr.bf16.mxu0 %v8497
    %8664 = vmatpush1.bf16.msra.mxu0 %v8496
    %8665 = vmatprep.subr.bf16.mxu0 %v8501
    %8666 = vmatpush1.bf16.msra.mxu0 %v8500
    %8667 = vmatprep.subr.bf16.mxu0 %v8505
    %8668 = vmatpush1.bf16.msra.mxu0 %v8504
    %8669 = vmatprep.subr.bf16.mxu0 %v8509
    %8670 = vmatpush1.bf16.msra.mxu0 %v8508
    %8671 = vmatprep.subr.bf16.mxu0 %v8513
    %8672 = vmatpush1.bf16.msra.mxu0 %v8512
    %8673 = vmatprep.subr.bf16.mxu0 %v8517
    %8674 = vmatpush1.bf16.msra.mxu0 %v8516
    %8675 = vmatprep.subr.bf16.mxu0 %v8521
    %8676 = vmatpush1.bf16.msra.mxu0 %v8520
    %8677 = vmatprep.subr.bf16.mxu0 %v8525
    %8678 = vmatpush1.bf16.msra.mxu0 %v8524
    %8679 = vmatprep.subr.bf16.mxu0 %v8529
    %8680 = vmatpush1.bf16.msra.mxu0 %v8528
    %8681 = vmatprep.subr.bf16.mxu0 %v8533
    %8682 = vmatpush1.bf16.msra.mxu0 %v8532
    %8683 = vmatprep.subr.bf16.mxu0 %v8537
    %8684 = vmatpush1.bf16.msra.mxu0 %v8536
    %8685 = vmatprep.subr.bf16.mxu0 %v8541
    %8686 = vmatpush1.bf16.msra.mxu0 %v8540
    %8687 = vmatprep.subr.bf16.mxu0 %v8545
    %8688 = vmatpush1.bf16.msra.mxu0 %v8544
    %8689 = vmatprep.subr.bf16.mxu0 %v8549
    %8690 = vmatpush1.bf16.msra.mxu0 %v8548
    %8691 = vmatprep.subr.bf16.mxu0 %v8553
    %8692 = vmatpush1.bf16.msra.mxu0 %v8552
    %8693 = vmatprep.subr.bf16.mxu0 %v8557
    %8694 = vmatpush1.bf16.msra.mxu0 %v8556
    %8695 = vmatprep.mubr.bf16.mxu0 %v8215
    %8696 = vmatmul.mubr.bf16.gmra.mrb[0].mxu0 %v8214
    %v8697 = vpop.f32.mrb[0].mxu0
    %v8698 = vadd.f32 %v8293, %v8697
    %v8699 = vpop.f32.mrb[0].mxu0
    %v8700 = vadd.f32 %v8297, %v8699
    %v8701 = vpop.f32.mrb[0].mxu0
    %v8702 = vpop.f32.mrb[0].mxu0
    %8703 = vdwg.mxu0
    %v8704 = vmax.f32 %v8657, 0.0
    %v8705 = vmax.f32 %v8659, 0.0
    %v8706 = vmax.f32 %v8698, 0.0
    %v8707 = vmax.f32 %v8700, 0.0
    %v8708 = vpack.c.bf16 %v8704, %v8704
    %v8709 = vpack.c.bf16 %v8705, %v8705
    %v8710 = vpack.c.bf16 %v8706, %v8706
    %v8711 = vpack.c.bf16 %v8707, %v8707
    %v8712 = vld [vmem:[#allocation24] sm:$0xff]
    %v8713 = vld [vmem:[#allocation24 + $0x8] sm:$0xff]
    %v8714 = vld [vmem:[#allocation24 + $0x10] sm:$0xff]
    %v8715 = vld [vmem:[#allocation24 + $0x18] sm:$0xff]
    %v8716 = vld [vmem:[#allocation24 + $0x20] sm:$0xff]
    %v8717 = vld [vmem:[#allocation24 + $0x28] sm:$0xff]
    %v8718 = vld [vmem:[#allocation24 + $0x30] sm:$0xff]
    %v8719 = vld [vmem:[#allocation24 + $0x38] sm:$0xff]
    %v8720 = vld [vmem:[#allocation24 + $0x40] sm:$0xff]
    %v8721 = vld [vmem:[#allocation24 + $0x48] sm:$0xff]
    %v8722 = vld [vmem:[#allocation24 + $0x50] sm:$0xff]
    %v8723 = vld [vmem:[#allocation24 + $0x58] sm:$0xff]
    %v8724 = vld [vmem:[#allocation24 + $0x60] sm:$0xff]
    %v8725 = vld [vmem:[#allocation24 + $0x68] sm:$0xff]
    %v8726 = vld [vmem:[#allocation24 + $0x70] sm:$0xff]
    %v8727 = vld [vmem:[#allocation24 + $0x78] sm:$0xff]
    %v8728 = vld [vmem:[#allocation24 + $0x80] sm:$0xff]
    %v8729 = vld [vmem:[#allocation24 + $0x88] sm:$0xff]
    %v8730 = vld [vmem:[#allocation24 + $0x90] sm:$0xff]
    %v8731 = vld [vmem:[#allocation24 + $0x98] sm:$0xff]
    %v8732 = vld [vmem:[#allocation24 + $0xa0] sm:$0xff]
    %v8733 = vld [vmem:[#allocation24 + $0xa8] sm:$0xff]
    %v8734 = vld [vmem:[#allocation24 + $0xb0] sm:$0xff]
    %v8735 = vld [vmem:[#allocation24 + $0xb8] sm:$0xff]
    %v8736 = vld [vmem:[#allocation24 + $0xc0] sm:$0xff]
    %v8737 = vld [vmem:[#allocation24 + $0xc8] sm:$0xff]
    %v8738 = vld [vmem:[#allocation24 + $0xd0] sm:$0xff]
    %v8739 = vld [vmem:[#allocation24 + $0xd8] sm:$0xff]
    %v8740 = vld [vmem:[#allocation24 + $0xe0] sm:$0xff]
    %v8741 = vld [vmem:[#allocation24 + $0xe8] sm:$0xff]
    %v8742 = vld [vmem:[#allocation24 + $0xf0] sm:$0xff]
    %v8743 = vld [vmem:[#allocation24 + $0xf8] sm:$0xff]
    %v8744 = vld [vmem:[#allocation24 + $0x100] sm:$0xff]
    %v8745 = vld [vmem:[#allocation24 + $0x108] sm:$0xff]
    %v8746 = vld [vmem:[#allocation24 + $0x110] sm:$0xff]
    %v8747 = vld [vmem:[#allocation24 + $0x118] sm:$0xff]
    %v8748 = vld [vmem:[#allocation24 + $0x120] sm:$0xff]
    %v8749 = vld [vmem:[#allocation24 + $0x128] sm:$0xff]
    %v8750 = vld [vmem:[#allocation24 + $0x130] sm:$0xff]
    %v8751 = vld [vmem:[#allocation24 + $0x138] sm:$0xff]
    %v8752 = vld [vmem:[#allocation24 + $0x140] sm:$0xff]
    %v8753 = vld [vmem:[#allocation24 + $0x148] sm:$0xff]
    %v8754 = vld [vmem:[#allocation24 + $0x150] sm:$0xff]
    %v8755 = vld [vmem:[#allocation24 + $0x158] sm:$0xff]
    %v8756 = vld [vmem:[#allocation24 + $0x160] sm:$0xff]
    %v8757 = vld [vmem:[#allocation24 + $0x168] sm:$0xff]
    %v8758 = vld [vmem:[#allocation24 + $0x170] sm:$0xff]
    %v8759 = vld [vmem:[#allocation24 + $0x178] sm:$0xff]
    %v8760 = vld [vmem:[#allocation24 + $0x180] sm:$0xff]
    %v8761 = vld [vmem:[#allocation24 + $0x188] sm:$0xff]
    %v8762 = vld [vmem:[#allocation24 + $0x190] sm:$0xff]
    %v8763 = vld [vmem:[#allocation24 + $0x198] sm:$0xff]
    %v8764 = vld [vmem:[#allocation24 + $0x1a0] sm:$0xff]
    %v8765 = vld [vmem:[#allocation24 + $0x1a8] sm:$0xff]
    %v8766 = vld [vmem:[#allocation24 + $0x1b0] sm:$0xff]
    %v8767 = vld [vmem:[#allocation24 + $0x1b8] sm:$0xff]
    %v8768 = vld [vmem:[#allocation24 + $0x1c0] sm:$0xff]
    %v8769 = vld [vmem:[#allocation24 + $0x1c8] sm:$0xff]
    %v8770 = vld [vmem:[#allocation24 + $0x1d0] sm:$0xff]
    %v8771 = vld [vmem:[#allocation24 + $0x1d8] sm:$0xff]
    %v8772 = vld [vmem:[#allocation24 + $0x1e0] sm:$0xff]
    %v8773 = vld [vmem:[#allocation24 + $0x1e8] sm:$0xff]
    %v8774 = vld [vmem:[#allocation24 + $0x1f0] sm:$0xff]
    %v8775 = vld [vmem:[#allocation24 + $0x1f8] sm:$0xff]
    %v8776 = vld [vmem:[#allocation24 + $0x200] sm:$0xff]
    %v8777 = vld [vmem:[#allocation24 + $0x208] sm:$0xff]
    %v8778 = vld [vmem:[#allocation24 + $0x210] sm:$0xff]
    %v8779 = vld [vmem:[#allocation24 + $0x218] sm:$0xff]
    %v8780 = vld [vmem:[#allocation24 + $0x220] sm:$0xff]
    %v8781 = vld [vmem:[#allocation24 + $0x228] sm:$0xff]
    %v8782 = vld [vmem:[#allocation24 + $0x230] sm:$0xff]
    %v8783 = vld [vmem:[#allocation24 + $0x238] sm:$0xff]
    %v8784 = vld [vmem:[#allocation24 + $0x240] sm:$0xff]
    %v8785 = vld [vmem:[#allocation24 + $0x248] sm:$0xff]
    %v8786 = vld [vmem:[#allocation24 + $0x250] sm:$0xff]
    %v8787 = vld [vmem:[#allocation24 + $0x258] sm:$0xff]
    %v8788 = vld [vmem:[#allocation24 + $0x260] sm:$0xff]
    %v8789 = vld [vmem:[#allocation24 + $0x268] sm:$0xff]
    %v8790 = vld [vmem:[#allocation24 + $0x270] sm:$0xff]
    %v8791 = vld [vmem:[#allocation24 + $0x278] sm:$0xff]
    %v8792 = vld [vmem:[#allocation24 + $0x280] sm:$0xff]
    %v8793 = vld [vmem:[#allocation24 + $0x288] sm:$0xff]
    %v8794 = vld [vmem:[#allocation24 + $0x290] sm:$0xff]
    %v8795 = vld [vmem:[#allocation24 + $0x298] sm:$0xff]
    %v8796 = vld [vmem:[#allocation24 + $0x2a0] sm:$0xff]
    %v8797 = vld [vmem:[#allocation24 + $0x2a8] sm:$0xff]
    %v8798 = vld [vmem:[#allocation24 + $0x2b0] sm:$0xff]
    %v8799 = vld [vmem:[#allocation24 + $0x2b8] sm:$0xff]
    %v8800 = vld [vmem:[#allocation24 + $0x2c0] sm:$0xff]
    %v8801 = vld [vmem:[#allocation24 + $0x2c8] sm:$0xff]
    %v8802 = vld [vmem:[#allocation24 + $0x2d0] sm:$0xff]
    %v8803 = vld [vmem:[#allocation24 + $0x2d8] sm:$0xff]
    %v8804 = vld [vmem:[#allocation24 + $0x2e0] sm:$0xff]
    %v8805 = vld [vmem:[#allocation24 + $0x2e8] sm:$0xff]
    %v8806 = vld [vmem:[#allocation24 + $0x2f0] sm:$0xff]
    %v8807 = vld [vmem:[#allocation24 + $0x2f8] sm:$0xff]
    %v8808 = vld [vmem:[#allocation24 + $0x300] sm:$0xff]
    %v8809 = vld [vmem:[#allocation24 + $0x308] sm:$0xff]
    %v8810 = vld [vmem:[#allocation24 + $0x310] sm:$0xff]
    %v8811 = vld [vmem:[#allocation24 + $0x318] sm:$0xff]
    %v8812 = vld [vmem:[#allocation24 + $0x320] sm:$0xff]
    %v8813 = vld [vmem:[#allocation24 + $0x328] sm:$0xff]
    %v8814 = vld [vmem:[#allocation24 + $0x330] sm:$0xff]
    %v8815 = vld [vmem:[#allocation24 + $0x338] sm:$0xff]
    %v8816 = vld [vmem:[#allocation24 + $0x340] sm:$0xff]
    %v8817 = vld [vmem:[#allocation24 + $0x348] sm:$0xff]
    %v8818 = vld [vmem:[#allocation24 + $0x350] sm:$0xff]
    %v8819 = vld [vmem:[#allocation24 + $0x358] sm:$0xff]
    %v8820 = vld [vmem:[#allocation24 + $0x360] sm:$0xff]
    %v8821 = vld [vmem:[#allocation24 + $0x368] sm:$0xff]
    %v8822 = vld [vmem:[#allocation24 + $0x370] sm:$0xff]
    %v8823 = vld [vmem:[#allocation24 + $0x378] sm:$0xff]
    %v8824 = vld [vmem:[#allocation24 + $0x380] sm:$0xff]
    %v8825 = vld [vmem:[#allocation24 + $0x388] sm:$0xff]
    %v8826 = vld [vmem:[#allocation24 + $0x390] sm:$0xff]
    %v8827 = vld [vmem:[#allocation24 + $0x398] sm:$0xff]
    %v8828 = vld [vmem:[#allocation24 + $0x3a0] sm:$0xff]
    %v8829 = vld [vmem:[#allocation24 + $0x3a8] sm:$0xff]
    %v8830 = vld [vmem:[#allocation24 + $0x3b0] sm:$0xff]
    %v8831 = vld [vmem:[#allocation24 + $0x3b8] sm:$0xff]
    %v8832 = vld [vmem:[#allocation24 + $0x3c0] sm:$0xff]
    %v8833 = vld [vmem:[#allocation24 + $0x3c8] sm:$0xff]
    %v8834 = vld [vmem:[#allocation24 + $0x3d0] sm:$0xff]
    %v8835 = vld [vmem:[#allocation24 + $0x3d8] sm:$0xff]
    %v8836 = vld [vmem:[#allocation24 + $0x3e0] sm:$0xff]
    %v8837 = vld [vmem:[#allocation24 + $0x3e8] sm:$0xff]
    %v8838 = vld [vmem:[#allocation24 + $0x3f0] sm:$0xff]
    %v8839 = vld [vmem:[#allocation24 + $0x3f8] sm:$0xff]
    %v8840 = vld [vmem:[#allocation24 + $0x400] sm:$0xff]
    %v8841 = vld [vmem:[#allocation24 + $0x408] sm:$0xff]
    %v8842 = vld [vmem:[#allocation24 + $0x410] sm:$0xff]
    %v8843 = vld [vmem:[#allocation24 + $0x418] sm:$0xff]
    %v8844 = vld [vmem:[#allocation24 + $0x420] sm:$0xff]
    %v8845 = vld [vmem:[#allocation24 + $0x428] sm:$0xff]
    %v8846 = vld [vmem:[#allocation24 + $0x430] sm:$0xff]
    %v8847 = vld [vmem:[#allocation24 + $0x438] sm:$0xff]
    %v8848 = vld [vmem:[#allocation24 + $0x440] sm:$0xff]
    %v8849 = vld [vmem:[#allocation24 + $0x448] sm:$0xff]
    %v8850 = vld [vmem:[#allocation24 + $0x450] sm:$0xff]
    %v8851 = vld [vmem:[#allocation24 + $0x458] sm:$0xff]
    %v8852 = vld [vmem:[#allocation24 + $0x460] sm:$0xff]
    %v8853 = vld [vmem:[#allocation24 + $0x468] sm:$0xff]
    %v8854 = vld [vmem:[#allocation24 + $0x470] sm:$0xff]
    %v8855 = vld [vmem:[#allocation24 + $0x478] sm:$0xff]
    %v8856 = vld [vmem:[#allocation24 + $0x480] sm:$0xff]
    %v8857 = vld [vmem:[#allocation24 + $0x488] sm:$0xff]
    %v8858 = vld [vmem:[#allocation24 + $0x490] sm:$0xff]
    %v8859 = vld [vmem:[#allocation24 + $0x498] sm:$0xff]
    %v8860 = vld [vmem:[#allocation24 + $0x4a0] sm:$0xff]
    %v8861 = vld [vmem:[#allocation24 + $0x4a8] sm:$0xff]
    %v8862 = vld [vmem:[#allocation24 + $0x4b0] sm:$0xff]
    %v8863 = vld [vmem:[#allocation24 + $0x4b8] sm:$0xff]
    %v8864 = vld [vmem:[#allocation24 + $0x4c0] sm:$0xff]
    %v8865 = vld [vmem:[#allocation24 + $0x4c8] sm:$0xff]
    %v8866 = vld [vmem:[#allocation24 + $0x4d0] sm:$0xff]
    %v8867 = vld [vmem:[#allocation24 + $0x4d8] sm:$0xff]
    %v8868 = vld [vmem:[#allocation24 + $0x4e0] sm:$0xff]
    %v8869 = vld [vmem:[#allocation24 + $0x4e8] sm:$0xff]
    %v8870 = vld [vmem:[#allocation24 + $0x4f0] sm:$0xff]
    %v8871 = vld [vmem:[#allocation24 + $0x4f8] sm:$0xff]
    %v8872 = vld [vmem:[#allocation24 + $0x500] sm:$0xff]
    %v8873 = vld [vmem:[#allocation24 + $0x508] sm:$0xff]
    %v8874 = vld [vmem:[#allocation24 + $0x510] sm:$0xff]
    %v8875 = vld [vmem:[#allocation24 + $0x518] sm:$0xff]
    %v8876 = vld [vmem:[#allocation24 + $0x520] sm:$0xff]
    %v8877 = vld [vmem:[#allocation24 + $0x528] sm:$0xff]
    %v8878 = vld [vmem:[#allocation24 + $0x530] sm:$0xff]
    %v8879 = vld [vmem:[#allocation24 + $0x538] sm:$0xff]
    %v8880 = vld [vmem:[#allocation24 + $0x540] sm:$0xff]
    %v8881 = vld [vmem:[#allocation24 + $0x548] sm:$0xff]
    %v8882 = vld [vmem:[#allocation24 + $0x550] sm:$0xff]
    %v8883 = vld [vmem:[#allocation24 + $0x558] sm:$0xff]
    %v8884 = vld [vmem:[#allocation24 + $0x560] sm:$0xff]
    %v8885 = vld [vmem:[#allocation24 + $0x568] sm:$0xff]
    %v8886 = vld [vmem:[#allocation24 + $0x570] sm:$0xff]
    %v8887 = vld [vmem:[#allocation24 + $0x578] sm:$0xff]
    %v8888 = vld [vmem:[#allocation24 + $0x580] sm:$0xff]
    %v8889 = vld [vmem:[#allocation24 + $0x588] sm:$0xff]
    %v8890 = vld [vmem:[#allocation24 + $0x590] sm:$0xff]
    %v8891 = vld [vmem:[#allocation24 + $0x598] sm:$0xff]
    %v8892 = vld [vmem:[#allocation24 + $0x5a0] sm:$0xff]
    %v8893 = vld [vmem:[#allocation24 + $0x5a8] sm:$0xff]
    %v8894 = vld [vmem:[#allocation24 + $0x5b0] sm:$0xff]
    %v8895 = vld [vmem:[#allocation24 + $0x5b8] sm:$0xff]
    %v8896 = vld [vmem:[#allocation24 + $0x5c0] sm:$0xff]
    %v8897 = vld [vmem:[#allocation24 + $0x5c8] sm:$0xff]
    %v8898 = vld [vmem:[#allocation24 + $0x5d0] sm:$0xff]
    %v8899 = vld [vmem:[#allocation24 + $0x5d8] sm:$0xff]
    %v8900 = vld [vmem:[#allocation24 + $0x5e0] sm:$0xff]
    %v8901 = vld [vmem:[#allocation24 + $0x5e8] sm:$0xff]
    %v8902 = vld [vmem:[#allocation24 + $0x5f0] sm:$0xff]
    %v8903 = vld [vmem:[#allocation24 + $0x5f8] sm:$0xff]
    %v8904 = vld [vmem:[#allocation24 + $0x600] sm:$0xff]
    %v8905 = vld [vmem:[#allocation24 + $0x608] sm:$0xff]
    %v8906 = vld [vmem:[#allocation24 + $0x610] sm:$0xff]
    %v8907 = vld [vmem:[#allocation24 + $0x618] sm:$0xff]
    %v8908 = vld [vmem:[#allocation24 + $0x620] sm:$0xff]
    %v8909 = vld [vmem:[#allocation24 + $0x628] sm:$0xff]
    %v8910 = vld [vmem:[#allocation24 + $0x630] sm:$0xff]
    %v8911 = vld [vmem:[#allocation24 + $0x638] sm:$0xff]
    %v8912 = vld [vmem:[#allocation24 + $0x640] sm:$0xff]
    %v8913 = vld [vmem:[#allocation24 + $0x648] sm:$0xff]
    %v8914 = vld [vmem:[#allocation24 + $0x650] sm:$0xff]
    %v8915 = vld [vmem:[#allocation24 + $0x658] sm:$0xff]
    %v8916 = vld [vmem:[#allocation24 + $0x660] sm:$0xff]
    %v8917 = vld [vmem:[#allocation24 + $0x668] sm:$0xff]
    %v8918 = vld [vmem:[#allocation24 + $0x670] sm:$0xff]
    %v8919 = vld [vmem:[#allocation24 + $0x678] sm:$0xff]
    %v8920 = vld [vmem:[#allocation24 + $0x680] sm:$0xff]
    %v8921 = vld [vmem:[#allocation24 + $0x688] sm:$0xff]
    %v8922 = vld [vmem:[#allocation24 + $0x690] sm:$0xff]
    %v8923 = vld [vmem:[#allocation24 + $0x698] sm:$0xff]
    %v8924 = vld [vmem:[#allocation24 + $0x6a0] sm:$0xff]
    %v8925 = vld [vmem:[#allocation24 + $0x6a8] sm:$0xff]
    %v8926 = vld [vmem:[#allocation24 + $0x6b0] sm:$0xff]
    %v8927 = vld [vmem:[#allocation24 + $0x6b8] sm:$0xff]
    %v8928 = vld [vmem:[#allocation24 + $0x6c0] sm:$0xff]
    %v8929 = vld [vmem:[#allocation24 + $0x6c8] sm:$0xff]
    %v8930 = vld [vmem:[#allocation24 + $0x6d0] sm:$0xff]
    %v8931 = vld [vmem:[#allocation24 + $0x6d8] sm:$0xff]
    %v8932 = vld [vmem:[#allocation24 + $0x6e0] sm:$0xff]
    %v8933 = vld [vmem:[#allocation24 + $0x6e8] sm:$0xff]
    %v8934 = vld [vmem:[#allocation24 + $0x6f0] sm:$0xff]
    %v8935 = vld [vmem:[#allocation24 + $0x6f8] sm:$0xff]
    %v8936 = vld [vmem:[#allocation24 + $0x700] sm:$0xff]
    %v8937 = vld [vmem:[#allocation24 + $0x708] sm:$0xff]
    %v8938 = vld [vmem:[#allocation24 + $0x710] sm:$0xff]
    %v8939 = vld [vmem:[#allocation24 + $0x718] sm:$0xff]
    %v8940 = vld [vmem:[#allocation24 + $0x720] sm:$0xff]
    %v8941 = vld [vmem:[#allocation24 + $0x728] sm:$0xff]
    %v8942 = vld [vmem:[#allocation24 + $0x730] sm:$0xff]
    %v8943 = vld [vmem:[#allocation24 + $0x738] sm:$0xff]
    %v8944 = vld [vmem:[#allocation24 + $0x740] sm:$0xff]
    %v8945 = vld [vmem:[#allocation24 + $0x748] sm:$0xff]
    %v8946 = vld [vmem:[#allocation24 + $0x750] sm:$0xff]
    %v8947 = vld [vmem:[#allocation24 + $0x758] sm:$0xff]
    %v8948 = vld [vmem:[#allocation24 + $0x760] sm:$0xff]
    %v8949 = vld [vmem:[#allocation24 + $0x768] sm:$0xff]
    %v8950 = vld [vmem:[#allocation24 + $0x770] sm:$0xff]
    %v8951 = vld [vmem:[#allocation24 + $0x778] sm:$0xff]
    %v8952 = vld [vmem:[#allocation24 + $0x780] sm:$0xff]
    %v8953 = vld [vmem:[#allocation24 + $0x788] sm:$0xff]
    %v8954 = vld [vmem:[#allocation24 + $0x790] sm:$0xff]
    %v8955 = vld [vmem:[#allocation24 + $0x798] sm:$0xff]
    %v8956 = vld [vmem:[#allocation24 + $0x7a0] sm:$0xff]
    %v8957 = vld [vmem:[#allocation24 + $0x7a8] sm:$0xff]
    %v8958 = vld [vmem:[#allocation24 + $0x7b0] sm:$0xff]
    %v8959 = vld [vmem:[#allocation24 + $0x7b8] sm:$0xff]
    %v8960 = vld [vmem:[#allocation24 + $0x7c0] sm:$0xff]
    %v8961 = vld [vmem:[#allocation24 + $0x7c8] sm:$0xff]
    %v8962 = vld [vmem:[#allocation24 + $0x7d0] sm:$0xff]
    %v8963 = vld [vmem:[#allocation24 + $0x7d8] sm:$0xff]
    %v8964 = vld [vmem:[#allocation24 + $0x7e0] sm:$0xff]
    %v8965 = vld [vmem:[#allocation24 + $0x7e8] sm:$0xff]
    %v8966 = vld [vmem:[#allocation24 + $0x7f0] sm:$0xff]
    %v8967 = vld [vmem:[#allocation24 + $0x7f8] sm:$0xff]
    %v8968 = vld [vmem:[#allocation33] sm:$0xff]
    %v8970 = vlaneseq
    %v8971 = vshrl.u32 %v8970, 7
    %v8972 = vsub.s32 0, %v8971
    %v8973 = vrot.slane %v8968, %v8972
    %v8974 = vlaneseq
    %v8975 = vshrl.u32 %v8974, 7
    %v8976 = vsub.s32 1, %v8975
    %v8977 = vrot.slane %v8968, %v8976
    %v8978 = vlaneseq
    %v8979 = vshrl.u32 %v8978, 7
    %v8980 = vsub.s32 2, %v8979
    %v8981 = vrot.slane %v8968, %v8980
    %v8982 = vlaneseq
    %v8983 = vshrl.u32 %v8982, 7
    %v8984 = vsub.s32 3, %v8983
    %v8985 = vrot.slane %v8968, %v8984
    %v8986 = vlaneseq
    %v8987 = vshrl.u32 %v8986, 7
    %v8988 = vsub.s32 4, %v8987
    %v8989 = vrot.slane %v8968, %v8988
    %v8990 = vlaneseq
    %v8991 = vshrl.u32 %v8990, 7
    %v8992 = vsub.s32 5, %v8991
    %v8993 = vrot.slane %v8968, %v8992
    %v8994 = vlaneseq
    %v8995 = vshrl.u32 %v8994, 7
    %v8996 = vsub.s32 6, %v8995
    %v8997 = vrot.slane %v8968, %v8996
    %v8998 = vlaneseq
    %v8999 = vshrl.u32 %v8998, 7
    %v9000 = vsub.s32 7, %v8999
    %v9001 = vrot.slane %v8968, %v9000
    %v9266 = vunpack.c.l.b16 %v8712
    %v9267 = vunpack.c.h.b16 %v8712
    %v9268 = vunpack.c.l.b16 %v8713
    %v9269 = vunpack.c.h.b16 %v8713
    %v9270 = vunpack.c.l.b16 %v8714
    %v9271 = vunpack.c.h.b16 %v8714
    %v9272 = vunpack.c.l.b16 %v8715
    %v9273 = vunpack.c.h.b16 %v8715
    %v9274 = vunpack.c.l.b16 %v8716
    %v9275 = vunpack.c.h.b16 %v8716
    %v9276 = vunpack.c.l.b16 %v8717
    %v9277 = vunpack.c.h.b16 %v8717
    %v9278 = vunpack.c.l.b16 %v8718
    %v9279 = vunpack.c.h.b16 %v8718
    %v9280 = vunpack.c.l.b16 %v8719
    %v9281 = vunpack.c.h.b16 %v8719
    %v9282 = vunpack.c.l.b16 %v8720
    %v9283 = vunpack.c.h.b16 %v8720
    %v9284 = vunpack.c.l.b16 %v8721
    %v9285 = vunpack.c.h.b16 %v8721
    %v9286 = vunpack.c.l.b16 %v8722
    %v9287 = vunpack.c.h.b16 %v8722
    %v9288 = vunpack.c.l.b16 %v8723
    %v9289 = vunpack.c.h.b16 %v8723
    %v9290 = vunpack.c.l.b16 %v8724
    %v9291 = vunpack.c.h.b16 %v8724
    %v9292 = vunpack.c.l.b16 %v8725
    %v9293 = vunpack.c.h.b16 %v8725
    %v9294 = vunpack.c.l.b16 %v8726
    %v9295 = vunpack.c.h.b16 %v8726
    %v9296 = vunpack.c.l.b16 %v8727
    %v9297 = vunpack.c.h.b16 %v8727
    %v9298 = vunpack.c.l.b16 %v8728
    %v9299 = vunpack.c.h.b16 %v8728
    %v9300 = vunpack.c.l.b16 %v8729
    %v9301 = vunpack.c.h.b16 %v8729
    %v9302 = vunpack.c.l.b16 %v8730
    %v9303 = vunpack.c.h.b16 %v8730
    %v9304 = vunpack.c.l.b16 %v8731
    %v9305 = vunpack.c.h.b16 %v8731
    %v9306 = vunpack.c.l.b16 %v8732
    %v9307 = vunpack.c.h.b16 %v8732
    %v9308 = vunpack.c.l.b16 %v8733
    %v9309 = vunpack.c.h.b16 %v8733
    %v9310 = vunpack.c.l.b16 %v8734
    %v9311 = vunpack.c.h.b16 %v8734
    %v9312 = vunpack.c.l.b16 %v8735
    %v9313 = vunpack.c.h.b16 %v8735
    %v9314 = vunpack.c.l.b16 %v8736
    %v9315 = vunpack.c.h.b16 %v8736
    %v9316 = vunpack.c.l.b16 %v8737
    %v9317 = vunpack.c.h.b16 %v8737
    %v9318 = vunpack.c.l.b16 %v8738
    %v9319 = vunpack.c.h.b16 %v8738
    %v9320 = vunpack.c.l.b16 %v8739
    %v9321 = vunpack.c.h.b16 %v8739
    %v9322 = vunpack.c.l.b16 %v8740
    %v9323 = vunpack.c.h.b16 %v8740
    %v9324 = vunpack.c.l.b16 %v8741
    %v9325 = vunpack.c.h.b16 %v8741
    %v9326 = vunpack.c.l.b16 %v8742
    %v9327 = vunpack.c.h.b16 %v8742
    %v9328 = vunpack.c.l.b16 %v8743
    %v9329 = vunpack.c.h.b16 %v8743
    %v9330 = vunpack.c.l.b16 %v8744
    %v9331 = vunpack.c.h.b16 %v8744
    %v9332 = vunpack.c.l.b16 %v8745
    %v9333 = vunpack.c.h.b16 %v8745
    %v9334 = vunpack.c.l.b16 %v8746
    %v9335 = vunpack.c.h.b16 %v8746
    %v9336 = vunpack.c.l.b16 %v8747
    %v9337 = vunpack.c.h.b16 %v8747
    %v9338 = vunpack.c.l.b16 %v8748
    %v9339 = vunpack.c.h.b16 %v8748
    %v9340 = vunpack.c.l.b16 %v8749
    %v9341 = vunpack.c.h.b16 %v8749
    %v9342 = vunpack.c.l.b16 %v8750
    %v9343 = vunpack.c.h.b16 %v8750
    %v9344 = vunpack.c.l.b16 %v8751
    %v9345 = vunpack.c.h.b16 %v8751
    %v9346 = vunpack.c.l.b16 %v8752
    %v9347 = vunpack.c.h.b16 %v8752
    %v9348 = vunpack.c.l.b16 %v8753
    %v9349 = vunpack.c.h.b16 %v8753
    %v9350 = vunpack.c.l.b16 %v8754
    %v9351 = vunpack.c.h.b16 %v8754
    %v9352 = vunpack.c.l.b16 %v8755
    %v9353 = vunpack.c.h.b16 %v8755
    %v9354 = vunpack.c.l.b16 %v8756
    %v9355 = vunpack.c.h.b16 %v8756
    %v9356 = vunpack.c.l.b16 %v8757
    %v9357 = vunpack.c.h.b16 %v8757
    %v9358 = vunpack.c.l.b16 %v8758
    %v9359 = vunpack.c.h.b16 %v8758
    %v9360 = vunpack.c.l.b16 %v8759
    %v9361 = vunpack.c.h.b16 %v8759
    %v9362 = vunpack.c.l.b16 %v8760
    %v9363 = vunpack.c.h.b16 %v8760
    %v9364 = vunpack.c.l.b16 %v8761
    %v9365 = vunpack.c.h.b16 %v8761
    %v9366 = vunpack.c.l.b16 %v8762
    %v9367 = vunpack.c.h.b16 %v8762
    %v9368 = vunpack.c.l.b16 %v8763
    %v9369 = vunpack.c.h.b16 %v8763
    %v9370 = vunpack.c.l.b16 %v8764
    %v9371 = vunpack.c.h.b16 %v8764
    %v9372 = vunpack.c.l.b16 %v8765
    %v9373 = vunpack.c.h.b16 %v8765
    %v9374 = vunpack.c.l.b16 %v8766
    %v9375 = vunpack.c.h.b16 %v8766
    %v9376 = vunpack.c.l.b16 %v8767
    %v9377 = vunpack.c.h.b16 %v8767
    %v9378 = vunpack.c.l.b16 %v8768
    %v9379 = vunpack.c.h.b16 %v8768
    %v9380 = vunpack.c.l.b16 %v8769
    %v9381 = vunpack.c.h.b16 %v8769
    %v9382 = vunpack.c.l.b16 %v8770
    %v9383 = vunpack.c.h.b16 %v8770
    %v9384 = vunpack.c.l.b16 %v8771
    %v9385 = vunpack.c.h.b16 %v8771
    %v9386 = vunpack.c.l.b16 %v8772
    %v9387 = vunpack.c.h.b16 %v8772
    %v9388 = vunpack.c.l.b16 %v8773
    %v9389 = vunpack.c.h.b16 %v8773
    %v9390 = vunpack.c.l.b16 %v8774
    %v9391 = vunpack.c.h.b16 %v8774
    %v9392 = vunpack.c.l.b16 %v8775
    %v9393 = vunpack.c.h.b16 %v8775
    %v9394 = vunpack.c.l.b16 %v8776
    %v9395 = vunpack.c.h.b16 %v8776
    %v9396 = vunpack.c.l.b16 %v8777
    %v9397 = vunpack.c.h.b16 %v8777
    %v9398 = vunpack.c.l.b16 %v8778
    %v9399 = vunpack.c.h.b16 %v8778
    %v9400 = vunpack.c.l.b16 %v8779
    %v9401 = vunpack.c.h.b16 %v8779
    %v9402 = vunpack.c.l.b16 %v8780
    %v9403 = vunpack.c.h.b16 %v8780
    %v9404 = vunpack.c.l.b16 %v8781
    %v9405 = vunpack.c.h.b16 %v8781
    %v9406 = vunpack.c.l.b16 %v8782
    %v9407 = vunpack.c.h.b16 %v8782
    %v9408 = vunpack.c.l.b16 %v8783
    %v9409 = vunpack.c.h.b16 %v8783
    %v9410 = vunpack.c.l.b16 %v8784
    %v9411 = vunpack.c.h.b16 %v8784
    %v9412 = vunpack.c.l.b16 %v8785
    %v9413 = vunpack.c.h.b16 %v8785
    %v9414 = vunpack.c.l.b16 %v8786
    %v9415 = vunpack.c.h.b16 %v8786
    %v9416 = vunpack.c.l.b16 %v8787
    %v9417 = vunpack.c.h.b16 %v8787
    %v9418 = vunpack.c.l.b16 %v8788
    %v9419 = vunpack.c.h.b16 %v8788
    %v9420 = vunpack.c.l.b16 %v8789
    %v9421 = vunpack.c.h.b16 %v8789
    %v9422 = vunpack.c.l.b16 %v8790
    %v9423 = vunpack.c.h.b16 %v8790
    %v9424 = vunpack.c.l.b16 %v8791
    %v9425 = vunpack.c.h.b16 %v8791
    %v9426 = vunpack.c.l.b16 %v8792
    %v9427 = vunpack.c.h.b16 %v8792
    %v9428 = vunpack.c.l.b16 %v8793
    %v9429 = vunpack.c.h.b16 %v8793
    %v9430 = vunpack.c.l.b16 %v8794
    %v9431 = vunpack.c.h.b16 %v8794
    %v9432 = vunpack.c.l.b16 %v8795
    %v9433 = vunpack.c.h.b16 %v8795
    %v9434 = vunpack.c.l.b16 %v8796
    %v9435 = vunpack.c.h.b16 %v8796
    %v9436 = vunpack.c.l.b16 %v8797
    %v9437 = vunpack.c.h.b16 %v8797
    %v9438 = vunpack.c.l.b16 %v8798
    %v9439 = vunpack.c.h.b16 %v8798
    %v9440 = vunpack.c.l.b16 %v8799
    %v9441 = vunpack.c.h.b16 %v8799
    %v9442 = vunpack.c.l.b16 %v8800
    %v9443 = vunpack.c.h.b16 %v8800
    %v9444 = vunpack.c.l.b16 %v8801
    %v9445 = vunpack.c.h.b16 %v8801
    %v9446 = vunpack.c.l.b16 %v8802
    %v9447 = vunpack.c.h.b16 %v8802
    %v9448 = vunpack.c.l.b16 %v8803
    %v9449 = vunpack.c.h.b16 %v8803
    %v9450 = vunpack.c.l.b16 %v8804
    %v9451 = vunpack.c.h.b16 %v8804
    %v9452 = vunpack.c.l.b16 %v8805
    %v9453 = vunpack.c.h.b16 %v8805
    %v9454 = vunpack.c.l.b16 %v8806
    %v9455 = vunpack.c.h.b16 %v8806
    %v9456 = vunpack.c.l.b16 %v8807
    %v9457 = vunpack.c.h.b16 %v8807
    %v9458 = vunpack.c.l.b16 %v8808
    %v9459 = vunpack.c.h.b16 %v8808
    %v9460 = vunpack.c.l.b16 %v8809
    %v9461 = vunpack.c.h.b16 %v8809
    %v9462 = vunpack.c.l.b16 %v8810
    %v9463 = vunpack.c.h.b16 %v8810
    %v9464 = vunpack.c.l.b16 %v8811
    %v9465 = vunpack.c.h.b16 %v8811
    %v9466 = vunpack.c.l.b16 %v8812
    %v9467 = vunpack.c.h.b16 %v8812
    %v9468 = vunpack.c.l.b16 %v8813
    %v9469 = vunpack.c.h.b16 %v8813
    %v9470 = vunpack.c.l.b16 %v8814
    %v9471 = vunpack.c.h.b16 %v8814
    %v9472 = vunpack.c.l.b16 %v8815
    %v9473 = vunpack.c.h.b16 %v8815
    %v9474 = vunpack.c.l.b16 %v8816
    %v9475 = vunpack.c.h.b16 %v8816
    %v9476 = vunpack.c.l.b16 %v8817
    %v9477 = vunpack.c.h.b16 %v8817
    %v9478 = vunpack.c.l.b16 %v8818
    %v9479 = vunpack.c.h.b16 %v8818
    %v9480 = vunpack.c.l.b16 %v8819
    %v9481 = vunpack.c.h.b16 %v8819
    %v9482 = vunpack.c.l.b16 %v8820
    %v9483 = vunpack.c.h.b16 %v8820
    %v9484 = vunpack.c.l.b16 %v8821
    %v9485 = vunpack.c.h.b16 %v8821
    %v9486 = vunpack.c.l.b16 %v8822
    %v9487 = vunpack.c.h.b16 %v8822
    %v9488 = vunpack.c.l.b16 %v8823
    %v9489 = vunpack.c.h.b16 %v8823
    %v9490 = vunpack.c.l.b16 %v8824
    %v9491 = vunpack.c.h.b16 %v8824
    %v9492 = vunpack.c.l.b16 %v8825
    %v9493 = vunpack.c.h.b16 %v8825
    %v9494 = vunpack.c.l.b16 %v8826
    %v9495 = vunpack.c.h.b16 %v8826
    %v9496 = vunpack.c.l.b16 %v8827
    %v9497 = vunpack.c.h.b16 %v8827
    %v9498 = vunpack.c.l.b16 %v8828
    %v9499 = vunpack.c.h.b16 %v8828
    %v9500 = vunpack.c.l.b16 %v8829
    %v9501 = vunpack.c.h.b16 %v8829
    %v9502 = vunpack.c.l.b16 %v8830
    %v9503 = vunpack.c.h.b16 %v8830
    %v9504 = vunpack.c.l.b16 %v8831
    %v9505 = vunpack.c.h.b16 %v8831
    %v9506 = vunpack.c.l.b16 %v8832
    %v9507 = vunpack.c.h.b16 %v8832
    %v9508 = vunpack.c.l.b16 %v8833
    %v9509 = vunpack.c.h.b16 %v8833
    %v9510 = vunpack.c.l.b16 %v8834
    %v9511 = vunpack.c.h.b16 %v8834
    %v9512 = vunpack.c.l.b16 %v8835
    %v9513 = vunpack.c.h.b16 %v8835
    %v9514 = vunpack.c.l.b16 %v8836
    %v9515 = vunpack.c.h.b16 %v8836
    %v9516 = vunpack.c.l.b16 %v8837
    %v9517 = vunpack.c.h.b16 %v8837
    %v9518 = vunpack.c.l.b16 %v8838
    %v9519 = vunpack.c.h.b16 %v8838
    %v9520 = vunpack.c.l.b16 %v8839
    %v9521 = vunpack.c.h.b16 %v8839
    %v9522 = vunpack.c.l.b16 %v8840
    %v9523 = vunpack.c.h.b16 %v8840
    %v9524 = vunpack.c.l.b16 %v8841
    %v9525 = vunpack.c.h.b16 %v8841
    %v9526 = vunpack.c.l.b16 %v8842
    %v9527 = vunpack.c.h.b16 %v8842
    %v9528 = vunpack.c.l.b16 %v8843
    %v9529 = vunpack.c.h.b16 %v8843
    %v9530 = vunpack.c.l.b16 %v8844
    %v9531 = vunpack.c.h.b16 %v8844
    %v9532 = vunpack.c.l.b16 %v8845
    %v9533 = vunpack.c.h.b16 %v8845
    %v9534 = vunpack.c.l.b16 %v8846
    %v9535 = vunpack.c.h.b16 %v8846
    %v9536 = vunpack.c.l.b16 %v8847
    %v9537 = vunpack.c.h.b16 %v8847
    %v9538 = vunpack.c.l.b16 %v8848
    %v9539 = vunpack.c.h.b16 %v8848
    %v9540 = vunpack.c.l.b16 %v8849
    %v9541 = vunpack.c.h.b16 %v8849
    %v9542 = vunpack.c.l.b16 %v8850
    %v9543 = vunpack.c.h.b16 %v8850
    %v9544 = vunpack.c.l.b16 %v8851
    %v9545 = vunpack.c.h.b16 %v8851
    %v9546 = vunpack.c.l.b16 %v8852
    %v9547 = vunpack.c.h.b16 %v8852
    %v9548 = vunpack.c.l.b16 %v8853
    %v9549 = vunpack.c.h.b16 %v8853
    %v9550 = vunpack.c.l.b16 %v8854
    %v9551 = vunpack.c.h.b16 %v8854
    %v9552 = vunpack.c.l.b16 %v8855
    %v9553 = vunpack.c.h.b16 %v8855
    %v9554 = vunpack.c.l.b16 %v8856
    %v9555 = vunpack.c.h.b16 %v8856
    %v9556 = vunpack.c.l.b16 %v8857
    %v9557 = vunpack.c.h.b16 %v8857
    %v9558 = vunpack.c.l.b16 %v8858
    %v9559 = vunpack.c.h.b16 %v8858
    %v9560 = vunpack.c.l.b16 %v8859
    %v9561 = vunpack.c.h.b16 %v8859
    %v9562 = vunpack.c.l.b16 %v8860
    %v9563 = vunpack.c.h.b16 %v8860
    %v9564 = vunpack.c.l.b16 %v8861
    %v9565 = vunpack.c.h.b16 %v8861
    %v9566 = vunpack.c.l.b16 %v8862
    %v9567 = vunpack.c.h.b16 %v8862
    %v9568 = vunpack.c.l.b16 %v8863
    %v9569 = vunpack.c.h.b16 %v8863
    %v9570 = vunpack.c.l.b16 %v8864
    %v9571 = vunpack.c.h.b16 %v8864
    %v9572 = vunpack.c.l.b16 %v8865
    %v9573 = vunpack.c.h.b16 %v8865
    %v9574 = vunpack.c.l.b16 %v8866
    %v9575 = vunpack.c.h.b16 %v8866
    %v9576 = vunpack.c.l.b16 %v8867
    %v9577 = vunpack.c.h.b16 %v8867
    %v9578 = vunpack.c.l.b16 %v8868
    %v9579 = vunpack.c.h.b16 %v8868
    %v9580 = vunpack.c.l.b16 %v8869
    %v9581 = vunpack.c.h.b16 %v8869
    %v9582 = vunpack.c.l.b16 %v8870
    %v9583 = vunpack.c.h.b16 %v8870
    %v9584 = vunpack.c.l.b16 %v8871
    %v9585 = vunpack.c.h.b16 %v8871
    %v9586 = vunpack.c.l.b16 %v8872
    %v9587 = vunpack.c.h.b16 %v8872
    %v9588 = vunpack.c.l.b16 %v8873
    %v9589 = vunpack.c.h.b16 %v8873
    %v9590 = vunpack.c.l.b16 %v8874
    %v9591 = vunpack.c.h.b16 %v8874
    %v9592 = vunpack.c.l.b16 %v8875
    %v9593 = vunpack.c.h.b16 %v8875
    %v9594 = vunpack.c.l.b16 %v8876
    %v9595 = vunpack.c.h.b16 %v8876
    %v9596 = vunpack.c.l.b16 %v8877
    %v9597 = vunpack.c.h.b16 %v8877
    %v9598 = vunpack.c.l.b16 %v8878
    %v9599 = vunpack.c.h.b16 %v8878
    %v9600 = vunpack.c.l.b16 %v8879
    %v9601 = vunpack.c.h.b16 %v8879
    %v9602 = vunpack.c.l.b16 %v8880
    %v9603 = vunpack.c.h.b16 %v8880
    %v9604 = vunpack.c.l.b16 %v8881
    %v9605 = vunpack.c.h.b16 %v8881
    %v9606 = vunpack.c.l.b16 %v8882
    %v9607 = vunpack.c.h.b16 %v8882
    %v9608 = vunpack.c.l.b16 %v8883
    %v9609 = vunpack.c.h.b16 %v8883
    %v9610 = vunpack.c.l.b16 %v8884
    %v9611 = vunpack.c.h.b16 %v8884
    %v9612 = vunpack.c.l.b16 %v8885
    %v9613 = vunpack.c.h.b16 %v8885
    %v9614 = vunpack.c.l.b16 %v8886
    %v9615 = vunpack.c.h.b16 %v8886
    %v9616 = vunpack.c.l.b16 %v8887
    %v9617 = vunpack.c.h.b16 %v8887
    %v9618 = vunpack.c.l.b16 %v8888
    %v9619 = vunpack.c.h.b16 %v8888
    %v9620 = vunpack.c.l.b16 %v8889
    %v9621 = vunpack.c.h.b16 %v8889
    %v9622 = vunpack.c.l.b16 %v8890
    %v9623 = vunpack.c.h.b16 %v8890
    %v9624 = vunpack.c.l.b16 %v8891
    %v9625 = vunpack.c.h.b16 %v8891
    %v9626 = vunpack.c.l.b16 %v8892
    %v9627 = vunpack.c.h.b16 %v8892
    %v9628 = vunpack.c.l.b16 %v8893
    %v9629 = vunpack.c.h.b16 %v8893
    %v9630 = vunpack.c.l.b16 %v8894
    %v9631 = vunpack.c.h.b16 %v8894
    %v9632 = vunpack.c.l.b16 %v8895
    %v9633 = vunpack.c.h.b16 %v8895
    %v9634 = vunpack.c.l.b16 %v8896
    %v9635 = vunpack.c.h.b16 %v8896
    %v9636 = vunpack.c.l.b16 %v8897
    %v9637 = vunpack.c.h.b16 %v8897
    %v9638 = vunpack.c.l.b16 %v8898
    %v9639 = vunpack.c.h.b16 %v8898
    %v9640 = vunpack.c.l.b16 %v8899
    %v9641 = vunpack.c.h.b16 %v8899
    %v9642 = vunpack.c.l.b16 %v8900
    %v9643 = vunpack.c.h.b16 %v8900
    %v9644 = vunpack.c.l.b16 %v8901
    %v9645 = vunpack.c.h.b16 %v8901
    %v9646 = vunpack.c.l.b16 %v8902
    %v9647 = vunpack.c.h.b16 %v8902
    %v9648 = vunpack.c.l.b16 %v8903
    %v9649 = vunpack.c.h.b16 %v8903
    %v9650 = vunpack.c.l.b16 %v8904
    %v9651 = vunpack.c.h.b16 %v8904
    %v9652 = vunpack.c.l.b16 %v8905
    %v9653 = vunpack.c.h.b16 %v8905
    %v9654 = vunpack.c.l.b16 %v8906
    %v9655 = vunpack.c.h.b16 %v8906
    %v9656 = vunpack.c.l.b16 %v8907
    %v9657 = vunpack.c.h.b16 %v8907
    %v9658 = vunpack.c.l.b16 %v8908
    %v9659 = vunpack.c.h.b16 %v8908
    %v9660 = vunpack.c.l.b16 %v8909
    %v9661 = vunpack.c.h.b16 %v8909
    %v9662 = vunpack.c.l.b16 %v8910
    %v9663 = vunpack.c.h.b16 %v8910
    %v9664 = vunpack.c.l.b16 %v8911
    %v9665 = vunpack.c.h.b16 %v8911
    %v9666 = vunpack.c.l.b16 %v8912
    %v9667 = vunpack.c.h.b16 %v8912
    %v9668 = vunpack.c.l.b16 %v8913
    %v9669 = vunpack.c.h.b16 %v8913
    %v9670 = vunpack.c.l.b16 %v8914
    %v9671 = vunpack.c.h.b16 %v8914
    %v9672 = vunpack.c.l.b16 %v8915
    %v9673 = vunpack.c.h.b16 %v8915
    %v9674 = vunpack.c.l.b16 %v8916
    %v9675 = vunpack.c.h.b16 %v8916
    %v9676 = vunpack.c.l.b16 %v8917
    %v9677 = vunpack.c.h.b16 %v8917
    %v9678 = vunpack.c.l.b16 %v8918
    %v9679 = vunpack.c.h.b16 %v8918
    %v9680 = vunpack.c.l.b16 %v8919
    %v9681 = vunpack.c.h.b16 %v8919
    %v9682 = vunpack.c.l.b16 %v8920
    %v9683 = vunpack.c.h.b16 %v8920
    %v9684 = vunpack.c.l.b16 %v8921
    %v9685 = vunpack.c.h.b16 %v8921
    %v9686 = vunpack.c.l.b16 %v8922
    %v9687 = vunpack.c.h.b16 %v8922
    %v9688 = vunpack.c.l.b16 %v8923
    %v9689 = vunpack.c.h.b16 %v8923
    %v9690 = vunpack.c.l.b16 %v8924
    %v9691 = vunpack.c.h.b16 %v8924
    %v9692 = vunpack.c.l.b16 %v8925
    %v9693 = vunpack.c.h.b16 %v8925
    %v9694 = vunpack.c.l.b16 %v8926
    %v9695 = vunpack.c.h.b16 %v8926
    %v9696 = vunpack.c.l.b16 %v8927
    %v9697 = vunpack.c.h.b16 %v8927
    %v9698 = vunpack.c.l.b16 %v8928
    %v9699 = vunpack.c.h.b16 %v8928
    %v9700 = vunpack.c.l.b16 %v8929
    %v9701 = vunpack.c.h.b16 %v8929
    %v9702 = vunpack.c.l.b16 %v8930
    %v9703 = vunpack.c.h.b16 %v8930
    %v9704 = vunpack.c.l.b16 %v8931
    %v9705 = vunpack.c.h.b16 %v8931
    %v9706 = vunpack.c.l.b16 %v8932
    %v9707 = vunpack.c.h.b16 %v8932
    %v9708 = vunpack.c.l.b16 %v8933
    %v9709 = vunpack.c.h.b16 %v8933
    %v9710 = vunpack.c.l.b16 %v8934
    %v9711 = vunpack.c.h.b16 %v8934
    %v9712 = vunpack.c.l.b16 %v8935
    %v9713 = vunpack.c.h.b16 %v8935
    %v9714 = vunpack.c.l.b16 %v8936
    %v9715 = vunpack.c.h.b16 %v8936
    %v9716 = vunpack.c.l.b16 %v8937
    %v9717 = vunpack.c.h.b16 %v8937
    %v9718 = vunpack.c.l.b16 %v8938
    %v9719 = vunpack.c.h.b16 %v8938
    %v9720 = vunpack.c.l.b16 %v8939
    %v9721 = vunpack.c.h.b16 %v8939
    %v9722 = vunpack.c.l.b16 %v8940
    %v9723 = vunpack.c.h.b16 %v8940
    %v9724 = vunpack.c.l.b16 %v8941
    %v9725 = vunpack.c.h.b16 %v8941
    %v9726 = vunpack.c.l.b16 %v8942
    %v9727 = vunpack.c.h.b16 %v8942
    %v9728 = vunpack.c.l.b16 %v8943
    %v9729 = vunpack.c.h.b16 %v8943
    %v9730 = vunpack.c.l.b16 %v8944
    %v9731 = vunpack.c.h.b16 %v8944
    %v9732 = vunpack.c.l.b16 %v8945
    %v9733 = vunpack.c.h.b16 %v8945
    %v9734 = vunpack.c.l.b16 %v8946
    %v9735 = vunpack.c.h.b16 %v8946
    %v9736 = vunpack.c.l.b16 %v8947
    %v9737 = vunpack.c.h.b16 %v8947
    %v9738 = vunpack.c.l.b16 %v8948
    %v9739 = vunpack.c.h.b16 %v8948
    %v9740 = vunpack.c.l.b16 %v8949
    %v9741 = vunpack.c.h.b16 %v8949
    %v9742 = vunpack.c.l.b16 %v8950
    %v9743 = vunpack.c.h.b16 %v8950
    %v9744 = vunpack.c.l.b16 %v8951
    %v9745 = vunpack.c.h.b16 %v8951
    %v9746 = vunpack.c.l.b16 %v8952
    %v9747 = vunpack.c.h.b16 %v8952
    %v9748 = vunpack.c.l.b16 %v8953
    %v9749 = vunpack.c.h.b16 %v8953
    %v9750 = vunpack.c.l.b16 %v8954
    %v9751 = vunpack.c.h.b16 %v8954
    %v9752 = vunpack.c.l.b16 %v8955
    %v9753 = vunpack.c.h.b16 %v8955
    %v9754 = vunpack.c.l.b16 %v8956
    %v9755 = vunpack.c.h.b16 %v8956
    %v9756 = vunpack.c.l.b16 %v8957
    %v9757 = vunpack.c.h.b16 %v8957
    %v9758 = vunpack.c.l.b16 %v8958
    %v9759 = vunpack.c.h.b16 %v8958
    %v9760 = vunpack.c.l.b16 %v8959
    %v9761 = vunpack.c.h.b16 %v8959
    %v9762 = vunpack.c.l.b16 %v8960
    %v9763 = vunpack.c.h.b16 %v8960
    %v9764 = vunpack.c.l.b16 %v8961
    %v9765 = vunpack.c.h.b16 %v8961
    %v9766 = vunpack.c.l.b16 %v8962
    %v9767 = vunpack.c.h.b16 %v8962
    %v9768 = vunpack.c.l.b16 %v8963
    %v9769 = vunpack.c.h.b16 %v8963
    %v9770 = vunpack.c.l.b16 %v8964
    %v9771 = vunpack.c.h.b16 %v8964
    %v9772 = vunpack.c.l.b16 %v8965
    %v9773 = vunpack.c.h.b16 %v8965
    %v9774 = vunpack.c.l.b16 %v8966
    %v9775 = vunpack.c.h.b16 %v8966
    %v9776 = vunpack.c.l.b16 %v8967
    %v9777 = vunpack.c.h.b16 %v8967
    %v9778 = vpack.c.b16 %v9274, %v9266
    %v9779 = vpack.c.b16 %v9275, %v9267
    %v9780 = vpack.c.b16 %v9276, %v9268
    %v9781 = vpack.c.b16 %v9277, %v9269
    %v9782 = vpack.c.b16 %v9278, %v9270
    %v9783 = vpack.c.b16 %v9279, %v9271
    %v9784 = vpack.c.b16 %v9280, %v9272
    %v9785 = vpack.c.b16 %v9281, %v9273
    %v9786 = vpack.c.b16 %v9290, %v9282
    %v9787 = vpack.c.b16 %v9291, %v9283
    %v9788 = vpack.c.b16 %v9292, %v9284
    %v9789 = vpack.c.b16 %v9293, %v9285
    %v9790 = vpack.c.b16 %v9294, %v9286
    %v9791 = vpack.c.b16 %v9295, %v9287
    %v9792 = vpack.c.b16 %v9296, %v9288
    %v9793 = vpack.c.b16 %v9297, %v9289
    %v9794 = vpack.c.b16 %v9306, %v9298
    %v9795 = vpack.c.b16 %v9307, %v9299
    %v9796 = vpack.c.b16 %v9308, %v9300
    %v9797 = vpack.c.b16 %v9309, %v9301
    %v9798 = vpack.c.b16 %v9310, %v9302
    %v9799 = vpack.c.b16 %v9311, %v9303
    %v9800 = vpack.c.b16 %v9312, %v9304
    %v9801 = vpack.c.b16 %v9313, %v9305
    %v9802 = vpack.c.b16 %v9322, %v9314
    %v9803 = vpack.c.b16 %v9323, %v9315
    %v9804 = vpack.c.b16 %v9324, %v9316
    %v9805 = vpack.c.b16 %v9325, %v9317
    %v9806 = vpack.c.b16 %v9326, %v9318
    %v9807 = vpack.c.b16 %v9327, %v9319
    %v9808 = vpack.c.b16 %v9328, %v9320
    %v9809 = vpack.c.b16 %v9329, %v9321
    %v9810 = vpack.c.b16 %v9338, %v9330
    %v9811 = vpack.c.b16 %v9339, %v9331
    %v9812 = vpack.c.b16 %v9340, %v9332
    %v9813 = vpack.c.b16 %v9341, %v9333
    %v9814 = vpack.c.b16 %v9342, %v9334
    %v9815 = vpack.c.b16 %v9343, %v9335
    %v9816 = vpack.c.b16 %v9344, %v9336
    %v9817 = vpack.c.b16 %v9345, %v9337
    %v9818 = vpack.c.b16 %v9354, %v9346
    %v9819 = vpack.c.b16 %v9355, %v9347
    %v9820 = vpack.c.b16 %v9356, %v9348
    %v9821 = vpack.c.b16 %v9357, %v9349
    %v9822 = vpack.c.b16 %v9358, %v9350
    %v9823 = vpack.c.b16 %v9359, %v9351
    %v9824 = vpack.c.b16 %v9360, %v9352
    %v9825 = vpack.c.b16 %v9361, %v9353
    %v9826 = vpack.c.b16 %v9370, %v9362
    %v9827 = vpack.c.b16 %v9371, %v9363
    %v9828 = vpack.c.b16 %v9372, %v9364
    %v9829 = vpack.c.b16 %v9373, %v9365
    %v9830 = vpack.c.b16 %v9374, %v9366
    %v9831 = vpack.c.b16 %v9375, %v9367
    %v9832 = vpack.c.b16 %v9376, %v9368
    %v9833 = vpack.c.b16 %v9377, %v9369
    %v9834 = vpack.c.b16 %v9386, %v9378
    %v9835 = vpack.c.b16 %v9387, %v9379
    %v9836 = vpack.c.b16 %v9388, %v9380
    %v9837 = vpack.c.b16 %v9389, %v9381
    %v9838 = vpack.c.b16 %v9390, %v9382
    %v9839 = vpack.c.b16 %v9391, %v9383
    %v9840 = vpack.c.b16 %v9392, %v9384
    %v9841 = vpack.c.b16 %v9393, %v9385
    %v9842 = vpack.c.b16 %v9402, %v9394
    %v9843 = vpack.c.b16 %v9403, %v9395
    %v9844 = vpack.c.b16 %v9404, %v9396
    %v9845 = vpack.c.b16 %v9405, %v9397
    %v9846 = vpack.c.b16 %v9406, %v9398
    %v9847 = vpack.c.b16 %v9407, %v9399
    %v9848 = vpack.c.b16 %v9408, %v9400
    %v9849 = vpack.c.b16 %v9409, %v9401
    %v9850 = vpack.c.b16 %v9418, %v9410
    %v9851 = vpack.c.b16 %v9419, %v9411
    %v9852 = vpack.c.b16 %v9420, %v9412
    %v9853 = vpack.c.b16 %v9421, %v9413
    %v9854 = vpack.c.b16 %v9422, %v9414
    %v9855 = vpack.c.b16 %v9423, %v9415
    %v9856 = vpack.c.b16 %v9424, %v9416
    %v9857 = vpack.c.b16 %v9425, %v9417
    %v9858 = vpack.c.b16 %v9434, %v9426
    %v9859 = vpack.c.b16 %v9435, %v9427
    %v9860 = vpack.c.b16 %v9436, %v9428
    %v9861 = vpack.c.b16 %v9437, %v9429
    %v9862 = vpack.c.b16 %v9438, %v9430
    %v9863 = vpack.c.b16 %v9439, %v9431
    %v9864 = vpack.c.b16 %v9440, %v9432
    %v9865 = vpack.c.b16 %v9441, %v9433
    %v9866 = vpack.c.b16 %v9450, %v9442
    %v9867 = vpack.c.b16 %v9451, %v9443
    %v9868 = vpack.c.b16 %v9452, %v9444
    %v9869 = vpack.c.b16 %v9453, %v9445
    %v9870 = vpack.c.b16 %v9454, %v9446
    %v9871 = vpack.c.b16 %v9455, %v9447
    %v9872 = vpack.c.b16 %v9456, %v9448
    %v9873 = vpack.c.b16 %v9457, %v9449
    %v9874 = vpack.c.b16 %v9466, %v9458
    %v9875 = vpack.c.b16 %v9467, %v9459
    %v9876 = vpack.c.b16 %v9468, %v9460
    %v9877 = vpack.c.b16 %v9469, %v9461
    %v9878 = vpack.c.b16 %v9470, %v9462
    %v9879 = vpack.c.b16 %v9471, %v9463
    %v9880 = vpack.c.b16 %v9472, %v9464
    %v9881 = vpack.c.b16 %v9473, %v9465
    %v9882 = vpack.c.b16 %v9482, %v9474
    %v9883 = vpack.c.b16 %v9483, %v9475
    %v9884 = vpack.c.b16 %v9484, %v9476
    %v9885 = vpack.c.b16 %v9485, %v9477
    %v9886 = vpack.c.b16 %v9486, %v9478
    %v9887 = vpack.c.b16 %v9487, %v9479
    %v9888 = vpack.c.b16 %v9488, %v9480
    %v9889 = vpack.c.b16 %v9489, %v9481
    %v9890 = vpack.c.b16 %v9498, %v9490
    %v9891 = vpack.c.b16 %v9499, %v9491
    %v9892 = vpack.c.b16 %v9500, %v9492
    %v9893 = vpack.c.b16 %v9501, %v9493
    %v9894 = vpack.c.b16 %v9502, %v9494
    %v9895 = vpack.c.b16 %v9503, %v9495
    %v9896 = vpack.c.b16 %v9504, %v9496
    %v9897 = vpack.c.b16 %v9505, %v9497
    %v9898 = vpack.c.b16 %v9514, %v9506
    %v9899 = vpack.c.b16 %v9515, %v9507
    %v9900 = vpack.c.b16 %v9516, %v9508
    %v9901 = vpack.c.b16 %v9517, %v9509
    %v9902 = vpack.c.b16 %v9518, %v9510
    %v9903 = vpack.c.b16 %v9519, %v9511
    %v9904 = vpack.c.b16 %v9520, %v9512
    %v9905 = vpack.c.b16 %v9521, %v9513
    %v9906 = vpack.c.b16 %v9530, %v9522
    %v9907 = vpack.c.b16 %v9531, %v9523
    %v9908 = vpack.c.b16 %v9532, %v9524
    %v9909 = vpack.c.b16 %v9533, %v9525
    %v9910 = vpack.c.b16 %v9534, %v9526
    %v9911 = vpack.c.b16 %v9535, %v9527
    %v9912 = vpack.c.b16 %v9536, %v9528
    %v9913 = vpack.c.b16 %v9537, %v9529
    %v9914 = vpack.c.b16 %v9546, %v9538
    %v9915 = vpack.c.b16 %v9547, %v9539
    %v9916 = vpack.c.b16 %v9548, %v9540
    %v9917 = vpack.c.b16 %v9549, %v9541
    %v9918 = vpack.c.b16 %v9550, %v9542
    %v9919 = vpack.c.b16 %v9551, %v9543
    %v9920 = vpack.c.b16 %v9552, %v9544
    %v9921 = vpack.c.b16 %v9553, %v9545
    %v9922 = vpack.c.b16 %v9562, %v9554
    %v9923 = vpack.c.b16 %v9563, %v9555
    %v9924 = vpack.c.b16 %v9564, %v9556
    %v9925 = vpack.c.b16 %v9565, %v9557
    %v9926 = vpack.c.b16 %v9566, %v9558
    %v9927 = vpack.c.b16 %v9567, %v9559
    %v9928 = vpack.c.b16 %v9568, %v9560
    %v9929 = vpack.c.b16 %v9569, %v9561
    %v9930 = vpack.c.b16 %v9578, %v9570
    %v9931 = vpack.c.b16 %v9579, %v9571
    %v9932 = vpack.c.b16 %v9580, %v9572
    %v9933 = vpack.c.b16 %v9581, %v9573
    %v9934 = vpack.c.b16 %v9582, %v9574
    %v9935 = vpack.c.b16 %v9583, %v9575
    %v9936 = vpack.c.b16 %v9584, %v9576
    %v9937 = vpack.c.b16 %v9585, %v9577
    %v9938 = vpack.c.b16 %v9594, %v9586
    %v9939 = vpack.c.b16 %v9595, %v9587
    %v9940 = vpack.c.b16 %v9596, %v9588
    %v9941 = vpack.c.b16 %v9597, %v9589
    %v9942 = vpack.c.b16 %v9598, %v9590
    %v9943 = vpack.c.b16 %v9599, %v9591
    %v9944 = vpack.c.b16 %v9600, %v9592
    %v9945 = vpack.c.b16 %v9601, %v9593
    %v9946 = vpack.c.b16 %v9610, %v9602
    %v9947 = vpack.c.b16 %v9611, %v9603
    %v9948 = vpack.c.b16 %v9612, %v9604
    %v9949 = vpack.c.b16 %v9613, %v9605
    %v9950 = vpack.c.b16 %v9614, %v9606
    %v9951 = vpack.c.b16 %v9615, %v9607
    %v9952 = vpack.c.b16 %v9616, %v9608
    %v9953 = vpack.c.b16 %v9617, %v9609
    %v9954 = vpack.c.b16 %v9626, %v9618
    %v9955 = vpack.c.b16 %v9627, %v9619
    %v9956 = vpack.c.b16 %v9628, %v9620
    %v9957 = vpack.c.b16 %v9629, %v9621
    %v9958 = vpack.c.b16 %v9630, %v9622
    %v9959 = vpack.c.b16 %v9631, %v9623
    %v9960 = vpack.c.b16 %v9632, %v9624
    %v9961 = vpack.c.b16 %v9633, %v9625
    %v9962 = vpack.c.b16 %v9642, %v9634
    %v9963 = vpack.c.b16 %v9643, %v9635
    %v9964 = vpack.c.b16 %v9644, %v9636
    %v9965 = vpack.c.b16 %v9645, %v9637
    %v9966 = vpack.c.b16 %v9646, %v9638
    %v9967 = vpack.c.b16 %v9647, %v9639
    %v9968 = vpack.c.b16 %v9648, %v9640
    %v9969 = vpack.c.b16 %v9649, %v9641
    %v9970 = vpack.c.b16 %v9658, %v9650
    %v9971 = vpack.c.b16 %v9659, %v9651
    %v9972 = vpack.c.b16 %v9660, %v9652
    %v9973 = vpack.c.b16 %v9661, %v9653
    %v9974 = vpack.c.b16 %v9662, %v9654
    %v9975 = vpack.c.b16 %v9663, %v9655
    %v9976 = vpack.c.b16 %v9664, %v9656
    %v9977 = vpack.c.b16 %v9665, %v9657
    %v9978 = vpack.c.b16 %v9674, %v9666
    %v9979 = vpack.c.b16 %v9675, %v9667
    %v9980 = vpack.c.b16 %v9676, %v9668
    %v9981 = vpack.c.b16 %v9677, %v9669
    %v9982 = vpack.c.b16 %v9678, %v9670
    %v9983 = vpack.c.b16 %v9679, %v9671
    %v9984 = vpack.c.b16 %v9680, %v9672
    %v9985 = vpack.c.b16 %v9681, %v9673
    %v9986 = vpack.c.b16 %v9690, %v9682
    %v9987 = vpack.c.b16 %v9691, %v9683
    %v9988 = vpack.c.b16 %v9692, %v9684
    %v9989 = vpack.c.b16 %v9693, %v9685
    %v9990 = vpack.c.b16 %v9694, %v9686
    %v9991 = vpack.c.b16 %v9695, %v9687
    %v9992 = vpack.c.b16 %v9696, %v9688
    %v9993 = vpack.c.b16 %v9697, %v9689
    %v9994 = vpack.c.b16 %v9706, %v9698
    %v9995 = vpack.c.b16 %v9707, %v9699
    %v9996 = vpack.c.b16 %v9708, %v9700
    %v9997 = vpack.c.b16 %v9709, %v9701
    %v9998 = vpack.c.b16 %v9710, %v9702
    %v9999 = vpack.c.b16 %v9711, %v9703
    %v10000 = vpack.c.b16 %v9712, %v9704
    %v10001 = vpack.c.b16 %v9713, %v9705
    %v10002 = vpack.c.b16 %v9722, %v9714
    %v10003 = vpack.c.b16 %v9723, %v9715
    %v10004 = vpack.c.b16 %v9724, %v9716
    %v10005 = vpack.c.b16 %v9725, %v9717
    %v10006 = vpack.c.b16 %v9726, %v9718
    %v10007 = vpack.c.b16 %v9727, %v9719
    %v10008 = vpack.c.b16 %v9728, %v9720
    %v10009 = vpack.c.b16 %v9729, %v9721
    %v10010 = vpack.c.b16 %v9738, %v9730
    %v10011 = vpack.c.b16 %v9739, %v9731
    %v10012 = vpack.c.b16 %v9740, %v9732
    %v10013 = vpack.c.b16 %v9741, %v9733
    %v10014 = vpack.c.b16 %v9742, %v9734
    %v10015 = vpack.c.b16 %v9743, %v9735
    %v10016 = vpack.c.b16 %v9744, %v9736
    %v10017 = vpack.c.b16 %v9745, %v9737
    %v10018 = vpack.c.b16 %v9754, %v9746
    %v10019 = vpack.c.b16 %v9755, %v9747
    %v10020 = vpack.c.b16 %v9756, %v9748
    %v10021 = vpack.c.b16 %v9757, %v9749
    %v10022 = vpack.c.b16 %v9758, %v9750
    %v10023 = vpack.c.b16 %v9759, %v9751
    %v10024 = vpack.c.b16 %v9760, %v9752
    %v10025 = vpack.c.b16 %v9761, %v9753
    %v10026 = vpack.c.b16 %v9770, %v9762
    %v10027 = vpack.c.b16 %v9771, %v9763
    %v10028 = vpack.c.b16 %v9772, %v9764
    %v10029 = vpack.c.b16 %v9773, %v9765
    %v10030 = vpack.c.b16 %v9774, %v9766
    %v10031 = vpack.c.b16 %v9775, %v9767
    %v10032 = vpack.c.b16 %v9776, %v9768
    %v10033 = vpack.c.b16 %v9777, %v9769
    %10290 = vmatprep.subr.bf16.mxu0 %v9779
    %10291 = vmatpush1.bf16.msra.mxu0 %v9778
    %10292 = vmatprep.subr.bf16.mxu0 %v9787
    %10293 = vmatpush1.bf16.msra.mxu0 %v9786
    %10294 = vmatprep.subr.bf16.mxu0 %v9795
    %10295 = vmatpush1.bf16.msra.mxu0 %v9794
    %10296 = vmatprep.subr.bf16.mxu0 %v9803
    %10297 = vmatpush1.bf16.msra.mxu0 %v9802
    %10298 = vmatprep.subr.bf16.mxu0 %v9811
    %10299 = vmatpush1.bf16.msra.mxu0 %v9810
    %10300 = vmatprep.subr.bf16.mxu0 %v9819
    %10301 = vmatpush1.bf16.msra.mxu0 %v9818
    %10302 = vmatprep.subr.bf16.mxu0 %v9827
    %10303 = vmatpush1.bf16.msra.mxu0 %v9826
    %10304 = vmatprep.subr.bf16.mxu0 %v9835
    %10305 = vmatpush1.bf16.msra.mxu0 %v9834
    %10306 = vmatprep.subr.bf16.mxu0 %v9843
    %10307 = vmatpush1.bf16.msra.mxu0 %v9842
    %10308 = vmatprep.subr.bf16.mxu0 %v9851
    %10309 = vmatpush1.bf16.msra.mxu0 %v9850
    %10310 = vmatprep.subr.bf16.mxu0 %v9859
    %10311 = vmatpush1.bf16.msra.mxu0 %v9858
    %10312 = vmatprep.subr.bf16.mxu0 %v9867
    %10313 = vmatpush1.bf16.msra.mxu0 %v9866
    %10314 = vmatprep.subr.bf16.mxu0 %v9875
    %10315 = vmatpush1.bf16.msra.mxu0 %v9874
    %10316 = vmatprep.subr.bf16.mxu0 %v9883
    %10317 = vmatpush1.bf16.msra.mxu0 %v9882
    %10318 = vmatprep.subr.bf16.mxu0 %v9891
    %10319 = vmatpush1.bf16.msra.mxu0 %v9890
    %10320 = vmatprep.subr.bf16.mxu0 %v9899
    %10321 = vmatpush1.bf16.msra.mxu0 %v9898
    %10322 = vmatprep.mubr.bf16.mxu0 %v8709
    %10323 = vmatmul.mubr.bf16.gmra.mrb[0].mxu0 %v8708
    %v10324 = vpop.f32.mrb[0].mxu0
    %v10325 = vadd.f32 %v8973, %v10324
    %v10326 = vpop.f32.mrb[0].mxu0
    %v10327 = vadd.f32 %v8977, %v10326
    %v10328 = vpop.f32.mrb[0].mxu0
    %v10329 = vpop.f32.mrb[0].mxu0
    %10330 = vdwg.mxu0
    %10331 = vmatprep.subr.bf16.mxu0 %v9907
    %10332 = vmatpush1.bf16.msra.mxu0 %v9906
    %10333 = vmatprep.subr.bf16.mxu0 %v9915
    %10334 = vmatpush1.bf16.msra.mxu0 %v9914
    %10335 = vmatprep.subr.bf16.mxu0 %v9923
    %10336 = vmatpush1.bf16.msra.mxu0 %v9922
    %10337 = vmatprep.subr.bf16.mxu0 %v9931
    %10338 = vmatpush1.bf16.msra.mxu0 %v9930
    %10339 = vmatprep.subr.bf16.mxu0 %v9939
    %10340 = vmatpush1.bf16.msra.mxu0 %v9938
    %10341 = vmatprep.subr.bf16.mxu0 %v9947
    %10342 = vmatpush1.bf16.msra.mxu0 %v9946
    %10343 = vmatprep.subr.bf16.mxu0 %v9955
    %10344 = vmatpush1.bf16.msra.mxu0 %v9954
    %10345 = vmatprep.subr.bf16.mxu0 %v9963
    %10346 = vmatpush1.bf16.msra.mxu0 %v9962
    %10347 = vmatprep.subr.bf16.mxu0 %v9971
    %10348 = vmatpush1.bf16.msra.mxu0 %v9970
    %10349 = vmatprep.subr.bf16.mxu0 %v9979
    %10350 = vmatpush1.bf16.msra.mxu0 %v9978
    %10351 = vmatprep.subr.bf16.mxu0 %v9987
    %10352 = vmatpush1.bf16.msra.mxu0 %v9986
    %10353 = vmatprep.subr.bf16.mxu0 %v9995
    %10354 = vmatpush1.bf16.msra.mxu0 %v9994
    %10355 = vmatprep.subr.bf16.mxu0 %v10003
    %10356 = vmatpush1.bf16.msra.mxu0 %v10002
    %10357 = vmatprep.subr.bf16.mxu0 %v10011
    %10358 = vmatpush1.bf16.msra.mxu0 %v10010
    %10359 = vmatprep.subr.bf16.mxu0 %v10019
    %10360 = vmatpush1.bf16.msra.mxu0 %v10018
    %10361 = vmatprep.subr.bf16.mxu0 %v10027
    %10362 = vmatpush1.bf16.msra.mxu0 %v10026
    %10363 = vmatprep.mubr.bf16.mxu0 %v8711
    %10364 = vmatmul.mubr.bf16.gmra.mrb[0].mxu0 %v8710
    %v10365 = vpop.f32.mrb[0].mxu0
    %v10366 = vadd.f32 %v10325, %v10365
    %v10367 = vpop.f32.mrb[0].mxu0
    %v10368 = vadd.f32 %v10327, %v10367
    %v10369 = vpop.f32.mrb[0].mxu0
    %v10370 = vpop.f32.mrb[0].mxu0
    %10371 = vdwg.mxu0
    %10372 = vmatprep.subr.bf16.mxu0 %v9781
    %10373 = vmatpush1.bf16.msra.mxu0 %v9780
    %10374 = vmatprep.subr.bf16.mxu0 %v9789
    %10375 = vmatpush1.bf16.msra.mxu0 %v9788
    %10376 = vmatprep.subr.bf16.mxu0 %v9797
    %10377 = vmatpush1.bf16.msra.mxu0 %v9796
    %10378 = vmatprep.subr.bf16.mxu0 %v9805
    %10379 = vmatpush1.bf16.msra.mxu0 %v9804
    %10380 = vmatprep.subr.bf16.mxu0 %v9813
    %10381 = vmatpush1.bf16.msra.mxu0 %v9812
    %10382 = vmatprep.subr.bf16.mxu0 %v9821
    %10383 = vmatpush1.bf16.msra.mxu0 %v9820
    %10384 = vmatprep.subr.bf16.mxu0 %v9829
    %10385 = vmatpush1.bf16.msra.mxu0 %v9828
    %10386 = vmatprep.subr.bf16.mxu0 %v9837
    %10387 = vmatpush1.bf16.msra.mxu0 %v9836
    %10388 = vmatprep.subr.bf16.mxu0 %v9845
    %10389 = vmatpush1.bf16.msra.mxu0 %v9844
    %10390 = vmatprep.subr.bf16.mxu0 %v9853
    %10391 = vmatpush1.bf16.msra.mxu0 %v9852
    %10392 = vmatprep.subr.bf16.mxu0 %v9861
    %10393 = vmatpush1.bf16.msra.mxu0 %v9860
    %10394 = vmatprep.subr.bf16.mxu0 %v9869
    %10395 = vmatpush1.bf16.msra.mxu0 %v9868
    %10396 = vmatprep.subr.bf16.mxu0 %v9877
    %10397 = vmatpush1.bf16.msra.mxu0 %v9876
    %10398 = vmatprep.subr.bf16.mxu0 %v9885
    %10399 = vmatpush1.bf16.msra.mxu0 %v9884
    %10400 = vmatprep.subr.bf16.mxu0 %v9893
    %10401 = vmatpush1.bf16.msra.mxu0 %v9892
    %10402 = vmatprep.subr.bf16.mxu0 %v9901
    %10403 = vmatpush1.bf16.msra.mxu0 %v9900
    %10404 = vmatprep.mubr.bf16.mxu0 %v8709
    %10405 = vmatmul.mubr.bf16.gmra.mrb[0].mxu0 %v8708
    %v10406 = vpop.f32.mrb[0].mxu0
    %v10407 = vadd.f32 %v8981, %v10406
    %v10408 = vpop.f32.mrb[0].mxu0
    %v10409 = vadd.f32 %v8985, %v10408
    %v10410 = vpop.f32.mrb[0].mxu0
    %v10411 = vpop.f32.mrb[0].mxu0
    %10412 = vdwg.mxu0
    %10413 = vmatprep.subr.bf16.mxu0 %v9909
    %10414 = vmatpush1.bf16.msra.mxu0 %v9908
    %10415 = vmatprep.subr.bf16.mxu0 %v9917
    %10416 = vmatpush1.bf16.msra.mxu0 %v9916
    %10417 = vmatprep.subr.bf16.mxu0 %v9925
    %10418 = vmatpush1.bf16.msra.mxu0 %v9924
    %10419 = vmatprep.subr.bf16.mxu0 %v9933
    %10420 = vmatpush1.bf16.msra.mxu0 %v9932
    %10421 = vmatprep.subr.bf16.mxu0 %v9941
    %10422 = vmatpush1.bf16.msra.mxu0 %v9940
    %10423 = vmatprep.subr.bf16.mxu0 %v9949
    %10424 = vmatpush1.bf16.msra.mxu0 %v9948
    %10425 = vmatprep.subr.bf16.mxu0 %v9957
    %10426 = vmatpush1.bf16.msra.mxu0 %v9956
    %10427 = vmatprep.subr.bf16.mxu0 %v9965
    %10428 = vmatpush1.bf16.msra.mxu0 %v9964
    %10429 = vmatprep.subr.bf16.mxu0 %v9973
    %10430 = vmatpush1.bf16.msra.mxu0 %v9972
    %10431 = vmatprep.subr.bf16.mxu0 %v9981
    %10432 = vmatpush1.bf16.msra.mxu0 %v9980
    %10433 = vmatprep.subr.bf16.mxu0 %v9989
    %10434 = vmatpush1.bf16.msra.mxu0 %v9988
    %10435 = vmatprep.subr.bf16.mxu0 %v9997
    %10436 = vmatpush1.bf16.msra.mxu0 %v9996
    %10437 = vmatprep.subr.bf16.mxu0 %v10005
    %10438 = vmatpush1.bf16.msra.mxu0 %v10004
    %10439 = vmatprep.subr.bf16.mxu0 %v10013
    %10440 = vmatpush1.bf16.msra.mxu0 %v10012
    %10441 = vmatprep.subr.bf16.mxu0 %v10021
    %10442 = vmatpush1.bf16.msra.mxu0 %v10020
    %10443 = vmatprep.subr.bf16.mxu0 %v10029
    %10444 = vmatpush1.bf16.msra.mxu0 %v10028
    %10445 = vmatprep.mubr.bf16.mxu0 %v8711
    %10446 = vmatmul.mubr.bf16.gmra.mrb[0].mxu0 %v8710
    %v10447 = vpop.f32.mrb[0].mxu0
    %v10448 = vadd.f32 %v10407, %v10447
    %v10449 = vpop.f32.mrb[0].mxu0
    %v10450 = vadd.f32 %v10409, %v10449
    %v10451 = vpop.f32.mrb[0].mxu0
    %v10452 = vpop.f32.mrb[0].mxu0
    %10453 = vdwg.mxu0
    %10454 = vmatprep.subr.bf16.mxu0 %v9783
    %10455 = vmatpush1.bf16.msra.mxu0 %v9782
    %10456 = vmatprep.subr.bf16.mxu0 %v9791
    %10457 = vmatpush1.bf16.msra.mxu0 %v9790
    %10458 = vmatprep.subr.bf16.mxu0 %v9799
    %10459 = vmatpush1.bf16.msra.mxu0 %v9798
    %10460 = vmatprep.subr.bf16.mxu0 %v9807
    %10461 = vmatpush1.bf16.msra.mxu0 %v9806
    %10462 = vmatprep.subr.bf16.mxu0 %v9815
    %10463 = vmatpush1.bf16.msra.mxu0 %v9814
    %10464 = vmatprep.subr.bf16.mxu0 %v9823
    %10465 = vmatpush1.bf16.msra.mxu0 %v9822
    %10466 = vmatprep.subr.bf16.mxu0 %v9831
    %10467 = vmatpush1.bf16.msra.mxu0 %v9830
    %10468 = vmatprep.subr.bf16.mxu0 %v9839
    %10469 = vmatpush1.bf16.msra.mxu0 %v9838
    %10470 = vmatprep.subr.bf16.mxu0 %v9847
    %10471 = vmatpush1.bf16.msra.mxu0 %v9846
    %10472 = vmatprep.subr.bf16.mxu0 %v9855
    %10473 = vmatpush1.bf16.msra.mxu0 %v9854
    %10474 = vmatprep.subr.bf16.mxu0 %v9863
    %10475 = vmatpush1.bf16.msra.mxu0 %v9862
    %10476 = vmatprep.subr.bf16.mxu0 %v9871
    %10477 = vmatpush1.bf16.msra.mxu0 %v9870
    %10478 = vmatprep.subr.bf16.mxu0 %v9879
    %10479 = vmatpush1.bf16.msra.mxu0 %v9878
    %10480 = vmatprep.subr.bf16.mxu0 %v9887
    %10481 = vmatpush1.bf16.msra.mxu0 %v9886
    %10482 = vmatprep.subr.bf16.mxu0 %v9895
    %10483 = vmatpush1.bf16.msra.mxu0 %v9894
    %10484 = vmatprep.subr.bf16.mxu0 %v9903
    %10485 = vmatpush1.bf16.msra.mxu0 %v9902
    %10486 = vmatprep.mubr.bf16.mxu0 %v8709
    %10487 = vmatmul.mubr.bf16.gmra.mrb[0].mxu0 %v8708
    %v10488 = vpop.f32.mrb[0].mxu0
    %v10489 = vadd.f32 %v8989, %v10488
    %v10490 = vpop.f32.mrb[0].mxu0
    %v10491 = vadd.f32 %v8993, %v10490
    %v10492 = vpop.f32.mrb[0].mxu0
    %v10493 = vpop.f32.mrb[0].mxu0
    %10494 = vdwg.mxu0
    %10495 = vmatprep.subr.bf16.mxu0 %v9911
    %10496 = vmatpush1.bf16.msra.mxu0 %v9910
    %10497 = vmatprep.subr.bf16.mxu0 %v9919
    %10498 = vmatpush1.bf16.msra.mxu0 %v9918
    %10499 = vmatprep.subr.bf16.mxu0 %v9927
    %10500 = vmatpush1.bf16.msra.mxu0 %v9926
    %10501 = vmatprep.subr.bf16.mxu0 %v9935
    %10502 = vmatpush1.bf16.msra.mxu0 %v9934
    %10503 = vmatprep.subr.bf16.mxu0 %v9943
    %10504 = vmatpush1.bf16.msra.mxu0 %v9942
    %10505 = vmatprep.subr.bf16.mxu0 %v9951
    %10506 = vmatpush1.bf16.msra.mxu0 %v9950
    %10507 = vmatprep.subr.bf16.mxu0 %v9959
    %10508 = vmatpush1.bf16.msra.mxu0 %v9958
    %10509 = vmatprep.subr.bf16.mxu0 %v9967
    %10510 = vmatpush1.bf16.msra.mxu0 %v9966
    %10511 = vmatprep.subr.bf16.mxu0 %v9975
    %10512 = vmatpush1.bf16.msra.mxu0 %v9974
    %10513 = vmatprep.subr.bf16.mxu0 %v9983
    %10514 = vmatpush1.bf16.msra.mxu0 %v9982
    %10515 = vmatprep.subr.bf16.mxu0 %v9991
    %10516 = vmatpush1.bf16.msra.mxu0 %v9990
    %10517 = vmatprep.subr.bf16.mxu0 %v9999
    %10518 = vmatpush1.bf16.msra.mxu0 %v9998
    %10519 = vmatprep.subr.bf16.mxu0 %v10007
    %10520 = vmatpush1.bf16.msra.mxu0 %v10006
    %10521 = vmatprep.subr.bf16.mxu0 %v10015
    %10522 = vmatpush1.bf16.msra.mxu0 %v10014
    %10523 = vmatprep.subr.bf16.mxu0 %v10023
    %10524 = vmatpush1.bf16.msra.mxu0 %v10022
    %10525 = vmatprep.subr.bf16.mxu0 %v10031
    %10526 = vmatpush1.bf16.msra.mxu0 %v10030
    %10527 = vmatprep.mubr.bf16.mxu0 %v8711
    %10528 = vmatmul.mubr.bf16.gmra.mrb[0].mxu0 %v8710
    %v10529 = vpop.f32.mrb[0].mxu0
    %v10530 = vadd.f32 %v10489, %v10529
    %v10531 = vpop.f32.mrb[0].mxu0
    %v10532 = vadd.f32 %v10491, %v10531
    %v10533 = vpop.f32.mrb[0].mxu0
    %v10534 = vpop.f32.mrb[0].mxu0
    %10535 = vdwg.mxu0
    %10536 = vmatprep.subr.bf16.mxu0 %v9785
    %10537 = vmatpush1.bf16.msra.mxu0 %v9784
    %10538 = vmatprep.subr.bf16.mxu0 %v9793
    %10539 = vmatpush1.bf16.msra.mxu0 %v9792
    %10540 = vmatprep.subr.bf16.mxu0 %v9801
    %10541 = vmatpush1.bf16.msra.mxu0 %v9800
    %10542 = vmatprep.subr.bf16.mxu0 %v9809
    %10543 = vmatpush1.bf16.msra.mxu0 %v9808
    %10544 = vmatprep.subr.bf16.mxu0 %v9817
    %10545 = vmatpush1.bf16.msra.mxu0 %v9816
    %10546 = vmatprep.subr.bf16.mxu0 %v9825
    %10547 = vmatpush1.bf16.msra.mxu0 %v9824
    %10548 = vmatprep.subr.bf16.mxu0 %v9833
    %10549 = vmatpush1.bf16.msra.mxu0 %v9832
    %10550 = vmatprep.subr.bf16.mxu0 %v9841
    %10551 = vmatpush1.bf16.msra.mxu0 %v9840
    %10552 = vmatprep.subr.bf16.mxu0 %v9849
    %10553 = vmatpush1.bf16.msra.mxu0 %v9848
    %10554 = vmatprep.subr.bf16.mxu0 %v9857
    %10555 = vmatpush1.bf16.msra.mxu0 %v9856
    %10556 = vmatprep.subr.bf16.mxu0 %v9865
    %10557 = vmatpush1.bf16.msra.mxu0 %v9864
    %10558 = vmatprep.subr.bf16.mxu0 %v9873
    %10559 = vmatpush1.bf16.msra.mxu0 %v9872
    %10560 = vmatprep.subr.bf16.mxu0 %v9881
    %10561 = vmatpush1.bf16.msra.mxu0 %v9880
    %10562 = vmatprep.subr.bf16.mxu0 %v9889
    %10563 = vmatpush1.bf16.msra.mxu0 %v9888
    %10564 = vmatprep.subr.bf16.mxu0 %v9897
    %10565 = vmatpush1.bf16.msra.mxu0 %v9896
    %10566 = vmatprep.subr.bf16.mxu0 %v9905
    %10567 = vmatpush1.bf16.msra.mxu0 %v9904
    %10568 = vmatprep.mubr.bf16.mxu0 %v8709
    %10569 = vmatmul.mubr.bf16.gmra.mrb[0].mxu0 %v8708
    %v10570 = vpop.f32.mrb[0].mxu0
    %v10571 = vadd.f32 %v8997, %v10570
    %v10572 = vpop.f32.mrb[0].mxu0
    %v10573 = vadd.f32 %v9001, %v10572
    %v10574 = vpop.f32.mrb[0].mxu0
    %v10575 = vpop.f32.mrb[0].mxu0
    %10576 = vdwg.mxu0
    %10577 = vmatprep.subr.bf16.mxu0 %v9913
    %10578 = vmatpush1.bf16.msra.mxu0 %v9912
    %10579 = vmatprep.subr.bf16.mxu0 %v9921
    %10580 = vmatpush1.bf16.msra.mxu0 %v9920
    %10581 = vmatprep.subr.bf16.mxu0 %v9929
    %10582 = vmatpush1.bf16.msra.mxu0 %v9928
    %10583 = vmatprep.subr.bf16.mxu0 %v9937
    %10584 = vmatpush1.bf16.msra.mxu0 %v9936
    %10585 = vmatprep.subr.bf16.mxu0 %v9945
    %10586 = vmatpush1.bf16.msra.mxu0 %v9944
    %10587 = vmatprep.subr.bf16.mxu0 %v9953
    %10588 = vmatpush1.bf16.msra.mxu0 %v9952
    %10589 = vmatprep.subr.bf16.mxu0 %v9961
    %10590 = vmatpush1.bf16.msra.mxu0 %v9960
    %10591 = vmatprep.subr.bf16.mxu0 %v9969
    %10592 = vmatpush1.bf16.msra.mxu0 %v9968
    %10593 = vmatprep.subr.bf16.mxu0 %v9977
    %10594 = vmatpush1.bf16.msra.mxu0 %v9976
    %10595 = vmatprep.subr.bf16.mxu0 %v9985
    %10596 = vmatpush1.bf16.msra.mxu0 %v9984
    %10597 = vmatprep.subr.bf16.mxu0 %v9993
    %10598 = vmatpush1.bf16.msra.mxu0 %v9992
    %10599 = vmatprep.subr.bf16.mxu0 %v10001
    %10600 = vmatpush1.bf16.msra.mxu0 %v10000
    %10601 = vmatprep.subr.bf16.mxu0 %v10009
    %10602 = vmatpush1.bf16.msra.mxu0 %v10008
    %10603 = vmatprep.subr.bf16.mxu0 %v10017
    %10604 = vmatpush1.bf16.msra.mxu0 %v10016
    %10605 = vmatprep.subr.bf16.mxu0 %v10025
    %10606 = vmatpush1.bf16.msra.mxu0 %v10024
    %10607 = vmatprep.subr.bf16.mxu0 %v10033
    %10608 = vmatpush1.bf16.msra.mxu0 %v10032
    %10609 = vmatprep.mubr.bf16.mxu0 %v8711
    %10610 = vmatmul.mubr.bf16.gmra.mrb[0].mxu0 %v8710
    %v10611 = vpop.f32.mrb[0].mxu0
    %v10612 = vadd.f32 %v10571, %v10611
    %v10613 = vpop.f32.mrb[0].mxu0
    %v10614 = vadd.f32 %v10573, %v10613
    %v10615 = vpop.f32.mrb[0].mxu0
    %v10616 = vpop.f32.mrb[0].mxu0
    %10617 = vdwg.mxu0
    %v10618 = vpack.c.bf16 %v5231, %v5231
    %v10619 = vpack.c.bf16 %v5233, %v5233
    %v10620 = vpack.c.bf16 %v5313, %v5313
    %v10621 = vpack.c.bf16 %v5315, %v5315
    %v10622 = vpack.c.bf16 %v5395, %v5395
    %v10623 = vpack.c.bf16 %v5397, %v5397
    %v10624 = vpack.c.bf16 %v5477, %v5477
    %v10625 = vpack.c.bf16 %v5479, %v5479
    %10626 = vmatprep.subr.bf16.mxu0 %v6546
    %10627 = vmatpush1.bf16.msra.mxu0 %v6545
    %10628 = vmatprep.subr.bf16.mxu0 %v6550
    %10629 = vmatpush1.bf16.msra.mxu0 %v6549
    %10630 = vmatprep.subr.bf16.mxu0 %v6554
    %10631 = vmatpush1.bf16.msra.mxu0 %v6553
    %10632 = vmatprep.subr.bf16.mxu0 %v6558
    %10633 = vmatpush1.bf16.msra.mxu0 %v6557
    %10634 = vmatprep.subr.bf16.mxu0 %v6562
    %10635 = vmatpush1.bf16.msra.mxu0 %v6561
    %10636 = vmatprep.subr.bf16.mxu0 %v6566
    %10637 = vmatpush1.bf16.msra.mxu0 %v6565
    %10638 = vmatprep.subr.bf16.mxu0 %v6570
    %10639 = vmatpush1.bf16.msra.mxu0 %v6569
    %10640 = vmatprep.subr.bf16.mxu0 %v6574
    %10641 = vmatpush1.bf16.msra.mxu0 %v6573
    %10642 = vmatprep.subr.bf16.mxu0 %v6578
    %10643 = vmatpush1.bf16.msra.mxu0 %v6577
    %10644 = vmatprep.subr.bf16.mxu0 %v6582
    %10645 = vmatpush1.bf16.msra.mxu0 %v6581
    %10646 = vmatprep.subr.bf16.mxu0 %v6586
    %10647 = vmatpush1.bf16.msra.mxu0 %v6585
    %10648 = vmatprep.subr.bf16.mxu0 %v6590
    %10649 = vmatpush1.bf16.msra.mxu0 %v6589
    %10650 = vmatprep.subr.bf16.mxu0 %v6594
    %10651 = vmatpush1.bf16.msra.mxu0 %v6593
    %10652 = vmatprep.subr.bf16.mxu0 %v6598
    %10653 = vmatpush1.bf16.msra.mxu0 %v6597
    %10654 = vmatprep.subr.bf16.mxu0 %v6602
    %10655 = vmatpush1.bf16.msra.mxu0 %v6601
    %10656 = vmatprep.subr.bf16.mxu0 %v6606
    %10657 = vmatpush1.bf16.msra.mxu0 %v6605
    %10658 = vmatprep.mubr.bf16.mxu0 %v10619
    %10659 = vmatmul.mubr.bf16.gmra.mrb[0].mxu0 %v10618
    %v10660 = vpop.f32.mrb[0].mxu0
    %v10661 = vadd.f32 %v5760, %v10660
    %v10662 = vpop.f32.mrb[0].mxu0
    %v10663 = vadd.f32 %v5764, %v10662
    %v10664 = vpop.f32.mrb[0].mxu0
    %v10665 = vpop.f32.mrb[0].mxu0
    %10666 = vdwg.mxu0
    %10667 = vmatprep.subr.bf16.mxu0 %v6610
    %10668 = vmatpush1.bf16.msra.mxu0 %v6609
    %10669 = vmatprep.subr.bf16.mxu0 %v6614
    %10670 = vmatpush1.bf16.msra.mxu0 %v6613
    %10671 = vmatprep.subr.bf16.mxu0 %v6618
    %10672 = vmatpush1.bf16.msra.mxu0 %v6617
    %10673 = vmatprep.subr.bf16.mxu0 %v6622
    %10674 = vmatpush1.bf16.msra.mxu0 %v6621
    %10675 = vmatprep.subr.bf16.mxu0 %v6626
    %10676 = vmatpush1.bf16.msra.mxu0 %v6625
    %10677 = vmatprep.subr.bf16.mxu0 %v6630
    %10678 = vmatpush1.bf16.msra.mxu0 %v6629
    %10679 = vmatprep.subr.bf16.mxu0 %v6634
    %10680 = vmatpush1.bf16.msra.mxu0 %v6633
    %10681 = vmatprep.subr.bf16.mxu0 %v6638
    %10682 = vmatpush1.bf16.msra.mxu0 %v6637
    %10683 = vmatprep.subr.bf16.mxu0 %v6642
    %10684 = vmatpush1.bf16.msra.mxu0 %v6641
    %10685 = vmatprep.subr.bf16.mxu0 %v6646
    %10686 = vmatpush1.bf16.msra.mxu0 %v6645
    %10687 = vmatprep.subr.bf16.mxu0 %v6650
    %10688 = vmatpush1.bf16.msra.mxu0 %v6649
    %10689 = vmatprep.subr.bf16.mxu0 %v6654
    %10690 = vmatpush1.bf16.msra.mxu0 %v6653
    %10691 = vmatprep.subr.bf16.mxu0 %v6658
    %10692 = vmatpush1.bf16.msra.mxu0 %v6657
    %10693 = vmatprep.subr.bf16.mxu0 %v6662
    %10694 = vmatpush1.bf16.msra.mxu0 %v6661
    %10695 = vmatprep.subr.bf16.mxu0 %v6666
    %10696 = vmatpush1.bf16.msra.mxu0 %v6665
    %10697 = vmatprep.subr.bf16.mxu0 %v6670
    %10698 = vmatpush1.bf16.msra.mxu0 %v6669
    %10699 = vmatprep.mubr.bf16.mxu0 %v10621
    %10700 = vmatmul.mubr.bf16.gmra.mrb[0].mxu0 %v10620
    %v10701 = vpop.f32.mrb[0].mxu0
    %v10702 = vadd.f32 %v10661, %v10701
    %v10703 = vpop.f32.mrb[0].mxu0
    %v10704 = vadd.f32 %v10663, %v10703
    %v10705 = vpop.f32.mrb[0].mxu0
    %v10706 = vpop.f32.mrb[0].mxu0
    %10707 = vdwg.mxu0
    %10708 = vmatprep.subr.bf16.mxu0 %v6674
    %10709 = vmatpush1.bf16.msra.mxu0 %v6673
    %10710 = vmatprep.subr.bf16.mxu0 %v6678
    %10711 = vmatpush1.bf16.msra.mxu0 %v6677
    %10712 = vmatprep.subr.bf16.mxu0 %v6682
    %10713 = vmatpush1.bf16.msra.mxu0 %v6681
    %10714 = vmatprep.subr.bf16.mxu0 %v6686
    %10715 = vmatpush1.bf16.msra.mxu0 %v6685
    %10716 = vmatprep.subr.bf16.mxu0 %v6690
    %10717 = vmatpush1.bf16.msra.mxu0 %v6689
    %10718 = vmatprep.subr.bf16.mxu0 %v6694
    %10719 = vmatpush1.bf16.msra.mxu0 %v6693
    %10720 = vmatprep.subr.bf16.mxu0 %v6698
    %10721 = vmatpush1.bf16.msra.mxu0 %v6697
    %10722 = vmatprep.subr.bf16.mxu0 %v6702
    %10723 = vmatpush1.bf16.msra.mxu0 %v6701
    %10724 = vmatprep.subr.bf16.mxu0 %v6706
    %10725 = vmatpush1.bf16.msra.mxu0 %v6705
    %10726 = vmatprep.subr.bf16.mxu0 %v6710
    %10727 = vmatpush1.bf16.msra.mxu0 %v6709
    %10728 = vmatprep.subr.bf16.mxu0 %v6714
    %10729 = vmatpush1.bf16.msra.mxu0 %v6713
    %10730 = vmatprep.subr.bf16.mxu0 %v6718
    %10731 = vmatpush1.bf16.msra.mxu0 %v6717
    %10732 = vmatprep.subr.bf16.mxu0 %v6722
    %10733 = vmatpush1.bf16.msra.mxu0 %v6721
    %10734 = vmatprep.subr.bf16.mxu0 %v6726
    %10735 = vmatpush1.bf16.msra.mxu0 %v6725
    %10736 = vmatprep.subr.bf16.mxu0 %v6730
    %10737 = vmatpush1.bf16.msra.mxu0 %v6729
    %10738 = vmatprep.subr.bf16.mxu0 %v6734
    %10739 = vmatpush1.bf16.msra.mxu0 %v6733
    %10740 = vmatprep.mubr.bf16.mxu0 %v10623
    %10741 = vmatmul.mubr.bf16.gmra.mrb[0].mxu0 %v10622
    %v10742 = vpop.f32.mrb[0].mxu0
    %v10743 = vadd.f32 %v10702, %v10742
    %v10744 = vpop.f32.mrb[0].mxu0
    %v10745 = vadd.f32 %v10704, %v10744
    %v10746 = vpop.f32.mrb[0].mxu0
    %v10747 = vpop.f32.mrb[0].mxu0
    %10748 = vdwg.mxu0
    %10749 = vmatprep.subr.bf16.mxu0 %v6738
    %10750 = vmatpush1.bf16.msra.mxu0 %v6737
    %10751 = vmatprep.subr.bf16.mxu0 %v6742
    %10752 = vmatpush1.bf16.msra.mxu0 %v6741
    %10753 = vmatprep.subr.bf16.mxu0 %v6746
    %10754 = vmatpush1.bf16.msra.mxu0 %v6745
    %10755 = vmatprep.subr.bf16.mxu0 %v6750
    %10756 = vmatpush1.bf16.msra.mxu0 %v6749
    %10757 = vmatprep.subr.bf16.mxu0 %v6754
    %10758 = vmatpush1.bf16.msra.mxu0 %v6753
    %10759 = vmatprep.subr.bf16.mxu0 %v6758
    %10760 = vmatpush1.bf16.msra.mxu0 %v6757
    %10761 = vmatprep.subr.bf16.mxu0 %v6762
    %10762 = vmatpush1.bf16.msra.mxu0 %v6761
    %10763 = vmatprep.subr.bf16.mxu0 %v6766
    %10764 = vmatpush1.bf16.msra.mxu0 %v6765
    %10765 = vmatprep.subr.bf16.mxu0 %v6770
    %10766 = vmatpush1.bf16.msra.mxu0 %v6769
    %10767 = vmatprep.subr.bf16.mxu0 %v6774
    %10768 = vmatpush1.bf16.msra.mxu0 %v6773
    %10769 = vmatprep.subr.bf16.mxu0 %v6778
    %10770 = vmatpush1.bf16.msra.mxu0 %v6777
    %10771 = vmatprep.subr.bf16.mxu0 %v6782
    %10772 = vmatpush1.bf16.msra.mxu0 %v6781
    %10773 = vmatprep.subr.bf16.mxu0 %v6786
    %10774 = vmatpush1.bf16.msra.mxu0 %v6785
    %10775 = vmatprep.subr.bf16.mxu0 %v6790
    %10776 = vmatpush1.bf16.msra.mxu0 %v6789
    %10777 = vmatprep.subr.bf16.mxu0 %v6794
    %10778 = vmatpush1.bf16.msra.mxu0 %v6793
    %10779 = vmatprep.subr.bf16.mxu0 %v6798
    %10780 = vmatpush1.bf16.msra.mxu0 %v6797
    %10781 = vmatprep.mubr.bf16.mxu0 %v10625
    %10782 = vmatmul.mubr.bf16.gmra.mrb[0].mxu0 %v10624
    %v10783 = vpop.f32.mrb[0].mxu0
    %v10784 = vadd.f32 %v10743, %v10783
    %v10785 = vpop.f32.mrb[0].mxu0
    %v10786 = vadd.f32 %v10745, %v10785
    %v10787 = vpop.f32.mrb[0].mxu0
    %v10788 = vpop.f32.mrb[0].mxu0
    %10789 = vdwg.mxu0
    %10790 = vmatprep.subr.bf16.mxu0 %v6548
    %10791 = vmatpush1.bf16.msra.mxu0 %v6547
    %10792 = vmatprep.subr.bf16.mxu0 %v6552
    %10793 = vmatpush1.bf16.msra.mxu0 %v6551
    %10794 = vmatprep.subr.bf16.mxu0 %v6556
    %10795 = vmatpush1.bf16.msra.mxu0 %v6555
    %10796 = vmatprep.subr.bf16.mxu0 %v6560
    %10797 = vmatpush1.bf16.msra.mxu0 %v6559
    %10798 = vmatprep.subr.bf16.mxu0 %v6564
    %10799 = vmatpush1.bf16.msra.mxu0 %v6563
    %10800 = vmatprep.subr.bf16.mxu0 %v6568
    %10801 = vmatpush1.bf16.msra.mxu0 %v6567
    %10802 = vmatprep.subr.bf16.mxu0 %v6572
    %10803 = vmatpush1.bf16.msra.mxu0 %v6571
    %10804 = vmatprep.subr.bf16.mxu0 %v6576
    %10805 = vmatpush1.bf16.msra.mxu0 %v6575
    %10806 = vmatprep.subr.bf16.mxu0 %v6580
    %10807 = vmatpush1.bf16.msra.mxu0 %v6579
    %10808 = vmatprep.subr.bf16.mxu0 %v6584
    %10809 = vmatpush1.bf16.msra.mxu0 %v6583
    %10810 = vmatprep.subr.bf16.mxu0 %v6588
    %10811 = vmatpush1.bf16.msra.mxu0 %v6587
    %10812 = vmatprep.subr.bf16.mxu0 %v6592
    %10813 = vmatpush1.bf16.msra.mxu0 %v6591
    %10814 = vmatprep.subr.bf16.mxu0 %v6596
    %10815 = vmatpush1.bf16.msra.mxu0 %v6595
    %10816 = vmatprep.subr.bf16.mxu0 %v6600
    %10817 = vmatpush1.bf16.msra.mxu0 %v6599
    %10818 = vmatprep.subr.bf16.mxu0 %v6604
    %10819 = vmatpush1.bf16.msra.mxu0 %v6603
    %10820 = vmatprep.subr.bf16.mxu0 %v6608
    %10821 = vmatpush1.bf16.msra.mxu0 %v6607
    %10822 = vmatprep.mubr.bf16.mxu0 %v10619
    %10823 = vmatmul.mubr.bf16.gmra.mrb[0].mxu0 %v10618
    %v10824 = vpop.f32.mrb[0].mxu0
    %v10825 = vadd.f32 %v5768, %v10824
    %v10826 = vpop.f32.mrb[0].mxu0
    %v10827 = vadd.f32 %v5772, %v10826
    %v10828 = vpop.f32.mrb[0].mxu0
    %v10829 = vpop.f32.mrb[0].mxu0
    %10830 = vdwg.mxu0
    %10831 = vmatprep.subr.bf16.mxu0 %v6612
    %10832 = vmatpush1.bf16.msra.mxu0 %v6611
    %10833 = vmatprep.subr.bf16.mxu0 %v6616
    %10834 = vmatpush1.bf16.msra.mxu0 %v6615
    %10835 = vmatprep.subr.bf16.mxu0 %v6620
    %10836 = vmatpush1.bf16.msra.mxu0 %v6619
    %10837 = vmatprep.subr.bf16.mxu0 %v6624
    %10838 = vmatpush1.bf16.msra.mxu0 %v6623
    %10839 = vmatprep.subr.bf16.mxu0 %v6628
    %10840 = vmatpush1.bf16.msra.mxu0 %v6627
    %10841 = vmatprep.subr.bf16.mxu0 %v6632
    %10842 = vmatpush1.bf16.msra.mxu0 %v6631
    %10843 = vmatprep.subr.bf16.mxu0 %v6636
    %10844 = vmatpush1.bf16.msra.mxu0 %v6635
    %10845 = vmatprep.subr.bf16.mxu0 %v6640
    %10846 = vmatpush1.bf16.msra.mxu0 %v6639
    %10847 = vmatprep.subr.bf16.mxu0 %v6644
    %10848 = vmatpush1.bf16.msra.mxu0 %v6643
    %10849 = vmatprep.subr.bf16.mxu0 %v6648
    %10850 = vmatpush1.bf16.msra.mxu0 %v6647
    %10851 = vmatprep.subr.bf16.mxu0 %v6652
    %10852 = vmatpush1.bf16.msra.mxu0 %v6651
    %10853 = vmatprep.subr.bf16.mxu0 %v6656
    %10854 = vmatpush1.bf16.msra.mxu0 %v6655
    %10855 = vmatprep.subr.bf16.mxu0 %v6660
    %10856 = vmatpush1.bf16.msra.mxu0 %v6659
    %10857 = vmatprep.subr.bf16.mxu0 %v6664
    %10858 = vmatpush1.bf16.msra.mxu0 %v6663
    %10859 = vmatprep.subr.bf16.mxu0 %v6668
    %10860 = vmatpush1.bf16.msra.mxu0 %v6667
    %10861 = vmatprep.subr.bf16.mxu0 %v6672
    %10862 = vmatpush1.bf16.msra.mxu0 %v6671
    %10863 = vmatprep.mubr.bf16.mxu0 %v10621
    %10864 = vmatmul.mubr.bf16.gmra.mrb[0].mxu0 %v10620
    %v10865 = vpop.f32.mrb[0].mxu0
    %v10866 = vadd.f32 %v10825, %v10865
    %v10867 = vpop.f32.mrb[0].mxu0
    %v10868 = vadd.f32 %v10827, %v10867
    %v10869 = vpop.f32.mrb[0].mxu0
    %v10870 = vpop.f32.mrb[0].mxu0
    %10871 = vdwg.mxu0
    %10872 = vmatprep.subr.bf16.mxu0 %v6676
    %10873 = vmatpush1.bf16.msra.mxu0 %v6675
    %10874 = vmatprep.subr.bf16.mxu0 %v6680
    %10875 = vmatpush1.bf16.msra.mxu0 %v6679
    %10876 = vmatprep.subr.bf16.mxu0 %v6684
    %10877 = vmatpush1.bf16.msra.mxu0 %v6683
    %10878 = vmatprep.subr.bf16.mxu0 %v6688
    %10879 = vmatpush1.bf16.msra.mxu0 %v6687
    %10880 = vmatprep.subr.bf16.mxu0 %v6692
    %10881 = vmatpush1.bf16.msra.mxu0 %v6691
    %10882 = vmatprep.subr.bf16.mxu0 %v6696
    %10883 = vmatpush1.bf16.msra.mxu0 %v6695
    %10884 = vmatprep.subr.bf16.mxu0 %v6700
    %10885 = vmatpush1.bf16.msra.mxu0 %v6699
    %10886 = vmatprep.subr.bf16.mxu0 %v6704
    %10887 = vmatpush1.bf16.msra.mxu0 %v6703
    %10888 = vmatprep.subr.bf16.mxu0 %v6708
    %10889 = vmatpush1.bf16.msra.mxu0 %v6707
    %10890 = vmatprep.subr.bf16.mxu0 %v6712
    %10891 = vmatpush1.bf16.msra.mxu0 %v6711
    %10892 = vmatprep.subr.bf16.mxu0 %v6716
    %10893 = vmatpush1.bf16.msra.mxu0 %v6715
    %10894 = vmatprep.subr.bf16.mxu0 %v6720
    %10895 = vmatpush1.bf16.msra.mxu0 %v6719
    %10896 = vmatprep.subr.bf16.mxu0 %v6724
    %10897 = vmatpush1.bf16.msra.mxu0 %v6723
    %10898 = vmatprep.subr.bf16.mxu0 %v6728
    %10899 = vmatpush1.bf16.msra.mxu0 %v6727
    %10900 = vmatprep.subr.bf16.mxu0 %v6732
    %10901 = vmatpush1.bf16.msra.mxu0 %v6731
    %10902 = vmatprep.subr.bf16.mxu0 %v6736
    %10903 = vmatpush1.bf16.msra.mxu0 %v6735
    %10904 = vmatprep.mubr.bf16.mxu0 %v10623
    %10905 = vmatmul.mubr.bf16.gmra.mrb[0].mxu0 %v10622
    %v10906 = vpop.f32.mrb[0].mxu0
    %v10907 = vadd.f32 %v10866, %v10906
    %v10908 = vpop.f32.mrb[0].mxu0
    %v10909 = vadd.f32 %v10868, %v10908
    %v10910 = vpop.f32.mrb[0].mxu0
    %v10911 = vpop.f32.mrb[0].mxu0
    %10912 = vdwg.mxu0
    %10913 = vmatprep.subr.bf16.mxu0 %v6740
    %10914 = vmatpush1.bf16.msra.mxu0 %v6739
    %10915 = vmatprep.subr.bf16.mxu0 %v6744
    %10916 = vmatpush1.bf16.msra.mxu0 %v6743
    %10917 = vmatprep.subr.bf16.mxu0 %v6748
    %10918 = vmatpush1.bf16.msra.mxu0 %v6747
    %10919 = vmatprep.subr.bf16.mxu0 %v6752
    %10920 = vmatpush1.bf16.msra.mxu0 %v6751
    %10921 = vmatprep.subr.bf16.mxu0 %v6756
    %10922 = vmatpush1.bf16.msra.mxu0 %v6755
    %10923 = vmatprep.subr.bf16.mxu0 %v6760
    %10924 = vmatpush1.bf16.msra.mxu0 %v6759
    %10925 = vmatprep.subr.bf16.mxu0 %v6764
    %10926 = vmatpush1.bf16.msra.mxu0 %v6763
    %10927 = vmatprep.subr.bf16.mxu0 %v6768
    %10928 = vmatpush1.bf16.msra.mxu0 %v6767
    %10929 = vmatprep.subr.bf16.mxu0 %v6772
    %10930 = vmatpush1.bf16.msra.mxu0 %v6771
    %10931 = vmatprep.subr.bf16.mxu0 %v6776
    %10932 = vmatpush1.bf16.msra.mxu0 %v6775
    %10933 = vmatprep.subr.bf16.mxu0 %v6780
    %10934 = vmatpush1.bf16.msra.mxu0 %v6779
    %10935 = vmatprep.subr.bf16.mxu0 %v6784
    %10936 = vmatpush1.bf16.msra.mxu0 %v6783
    %10937 = vmatprep.subr.bf16.mxu0 %v6788
    %10938 = vmatpush1.bf16.msra.mxu0 %v6787
    %10939 = vmatprep.subr.bf16.mxu0 %v6792
    %10940 = vmatpush1.bf16.msra.mxu0 %v6791
    %10941 = vmatprep.subr.bf16.mxu0 %v6796
    %10942 = vmatpush1.bf16.msra.mxu0 %v6795
    %10943 = vmatprep.subr.bf16.mxu0 %v6800
    %10944 = vmatpush1.bf16.msra.mxu0 %v6799
    %10945 = vmatprep.mubr.bf16.mxu0 %v10625
    %10946 = vmatmul.mubr.bf16.gmra.mrb[0].mxu0 %v10624
    %v10947 = vpop.f32.mrb[0].mxu0
    %v10948 = vadd.f32 %v10907, %v10947
    %v10949 = vpop.f32.mrb[0].mxu0
    %v10950 = vadd.f32 %v10909, %v10949
    %v10951 = vpop.f32.mrb[0].mxu0
    %v10952 = vpop.f32.mrb[0].mxu0
    %10953 = vdwg.mxu0
    %vm10954 = vcmp.gt.f32.partialorder %v10784, 0.0
    %vm10955 = vcmp.gt.f32.partialorder %v10786, 0.0
    %vm10956 = vcmp.gt.f32.partialorder %v10948, 0.0
    %vm10957 = vcmp.gt.f32.partialorder %v10950, 0.0
    %v10958 = vmul.f32 %v10784, 0.01
    %v10959 = vmul.f32 %v10786, 0.01
    %v10960 = vmul.f32 %v10948, 0.01
    %v10961 = vmul.f32 %v10950, 0.01
    %v10962 = vsel %vm10954, %v10784, %v10958
    %v10963 = vsel %vm10955, %v10786, %v10959
    %v10964 = vsel %vm10956, %v10948, %v10960
    %v10965 = vsel %vm10957, %v10950, %v10961
    %v10966 = vpack.c.bf16 %v10962, %v10962
    %v10967 = vpack.c.bf16 %v10963, %v10963
    %v10968 = vpack.c.bf16 %v10964, %v10964
    %v10969 = vpack.c.bf16 %v10965, %v10965
    %10970 = vmatprep.subr.bf16.mxu0 %v7670
    %10971 = vmatpush1.bf16.msra.mxu0 %v7669
    %10972 = vmatprep.subr.bf16.mxu0 %v7672
    %10973 = vmatpush1.bf16.msra.mxu0 %v7671
    %10974 = vmatprep.subr.bf16.mxu0 %v7674
    %10975 = vmatpush1.bf16.msra.mxu0 %v7673
    %10976 = vmatprep.subr.bf16.mxu0 %v7676
    %10977 = vmatpush1.bf16.msra.mxu0 %v7675
    %10978 = vmatprep.subr.bf16.mxu0 %v7678
    %10979 = vmatpush1.bf16.msra.mxu0 %v7677
    %10980 = vmatprep.subr.bf16.mxu0 %v7680
    %10981 = vmatpush1.bf16.msra.mxu0 %v7679
    %10982 = vmatprep.subr.bf16.mxu0 %v7682
    %10983 = vmatpush1.bf16.msra.mxu0 %v7681
    %10984 = vmatprep.subr.bf16.mxu0 %v7684
    %10985 = vmatpush1.bf16.msra.mxu0 %v7683
    %10986 = vmatprep.subr.bf16.mxu0 %v7686
    %10987 = vmatpush1.bf16.msra.mxu0 %v7685
    %10988 = vmatprep.subr.bf16.mxu0 %v7688
    %10989 = vmatpush1.bf16.msra.mxu0 %v7687
    %10990 = vmatprep.subr.bf16.mxu0 %v7690
    %10991 = vmatpush1.bf16.msra.mxu0 %v7689
    %10992 = vmatprep.subr.bf16.mxu0 %v7692
    %10993 = vmatpush1.bf16.msra.mxu0 %v7691
    %10994 = vmatprep.subr.bf16.mxu0 %v7694
    %10995 = vmatpush1.bf16.msra.mxu0 %v7693
    %10996 = vmatprep.subr.bf16.mxu0 %v7696
    %10997 = vmatpush1.bf16.msra.mxu0 %v7695
    %10998 = vmatprep.subr.bf16.mxu0 %v7698
    %10999 = vmatpush1.bf16.msra.mxu0 %v7697
    %11000 = vmatprep.subr.bf16.mxu0 %v7700
    %11001 = vmatpush1.bf16.msra.mxu0 %v7699
    %11002 = vmatprep.mubr.bf16.mxu0 %v10967
    %11003 = vmatmul.mubr.bf16.gmra.mrb[0].mxu0 %v10966
    %v11004 = vpop.f32.mrb[0].mxu0
    %v11005 = vadd.f32 %v7470, %v11004
    %v11006 = vpop.f32.mrb[0].mxu0
    %v11007 = vadd.f32 %v7474, %v11006
    %v11008 = vpop.f32.mrb[0].mxu0
    %v11009 = vpop.f32.mrb[0].mxu0
    %11010 = vdwg.mxu0
    %11011 = vmatprep.subr.bf16.mxu0 %v7702
    %11012 = vmatpush1.bf16.msra.mxu0 %v7701
    %11013 = vmatprep.subr.bf16.mxu0 %v7704
    %11014 = vmatpush1.bf16.msra.mxu0 %v7703
    %11015 = vmatprep.subr.bf16.mxu0 %v7706
    %11016 = vmatpush1.bf16.msra.mxu0 %v7705
    %11017 = vmatprep.subr.bf16.mxu0 %v7708
    %11018 = vmatpush1.bf16.msra.mxu0 %v7707
    %11019 = vmatprep.subr.bf16.mxu0 %v7710
    %11020 = vmatpush1.bf16.msra.mxu0 %v7709
    %11021 = vmatprep.subr.bf16.mxu0 %v7712
    %11022 = vmatpush1.bf16.msra.mxu0 %v7711
    %11023 = vmatprep.subr.bf16.mxu0 %v7714
    %11024 = vmatpush1.bf16.msra.mxu0 %v7713
    %11025 = vmatprep.subr.bf16.mxu0 %v7716
    %11026 = vmatpush1.bf16.msra.mxu0 %v7715
    %11027 = vmatprep.subr.bf16.mxu0 %v7718
    %11028 = vmatpush1.bf16.msra.mxu0 %v7717
    %11029 = vmatprep.subr.bf16.mxu0 %v7720
    %11030 = vmatpush1.bf16.msra.mxu0 %v7719
    %11031 = vmatprep.subr.bf16.mxu0 %v7722
    %11032 = vmatpush1.bf16.msra.mxu0 %v7721
    %11033 = vmatprep.subr.bf16.mxu0 %v7724
    %11034 = vmatpush1.bf16.msra.mxu0 %v7723
    %11035 = vmatprep.subr.bf16.mxu0 %v7726
    %11036 = vmatpush1.bf16.msra.mxu0 %v7725
    %11037 = vmatprep.subr.bf16.mxu0 %v7728
    %11038 = vmatpush1.bf16.msra.mxu0 %v7727
    %11039 = vmatprep.subr.bf16.mxu0 %v7730
    %11040 = vmatpush1.bf16.msra.mxu0 %v7729
    %11041 = vmatprep.subr.bf16.mxu0 %v7732
    %11042 = vmatpush1.bf16.msra.mxu0 %v7731
    %11043 = vmatprep.mubr.bf16.mxu0 %v10969
    %11044 = vmatmul.mubr.bf16.gmra.mrb[0].mxu0 %v10968
    %v11045 = vpop.f32.mrb[0].mxu0
    %v11046 = vadd.f32 %v11005, %v11045
    %v11047 = vpop.f32.mrb[0].mxu0
    %v11048 = vadd.f32 %v11007, %v11047
    %v11049 = vpop.f32.mrb[0].mxu0
    %v11050 = vpop.f32.mrb[0].mxu0
    %11051 = vdwg.mxu0
    %vm11052 = vcmp.gt.f32.partialorder %v11046, 0.0
    %vm11053 = vcmp.gt.f32.partialorder %v11048, 0.0
    %v11054 = vmul.f32 %v11046, 0.01
    %v11055 = vmul.f32 %v11048, 0.01
    %v11056 = vsel %vm11052, %v11046, %v11054
    %v11057 = vsel %vm11053, %v11048, %v11055
    %v11058 = vpack.c.bf16 %v11056, %v11056
    %v11059 = vpack.c.bf16 %v11057, %v11057
    %11060 = vmatprep.subr.bf16.mxu0 0
    %11061 = vmatpush1.bf16.msra.mxu0 %v7990
    %11062 = vmatprep.subr.bf16.mxu0 0
    %11063 = vmatpush1.bf16.msra.mxu0 %v7991
    %11064 = vmatprep.subr.bf16.mxu0 0
    %11065 = vmatpush1.bf16.msra.mxu0 %v7992
    %11066 = vmatprep.subr.bf16.mxu0 0
    %11067 = vmatpush1.bf16.msra.mxu0 %v7993
    %11068 = vmatprep.subr.bf16.mxu0 0
    %11069 = vmatpush1.bf16.msra.mxu0 %v7994
    %11070 = vmatprep.subr.bf16.mxu0 0
    %11071 = vmatpush1.bf16.msra.mxu0 %v7995
    %11072 = vmatprep.subr.bf16.mxu0 0
    %11073 = vmatpush1.bf16.msra.mxu0 %v7996
    %11074 = vmatprep.subr.bf16.mxu0 0
    %11075 = vmatpush1.bf16.msra.mxu0 %v7997
    %11076 = vmatprep.subr.bf16.mxu0 0
    %11077 = vmatpush1.bf16.msra.mxu0 %v7998
    %11078 = vmatprep.subr.bf16.mxu0 0
    %11079 = vmatpush1.bf16.msra.mxu0 %v7999
    %11080 = vmatprep.subr.bf16.mxu0 0
    %11081 = vmatpush1.bf16.msra.mxu0 %v8000
    %11082 = vmatprep.subr.bf16.mxu0 0
    %11083 = vmatpush1.bf16.msra.mxu0 %v8001
    %11084 = vmatprep.subr.bf16.mxu0 0
    %11085 = vmatpush1.bf16.msra.mxu0 %v8002
    %11086 = vmatprep.subr.bf16.mxu0 0
    %11087 = vmatpush1.bf16.msra.mxu0 %v8003
    %11088 = vmatprep.subr.bf16.mxu0 0
    %11089 = vmatpush1.bf16.msra.mxu0 %v8004
    %11090 = vmatprep.subr.bf16.mxu0 0
    %11091 = vmatpush1.bf16.msra.mxu0 %v8005
    %11092 = vmatprep.mubr.bf16.mxu0 %v11059
    %11093 = vmatmul.mubr.bf16.gmra.mrb[0].mxu0 %v11058
    %v11094 = vpop.f32.mrb[0].mxu0
    %v11095 = vadd.f32 %v7924, %v11094
    %v11096 = vpop.f32.mrb[0].mxu0
    %v11097 = vpop.f32.mrb[0].mxu0
    %v11098 = vpop.f32.mrb[0].mxu0
    %11099 = vdwg.mxu0
    %v11100 = vpack.c.bf16 %v11095, %v11095
    %11101 = vmatprep.subr.bf16.mxu0 %v8140
    %11102 = vmatpush1.bf16.msra.mxu0 %v8139
    %11103 = vmatprep.subr.bf16.mxu0 %v8142
    %11104 = vmatpush1.bf16.msra.mxu0 %v8141
    %11105 = vmatprep.subr.bf16.mxu0 %v8144
    %11106 = vmatpush1.bf16.msra.mxu0 %v8143
    %11107 = vmatprep.subr.bf16.mxu0 %v8146
    %11108 = vmatpush1.bf16.msra.mxu0 %v8145
    %11109 = vmatprep.subr.bf16.mxu0 %v8148
    %11110 = vmatpush1.bf16.msra.mxu0 %v8147
    %11111 = vmatprep.subr.bf16.mxu0 %v8150
    %11112 = vmatpush1.bf16.msra.mxu0 %v8149
    %11113 = vmatprep.subr.bf16.mxu0 %v8152
    %11114 = vmatpush1.bf16.msra.mxu0 %v8151
    %11115 = vmatprep.subr.bf16.mxu0 %v8154
    %11116 = vmatpush1.bf16.msra.mxu0 %v8153
    %11117 = vmatprep.subr.bf16.mxu0 0
    %11118 = vmatpush1.bf16.msra.mxu0 0
    %11119 = vmatprep.subr.bf16.mxu0 0
    %11120 = vmatpush1.bf16.msra.mxu0 0
    %11121 = vmatprep.subr.bf16.mxu0 0
    %11122 = vmatpush1.bf16.msra.mxu0 0
    %11123 = vmatprep.subr.bf16.mxu0 0
    %11124 = vmatpush1.bf16.msra.mxu0 0
    %11125 = vmatprep.subr.bf16.mxu0 0
    %11126 = vmatpush1.bf16.msra.mxu0 0
    %11127 = vmatprep.subr.bf16.mxu0 0
    %11128 = vmatpush1.bf16.msra.mxu0 0
    %11129 = vmatprep.subr.bf16.mxu0 0
    %11130 = vmatpush1.bf16.msra.mxu0 0
    %11131 = vmatprep.subr.bf16.mxu0 0
    %11132 = vmatpush1.bf16.msra.mxu0 0
    %11133 = vmatprep.mubr.bf16.mxu0 0
    %11134 = vmatmul.mubr.bf16.gmra.mrb[0].mxu0 %v11100
    %v11135 = vpop.f32.mrb[0].mxu0
    %v11136 = vadd.f32 %v8084, %v11135
    %v11137 = vpop.f32.mrb[0].mxu0
    %v11138 = vadd.f32 %v8088, %v11137
    %v11139 = vpop.f32.mrb[0].mxu0
    %v11140 = vpop.f32.mrb[0].mxu0
    %11141 = vdwg.mxu0
    %v11142 = vmax.f32 %v11136, 0.0
    %v11143 = vmax.f32 %v11138, 0.0
    %v11144 = vpack.c.bf16 %v11142, %v11142
    %v11145 = vpack.c.bf16 %v11143, %v11143
    %11146 = vmatprep.subr.bf16.mxu0 %v8495
    %11147 = vmatpush1.bf16.msra.mxu0 %v8494
    %11148 = vmatprep.subr.bf16.mxu0 %v8499
    %11149 = vmatpush1.bf16.msra.mxu0 %v8498
    %11150 = vmatprep.subr.bf16.mxu0 %v8503
    %11151 = vmatpush1.bf16.msra.mxu0 %v8502
    %11152 = vmatprep.subr.bf16.mxu0 %v8507
    %11153 = vmatpush1.bf16.msra.mxu0 %v8506
    %11154 = vmatprep.subr.bf16.mxu0 %v8511
    %11155 = vmatpush1.bf16.msra.mxu0 %v8510
    %11156 = vmatprep.subr.bf16.mxu0 %v8515
    %11157 = vmatpush1.bf16.msra.mxu0 %v8514
    %11158 = vmatprep.subr.bf16.mxu0 %v8519
    %11159 = vmatpush1.bf16.msra.mxu0 %v8518
    %11160 = vmatprep.subr.bf16.mxu0 %v8523
    %11161 = vmatpush1.bf16.msra.mxu0 %v8522
    %11162 = vmatprep.subr.bf16.mxu0 %v8527
    %11163 = vmatpush1.bf16.msra.mxu0 %v8526
    %11164 = vmatprep.subr.bf16.mxu0 %v8531
    %11165 = vmatpush1.bf16.msra.mxu0 %v8530
    %11166 = vmatprep.subr.bf16.mxu0 %v8535
    %11167 = vmatpush1.bf16.msra.mxu0 %v8534
    %11168 = vmatprep.subr.bf16.mxu0 %v8539
    %11169 = vmatpush1.bf16.msra.mxu0 %v8538
    %11170 = vmatprep.subr.bf16.mxu0 %v8543
    %11171 = vmatpush1.bf16.msra.mxu0 %v8542
    %11172 = vmatprep.subr.bf16.mxu0 %v8547
    %11173 = vmatpush1.bf16.msra.mxu0 %v8546
    %11174 = vmatprep.subr.bf16.mxu0 %v8551
    %11175 = vmatpush1.bf16.msra.mxu0 %v8550
    %11176 = vmatprep.subr.bf16.mxu0 %v8555
    %11177 = vmatpush1.bf16.msra.mxu0 %v8554
    %11178 = vmatprep.mubr.bf16.mxu0 %v11145
    %11179 = vmatmul.mubr.bf16.gmra.mrb[0].mxu0 %v11144
    %v11180 = vpop.f32.mrb[0].mxu0
    %v11181 = vadd.f32 %v8285, %v11180
    %v11182 = vpop.f32.mrb[0].mxu0
    %v11183 = vadd.f32 %v8289, %v11182
    %v11184 = vpop.f32.mrb[0].mxu0
    %v11185 = vpop.f32.mrb[0].mxu0
    %11186 = vdwg.mxu0
    %11187 = vmatprep.subr.bf16.mxu0 %v8497
    %11188 = vmatpush1.bf16.msra.mxu0 %v8496
    %11189 = vmatprep.subr.bf16.mxu0 %v8501
    %11190 = vmatpush1.bf16.msra.mxu0 %v8500
    %11191 = vmatprep.subr.bf16.mxu0 %v8505
    %11192 = vmatpush1.bf16.msra.mxu0 %v8504
    %11193 = vmatprep.subr.bf16.mxu0 %v8509
    %11194 = vmatpush1.bf16.msra.mxu0 %v8508
    %11195 = vmatprep.subr.bf16.mxu0 %v8513
    %11196 = vmatpush1.bf16.msra.mxu0 %v8512
    %11197 = vmatprep.subr.bf16.mxu0 %v8517
    %11198 = vmatpush1.bf16.msra.mxu0 %v8516
    %11199 = vmatprep.subr.bf16.mxu0 %v8521
    %11200 = vmatpush1.bf16.msra.mxu0 %v8520
    %11201 = vmatprep.subr.bf16.mxu0 %v8525
    %11202 = vmatpush1.bf16.msra.mxu0 %v8524
    %11203 = vmatprep.subr.bf16.mxu0 %v8529
    %11204 = vmatpush1.bf16.msra.mxu0 %v8528
    %11205 = vmatprep.subr.bf16.mxu0 %v8533
    %11206 = vmatpush1.bf16.msra.mxu0 %v8532
    %11207 = vmatprep.subr.bf16.mxu0 %v8537
    %11208 = vmatpush1.bf16.msra.mxu0 %v8536
    %11209 = vmatprep.subr.bf16.mxu0 %v8541
    %11210 = vmatpush1.bf16.msra.mxu0 %v8540
    %11211 = vmatprep.subr.bf16.mxu0 %v8545
    %11212 = vmatpush1.bf16.msra.mxu0 %v8544
    %11213 = vmatprep.subr.bf16.mxu0 %v8549
    %11214 = vmatpush1.bf16.msra.mxu0 %v8548
    %11215 = vmatprep.subr.bf16.mxu0 %v8553
    %11216 = vmatpush1.bf16.msra.mxu0 %v8552
    %11217 = vmatprep.subr.bf16.mxu0 %v8557
    %11218 = vmatpush1.bf16.msra.mxu0 %v8556
    %11219 = vmatprep.mubr.bf16.mxu0 %v11145
    %11220 = vmatmul.mubr.bf16.gmra.mrb[0].mxu0 %v11144
    %v11221 = vpop.f32.mrb[0].mxu0
    %v11222 = vadd.f32 %v8293, %v11221
    %v11223 = vpop.f32.mrb[0].mxu0
    %v11224 = vadd.f32 %v8297, %v11223
    %v11225 = vpop.f32.mrb[0].mxu0
    %v11226 = vpop.f32.mrb[0].mxu0
    %11227 = vdwg.mxu0
    %v11228 = vmax.f32 %v11181, 0.0
    %v11229 = vmax.f32 %v11183, 0.0
    %v11230 = vmax.f32 %v11222, 0.0
    %v11231 = vmax.f32 %v11224, 0.0
    %v11232 = vpack.c.bf16 %v11228, %v11228
    %v11233 = vpack.c.bf16 %v11229, %v11229
    %v11234 = vpack.c.bf16 %v11230, %v11230
    %v11235 = vpack.c.bf16 %v11231, %v11231
    %11236 = vmatprep.subr.bf16.mxu0 %v9779
    %11237 = vmatpush1.bf16.msra.mxu0 %v9778
    %11238 = vmatprep.subr.bf16.mxu0 %v9787
    %11239 = vmatpush1.bf16.msra.mxu0 %v9786
    %11240 = vmatprep.subr.bf16.mxu0 %v9795
    %11241 = vmatpush1.bf16.msra.mxu0 %v9794
    %11242 = vmatprep.subr.bf16.mxu0 %v9803
    %11243 = vmatpush1.bf16.msra.mxu0 %v9802
    %11244 = vmatprep.subr.bf16.mxu0 %v9811
    %11245 = vmatpush1.bf16.msra.mxu0 %v9810
    %11246 = vmatprep.subr.bf16.mxu0 %v9819
    %11247 = vmatpush1.bf16.msra.mxu0 %v9818
    %11248 = vmatprep.subr.bf16.mxu0 %v9827
    %11249 = vmatpush1.bf16.msra.mxu0 %v9826
    %11250 = vmatprep.subr.bf16.mxu0 %v9835
    %11251 = vmatpush1.bf16.msra.mxu0 %v9834
    %11252 = vmatprep.subr.bf16.mxu0 %v9843
    %11253 = vmatpush1.bf16.msra.mxu0 %v9842
    %11254 = vmatprep.subr.bf16.mxu0 %v9851
    %11255 = vmatpush1.bf16.msra.mxu0 %v9850
    %11256 = vmatprep.subr.bf16.mxu0 %v9859
    %11257 = vmatpush1.bf16.msra.mxu0 %v9858
    %11258 = vmatprep.subr.bf16.mxu0 %v9867
    %11259 = vmatpush1.bf16.msra.mxu0 %v9866
    %11260 = vmatprep.subr.bf16.mxu0 %v9875
    %11261 = vmatpush1.bf16.msra.mxu0 %v9874
    %11262 = vmatprep.subr.bf16.mxu0 %v9883
    %11263 = vmatpush1.bf16.msra.mxu0 %v9882
    %11264 = vmatprep.subr.bf16.mxu0 %v9891
    %11265 = vmatpush1.bf16.msra.mxu0 %v9890
    %11266 = vmatprep.subr.bf16.mxu0 %v9899
    %11267 = vmatpush1.bf16.msra.mxu0 %v9898
    %11268 = vmatprep.mubr.bf16.mxu0 %v11233
    %11269 = vmatmul.mubr.bf16.gmra.mrb[0].mxu0 %v11232
    %v11270 = vpop.f32.mrb[0].mxu0
    %v11271 = vadd.f32 %v8973, %v11270
    %v11272 = vpop.f32.mrb[0].mxu0
    %v11273 = vadd.f32 %v8977, %v11272
    %v11274 = vpop.f32.mrb[0].mxu0
    %v11275 = vpop.f32.mrb[0].mxu0
    %11276 = vdwg.mxu0
    %11277 = vmatprep.subr.bf16.mxu0 %v9907
    %11278 = vmatpush1.bf16.msra.mxu0 %v9906
    %11279 = vmatprep.subr.bf16.mxu0 %v9915
    %11280 = vmatpush1.bf16.msra.mxu0 %v9914
    %11281 = vmatprep.subr.bf16.mxu0 %v9923
    %11282 = vmatpush1.bf16.msra.mxu0 %v9922
    %11283 = vmatprep.subr.bf16.mxu0 %v9931
    %11284 = vmatpush1.bf16.msra.mxu0 %v9930
    %11285 = vmatprep.subr.bf16.mxu0 %v9939
    %11286 = vmatpush1.bf16.msra.mxu0 %v9938
    %11287 = vmatprep.subr.bf16.mxu0 %v9947
    %11288 = vmatpush1.bf16.msra.mxu0 %v9946
    %11289 = vmatprep.subr.bf16.mxu0 %v9955
    %11290 = vmatpush1.bf16.msra.mxu0 %v9954
    %11291 = vmatprep.subr.bf16.mxu0 %v9963
    %11292 = vmatpush1.bf16.msra.mxu0 %v9962
    %11293 = vmatprep.subr.bf16.mxu0 %v9971
    %11294 = vmatpush1.bf16.msra.mxu0 %v9970
    %11295 = vmatprep.subr.bf16.mxu0 %v9979
    %11296 = vmatpush1.bf16.msra.mxu0 %v9978
    %11297 = vmatprep.subr.bf16.mxu0 %v9987
    %11298 = vmatpush1.bf16.msra.mxu0 %v9986
    %11299 = vmatprep.subr.bf16.mxu0 %v9995
    %11300 = vmatpush1.bf16.msra.mxu0 %v9994
    %11301 = vmatprep.subr.bf16.mxu0 %v10003
    %11302 = vmatpush1.bf16.msra.mxu0 %v10002
    %11303 = vmatprep.subr.bf16.mxu0 %v10011
    %11304 = vmatpush1.bf16.msra.mxu0 %v10010
    %11305 = vmatprep.subr.bf16.mxu0 %v10019
    %11306 = vmatpush1.bf16.msra.mxu0 %v10018
    %11307 = vmatprep.subr.bf16.mxu0 %v10027
    %11308 = vmatpush1.bf16.msra.mxu0 %v10026
    %11309 = vmatprep.mubr.bf16.mxu0 %v11235
    %11310 = vmatmul.mubr.bf16.gmra.mrb[0].mxu0 %v11234
    %v11311 = vpop.f32.mrb[0].mxu0
    %v11312 = vadd.f32 %v11271, %v11311
    %v11313 = vpop.f32.mrb[0].mxu0
    %v11314 = vadd.f32 %v11273, %v11313
    %v11315 = vpop.f32.mrb[0].mxu0
    %v11316 = vpop.f32.mrb[0].mxu0
    %11317 = vdwg.mxu0
    %11318 = vmatprep.subr.bf16.mxu0 %v9781
    %11319 = vmatpush1.bf16.msra.mxu0 %v9780
    %11320 = vmatprep.subr.bf16.mxu0 %v9789
    %11321 = vmatpush1.bf16.msra.mxu0 %v9788
    %11322 = vmatprep.subr.bf16.mxu0 %v9797
    %11323 = vmatpush1.bf16.msra.mxu0 %v9796
    %11324 = vmatprep.subr.bf16.mxu0 %v9805
    %11325 = vmatpush1.bf16.msra.mxu0 %v9804
    %11326 = vmatprep.subr.bf16.mxu0 %v9813
    %11327 = vmatpush1.bf16.msra.mxu0 %v9812
    %11328 = vmatprep.subr.bf16.mxu0 %v9821
    %11329 = vmatpush1.bf16.msra.mxu0 %v9820
    %11330 = vmatprep.subr.bf16.mxu0 %v9829
    %11331 = vmatpush1.bf16.msra.mxu0 %v9828
    %11332 = vmatprep.subr.bf16.mxu0 %v9837
    %11333 = vmatpush1.bf16.msra.mxu0 %v9836
    %11334 = vmatprep.subr.bf16.mxu0 %v9845
    %11335 = vmatpush1.bf16.msra.mxu0 %v9844
    %11336 = vmatprep.subr.bf16.mxu0 %v9853
    %11337 = vmatpush1.bf16.msra.mxu0 %v9852
    %11338 = vmatprep.subr.bf16.mxu0 %v9861
    %11339 = vmatpush1.bf16.msra.mxu0 %v9860
    %11340 = vmatprep.subr.bf16.mxu0 %v9869
    %11341 = vmatpush1.bf16.msra.mxu0 %v9868
    %11342 = vmatprep.subr.bf16.mxu0 %v9877
    %11343 = vmatpush1.bf16.msra.mxu0 %v9876
    %11344 = vmatprep.subr.bf16.mxu0 %v9885
    %11345 = vmatpush1.bf16.msra.mxu0 %v9884
    %11346 = vmatprep.subr.bf16.mxu0 %v9893
    %11347 = vmatpush1.bf16.msra.mxu0 %v9892
    %11348 = vmatprep.subr.bf16.mxu0 %v9901
    %11349 = vmatpush1.bf16.msra.mxu0 %v9900
    %11350 = vmatprep.mubr.bf16.mxu0 %v11233
    %11351 = vmatmul.mubr.bf16.gmra.mrb[0].mxu0 %v11232
    %v11352 = vpop.f32.mrb[0].mxu0
    %v11353 = vadd.f32 %v8981, %v11352
    %v11354 = vpop.f32.mrb[0].mxu0
    %v11355 = vadd.f32 %v8985, %v11354
    %v11356 = vpop.f32.mrb[0].mxu0
    %v11357 = vpop.f32.mrb[0].mxu0
    %11358 = vdwg.mxu0
    %11359 = vmatprep.subr.bf16.mxu0 %v9909
    %11360 = vmatpush1.bf16.msra.mxu0 %v9908
    %11361 = vmatprep.subr.bf16.mxu0 %v9917
    %11362 = vmatpush1.bf16.msra.mxu0 %v9916
    %11363 = vmatprep.subr.bf16.mxu0 %v9925
    %11364 = vmatpush1.bf16.msra.mxu0 %v9924
    %11365 = vmatprep.subr.bf16.mxu0 %v9933
    %11366 = vmatpush1.bf16.msra.mxu0 %v9932
    %11367 = vmatprep.subr.bf16.mxu0 %v9941
    %11368 = vmatpush1.bf16.msra.mxu0 %v9940
    %11369 = vmatprep.subr.bf16.mxu0 %v9949
    %11370 = vmatpush1.bf16.msra.mxu0 %v9948
    %11371 = vmatprep.subr.bf16.mxu0 %v9957
    %11372 = vmatpush1.bf16.msra.mxu0 %v9956
    %11373 = vmatprep.subr.bf16.mxu0 %v9965
    %11374 = vmatpush1.bf16.msra.mxu0 %v9964
    %11375 = vmatprep.subr.bf16.mxu0 %v9973
    %11376 = vmatpush1.bf16.msra.mxu0 %v9972
    %11377 = vmatprep.subr.bf16.mxu0 %v9981
    %11378 = vmatpush1.bf16.msra.mxu0 %v9980
    %11379 = vmatprep.subr.bf16.mxu0 %v9989
    %11380 = vmatpush1.bf16.msra.mxu0 %v9988
    %11381 = vmatprep.subr.bf16.mxu0 %v9997
    %11382 = vmatpush1.bf16.msra.mxu0 %v9996
    %11383 = vmatprep.subr.bf16.mxu0 %v10005
    %11384 = vmatpush1.bf16.msra.mxu0 %v10004
    %11385 = vmatprep.subr.bf16.mxu0 %v10013
    %11386 = vmatpush1.bf16.msra.mxu0 %v10012
    %11387 = vmatprep.subr.bf16.mxu0 %v10021
    %11388 = vmatpush1.bf16.msra.mxu0 %v10020
    %11389 = vmatprep.subr.bf16.mxu0 %v10029
    %11390 = vmatpush1.bf16.msra.mxu0 %v10028
    %11391 = vmatprep.mubr.bf16.mxu0 %v11235
    %11392 = vmatmul.mubr.bf16.gmra.mrb[0].mxu0 %v11234
    %v11393 = vpop.f32.mrb[0].mxu0
    %v11394 = vadd.f32 %v11353, %v11393
    %v11395 = vpop.f32.mrb[0].mxu0
    %v11396 = vadd.f32 %v11355, %v11395
    %v11397 = vpop.f32.mrb[0].mxu0
    %v11398 = vpop.f32.mrb[0].mxu0
    %11399 = vdwg.mxu0
    %11400 = vmatprep.subr.bf16.mxu0 %v9783
    %11401 = vmatpush1.bf16.msra.mxu0 %v9782
    %11402 = vmatprep.subr.bf16.mxu0 %v9791
    %11403 = vmatpush1.bf16.msra.mxu0 %v9790
    %11404 = vmatprep.subr.bf16.mxu0 %v9799
    %11405 = vmatpush1.bf16.msra.mxu0 %v9798
    %11406 = vmatprep.subr.bf16.mxu0 %v9807
    %11407 = vmatpush1.bf16.msra.mxu0 %v9806
    %11408 = vmatprep.subr.bf16.mxu0 %v9815
    %11409 = vmatpush1.bf16.msra.mxu0 %v9814
    %11410 = vmatprep.subr.bf16.mxu0 %v9823
    %11411 = vmatpush1.bf16.msra.mxu0 %v9822
    %11412 = vmatprep.subr.bf16.mxu0 %v9831
    %11413 = vmatpush1.bf16.msra.mxu0 %v9830
    %11414 = vmatprep.subr.bf16.mxu0 %v9839
    %11415 = vmatpush1.bf16.msra.mxu0 %v9838
    %11416 = vmatprep.subr.bf16.mxu0 %v9847
    %11417 = vmatpush1.bf16.msra.mxu0 %v9846
    %11418 = vmatprep.subr.bf16.mxu0 %v9855
    %11419 = vmatpush1.bf16.msra.mxu0 %v9854
    %11420 = vmatprep.subr.bf16.mxu0 %v9863
    %11421 = vmatpush1.bf16.msra.mxu0 %v9862
    %11422 = vmatprep.subr.bf16.mxu0 %v9871
    %11423 = vmatpush1.bf16.msra.mxu0 %v9870
    %11424 = vmatprep.subr.bf16.mxu0 %v9879
    %11425 = vmatpush1.bf16.msra.mxu0 %v9878
    %11426 = vmatprep.subr.bf16.mxu0 %v9887
    %11427 = vmatpush1.bf16.msra.mxu0 %v9886
    %11428 = vmatprep.subr.bf16.mxu0 %v9895
    %11429 = vmatpush1.bf16.msra.mxu0 %v9894
    %11430 = vmatprep.subr.bf16.mxu0 %v9903
    %11431 = vmatpush1.bf16.msra.mxu0 %v9902
    %11432 = vmatprep.mubr.bf16.mxu0 %v11233
    %11433 = vmatmul.mubr.bf16.gmra.mrb[0].mxu0 %v11232
    %v11434 = vpop.f32.mrb[0].mxu0
    %v11435 = vadd.f32 %v8989, %v11434
    %v11436 = vpop.f32.mrb[0].mxu0
    %v11437 = vadd.f32 %v8993, %v11436
    %v11438 = vpop.f32.mrb[0].mxu0
    %v11439 = vpop.f32.mrb[0].mxu0
    %11440 = vdwg.mxu0
    %11441 = vmatprep.subr.bf16.mxu0 %v9911
    %11442 = vmatpush1.bf16.msra.mxu0 %v9910
    %11443 = vmatprep.subr.bf16.mxu0 %v9919
    %11444 = vmatpush1.bf16.msra.mxu0 %v9918
    %11445 = vmatprep.subr.bf16.mxu0 %v9927
    %11446 = vmatpush1.bf16.msra.mxu0 %v9926
    %11447 = vmatprep.subr.bf16.mxu0 %v9935
    %11448 = vmatpush1.bf16.msra.mxu0 %v9934
    %11449 = vmatprep.subr.bf16.mxu0 %v9943
    %11450 = vmatpush1.bf16.msra.mxu0 %v9942
    %11451 = vmatprep.subr.bf16.mxu0 %v9951
    %11452 = vmatpush1.bf16.msra.mxu0 %v9950
    %11453 = vmatprep.subr.bf16.mxu0 %v9959
    %11454 = vmatpush1.bf16.msra.mxu0 %v9958
    %11455 = vmatprep.subr.bf16.mxu0 %v9967
    %11456 = vmatpush1.bf16.msra.mxu0 %v9966
    %11457 = vmatprep.subr.bf16.mxu0 %v9975
    %11458 = vmatpush1.bf16.msra.mxu0 %v9974
    %11459 = vmatprep.subr.bf16.mxu0 %v9983
    %11460 = vmatpush1.bf16.msra.mxu0 %v9982
    %11461 = vmatprep.subr.bf16.mxu0 %v9991
    %11462 = vmatpush1.bf16.msra.mxu0 %v9990
    %11463 = vmatprep.subr.bf16.mxu0 %v9999
    %11464 = vmatpush1.bf16.msra.mxu0 %v9998
    %11465 = vmatprep.subr.bf16.mxu0 %v10007
    %11466 = vmatpush1.bf16.msra.mxu0 %v10006
    %11467 = vmatprep.subr.bf16.mxu0 %v10015
    %11468 = vmatpush1.bf16.msra.mxu0 %v10014
    %11469 = vmatprep.subr.bf16.mxu0 %v10023
    %11470 = vmatpush1.bf16.msra.mxu0 %v10022
    %11471 = vmatprep.subr.bf16.mxu0 %v10031
    %11472 = vmatpush1.bf16.msra.mxu0 %v10030
    %11473 = vmatprep.mubr.bf16.mxu0 %v11235
    %11474 = vmatmul.mubr.bf16.gmra.mrb[0].mxu0 %v11234
    %v11475 = vpop.f32.mrb[0].mxu0
    %v11476 = vadd.f32 %v11435, %v11475
    %v11477 = vpop.f32.mrb[0].mxu0
    %v11478 = vadd.f32 %v11437, %v11477
    %v11479 = vpop.f32.mrb[0].mxu0
    %v11480 = vpop.f32.mrb[0].mxu0
    %11481 = vdwg.mxu0
    %11482 = vmatprep.subr.bf16.mxu0 %v9785
    %11483 = vmatpush1.bf16.msra.mxu0 %v9784
    %11484 = vmatprep.subr.bf16.mxu0 %v9793
    %11485 = vmatpush1.bf16.msra.mxu0 %v9792
    %11486 = vmatprep.subr.bf16.mxu0 %v9801
    %11487 = vmatpush1.bf16.msra.mxu0 %v9800
    %11488 = vmatprep.subr.bf16.mxu0 %v9809
    %11489 = vmatpush1.bf16.msra.mxu0 %v9808
    %11490 = vmatprep.subr.bf16.mxu0 %v9817
    %11491 = vmatpush1.bf16.msra.mxu0 %v9816
    %11492 = vmatprep.subr.bf16.mxu0 %v9825
    %11493 = vmatpush1.bf16.msra.mxu0 %v9824
    %11494 = vmatprep.subr.bf16.mxu0 %v9833
    %11495 = vmatpush1.bf16.msra.mxu0 %v9832
    %11496 = vmatprep.subr.bf16.mxu0 %v9841
    %11497 = vmatpush1.bf16.msra.mxu0 %v9840
    %11498 = vmatprep.subr.bf16.mxu0 %v9849
    %11499 = vmatpush1.bf16.msra.mxu0 %v9848
    %11500 = vmatprep.subr.bf16.mxu0 %v9857
    %11501 = vmatpush1.bf16.msra.mxu0 %v9856
    %11502 = vmatprep.subr.bf16.mxu0 %v9865
    %11503 = vmatpush1.bf16.msra.mxu0 %v9864
    %11504 = vmatprep.subr.bf16.mxu0 %v9873
    %11505 = vmatpush1.bf16.msra.mxu0 %v9872
    %11506 = vmatprep.subr.bf16.mxu0 %v9881
    %11507 = vmatpush1.bf16.msra.mxu0 %v9880
    %11508 = vmatprep.subr.bf16.mxu0 %v9889
    %11509 = vmatpush1.bf16.msra.mxu0 %v9888
    %11510 = vmatprep.subr.bf16.mxu0 %v9897
    %11511 = vmatpush1.bf16.msra.mxu0 %v9896
    %11512 = vmatprep.subr.bf16.mxu0 %v9905
    %11513 = vmatpush1.bf16.msra.mxu0 %v9904
    %11514 = vmatprep.mubr.bf16.mxu0 %v11233
    %11515 = vmatmul.mubr.bf16.gmra.mrb[0].mxu0 %v11232
    %v11516 = vpop.f32.mrb[0].mxu0
    %v11517 = vadd.f32 %v8997, %v11516
    %v11518 = vpop.f32.mrb[0].mxu0
    %v11519 = vadd.f32 %v9001, %v11518
    %v11520 = vpop.f32.mrb[0].mxu0
    %v11521 = vpop.f32.mrb[0].mxu0
    %11522 = vdwg.mxu0
    %11523 = vmatprep.subr.bf16.mxu0 %v9913
    %11524 = vmatpush1.bf16.msra.mxu0 %v9912
    %11525 = vmatprep.subr.bf16.mxu0 %v9921
    %11526 = vmatpush1.bf16.msra.mxu0 %v9920
    %11527 = vmatprep.subr.bf16.mxu0 %v9929
    %11528 = vmatpush1.bf16.msra.mxu0 %v9928
    %11529 = vmatprep.subr.bf16.mxu0 %v9937
    %11530 = vmatpush1.bf16.msra.mxu0 %v9936
    %11531 = vmatprep.subr.bf16.mxu0 %v9945
    %11532 = vmatpush1.bf16.msra.mxu0 %v9944
    %11533 = vmatprep.subr.bf16.mxu0 %v9953
    %11534 = vmatpush1.bf16.msra.mxu0 %v9952
    %11535 = vmatprep.subr.bf16.mxu0 %v9961
    %11536 = vmatpush1.bf16.msra.mxu0 %v9960
    %11537 = vmatprep.subr.bf16.mxu0 %v9969
    %11538 = vmatpush1.bf16.msra.mxu0 %v9968
    %11539 = vmatprep.subr.bf16.mxu0 %v9977
    %11540 = vmatpush1.bf16.msra.mxu0 %v9976
    %11541 = vmatprep.subr.bf16.mxu0 %v9985
    %11542 = vmatpush1.bf16.msra.mxu0 %v9984
    %11543 = vmatprep.subr.bf16.mxu0 %v9993
    %11544 = vmatpush1.bf16.msra.mxu0 %v9992
    %11545 = vmatprep.subr.bf16.mxu0 %v10001
    %11546 = vmatpush1.bf16.msra.mxu0 %v10000
    %11547 = vmatprep.subr.bf16.mxu0 %v10009
    %11548 = vmatpush1.bf16.msra.mxu0 %v10008
    %11549 = vmatprep.subr.bf16.mxu0 %v10017
    %11550 = vmatpush1.bf16.msra.mxu0 %v10016
    %11551 = vmatprep.subr.bf16.mxu0 %v10025
    %11552 = vmatpush1.bf16.msra.mxu0 %v10024
    %11553 = vmatprep.subr.bf16.mxu0 %v10033
    %11554 = vmatpush1.bf16.msra.mxu0 %v10032
    %11555 = vmatprep.mubr.bf16.mxu0 %v11235
    %11556 = vmatmul.mubr.bf16.gmra.mrb[0].mxu0 %v11234
    %v11557 = vpop.f32.mrb[0].mxu0
    %v11558 = vadd.f32 %v11517, %v11557
    %v11559 = vpop.f32.mrb[0].mxu0
    %v11560 = vadd.f32 %v11519, %v11559
    %v11561 = vpop.f32.mrb[0].mxu0
    %v11562 = vpop.f32.mrb[0].mxu0
    %11563 = vdwg.mxu0
    %v11564 = vpack.c.bf16 %v10366, %v10366
    %v11565 = vpack.c.bf16 %v10368, %v10368
    %v11566 = vpack.c.bf16 %v10448, %v10448
    %v11567 = vpack.c.bf16 %v10450, %v10450
    %v11568 = vpack.c.bf16 %v10530, %v10530
    %v11569 = vpack.c.bf16 %v10532, %v10532
    %v11570 = vpack.c.bf16 %v10612, %v10612
    %v11571 = vpack.c.bf16 %v10614, %v10614
    %11572 = vmatprep.subr.bf16.mxu0 %v1411
    %11573 = vmatpush1.bf16.msra.mxu0 %v1410
    %11574 = vmatprep.subr.bf16.mxu0 %v1415
    %11575 = vmatpush1.bf16.msra.mxu0 %v1414
    %11576 = vmatprep.subr.bf16.mxu0 %v1419
    %11577 = vmatpush1.bf16.msra.mxu0 %v1418
    %11578 = vmatprep.subr.bf16.mxu0 %v1423
    %11579 = vmatpush1.bf16.msra.mxu0 %v1422
    %11580 = vmatprep.subr.bf16.mxu0 %v1427
    %11581 = vmatpush1.bf16.msra.mxu0 %v1426
    %11582 = vmatprep.subr.bf16.mxu0 %v1431
    %11583 = vmatpush1.bf16.msra.mxu0 %v1430
    %11584 = vmatprep.subr.bf16.mxu0 %v1435
    %11585 = vmatpush1.bf16.msra.mxu0 %v1434
    %11586 = vmatprep.subr.bf16.mxu0 %v1439
    %11587 = vmatpush1.bf16.msra.mxu0 %v1438
    %11588 = vmatprep.subr.bf16.mxu0 %v1443
    %11589 = vmatpush1.bf16.msra.mxu0 %v1442
    %11590 = vmatprep.subr.bf16.mxu0 %v1447
    %11591 = vmatpush1.bf16.msra.mxu0 %v1446
    %11592 = vmatprep.subr.bf16.mxu0 %v1451
    %11593 = vmatpush1.bf16.msra.mxu0 %v1450
    %11594 = vmatprep.subr.bf16.mxu0 %v1455
    %11595 = vmatpush1.bf16.msra.mxu0 %v1454
    %11596 = vmatprep.subr.bf16.mxu0 %v1459
    %11597 = vmatpush1.bf16.msra.mxu0 %v1458
    %11598 = vmatprep.subr.bf16.mxu0 %v1463
    %11599 = vmatpush1.bf16.msra.mxu0 %v1462
    %11600 = vmatprep.subr.bf16.mxu0 %v1467
    %11601 = vmatpush1.bf16.msra.mxu0 %v1466
    %11602 = vmatprep.subr.bf16.mxu0 %v1471
    %11603 = vmatpush1.bf16.msra.mxu0 %v1470
    %11604 = vmatprep.mubr.bf16.mxu0 %v11565
    %11605 = vmatmul.mubr.bf16.gmra.mrb[0].mxu0 %v11564
    %v11606 = vpop.f32.mrb[0].mxu0
    %v11607 = vadd.f32 %v625, %v11606
    %v11608 = vpop.f32.mrb[0].mxu0
    %v11609 = vadd.f32 %v629, %v11608
    %v11610 = vpop.f32.mrb[0].mxu0
    %v11611 = vpop.f32.mrb[0].mxu0
    %11612 = vdwg.mxu0
    %11613 = vmatprep.subr.bf16.mxu0 %v1475
    %11614 = vmatpush1.bf16.msra.mxu0 %v1474
    %11615 = vmatprep.subr.bf16.mxu0 %v1479
    %11616 = vmatpush1.bf16.msra.mxu0 %v1478
    %11617 = vmatprep.subr.bf16.mxu0 %v1483
    %11618 = vmatpush1.bf16.msra.mxu0 %v1482
    %11619 = vmatprep.subr.bf16.mxu0 %v1487
    %11620 = vmatpush1.bf16.msra.mxu0 %v1486
    %11621 = vmatprep.subr.bf16.mxu0 %v1491
    %11622 = vmatpush1.bf16.msra.mxu0 %v1490
    %11623 = vmatprep.subr.bf16.mxu0 %v1495
    %11624 = vmatpush1.bf16.msra.mxu0 %v1494
    %11625 = vmatprep.subr.bf16.mxu0 %v1499
    %11626 = vmatpush1.bf16.msra.mxu0 %v1498
    %11627 = vmatprep.subr.bf16.mxu0 %v1503
    %11628 = vmatpush1.bf16.msra.mxu0 %v1502
    %11629 = vmatprep.subr.bf16.mxu0 %v1507
    %11630 = vmatpush1.bf16.msra.mxu0 %v1506
    %11631 = vmatprep.subr.bf16.mxu0 %v1511
    %11632 = vmatpush1.bf16.msra.mxu0 %v1510
    %11633 = vmatprep.subr.bf16.mxu0 %v1515
    %11634 = vmatpush1.bf16.msra.mxu0 %v1514
    %11635 = vmatprep.subr.bf16.mxu0 %v1519
    %11636 = vmatpush1.bf16.msra.mxu0 %v1518
    %11637 = vmatprep.subr.bf16.mxu0 %v1523
    %11638 = vmatpush1.bf16.msra.mxu0 %v1522
    %11639 = vmatprep.subr.bf16.mxu0 %v1527
    %11640 = vmatpush1.bf16.msra.mxu0 %v1526
    %11641 = vmatprep.subr.bf16.mxu0 %v1531
    %11642 = vmatpush1.bf16.msra.mxu0 %v1530
    %11643 = vmatprep.subr.bf16.mxu0 %v1535
    %11644 = vmatpush1.bf16.msra.mxu0 %v1534
    %11645 = vmatprep.mubr.bf16.mxu0 %v11567
    %11646 = vmatmul.mubr.bf16.gmra.mrb[0].mxu0 %v11566
    %v11647 = vpop.f32.mrb[0].mxu0
    %v11648 = vadd.f32 %v11607, %v11647
    %v11649 = vpop.f32.mrb[0].mxu0
    %v11650 = vadd.f32 %v11609, %v11649
    %v11651 = vpop.f32.mrb[0].mxu0
    %v11652 = vpop.f32.mrb[0].mxu0
    %11653 = vdwg.mxu0
    %11654 = vmatprep.subr.bf16.mxu0 %v1539
    %11655 = vmatpush1.bf16.msra.mxu0 %v1538
    %11656 = vmatprep.subr.bf16.mxu0 %v1543
    %11657 = vmatpush1.bf16.msra.mxu0 %v1542
    %11658 = vmatprep.subr.bf16.mxu0 %v1547
    %11659 = vmatpush1.bf16.msra.mxu0 %v1546
    %11660 = vmatprep.subr.bf16.mxu0 %v1551
    %11661 = vmatpush1.bf16.msra.mxu0 %v1550
    %11662 = vmatprep.subr.bf16.mxu0 %v1555
    %11663 = vmatpush1.bf16.msra.mxu0 %v1554
    %11664 = vmatprep.subr.bf16.mxu0 %v1559
    %11665 = vmatpush1.bf16.msra.mxu0 %v1558
    %11666 = vmatprep.subr.bf16.mxu0 %v1563
    %11667 = vmatpush1.bf16.msra.mxu0 %v1562
    %11668 = vmatprep.subr.bf16.mxu0 %v1567
    %11669 = vmatpush1.bf16.msra.mxu0 %v1566
    %11670 = vmatprep.subr.bf16.mxu0 %v1571
    %11671 = vmatpush1.bf16.msra.mxu0 %v1570
    %11672 = vmatprep.subr.bf16.mxu0 %v1575
    %11673 = vmatpush1.bf16.msra.mxu0 %v1574
    %11674 = vmatprep.subr.bf16.mxu0 %v1579
    %11675 = vmatpush1.bf16.msra.mxu0 %v1578
    %11676 = vmatprep.subr.bf16.mxu0 %v1583
    %11677 = vmatpush1.bf16.msra.mxu0 %v1582
    %11678 = vmatprep.subr.bf16.mxu0 %v1587
    %11679 = vmatpush1.bf16.msra.mxu0 %v1586
    %11680 = vmatprep.subr.bf16.mxu0 %v1591
    %11681 = vmatpush1.bf16.msra.mxu0 %v1590
    %11682 = vmatprep.subr.bf16.mxu0 %v1595
    %11683 = vmatpush1.bf16.msra.mxu0 %v1594
    %11684 = vmatprep.subr.bf16.mxu0 %v1599
    %11685 = vmatpush1.bf16.msra.mxu0 %v1598
    %11686 = vmatprep.mubr.bf16.mxu0 %v11569
    %11687 = vmatmul.mubr.bf16.gmra.mrb[0].mxu0 %v11568
    %v11688 = vpop.f32.mrb[0].mxu0
    %v11689 = vadd.f32 %v11648, %v11688
    %v11690 = vpop.f32.mrb[0].mxu0
    %v11691 = vadd.f32 %v11650, %v11690
    %v11692 = vpop.f32.mrb[0].mxu0
    %v11693 = vpop.f32.mrb[0].mxu0
    %11694 = vdwg.mxu0
    %11695 = vmatprep.subr.bf16.mxu0 %v1603
    %11696 = vmatpush1.bf16.msra.mxu0 %v1602
    %11697 = vmatprep.subr.bf16.mxu0 %v1607
    %11698 = vmatpush1.bf16.msra.mxu0 %v1606
    %11699 = vmatprep.subr.bf16.mxu0 %v1611
    %11700 = vmatpush1.bf16.msra.mxu0 %v1610
    %11701 = vmatprep.subr.bf16.mxu0 %v1615
    %11702 = vmatpush1.bf16.msra.mxu0 %v1614
    %11703 = vmatprep.subr.bf16.mxu0 %v1619
    %11704 = vmatpush1.bf16.msra.mxu0 %v1618
    %11705 = vmatprep.subr.bf16.mxu0 %v1623
    %11706 = vmatpush1.bf16.msra.mxu0 %v1622
    %11707 = vmatprep.subr.bf16.mxu0 %v1627
    %11708 = vmatpush1.bf16.msra.mxu0 %v1626
    %11709 = vmatprep.subr.bf16.mxu0 %v1631
    %11710 = vmatpush1.bf16.msra.mxu0 %v1630
    %11711 = vmatprep.subr.bf16.mxu0 %v1635
    %11712 = vmatpush1.bf16.msra.mxu0 %v1634
    %11713 = vmatprep.subr.bf16.mxu0 %v1639
    %11714 = vmatpush1.bf16.msra.mxu0 %v1638
    %11715 = vmatprep.subr.bf16.mxu0 %v1643
    %11716 = vmatpush1.bf16.msra.mxu0 %v1642
    %11717 = vmatprep.subr.bf16.mxu0 %v1647
    %11718 = vmatpush1.bf16.msra.mxu0 %v1646
    %11719 = vmatprep.subr.bf16.mxu0 %v1651
    %11720 = vmatpush1.bf16.msra.mxu0 %v1650
    %11721 = vmatprep.subr.bf16.mxu0 %v1655
    %11722 = vmatpush1.bf16.msra.mxu0 %v1654
    %11723 = vmatprep.subr.bf16.mxu0 %v1659
    %11724 = vmatpush1.bf16.msra.mxu0 %v1658
    %11725 = vmatprep.subr.bf16.mxu0 %v1663
    %11726 = vmatpush1.bf16.msra.mxu0 %v1662
    %11727 = vmatprep.mubr.bf16.mxu0 %v11571
    %11728 = vmatmul.mubr.bf16.gmra.mrb[0].mxu0 %v11570
    %v11729 = vpop.f32.mrb[0].mxu0
    %v11730 = vadd.f32 %v11689, %v11729
    %v11731 = vpop.f32.mrb[0].mxu0
    %v11732 = vadd.f32 %v11691, %v11731
    %v11733 = vpop.f32.mrb[0].mxu0
    %v11734 = vpop.f32.mrb[0].mxu0
    %11735 = vdwg.mxu0
    %11736 = vmatprep.subr.bf16.mxu0 %v1413
    %11737 = vmatpush1.bf16.msra.mxu0 %v1412
    %11738 = vmatprep.subr.bf16.mxu0 %v1417
    %11739 = vmatpush1.bf16.msra.mxu0 %v1416
    %11740 = vmatprep.subr.bf16.mxu0 %v1421
    %11741 = vmatpush1.bf16.msra.mxu0 %v1420
    %11742 = vmatprep.subr.bf16.mxu0 %v1425
    %11743 = vmatpush1.bf16.msra.mxu0 %v1424
    %11744 = vmatprep.subr.bf16.mxu0 %v1429
    %11745 = vmatpush1.bf16.msra.mxu0 %v1428
    %11746 = vmatprep.subr.bf16.mxu0 %v1433
    %11747 = vmatpush1.bf16.msra.mxu0 %v1432
    %11748 = vmatprep.subr.bf16.mxu0 %v1437
    %11749 = vmatpush1.bf16.msra.mxu0 %v1436
    %11750 = vmatprep.subr.bf16.mxu0 %v1441
    %11751 = vmatpush1.bf16.msra.mxu0 %v1440
    %11752 = vmatprep.subr.bf16.mxu0 %v1445
    %11753 = vmatpush1.bf16.msra.mxu0 %v1444
    %11754 = vmatprep.subr.bf16.mxu0 %v1449
    %11755 = vmatpush1.bf16.msra.mxu0 %v1448
    %11756 = vmatprep.subr.bf16.mxu0 %v1453
    %11757 = vmatpush1.bf16.msra.mxu0 %v1452
    %11758 = vmatprep.subr.bf16.mxu0 %v1457
    %11759 = vmatpush1.bf16.msra.mxu0 %v1456
    %11760 = vmatprep.subr.bf16.mxu0 %v1461
    %11761 = vmatpush1.bf16.msra.mxu0 %v1460
    %11762 = vmatprep.subr.bf16.mxu0 %v1465
    %11763 = vmatpush1.bf16.msra.mxu0 %v1464
    %11764 = vmatprep.subr.bf16.mxu0 %v1469
    %11765 = vmatpush1.bf16.msra.mxu0 %v1468
    %11766 = vmatprep.subr.bf16.mxu0 %v1473
    %11767 = vmatpush1.bf16.msra.mxu0 %v1472
    %11768 = vmatprep.mubr.bf16.mxu0 %v11565
    %11769 = vmatmul.mubr.bf16.gmra.mrb[0].mxu0 %v11564
    %v11770 = vpop.f32.mrb[0].mxu0
    %v11771 = vadd.f32 %v633, %v11770
    %v11772 = vpop.f32.mrb[0].mxu0
    %v11773 = vadd.f32 %v637, %v11772
    %v11774 = vpop.f32.mrb[0].mxu0
    %v11775 = vpop.f32.mrb[0].mxu0
    %11776 = vdwg.mxu0
    %11777 = vmatprep.subr.bf16.mxu0 %v1477
    %11778 = vmatpush1.bf16.msra.mxu0 %v1476
    %11779 = vmatprep.subr.bf16.mxu0 %v1481
    %11780 = vmatpush1.bf16.msra.mxu0 %v1480
    %11781 = vmatprep.subr.bf16.mxu0 %v1485
    %11782 = vmatpush1.bf16.msra.mxu0 %v1484
    %11783 = vmatprep.subr.bf16.mxu0 %v1489
    %11784 = vmatpush1.bf16.msra.mxu0 %v1488
    %11785 = vmatprep.subr.bf16.mxu0 %v1493
    %11786 = vmatpush1.bf16.msra.mxu0 %v1492
    %11787 = vmatprep.subr.bf16.mxu0 %v1497
    %11788 = vmatpush1.bf16.msra.mxu0 %v1496
    %11789 = vmatprep.subr.bf16.mxu0 %v1501
    %11790 = vmatpush1.bf16.msra.mxu0 %v1500
    %11791 = vmatprep.subr.bf16.mxu0 %v1505
    %11792 = vmatpush1.bf16.msra.mxu0 %v1504
    %11793 = vmatprep.subr.bf16.mxu0 %v1509
    %11794 = vmatpush1.bf16.msra.mxu0 %v1508
    %11795 = vmatprep.subr.bf16.mxu0 %v1513
    %11796 = vmatpush1.bf16.msra.mxu0 %v1512
    %11797 = vmatprep.subr.bf16.mxu0 %v1517
    %11798 = vmatpush1.bf16.msra.mxu0 %v1516
    %11799 = vmatprep.subr.bf16.mxu0 %v1521
    %11800 = vmatpush1.bf16.msra.mxu0 %v1520
    %11801 = vmatprep.subr.bf16.mxu0 %v1525
    %11802 = vmatpush1.bf16.msra.mxu0 %v1524
    %11803 = vmatprep.subr.bf16.mxu0 %v1529
    %11804 = vmatpush1.bf16.msra.mxu0 %v1528
    %11805 = vmatprep.subr.bf16.mxu0 %v1533
    %11806 = vmatpush1.bf16.msra.mxu0 %v1532
    %11807 = vmatprep.subr.bf16.mxu0 %v1537
    %11808 = vmatpush1.bf16.msra.mxu0 %v1536
    %11809 = vmatprep.mubr.bf16.mxu0 %v11567
    %11810 = vmatmul.mubr.bf16.gmra.mrb[0].mxu0 %v11566
    %v11811 = vpop.f32.mrb[0].mxu0
    %v11812 = vadd.f32 %v11771, %v11811
    %v11813 = vpop.f32.mrb[0].mxu0
    %v11814 = vadd.f32 %v11773, %v11813
    %v11815 = vpop.f32.mrb[0].mxu0
    %v11816 = vpop.f32.mrb[0].mxu0
    %11817 = vdwg.mxu0
    %11818 = vmatprep.subr.bf16.mxu0 %v1541
    %11819 = vmatpush1.bf16.msra.mxu0 %v1540
    %11820 = vmatprep.subr.bf16.mxu0 %v1545
    %11821 = vmatpush1.bf16.msra.mxu0 %v1544
    %11822 = vmatprep.subr.bf16.mxu0 %v1549
    %11823 = vmatpush1.bf16.msra.mxu0 %v1548
    %11824 = vmatprep.subr.bf16.mxu0 %v1553
    %11825 = vmatpush1.bf16.msra.mxu0 %v1552
    %11826 = vmatprep.subr.bf16.mxu0 %v1557
    %11827 = vmatpush1.bf16.msra.mxu0 %v1556
    %11828 = vmatprep.subr.bf16.mxu0 %v1561
    %11829 = vmatpush1.bf16.msra.mxu0 %v1560
    %11830 = vmatprep.subr.bf16.mxu0 %v1565
    %11831 = vmatpush1.bf16.msra.mxu0 %v1564
    %11832 = vmatprep.subr.bf16.mxu0 %v1569
    %11833 = vmatpush1.bf16.msra.mxu0 %v1568
    %11834 = vmatprep.subr.bf16.mxu0 %v1573
    %11835 = vmatpush1.bf16.msra.mxu0 %v1572
    %11836 = vmatprep.subr.bf16.mxu0 %v1577
    %11837 = vmatpush1.bf16.msra.mxu0 %v1576
    %11838 = vmatprep.subr.bf16.mxu0 %v1581
    %11839 = vmatpush1.bf16.msra.mxu0 %v1580
    %11840 = vmatprep.subr.bf16.mxu0 %v1585
    %11841 = vmatpush1.bf16.msra.mxu0 %v1584
    %11842 = vmatprep.subr.bf16.mxu0 %v1589
    %11843 = vmatpush1.bf16.msra.mxu0 %v1588
    %11844 = vmatprep.subr.bf16.mxu0 %v1593
    %11845 = vmatpush1.bf16.msra.mxu0 %v1592
    %11846 = vmatprep.subr.bf16.mxu0 %v1597
    %11847 = vmatpush1.bf16.msra.mxu0 %v1596
    %11848 = vmatprep.subr.bf16.mxu0 %v1601
    %11849 = vmatpush1.bf16.msra.mxu0 %v1600
    %11850 = vmatprep.mubr.bf16.mxu0 %v11569
    %11851 = vmatmul.mubr.bf16.gmra.mrb[0].mxu0 %v11568
    %v11852 = vpop.f32.mrb[0].mxu0
    %v11853 = vadd.f32 %v11812, %v11852
    %v11854 = vpop.f32.mrb[0].mxu0
    %v11855 = vadd.f32 %v11814, %v11854
    %v11856 = vpop.f32.mrb[0].mxu0
    %v11857 = vpop.f32.mrb[0].mxu0
    %11858 = vdwg.mxu0
    %11859 = vmatprep.subr.bf16.mxu0 %v1605
    %11860 = vmatpush1.bf16.msra.mxu0 %v1604
    %11861 = vmatprep.subr.bf16.mxu0 %v1609
    %11862 = vmatpush1.bf16.msra.mxu0 %v1608
    %11863 = vmatprep.subr.bf16.mxu0 %v1613
    %11864 = vmatpush1.bf16.msra.mxu0 %v1612
    %11865 = vmatprep.subr.bf16.mxu0 %v1617
    %11866 = vmatpush1.bf16.msra.mxu0 %v1616
    %11867 = vmatprep.subr.bf16.mxu0 %v1621
    %11868 = vmatpush1.bf16.msra.mxu0 %v1620
    %11869 = vmatprep.subr.bf16.mxu0 %v1625
    %11870 = vmatpush1.bf16.msra.mxu0 %v1624
    %11871 = vmatprep.subr.bf16.mxu0 %v1629
    %11872 = vmatpush1.bf16.msra.mxu0 %v1628
    %11873 = vmatprep.subr.bf16.mxu0 %v1633
    %11874 = vmatpush1.bf16.msra.mxu0 %v1632
    %11875 = vmatprep.subr.bf16.mxu0 %v1637
    %11876 = vmatpush1.bf16.msra.mxu0 %v1636
    %11877 = vmatprep.subr.bf16.mxu0 %v1641
    %11878 = vmatpush1.bf16.msra.mxu0 %v1640
    %11879 = vmatprep.subr.bf16.mxu0 %v1645
    %11880 = vmatpush1.bf16.msra.mxu0 %v1644
    %11881 = vmatprep.subr.bf16.mxu0 %v1649
    %11882 = vmatpush1.bf16.msra.mxu0 %v1648
    %11883 = vmatprep.subr.bf16.mxu0 %v1653
    %11884 = vmatpush1.bf16.msra.mxu0 %v1652
    %11885 = vmatprep.subr.bf16.mxu0 %v1657
    %11886 = vmatpush1.bf16.msra.mxu0 %v1656
    %11887 = vmatprep.subr.bf16.mxu0 %v1661
    %11888 = vmatpush1.bf16.msra.mxu0 %v1660
    %11889 = vmatprep.subr.bf16.mxu0 %v1665
    %11890 = vmatpush1.bf16.msra.mxu0 %v1664
    %11891 = vmatprep.mubr.bf16.mxu0 %v11571
    %11892 = vmatmul.mubr.bf16.gmra.mrb[0].mxu0 %v11570
    %v11893 = vpop.f32.mrb[0].mxu0
    %v11894 = vadd.f32 %v11853, %v11893
    %v11895 = vpop.f32.mrb[0].mxu0
    %v11896 = vadd.f32 %v11855, %v11895
    %v11897 = vpop.f32.mrb[0].mxu0
    %v11898 = vpop.f32.mrb[0].mxu0
    %11899 = vdwg.mxu0
    %vm11900 = vcmp.gt.f32.partialorder %v11730, 0.0
    %vm11901 = vcmp.gt.f32.partialorder %v11732, 0.0
    %vm11902 = vcmp.gt.f32.partialorder %v11894, 0.0
    %vm11903 = vcmp.gt.f32.partialorder %v11896, 0.0
    %v11904 = vmul.f32 %v11730, 0.01
    %v11905 = vmul.f32 %v11732, 0.01
    %v11906 = vmul.f32 %v11894, 0.01
    %v11907 = vmul.f32 %v11896, 0.01
    %v11908 = vsel %vm11900, %v11730, %v11904
    %v11909 = vsel %vm11901, %v11732, %v11905
    %v11910 = vsel %vm11902, %v11894, %v11906
    %v11911 = vsel %vm11903, %v11896, %v11907
    %v11912 = vpack.c.bf16 %v11908, %v11908
    %v11913 = vpack.c.bf16 %v11909, %v11909
    %v11914 = vpack.c.bf16 %v11910, %v11910
    %v11915 = vpack.c.bf16 %v11911, %v11911
    %11916 = vmatprep.subr.bf16.mxu0 %v2535
    %11917 = vmatpush1.bf16.msra.mxu0 %v2534
    %11918 = vmatprep.subr.bf16.mxu0 %v2537
    %11919 = vmatpush1.bf16.msra.mxu0 %v2536
    %11920 = vmatprep.subr.bf16.mxu0 %v2539
    %11921 = vmatpush1.bf16.msra.mxu0 %v2538
    %11922 = vmatprep.subr.bf16.mxu0 %v2541
    %11923 = vmatpush1.bf16.msra.mxu0 %v2540
    %11924 = vmatprep.subr.bf16.mxu0 %v2543
    %11925 = vmatpush1.bf16.msra.mxu0 %v2542
    %11926 = vmatprep.subr.bf16.mxu0 %v2545
    %11927 = vmatpush1.bf16.msra.mxu0 %v2544
    %11928 = vmatprep.subr.bf16.mxu0 %v2547
    %11929 = vmatpush1.bf16.msra.mxu0 %v2546
    %11930 = vmatprep.subr.bf16.mxu0 %v2549
    %11931 = vmatpush1.bf16.msra.mxu0 %v2548
    %11932 = vmatprep.subr.bf16.mxu0 %v2551
    %11933 = vmatpush1.bf16.msra.mxu0 %v2550
    %11934 = vmatprep.subr.bf16.mxu0 %v2553
    %11935 = vmatpush1.bf16.msra.mxu0 %v2552
    %11936 = vmatprep.subr.bf16.mxu0 %v2555
    %11937 = vmatpush1.bf16.msra.mxu0 %v2554
    %11938 = vmatprep.subr.bf16.mxu0 %v2557
    %11939 = vmatpush1.bf16.msra.mxu0 %v2556
    %11940 = vmatprep.subr.bf16.mxu0 %v2559
    %11941 = vmatpush1.bf16.msra.mxu0 %v2558
    %11942 = vmatprep.subr.bf16.mxu0 %v2561
    %11943 = vmatpush1.bf16.msra.mxu0 %v2560
    %11944 = vmatprep.subr.bf16.mxu0 %v2563
    %11945 = vmatpush1.bf16.msra.mxu0 %v2562
    %11946 = vmatprep.subr.bf16.mxu0 %v2565
    %11947 = vmatpush1.bf16.msra.mxu0 %v2564
    %11948 = vmatprep.mubr.bf16.mxu0 %v11913
    %11949 = vmatmul.mubr.bf16.gmra.mrb[0].mxu0 %v11912
    %v11950 = vpop.f32.mrb[0].mxu0
    %v11951 = vadd.f32 %v2335, %v11950
    %v11952 = vpop.f32.mrb[0].mxu0
    %v11953 = vadd.f32 %v2339, %v11952
    %v11954 = vpop.f32.mrb[0].mxu0
    %v11955 = vpop.f32.mrb[0].mxu0
    %11956 = vdwg.mxu0
    %11957 = vmatprep.subr.bf16.mxu0 %v2567
    %11958 = vmatpush1.bf16.msra.mxu0 %v2566
    %11959 = vmatprep.subr.bf16.mxu0 %v2569
    %11960 = vmatpush1.bf16.msra.mxu0 %v2568
    %11961 = vmatprep.subr.bf16.mxu0 %v2571
    %11962 = vmatpush1.bf16.msra.mxu0 %v2570
    %11963 = vmatprep.subr.bf16.mxu0 %v2573
    %11964 = vmatpush1.bf16.msra.mxu0 %v2572
    %11965 = vmatprep.subr.bf16.mxu0 %v2575
    %11966 = vmatpush1.bf16.msra.mxu0 %v2574
    %11967 = vmatprep.subr.bf16.mxu0 %v2577
    %11968 = vmatpush1.bf16.msra.mxu0 %v2576
    %11969 = vmatprep.subr.bf16.mxu0 %v2579
    %11970 = vmatpush1.bf16.msra.mxu0 %v2578
    %11971 = vmatprep.subr.bf16.mxu0 %v2581
    %11972 = vmatpush1.bf16.msra.mxu0 %v2580
    %11973 = vmatprep.subr.bf16.mxu0 %v2583
    %11974 = vmatpush1.bf16.msra.mxu0 %v2582
    %11975 = vmatprep.subr.bf16.mxu0 %v2585
    %11976 = vmatpush1.bf16.msra.mxu0 %v2584
    %11977 = vmatprep.subr.bf16.mxu0 %v2587
    %11978 = vmatpush1.bf16.msra.mxu0 %v2586
    %11979 = vmatprep.subr.bf16.mxu0 %v2589
    %11980 = vmatpush1.bf16.msra.mxu0 %v2588
    %11981 = vmatprep.subr.bf16.mxu0 %v2591
    %11982 = vmatpush1.bf16.msra.mxu0 %v2590
    %11983 = vmatprep.subr.bf16.mxu0 %v2593
    %11984 = vmatpush1.bf16.msra.mxu0 %v2592
    %11985 = vmatprep.subr.bf16.mxu0 %v2595
    %11986 = vmatpush1.bf16.msra.mxu0 %v2594
    %11987 = vmatprep.subr.bf16.mxu0 %v2597
    %11988 = vmatpush1.bf16.msra.mxu0 %v2596
    %11989 = vmatprep.mubr.bf16.mxu0 %v11915
    %11990 = vmatmul.mubr.bf16.gmra.mrb[0].mxu0 %v11914
    %v11991 = vpop.f32.mrb[0].mxu0
    %v11992 = vadd.f32 %v11951, %v11991
    %v11993 = vpop.f32.mrb[0].mxu0
    %v11994 = vadd.f32 %v11953, %v11993
    %v11995 = vpop.f32.mrb[0].mxu0
    %v11996 = vpop.f32.mrb[0].mxu0
    %11997 = vdwg.mxu0
    %vm11998 = vcmp.gt.f32.partialorder %v11992, 0.0
    %vm11999 = vcmp.gt.f32.partialorder %v11994, 0.0
    %v12000 = vmul.f32 %v11992, 0.01
    %v12001 = vmul.f32 %v11994, 0.01
    %v12002 = vsel %vm11998, %v11992, %v12000
    %v12003 = vsel %vm11999, %v11994, %v12001
    %v12004 = vpack.c.bf16 %v12002, %v12002
    %v12005 = vpack.c.bf16 %v12003, %v12003
    %12006 = vmatprep.subr.bf16.mxu0 0
    %12007 = vmatpush1.bf16.msra.mxu0 %v2855
    %12008 = vmatprep.subr.bf16.mxu0 0
    %12009 = vmatpush1.bf16.msra.mxu0 %v2856
    %12010 = vmatprep.subr.bf16.mxu0 0
    %12011 = vmatpush1.bf16.msra.mxu0 %v2857
    %12012 = vmatprep.subr.bf16.mxu0 0
    %12013 = vmatpush1.bf16.msra.mxu0 %v2858
    %12014 = vmatprep.subr.bf16.mxu0 0
    %12015 = vmatpush1.bf16.msra.mxu0 %v2859
    %12016 = vmatprep.subr.bf16.mxu0 0
    %12017 = vmatpush1.bf16.msra.mxu0 %v2860
    %12018 = vmatprep.subr.bf16.mxu0 0
    %12019 = vmatpush1.bf16.msra.mxu0 %v2861
    %12020 = vmatprep.subr.bf16.mxu0 0
    %12021 = vmatpush1.bf16.msra.mxu0 %v2862
    %12022 = vmatprep.subr.bf16.mxu0 0
    %12023 = vmatpush1.bf16.msra.mxu0 %v2863
    %12024 = vmatprep.subr.bf16.mxu0 0
    %12025 = vmatpush1.bf16.msra.mxu0 %v2864
    %12026 = vmatprep.subr.bf16.mxu0 0
    %12027 = vmatpush1.bf16.msra.mxu0 %v2865
    %12028 = vmatprep.subr.bf16.mxu0 0
    %12029 = vmatpush1.bf16.msra.mxu0 %v2866
    %12030 = vmatprep.subr.bf16.mxu0 0
    %12031 = vmatpush1.bf16.msra.mxu0 %v2867
    %12032 = vmatprep.subr.bf16.mxu0 0
    %12033 = vmatpush1.bf16.msra.mxu0 %v2868
    %12034 = vmatprep.subr.bf16.mxu0 0
    %12035 = vmatpush1.bf16.msra.mxu0 %v2869
    %12036 = vmatprep.subr.bf16.mxu0 0
    %12037 = vmatpush1.bf16.msra.mxu0 %v2870
    %12038 = vmatprep.mubr.bf16.mxu0 %v12005
    %12039 = vmatmul.mubr.bf16.gmra.mrb[0].mxu0 %v12004
    %v12040 = vpop.f32.mrb[0].mxu0
    %v12041 = vadd.f32 %v2789, %v12040
    %v12042 = vpop.f32.mrb[0].mxu0
    %v12043 = vpop.f32.mrb[0].mxu0
    %v12044 = vpop.f32.mrb[0].mxu0
    %12045 = vdwg.mxu0
    %v12046 = vpack.c.bf16 %v12041, %v12041
    %12047 = vmatprep.subr.bf16.mxu0 %v3005
    %12048 = vmatpush1.bf16.msra.mxu0 %v3004
    %12049 = vmatprep.subr.bf16.mxu0 %v3007
    %12050 = vmatpush1.bf16.msra.mxu0 %v3006
    %12051 = vmatprep.subr.bf16.mxu0 %v3009
    %12052 = vmatpush1.bf16.msra.mxu0 %v3008
    %12053 = vmatprep.subr.bf16.mxu0 %v3011
    %12054 = vmatpush1.bf16.msra.mxu0 %v3010
    %12055 = vmatprep.subr.bf16.mxu0 %v3013
    %12056 = vmatpush1.bf16.msra.mxu0 %v3012
    %12057 = vmatprep.subr.bf16.mxu0 %v3015
    %12058 = vmatpush1.bf16.msra.mxu0 %v3014
    %12059 = vmatprep.subr.bf16.mxu0 %v3017
    %12060 = vmatpush1.bf16.msra.mxu0 %v3016
    %12061 = vmatprep.subr.bf16.mxu0 %v3019
    %12062 = vmatpush1.bf16.msra.mxu0 %v3018
    %12063 = vmatprep.subr.bf16.mxu0 0
    %12064 = vmatpush1.bf16.msra.mxu0 0
    %12065 = vmatprep.subr.bf16.mxu0 0
    %12066 = vmatpush1.bf16.msra.mxu0 0
    %12067 = vmatprep.subr.bf16.mxu0 0
    %12068 = vmatpush1.bf16.msra.mxu0 0
    %12069 = vmatprep.subr.bf16.mxu0 0
    %12070 = vmatpush1.bf16.msra.mxu0 0
    %12071 = vmatprep.subr.bf16.mxu0 0
    %12072 = vmatpush1.bf16.msra.mxu0 0
    %12073 = vmatprep.subr.bf16.mxu0 0
    %12074 = vmatpush1.bf16.msra.mxu0 0
    %12075 = vmatprep.subr.bf16.mxu0 0
    %12076 = vmatpush1.bf16.msra.mxu0 0
    %12077 = vmatprep.subr.bf16.mxu0 0
    %12078 = vmatpush1.bf16.msra.mxu0 0
    %12079 = vmatprep.mubr.bf16.mxu0 0
    %12080 = vmatmul.mubr.bf16.gmra.mrb[0].mxu0 %v12046
    %v12081 = vpop.f32.mrb[0].mxu0
    %v12082 = vadd.f32 %v2949, %v12081
    %v12083 = vpop.f32.mrb[0].mxu0
    %v12084 = vadd.f32 %v2953, %v12083
    %v12085 = vpop.f32.mrb[0].mxu0
    %v12086 = vpop.f32.mrb[0].mxu0
    %12087 = vdwg.mxu0
    %v12088 = vmax.f32 %v12082, 0.0
    %v12089 = vmax.f32 %v12084, 0.0
    %v12090 = vpack.c.bf16 %v12088, %v12088
    %v12091 = vpack.c.bf16 %v12089, %v12089
    %12092 = vmatprep.subr.bf16.mxu0 %v3360
    %12093 = vmatpush1.bf16.msra.mxu0 %v3359
    %12094 = vmatprep.subr.bf16.mxu0 %v3364
    %12095 = vmatpush1.bf16.msra.mxu0 %v3363
    %12096 = vmatprep.subr.bf16.mxu0 %v3368
    %12097 = vmatpush1.bf16.msra.mxu0 %v3367
    %12098 = vmatprep.subr.bf16.mxu0 %v3372
    %12099 = vmatpush1.bf16.msra.mxu0 %v3371
    %12100 = vmatprep.subr.bf16.mxu0 %v3376
    %12101 = vmatpush1.bf16.msra.mxu0 %v3375
    %12102 = vmatprep.subr.bf16.mxu0 %v3380
    %12103 = vmatpush1.bf16.msra.mxu0 %v3379
    %12104 = vmatprep.subr.bf16.mxu0 %v3384
    %12105 = vmatpush1.bf16.msra.mxu0 %v3383
    %12106 = vmatprep.subr.bf16.mxu0 %v3388
    %12107 = vmatpush1.bf16.msra.mxu0 %v3387
    %12108 = vmatprep.subr.bf16.mxu0 %v3392
    %12109 = vmatpush1.bf16.msra.mxu0 %v3391
    %12110 = vmatprep.subr.bf16.mxu0 %v3396
    %12111 = vmatpush1.bf16.msra.mxu0 %v3395
    %12112 = vmatprep.subr.bf16.mxu0 %v3400
    %12113 = vmatpush1.bf16.msra.mxu0 %v3399
    %12114 = vmatprep.subr.bf16.mxu0 %v3404
    %12115 = vmatpush1.bf16.msra.mxu0 %v3403
    %12116 = vmatprep.subr.bf16.mxu0 %v3408
    %12117 = vmatpush1.bf16.msra.mxu0 %v3407
    %12118 = vmatprep.subr.bf16.mxu0 %v3412
    %12119 = vmatpush1.bf16.msra.mxu0 %v3411
    %12120 = vmatprep.subr.bf16.mxu0 %v3416
    %12121 = vmatpush1.bf16.msra.mxu0 %v3415
    %12122 = vmatprep.subr.bf16.mxu0 %v3420
    %12123 = vmatpush1.bf16.msra.mxu0 %v3419
    %12124 = vmatprep.mubr.bf16.mxu0 %v12091
    %12125 = vmatmul.mubr.bf16.gmra.mrb[0].mxu0 %v12090
    %v12126 = vpop.f32.mrb[0].mxu0
    %v12127 = vadd.f32 %v3150, %v12126
    %v12128 = vpop.f32.mrb[0].mxu0
    %v12129 = vadd.f32 %v3154, %v12128
    %v12130 = vpop.f32.mrb[0].mxu0
    %v12131 = vpop.f32.mrb[0].mxu0
    %12132 = vdwg.mxu0
    %12133 = vmatprep.subr.bf16.mxu0 %v3362
    %12134 = vmatpush1.bf16.msra.mxu0 %v3361
    %12135 = vmatprep.subr.bf16.mxu0 %v3366
    %12136 = vmatpush1.bf16.msra.mxu0 %v3365
    %12137 = vmatprep.subr.bf16.mxu0 %v3370
    %12138 = vmatpush1.bf16.msra.mxu0 %v3369
    %12139 = vmatprep.subr.bf16.mxu0 %v3374
    %12140 = vmatpush1.bf16.msra.mxu0 %v3373
    %12141 = vmatprep.subr.bf16.mxu0 %v3378
    %12142 = vmatpush1.bf16.msra.mxu0 %v3377
    %12143 = vmatprep.subr.bf16.mxu0 %v3382
    %12144 = vmatpush1.bf16.msra.mxu0 %v3381
    %12145 = vmatprep.subr.bf16.mxu0 %v3386
    %12146 = vmatpush1.bf16.msra.mxu0 %v3385
    %12147 = vmatprep.subr.bf16.mxu0 %v3390
    %12148 = vmatpush1.bf16.msra.mxu0 %v3389
    %12149 = vmatprep.subr.bf16.mxu0 %v3394
    %12150 = vmatpush1.bf16.msra.mxu0 %v3393
    %12151 = vmatprep.subr.bf16.mxu0 %v3398
    %12152 = vmatpush1.bf16.msra.mxu0 %v3397
    %12153 = vmatprep.subr.bf16.mxu0 %v3402
    %12154 = vmatpush1.bf16.msra.mxu0 %v3401
    %12155 = vmatprep.subr.bf16.mxu0 %v3406
    %12156 = vmatpush1.bf16.msra.mxu0 %v3405
    %12157 = vmatprep.subr.bf16.mxu0 %v3410
    %12158 = vmatpush1.bf16.msra.mxu0 %v3409
    %12159 = vmatprep.subr.bf16.mxu0 %v3414
    %12160 = vmatpush1.bf16.msra.mxu0 %v3413
    %12161 = vmatprep.subr.bf16.mxu0 %v3418
    %12162 = vmatpush1.bf16.msra.mxu0 %v3417
    %12163 = vmatprep.subr.bf16.mxu0 %v3422
    %12164 = vmatpush1.bf16.msra.mxu0 %v3421
    %12165 = vmatprep.mubr.bf16.mxu0 %v12091
    %12166 = vmatmul.mubr.bf16.gmra.mrb[0].mxu0 %v12090
    %v12167 = vpop.f32.mrb[0].mxu0
    %v12168 = vadd.f32 %v3158, %v12167
    %v12169 = vpop.f32.mrb[0].mxu0
    %v12170 = vadd.f32 %v3162, %v12169
    %v12171 = vpop.f32.mrb[0].mxu0
    %v12172 = vpop.f32.mrb[0].mxu0
    %12173 = vdwg.mxu0
    %v12174 = vmax.f32 %v12127, 0.0
    %v12175 = vmax.f32 %v12129, 0.0
    %v12176 = vmax.f32 %v12168, 0.0
    %v12177 = vmax.f32 %v12170, 0.0
    %v12178 = vpack.c.bf16 %v12174, %v12174
    %v12179 = vpack.c.bf16 %v12175, %v12175
    %v12180 = vpack.c.bf16 %v12176, %v12176
    %v12181 = vpack.c.bf16 %v12177, %v12177
    %12182 = vmatprep.subr.bf16.mxu0 %v4644
    %12183 = vmatpush1.bf16.msra.mxu0 %v4643
    %12184 = vmatprep.subr.bf16.mxu0 %v4652
    %12185 = vmatpush1.bf16.msra.mxu0 %v4651
    %12186 = vmatprep.subr.bf16.mxu0 %v4660
    %12187 = vmatpush1.bf16.msra.mxu0 %v4659
    %12188 = vmatprep.subr.bf16.mxu0 %v4668
    %12189 = vmatpush1.bf16.msra.mxu0 %v4667
    %12190 = vmatprep.subr.bf16.mxu0 %v4676
    %12191 = vmatpush1.bf16.msra.mxu0 %v4675
    %12192 = vmatprep.subr.bf16.mxu0 %v4684
    %12193 = vmatpush1.bf16.msra.mxu0 %v4683
    %12194 = vmatprep.subr.bf16.mxu0 %v4692
    %12195 = vmatpush1.bf16.msra.mxu0 %v4691
    %12196 = vmatprep.subr.bf16.mxu0 %v4700
    %12197 = vmatpush1.bf16.msra.mxu0 %v4699
    %12198 = vmatprep.subr.bf16.mxu0 %v4708
    %12199 = vmatpush1.bf16.msra.mxu0 %v4707
    %12200 = vmatprep.subr.bf16.mxu0 %v4716
    %12201 = vmatpush1.bf16.msra.mxu0 %v4715
    %12202 = vmatprep.subr.bf16.mxu0 %v4724
    %12203 = vmatpush1.bf16.msra.mxu0 %v4723
    %12204 = vmatprep.subr.bf16.mxu0 %v4732
    %12205 = vmatpush1.bf16.msra.mxu0 %v4731
    %12206 = vmatprep.subr.bf16.mxu0 %v4740
    %12207 = vmatpush1.bf16.msra.mxu0 %v4739
    %12208 = vmatprep.subr.bf16.mxu0 %v4748
    %12209 = vmatpush1.bf16.msra.mxu0 %v4747
    %12210 = vmatprep.subr.bf16.mxu0 %v4756
    %12211 = vmatpush1.bf16.msra.mxu0 %v4755
    %12212 = vmatprep.subr.bf16.mxu0 %v4764
    %12213 = vmatpush1.bf16.msra.mxu0 %v4763
    %12214 = vmatprep.mubr.bf16.mxu0 %v12179
    %12215 = vmatmul.mubr.bf16.gmra.mrb[0].mxu0 %v12178
    %v12216 = vpop.f32.mrb[0].mxu0
    %v12217 = vadd.f32 %v3838, %v12216
    %v12218 = vpop.f32.mrb[0].mxu0
    %v12219 = vadd.f32 %v3842, %v12218
    %v12220 = vpop.f32.mrb[0].mxu0
    %v12221 = vpop.f32.mrb[0].mxu0
    %12222 = vdwg.mxu0
    %12223 = vmatprep.subr.bf16.mxu0 %v4772
    %12224 = vmatpush1.bf16.msra.mxu0 %v4771
    %12225 = vmatprep.subr.bf16.mxu0 %v4780
    %12226 = vmatpush1.bf16.msra.mxu0 %v4779
    %12227 = vmatprep.subr.bf16.mxu0 %v4788
    %12228 = vmatpush1.bf16.msra.mxu0 %v4787
    %12229 = vmatprep.subr.bf16.mxu0 %v4796
    %12230 = vmatpush1.bf16.msra.mxu0 %v4795
    %12231 = vmatprep.subr.bf16.mxu0 %v4804
    %12232 = vmatpush1.bf16.msra.mxu0 %v4803
    %12233 = vmatprep.subr.bf16.mxu0 %v4812
    %12234 = vmatpush1.bf16.msra.mxu0 %v4811
    %12235 = vmatprep.subr.bf16.mxu0 %v4820
    %12236 = vmatpush1.bf16.msra.mxu0 %v4819
    %12237 = vmatprep.subr.bf16.mxu0 %v4828
    %12238 = vmatpush1.bf16.msra.mxu0 %v4827
    %12239 = vmatprep.subr.bf16.mxu0 %v4836
    %12240 = vmatpush1.bf16.msra.mxu0 %v4835
    %12241 = vmatprep.subr.bf16.mxu0 %v4844
    %12242 = vmatpush1.bf16.msra.mxu0 %v4843
    %12243 = vmatprep.subr.bf16.mxu0 %v4852
    %12244 = vmatpush1.bf16.msra.mxu0 %v4851
    %12245 = vmatprep.subr.bf16.mxu0 %v4860
    %12246 = vmatpush1.bf16.msra.mxu0 %v4859
    %12247 = vmatprep.subr.bf16.mxu0 %v4868
    %12248 = vmatpush1.bf16.msra.mxu0 %v4867
    %12249 = vmatprep.subr.bf16.mxu0 %v4876
    %12250 = vmatpush1.bf16.msra.mxu0 %v4875
    %12251 = vmatprep.subr.bf16.mxu0 %v4884
    %12252 = vmatpush1.bf16.msra.mxu0 %v4883
    %12253 = vmatprep.subr.bf16.mxu0 %v4892
    %12254 = vmatpush1.bf16.msra.mxu0 %v4891
    %12255 = vmatprep.mubr.bf16.mxu0 %v12181
    %12256 = vmatmul.mubr.bf16.gmra.mrb[0].mxu0 %v12180
    %v12257 = vpop.f32.mrb[0].mxu0
    %v12258 = vadd.f32 %v12217, %v12257
    %v12259 = vpop.f32.mrb[0].mxu0
    %v12260 = vadd.f32 %v12219, %v12259
    %v12261 = vpop.f32.mrb[0].mxu0
    %v12262 = vpop.f32.mrb[0].mxu0
    %12263 = vdwg.mxu0
    %12264 = vmatprep.subr.bf16.mxu0 %v4646
    %12265 = vmatpush1.bf16.msra.mxu0 %v4645
    %12266 = vmatprep.subr.bf16.mxu0 %v4654
    %12267 = vmatpush1.bf16.msra.mxu0 %v4653
    %12268 = vmatprep.subr.bf16.mxu0 %v4662
    %12269 = vmatpush1.bf16.msra.mxu0 %v4661
    %12270 = vmatprep.subr.bf16.mxu0 %v4670
    %12271 = vmatpush1.bf16.msra.mxu0 %v4669
    %12272 = vmatprep.subr.bf16.mxu0 %v4678
    %12273 = vmatpush1.bf16.msra.mxu0 %v4677
    %12274 = vmatprep.subr.bf16.mxu0 %v4686
    %12275 = vmatpush1.bf16.msra.mxu0 %v4685
    %12276 = vmatprep.subr.bf16.mxu0 %v4694
    %12277 = vmatpush1.bf16.msra.mxu0 %v4693
    %12278 = vmatprep.subr.bf16.mxu0 %v4702
    %12279 = vmatpush1.bf16.msra.mxu0 %v4701
    %12280 = vmatprep.subr.bf16.mxu0 %v4710
    %12281 = vmatpush1.bf16.msra.mxu0 %v4709
    %12282 = vmatprep.subr.bf16.mxu0 %v4718
    %12283 = vmatpush1.bf16.msra.mxu0 %v4717
    %12284 = vmatprep.subr.bf16.mxu0 %v4726
    %12285 = vmatpush1.bf16.msra.mxu0 %v4725
    %12286 = vmatprep.subr.bf16.mxu0 %v4734
    %12287 = vmatpush1.bf16.msra.mxu0 %v4733
    %12288 = vmatprep.subr.bf16.mxu0 %v4742
    %12289 = vmatpush1.bf16.msra.mxu0 %v4741
    %12290 = vmatprep.subr.bf16.mxu0 %v4750
    %12291 = vmatpush1.bf16.msra.mxu0 %v4749
    %12292 = vmatprep.subr.bf16.mxu0 %v4758
    %12293 = vmatpush1.bf16.msra.mxu0 %v4757
    %12294 = vmatprep.subr.bf16.mxu0 %v4766
    %12295 = vmatpush1.bf16.msra.mxu0 %v4765
    %12296 = vmatprep.mubr.bf16.mxu0 %v12179
    %12297 = vmatmul.mubr.bf16.gmra.mrb[0].mxu0 %v12178
    %v12298 = vpop.f32.mrb[0].mxu0
    %v12299 = vadd.f32 %v3846, %v12298
    %v12300 = vpop.f32.mrb[0].mxu0
    %v12301 = vadd.f32 %v3850, %v12300
    %v12302 = vpop.f32.mrb[0].mxu0
    %v12303 = vpop.f32.mrb[0].mxu0
    %12304 = vdwg.mxu0
    %12305 = vmatprep.subr.bf16.mxu0 %v4774
    %12306 = vmatpush1.bf16.msra.mxu0 %v4773
    %12307 = vmatprep.subr.bf16.mxu0 %v4782
    %12308 = vmatpush1.bf16.msra.mxu0 %v4781
    %12309 = vmatprep.subr.bf16.mxu0 %v4790
    %12310 = vmatpush1.bf16.msra.mxu0 %v4789
    %12311 = vmatprep.subr.bf16.mxu0 %v4798
    %12312 = vmatpush1.bf16.msra.mxu0 %v4797
    %12313 = vmatprep.subr.bf16.mxu0 %v4806
    %12314 = vmatpush1.bf16.msra.mxu0 %v4805
    %12315 = vmatprep.subr.bf16.mxu0 %v4814
    %12316 = vmatpush1.bf16.msra.mxu0 %v4813
    %12317 = vmatprep.subr.bf16.mxu0 %v4822
    %12318 = vmatpush1.bf16.msra.mxu0 %v4821
    %12319 = vmatprep.subr.bf16.mxu0 %v4830
    %12320 = vmatpush1.bf16.msra.mxu0 %v4829
    %12321 = vmatprep.subr.bf16.mxu0 %v4838
    %12322 = vmatpush1.bf16.msra.mxu0 %v4837
    %12323 = vmatprep.subr.bf16.mxu0 %v4846
    %12324 = vmatpush1.bf16.msra.mxu0 %v4845
    %12325 = vmatprep.subr.bf16.mxu0 %v4854
    %12326 = vmatpush1.bf16.msra.mxu0 %v4853
    %12327 = vmatprep.subr.bf16.mxu0 %v4862
    %12328 = vmatpush1.bf16.msra.mxu0 %v4861
    %12329 = vmatprep.subr.bf16.mxu0 %v4870
    %12330 = vmatpush1.bf16.msra.mxu0 %v4869
    %12331 = vmatprep.subr.bf16.mxu0 %v4878
    %12332 = vmatpush1.bf16.msra.mxu0 %v4877
    %12333 = vmatprep.subr.bf16.mxu0 %v4886
    %12334 = vmatpush1.bf16.msra.mxu0 %v4885
    %12335 = vmatprep.subr.bf16.mxu0 %v4894
    %12336 = vmatpush1.bf16.msra.mxu0 %v4893
    %12337 = vmatprep.mubr.bf16.mxu0 %v12181
    %12338 = vmatmul.mubr.bf16.gmra.mrb[0].mxu0 %v12180
    %v12339 = vpop.f32.mrb[0].mxu0
    %v12340 = vadd.f32 %v12299, %v12339
    %v12341 = vpop.f32.mrb[0].mxu0
    %v12342 = vadd.f32 %v12301, %v12341
    %v12343 = vpop.f32.mrb[0].mxu0
    %v12344 = vpop.f32.mrb[0].mxu0
    %12345 = vdwg.mxu0
    %12346 = vmatprep.subr.bf16.mxu0 %v4648
    %12347 = vmatpush1.bf16.msra.mxu0 %v4647
    %12348 = vmatprep.subr.bf16.mxu0 %v4656
    %12349 = vmatpush1.bf16.msra.mxu0 %v4655
    %12350 = vmatprep.subr.bf16.mxu0 %v4664
    %12351 = vmatpush1.bf16.msra.mxu0 %v4663
    %12352 = vmatprep.subr.bf16.mxu0 %v4672
    %12353 = vmatpush1.bf16.msra.mxu0 %v4671
    %12354 = vmatprep.subr.bf16.mxu0 %v4680
    %12355 = vmatpush1.bf16.msra.mxu0 %v4679
    %12356 = vmatprep.subr.bf16.mxu0 %v4688
    %12357 = vmatpush1.bf16.msra.mxu0 %v4687
    %12358 = vmatprep.subr.bf16.mxu0 %v4696
    %12359 = vmatpush1.bf16.msra.mxu0 %v4695
    %12360 = vmatprep.subr.bf16.mxu0 %v4704
    %12361 = vmatpush1.bf16.msra.mxu0 %v4703
    %12362 = vmatprep.subr.bf16.mxu0 %v4712
    %12363 = vmatpush1.bf16.msra.mxu0 %v4711
    %12364 = vmatprep.subr.bf16.mxu0 %v4720
    %12365 = vmatpush1.bf16.msra.mxu0 %v4719
    %12366 = vmatprep.subr.bf16.mxu0 %v4728
    %12367 = vmatpush1.bf16.msra.mxu0 %v4727
    %12368 = vmatprep.subr.bf16.mxu0 %v4736
    %12369 = vmatpush1.bf16.msra.mxu0 %v4735
    %12370 = vmatprep.subr.bf16.mxu0 %v4744
    %12371 = vmatpush1.bf16.msra.mxu0 %v4743
    %12372 = vmatprep.subr.bf16.mxu0 %v4752
    %12373 = vmatpush1.bf16.msra.mxu0 %v4751
    %12374 = vmatprep.subr.bf16.mxu0 %v4760
    %12375 = vmatpush1.bf16.msra.mxu0 %v4759
    %12376 = vmatprep.subr.bf16.mxu0 %v4768
    %12377 = vmatpush1.bf16.msra.mxu0 %v4767
    %12378 = vmatprep.mubr.bf16.mxu0 %v12179
    %12379 = vmatmul.mubr.bf16.gmra.mrb[0].mxu0 %v12178
    %v12380 = vpop.f32.mrb[0].mxu0
    %v12381 = vadd.f32 %v3854, %v12380
    %v12382 = vpop.f32.mrb[0].mxu0
    %v12383 = vadd.f32 %v3858, %v12382
    %v12384 = vpop.f32.mrb[0].mxu0
    %v12385 = vpop.f32.mrb[0].mxu0
    %12386 = vdwg.mxu0
    %12387 = vmatprep.subr.bf16.mxu0 %v4776
    %12388 = vmatpush1.bf16.msra.mxu0 %v4775
    %12389 = vmatprep.subr.bf16.mxu0 %v4784
    %12390 = vmatpush1.bf16.msra.mxu0 %v4783
    %12391 = vmatprep.subr.bf16.mxu0 %v4792
    %12392 = vmatpush1.bf16.msra.mxu0 %v4791
    %12393 = vmatprep.subr.bf16.mxu0 %v4800
    %12394 = vmatpush1.bf16.msra.mxu0 %v4799
    %12395 = vmatprep.subr.bf16.mxu0 %v4808
    %12396 = vmatpush1.bf16.msra.mxu0 %v4807
    %12397 = vmatprep.subr.bf16.mxu0 %v4816
    %12398 = vmatpush1.bf16.msra.mxu0 %v4815
    %12399 = vmatprep.subr.bf16.mxu0 %v4824
    %12400 = vmatpush1.bf16.msra.mxu0 %v4823
    %12401 = vmatprep.subr.bf16.mxu0 %v4832
    %12402 = vmatpush1.bf16.msra.mxu0 %v4831
    %12403 = vmatprep.subr.bf16.mxu0 %v4840
    %12404 = vmatpush1.bf16.msra.mxu0 %v4839
    %12405 = vmatprep.subr.bf16.mxu0 %v4848
    %12406 = vmatpush1.bf16.msra.mxu0 %v4847
    %12407 = vmatprep.subr.bf16.mxu0 %v4856
    %12408 = vmatpush1.bf16.msra.mxu0 %v4855
    %12409 = vmatprep.subr.bf16.mxu0 %v4864
    %12410 = vmatpush1.bf16.msra.mxu0 %v4863
    %12411 = vmatprep.subr.bf16.mxu0 %v4872
    %12412 = vmatpush1.bf16.msra.mxu0 %v4871
    %12413 = vmatprep.subr.bf16.mxu0 %v4880
    %12414 = vmatpush1.bf16.msra.mxu0 %v4879
    %12415 = vmatprep.subr.bf16.mxu0 %v4888
    %12416 = vmatpush1.bf16.msra.mxu0 %v4887
    %12417 = vmatprep.subr.bf16.mxu0 %v4896
    %12418 = vmatpush1.bf16.msra.mxu0 %v4895
    %12419 = vmatprep.mubr.bf16.mxu0 %v12181
    %12420 = vmatmul.mubr.bf16.gmra.mrb[0].mxu0 %v12180
    %v12421 = vpop.f32.mrb[0].mxu0
    %v12422 = vadd.f32 %v12381, %v12421
    %v12423 = vpop.f32.mrb[0].mxu0
    %v12424 = vadd.f32 %v12383, %v12423
    %v12425 = vpop.f32.mrb[0].mxu0
    %v12426 = vpop.f32.mrb[0].mxu0
    %12427 = vdwg.mxu0
    %12428 = vmatprep.subr.bf16.mxu0 %v4650
    %12429 = vmatpush1.bf16.msra.mxu0 %v4649
    %12430 = vmatprep.subr.bf16.mxu0 %v4658
    %12431 = vmatpush1.bf16.msra.mxu0 %v4657
    %12432 = vmatprep.subr.bf16.mxu0 %v4666
    %12433 = vmatpush1.bf16.msra.mxu0 %v4665
    %12434 = vmatprep.subr.bf16.mxu0 %v4674
    %12435 = vmatpush1.bf16.msra.mxu0 %v4673
    %12436 = vmatprep.subr.bf16.mxu0 %v4682
    %12437 = vmatpush1.bf16.msra.mxu0 %v4681
    %12438 = vmatprep.subr.bf16.mxu0 %v4690
    %12439 = vmatpush1.bf16.msra.mxu0 %v4689
    %12440 = vmatprep.subr.bf16.mxu0 %v4698
    %12441 = vmatpush1.bf16.msra.mxu0 %v4697
    %12442 = vmatprep.subr.bf16.mxu0 %v4706
    %12443 = vmatpush1.bf16.msra.mxu0 %v4705
    %12444 = vmatprep.subr.bf16.mxu0 %v4714
    %12445 = vmatpush1.bf16.msra.mxu0 %v4713
    %12446 = vmatprep.subr.bf16.mxu0 %v4722
    %12447 = vmatpush1.bf16.msra.mxu0 %v4721
    %12448 = vmatprep.subr.bf16.mxu0 %v4730
    %12449 = vmatpush1.bf16.msra.mxu0 %v4729
    %12450 = vmatprep.subr.bf16.mxu0 %v4738
    %12451 = vmatpush1.bf16.msra.mxu0 %v4737
    %12452 = vmatprep.subr.bf16.mxu0 %v4746
    %12453 = vmatpush1.bf16.msra.mxu0 %v4745
    %12454 = vmatprep.subr.bf16.mxu0 %v4754
    %12455 = vmatpush1.bf16.msra.mxu0 %v4753
    %12456 = vmatprep.subr.bf16.mxu0 %v4762
    %12457 = vmatpush1.bf16.msra.mxu0 %v4761
    %12458 = vmatprep.subr.bf16.mxu0 %v4770
    %12459 = vmatpush1.bf16.msra.mxu0 %v4769
    %12460 = vmatprep.mubr.bf16.mxu0 %v12179
    %12461 = vmatmul.mubr.bf16.gmra.mrb[0].mxu0 %v12178
    %v12462 = vpop.f32.mrb[0].mxu0
    %v12463 = vadd.f32 %v3862, %v12462
    %v12464 = vpop.f32.mrb[0].mxu0
    %v12465 = vadd.f32 %v3866, %v12464
    %v12466 = vpop.f32.mrb[0].mxu0
    %v12467 = vpop.f32.mrb[0].mxu0
    %12468 = vdwg.mxu0
    %12469 = vmatprep.subr.bf16.mxu0 %v4778
    %12470 = vmatpush1.bf16.msra.mxu0 %v4777
    %12471 = vmatprep.subr.bf16.mxu0 %v4786
    %12472 = vmatpush1.bf16.msra.mxu0 %v4785
    %12473 = vmatprep.subr.bf16.mxu0 %v4794
    %12474 = vmatpush1.bf16.msra.mxu0 %v4793
    %12475 = vmatprep.subr.bf16.mxu0 %v4802
    %12476 = vmatpush1.bf16.msra.mxu0 %v4801
    %12477 = vmatprep.subr.bf16.mxu0 %v4810
    %12478 = vmatpush1.bf16.msra.mxu0 %v4809
    %12479 = vmatprep.subr.bf16.mxu0 %v4818
    %12480 = vmatpush1.bf16.msra.mxu0 %v4817
    %12481 = vmatprep.subr.bf16.mxu0 %v4826
    %12482 = vmatpush1.bf16.msra.mxu0 %v4825
    %12483 = vmatprep.subr.bf16.mxu0 %v4834
    %12484 = vmatpush1.bf16.msra.mxu0 %v4833
    %12485 = vmatprep.subr.bf16.mxu0 %v4842
    %12486 = vmatpush1.bf16.msra.mxu0 %v4841
    %12487 = vmatprep.subr.bf16.mxu0 %v4850
    %12488 = vmatpush1.bf16.msra.mxu0 %v4849
    %12489 = vmatprep.subr.bf16.mxu0 %v4858
    %12490 = vmatpush1.bf16.msra.mxu0 %v4857
    %12491 = vmatprep.subr.bf16.mxu0 %v4866
    %12492 = vmatpush1.bf16.msra.mxu0 %v4865
    %12493 = vmatprep.subr.bf16.mxu0 %v4874
    %12494 = vmatpush1.bf16.msra.mxu0 %v4873
    %12495 = vmatprep.subr.bf16.mxu0 %v4882
    %12496 = vmatpush1.bf16.msra.mxu0 %v4881
    %12497 = vmatprep.subr.bf16.mxu0 %v4890
    %12498 = vmatpush1.bf16.msra.mxu0 %v4889
    %12499 = vmatprep.subr.bf16.mxu0 %v4898
    %12500 = vmatpush1.bf16.msra.mxu0 %v4897
    %12501 = vmatprep.mubr.bf16.mxu0 %v12181
    %12502 = vmatmul.mubr.bf16.gmra.mrb[0].mxu0 %v12180
    %v12503 = vpop.f32.mrb[0].mxu0
    %v12504 = vadd.f32 %v12463, %v12503
    %v12505 = vpop.f32.mrb[0].mxu0
    %v12506 = vadd.f32 %v12465, %v12505
    %v12507 = vpop.f32.mrb[0].mxu0
    %v12508 = vpop.f32.mrb[0].mxu0
    %12509 = vdwg.mxu0
    %12510 = vst [vmem:[%s26] sm:$0x3] %v2922
    %12511 = vst [vmem:[%s26 + $0x2] sm:$0x3] %v8057
    %12512 = vst [vmem:[%s26 + $0x4] sm:$0x3] %v11095
    %12513 = vst [vmem:[%s26 + $0x6] sm:$0x3] %v12041
    %12514 = vst [vmem:[%s27] sm:$0x3] %v5231
    %12515 = vst [vmem:[%s27 + $0x8] sm:$0x3] %v5233
    %12516 = vst [vmem:[%s27 + $0x10] sm:$0x3] %v5313
    %12517 = vst [vmem:[%s27 + $0x18] sm:$0x3] %v5315
    %12518 = vst [vmem:[%s27 + $0x20] sm:$0x3] %v5395
    %12519 = vst [vmem:[%s27 + $0x28] sm:$0x3] %v5397
    %12520 = vst [vmem:[%s27 + $0x30] sm:$0x3] %v5477
    %12521 = vst [vmem:[%s27 + $0x38] sm:$0x3] %v5479
    %v12530 = vrot.slane %v10366, 6
    %v12531 = vrot.slane %v10368, 6
    %v12532 = vrot.slane %v10448, 6
    %v12533 = vrot.slane %v10450, 6
    %v12534 = vrot.slane %v10530, 6
    %v12535 = vrot.slane %v10532, 6
    %v12536 = vrot.slane %v10612, 6
    %v12537 = vrot.slane %v10614, 6
    %12546 = vst [vmem:[%s27] sm:$0xc] %v12530
    %12547 = vst [vmem:[%s27 + $0x8] sm:$0xc] %v12531
    %12548 = vst [vmem:[%s27 + $0x10] sm:$0xc] %v12532
    %12549 = vst [vmem:[%s27 + $0x18] sm:$0xc] %v12533
    %12550 = vst [vmem:[%s27 + $0x20] sm:$0xc] %v12534
    %12551 = vst [vmem:[%s27 + $0x28] sm:$0xc] %v12535
    %12552 = vst [vmem:[%s27 + $0x30] sm:$0xc] %v12536
    %12553 = vst [vmem:[%s27 + $0x38] sm:$0xc] %v12537
    %v12562 = vrot.slane %v11312, 4
    %v12563 = vrot.slane %v11314, 4
    %v12564 = vrot.slane %v11394, 4
    %v12565 = vrot.slane %v11396, 4
    %v12566 = vrot.slane %v11476, 4
    %v12567 = vrot.slane %v11478, 4
    %v12568 = vrot.slane %v11558, 4
    %v12569 = vrot.slane %v11560, 4
    %12578 = vst [vmem:[%s27] sm:$0x30] %v12562
    %12579 = vst [vmem:[%s27 + $0x8] sm:$0x30] %v12563
    %12580 = vst [vmem:[%s27 + $0x10] sm:$0x30] %v12564
    %12581 = vst [vmem:[%s27 + $0x18] sm:$0x30] %v12565
    %12582 = vst [vmem:[%s27 + $0x20] sm:$0x30] %v12566
    %12583 = vst [vmem:[%s27 + $0x28] sm:$0x30] %v12567
    %12584 = vst [vmem:[%s27 + $0x30] sm:$0x30] %v12568
    %12585 = vst [vmem:[%s27 + $0x38] sm:$0x30] %v12569
    %v12594 = vrot.slane %v12258, 2
    %v12595 = vrot.slane %v12260, 2
    %v12596 = vrot.slane %v12340, 2
    %v12597 = vrot.slane %v12342, 2
    %v12598 = vrot.slane %v12422, 2
    %v12599 = vrot.slane %v12424, 2
    %v12600 = vrot.slane %v12504, 2
    %v12601 = vrot.slane %v12506, 2
    %12610 = vst [vmem:[%s27] sm:$0xc0] %v12594
    %12611 = vst [vmem:[%s27 + $0x8] sm:$0xc0] %v12595
    %12612 = vst [vmem:[%s27 + $0x10] sm:$0xc0] %v12596
    %12613 = vst [vmem:[%s27 + $0x18] sm:$0xc0] %v12597
    %12614 = vst [vmem:[%s27 + $0x20] sm:$0xc0] %v12598
    %12615 = vst [vmem:[%s27 + $0x28] sm:$0xc0] %v12599
    %12616 = vst [vmem:[%s27 + $0x30] sm:$0xc0] %v12600
    %12617 = vst [vmem:[%s27 + $0x38] sm:$0xc0] %v12601
    // Predicated region
    $region190: #{cycle_prot_trans_vae_forward.1} parent=1 // pred_check
      _
    $region191: #{cycle_prot_trans_vae_forward.1} parent=1 // pred_check_branch
      %12619 = sbr.rel (0) target = $region193
    $region192: #{cycle_prot_trans_vae_forward.1} parent=1 // pred_region
      _
    $region193: #{cycle_prot_trans_vae_forward.1} parent=1 // pred_fallthru
      _
    // Predicated region
    $region194: #{cycle_prot_trans_vae_forward.1} parent=1 // pred_check
      _
    $region195: #{cycle_prot_trans_vae_forward.1} parent=1 // pred_check_branch
      %12621 = sbr.rel (0) target = $region197
    $region196: #{cycle_prot_trans_vae_forward.1} parent=1 // pred_region
      _
    $region197: #{cycle_prot_trans_vae_forward.1} parent=1 // pred_fallthru
      _
    // Predicated region
    $region198: #{cycle_prot_trans_vae_forward.1} parent=1 // pred_check
      _
    $region199: #{cycle_prot_trans_vae_forward.1} parent=1 // pred_check_branch
      %12623 = sbr.rel (0) target = $region201
    $region200: #{cycle_prot_trans_vae_forward.1} parent=1 // pred_region
      _
    $region201: #{cycle_prot_trans_vae_forward.1} parent=1 // pred_fallthru
      _
    // Predicated region
    $region202: #{cycle_prot_trans_vae_forward.1} parent=1 // pred_check
      _
    $region203: #{cycle_prot_trans_vae_forward.1} parent=1 // pred_check_branch
      %12625 = sbr.rel (0) target = $region205
    $region204: #{cycle_prot_trans_vae_forward.1} parent=1 // pred_region
      _
    $region205: #{cycle_prot_trans_vae_forward.1} parent=1 // pred_fallthru
      _
    %12626 = vsyncpa [#allocation3], 1
    %12627 = vsyncpa [#allocation5], 1
    %12628 = vsyncpa [#allocation8], 1
    %12629 = vsyncpa [#allocation11], 1
    %12630 = vsyncpa [#allocation14], 1
    %12631 = vsyncpa [#allocation17], 1
    %12632 = vsyncpa [#allocation20], 1
    %12633 = vsyncpa [#allocation23], 1
    %12634 = vsyncpa [#allocation26], 1
    %12635 = vsyncpa [#allocation29], 1
    %12636 = vsyncpa [#allocation32], 1

</llo_original>
